<compile_context>
chip_gen: v6e
topology: v6e:2x2x1
jax: 0.10.0
libtpu: 0.0.40
codegen_flags: <defaults>
</compile_context>

<pallas_src>
import functools
import math

import jax
import jax.numpy as jnp
from jax.experimental import pallas as pl
from jax.experimental.pallas import tpu as pltpu

NUM_HEADS = 8
ATTN_SIZE = 512
HEAD_DIM = ATTN_SIZE // NUM_HEADS
HIDDEN = 128


def _spatial_edge_self_attn_kernel(x_ref, lens_ref,
                                   w1_ref, b1_ref, w2_ref, b2_ref,
                                   wqkv_ref, bqkv_ref, wo_ref, bo_ref,
                                   z_ref, o_scr):
    tb, hp, din = x_ref.shape
    rows = tb * hp

    # ---- embedding MLP: Linear(Din,128)+ReLU, Linear(128,512)+ReLU (bf16 MXU, f32 accum) ----
    x = x_ref[...].reshape(rows, din).astype(jnp.bfloat16)
    h1 = jnp.dot(x, w1_ref[...], preferred_element_type=jnp.float32) + b1_ref[...]
    h1 = jnp.maximum(h1, 0.0).astype(jnp.bfloat16)
    e = jnp.dot(h1, w2_ref[...], preferred_element_type=jnp.float32) + b2_ref[...]
    e = jnp.maximum(e, 0.0).astype(jnp.bfloat16)                     # (rows, 512)

    # ---- fused (q|k|v) projection; 1/sqrt(d_head) scale pre-folded into the q columns ----
    qkv = jnp.dot(e, wqkv_ref[...], preferred_element_type=jnp.float32) + bqkv_ref[...]
    qkv = qkv.astype(jnp.bfloat16)                                   # (rows, 1536)
    q = qkv[:, :ATTN_SIZE].reshape(tb, hp, ATTN_SIZE)
    k = qkv[:, ATTN_SIZE:2 * ATTN_SIZE].reshape(tb, hp, ATTN_SIZE)
    v = qkv[:, 2 * ATTN_SIZE:].reshape(tb, hp, ATTN_SIZE)

    # ---- additive key-padding bias built in-kernel from the per-row human counts ----
    key_idx = jax.lax.broadcasted_iota(jnp.int32, (tb, 1, hp), 2)
    bias = jnp.where(key_idx < lens_ref[...], 0.0, -1e9).astype(jnp.float32)  # (tb,1,hp)

    # ---- per-head attention (unrolled); head outputs land in a (rows,512) bf16 scratch ----
    for h in range(NUM_HEADS):
        sl = slice(h * HEAD_DIM, (h + 1) * HEAD_DIM)
        s = jnp.einsum('bqd,bkd->bqk', q[:, :, sl], k[:, :, sl],
                       preferred_element_type=jnp.float32) + bias    # (tb, hp, hp)
        m = jnp.max(s, axis=-1, keepdims=True)
        p = jnp.exp(s - m)
        p = p * pl.reciprocal(jnp.sum(p, axis=-1, keepdims=True), approx=True)
        oh = jnp.einsum('bqk,bkd->bqd', p.astype(jnp.bfloat16), v[:, :, sl],
                        preferred_element_type=jnp.float32)          # (tb, hp, 64)
        o_scr[:, sl] = oh.reshape(rows, HEAD_DIM).astype(jnp.bfloat16)

    # ---- MHA output projection ----
    z = jnp.dot(o_scr[...], wo_ref[...], preferred_element_type=jnp.float32) + bo_ref[...]
    z_ref[...] = z.reshape(tb, hp, ATTN_SIZE).astype(z_ref.dtype)


def _choose_tb(B, Hp, block_b):
    """Batch-tile size: keep rows=TB*Hp around 1024 (tall MXU M), make rows a
    multiple of 256 when possible, and guarantee >=2 grid steps so both v7x
    TensorCores get work."""
    mxu_step = 256 // math.gcd(Hp, 256)
    tb = min(block_b, max(1, 1024 // Hp), B)
    if tb >= mxu_step:
        tb = (tb // mxu_step) * mxu_step
    if B >= 2:
        tb = min(tb, (B + 1) // 2)
    return max(tb, 1)


def prepare_params(params):
    """One-time (outside the per-call path) folding of q/k/v linears with the
    MHA in-projections, QKV fusion, transposes and bf16 casts."""
    P = jax.lax.Precision.HIGHEST
    mm = lambda a, b: jnp.matmul(a, b, precision=P)
    scale = 1.0 / math.sqrt(HEAD_DIM)
    wq = mm(params['Wq'].T, params['Wiq'].T) * scale
    bq = (mm(params['bq'], params['Wiq'].T) + params['biq']) * scale
    wk = mm(params['Wk'].T, params['Wik'].T)
    bk = mm(params['bk'], params['Wik'].T) + params['bik']
    wv = mm(params['Wv'].T, params['Wiv'].T)
    bv = mm(params['bv'], params['Wiv'].T) + params['biv']
    wqkv = jnp.concatenate([wq, wk, wv], axis=1)          # (512, 1536)
    bqkv = jnp.concatenate([bq, bk, bv], axis=0)          # (1536,)
    return {
        'w1': params['W1'].T.astype(jnp.bfloat16), 'b1': params['b1'].reshape(1, -1),
        'w2': params['W2'].T.astype(jnp.bfloat16), 'b2': params['b2'].reshape(1, -1),
        'wqkv': wqkv.astype(jnp.bfloat16), 'bqkv': bqkv.reshape(1, -1),
        'wo': params['Wo'].T.astype(jnp.bfloat16), 'bo': params['bo'].reshape(1, -1),
    }


@functools.partial(jax.jit, static_argnames=("block_b",))
def spatial_edge_self_attn(inp, each_seq_len, kparams, *, block_b=128):
    """inp: (seq_len, nenv, max_human_num, input_size); each_seq_len: (seq_len, nenv) ints.
    kparams: output of prepare_params.  Returns (seq_len*nenv, max_human_num, 512)."""
    seq_len, nenv, H, Din = inp.shape
    B = seq_len * nenv
    dtype = inp.dtype

    # Pad humans to a multiple of 8 (sublane friendly); padded keys get masked.
    Hp = max(8, ((H + 7) // 8) * 8)
    x = inp.reshape(B, H, Din)
    if Hp != H:
        x = jnp.pad(x, ((0, 0), (0, Hp - H), (0, 0)))

    TB = _choose_tb(B, Hp, block_b)
    Bp = ((B + TB - 1) // TB) * TB
    if Bp != B:
        # Padded batch rows get length 0 (all keys masked -> finite garbage) and
        # are discarded by the trailing [:B] slice.
        x = jnp.pad(x, ((0, Bp - B), (0, 0), (0, 0)))

    lens = each_seq_len.reshape(B).astype(jnp.int32)
    if Bp != B:
        lens = jnp.pad(lens, (0, Bp - B))
    lens = lens.reshape(Bp, 1, 1)

    def const(shape):
        # Grid-invariant weight/bias: constant index_map + single buffering.
        return pl.BlockSpec(shape, lambda b: (0,) * len(shape),
                            pipeline_mode=pl.Buffered(1))

    z = pl.pallas_call(
        _spatial_edge_self_attn_kernel,
        out_shape=jax.ShapeDtypeStruct((Bp, Hp, ATTN_SIZE), dtype),
        grid_spec=pltpu.PrefetchScalarGridSpec(
            num_scalar_prefetch=0,
            grid=(Bp // TB,),
            in_specs=[
                pl.BlockSpec((TB, Hp, Din), lambda b: (b, 0, 0)),
                pl.BlockSpec((TB, 1, 1), lambda b: (b, 0, 0)),
                const((Din, HIDDEN)),
                const((1, HIDDEN)),
                const((HIDDEN, ATTN_SIZE)),
                const((1, ATTN_SIZE)),
                const((ATTN_SIZE, 3 * ATTN_SIZE)),
                const((1, 3 * ATTN_SIZE)),
                const((ATTN_SIZE, ATTN_SIZE)),
                const((1, ATTN_SIZE)),
            ],
            out_specs=pl.BlockSpec((TB, Hp, ATTN_SIZE), lambda b: (b, 0, 0)),
            scratch_shapes=[pltpu.VMEM((TB * Hp, ATTN_SIZE), jnp.bfloat16)],
        ),
        compiler_params=pltpu.CompilerParams(
            dimension_semantics=("parallel",),
            vmem_limit_bytes=48 * 1024 * 1024,
        ),
    )(x, lens,
      kparams['w1'], kparams['b1'], kparams['w2'], kparams['b2'],
      kparams['wqkv'], kparams['bqkv'], kparams['wo'], kparams['bo'])

    return z[:B, :H, :]


def init_params(key, input_size):
    keys = iter(jax.random.split(key, 20))

    def w(shape, fan_in):
        return jax.random.normal(next(keys), shape, jnp.float32) / math.sqrt(fan_in)

    p = {
        'W1': w((HIDDEN, input_size), input_size), 'b1': w((HIDDEN,), HIDDEN),
        'W2': w((ATTN_SIZE, HIDDEN), HIDDEN), 'b2': w((ATTN_SIZE,), ATTN_SIZE),
        'Wo': w((ATTN_SIZE, ATTN_SIZE), ATTN_SIZE), 'bo': w((ATTN_SIZE,), ATTN_SIZE),
    }
    for name in ('q', 'k', 'v'):
        p[f'W{name}'] = w((ATTN_SIZE, ATTN_SIZE), ATTN_SIZE)   # q/k/v Linear
        p[f'b{name}'] = w((ATTN_SIZE,), ATTN_SIZE)
        p[f'Wi{name}'] = w((ATTN_SIZE, ATTN_SIZE), ATTN_SIZE)  # MHA in_proj slices
        p[f'bi{name}'] = w((ATTN_SIZE,), ATTN_SIZE)
    return p


def reference(inp, each_seq_len, params):
    """Pure-JAX, un-fused, full-f32 replica of the PyTorch forward for verification."""
    P = jax.lax.Precision.HIGHEST
    mm = lambda a, b: jnp.matmul(a, b, precision=P)
    S, N, H, Din = inp.shape
    B = S * N
    x = inp.reshape(B, H, Din)
    e = jax.nn.relu(mm(x, params['W1'].T) + params['b1'])
    e = jax.nn.relu(mm(e, params['W2'].T) + params['b2'])
    q = mm(mm(e, params['Wq'].T) + params['bq'], params['Wiq'].T) + params['biq']
    k = mm(mm(e, params['Wk'].T) + params['bk'], params['Wik'].T) + params['bik']
    v = mm(mm(e, params['Wv'].T) + params['bv'], params['Wiv'].T) + params['biv']
    q = q.reshape(B, H, NUM_HEADS, HEAD_DIM) / math.sqrt(HEAD_DIM)
    k = k.reshape(B, H, NUM_HEADS, HEAD_DIM)
    v = v.reshape(B, H, NUM_HEADS, HEAD_DIM)
    s = jnp.einsum('bqhd,bkhd->bhqk', q, k, precision=P)
    lengths = each_seq_len.reshape(B).astype(jnp.int32)
    valid = jnp.arange(H, dtype=jnp.int32)[None, :] < lengths[:, None]
    bias = jnp.where(valid, 0.0, -1e9)[:, None, None, :]
    p = jax.nn.softmax(s + bias, axis=-1)
    o = jnp.einsum('bhqk,bkhd->bqhd', p, v, precision=P).reshape(B, H, ATTN_SIZE)
    return mm(o, params['Wo'].T) + params['bo']


if __name__ == "__main__":
    # CrowdSimPred-v0: input_size = 12; small deterministic shapes.
    seq_len, nenv, max_human_num, input_size = 2, 2, 8, 12

    key = jax.random.PRNGKey(0)
    kp, kx, kl = jax.random.split(key, 3)
    params = init_params(kp, input_size)
    kparams = prepare_params(params)          # one-time weight folding / bf16 cast
    inp = jax.random.normal(kx, (seq_len, nenv, max_human_num, input_size),
                            jnp.float32)
    each_seq_len = jax.random.randint(kl, (seq_len, nenv), 1, max_human_num + 1)

    z = spatial_edge_self_attn(inp, each_seq_len, kparams)
    jax.block_until_ready(z)

    z_ref = reference(inp, each_seq_len, params)
    assert z.shape == (seq_len * nenv, max_human_num, ATTN_SIZE)
    max_err = float(jnp.max(jnp.abs(z - z_ref)))
    # bf16 MXU path vs full-f32 reference -> loosened tolerance.
    assert jnp.allclose(z, z_ref, rtol=5e-2, atol=5e-2), f"max abs err {max_err}"

    print("KERNEL_OK")
</pallas_src>

<mosaic_0001>
module attributes {stable_mosaic.version = 11 : i64} {
  func.func @_spatial_edge_self_attn_kernel(%arg0: i32, %arg1: memref<2x8x12xf32, #tpu.memory_space<vmem>>, %arg2: memref<2x1x1xi32, #tpu.memory_space<vmem>>, %arg3: memref<12x128xbf16, #tpu.memory_space<vmem>>, %arg4: memref<1x128xf32, #tpu.memory_space<vmem>>, %arg5: memref<128x512xbf16, #tpu.memory_space<vmem>>, %arg6: memref<1x512xf32, #tpu.memory_space<vmem>>, %arg7: memref<512x1536xbf16, #tpu.memory_space<vmem>>, %arg8: memref<1x1536xf32, #tpu.memory_space<vmem>>, %arg9: memref<512x512xbf16, #tpu.memory_space<vmem>>, %arg10: memref<1x512xf32, #tpu.memory_space<vmem>>, %arg11: memref<2x8x512xf32, #tpu.memory_space<vmem>>, %arg12: memref<16x512xbf16, #tpu.memory_space<vmem>>) attributes {dimension_semantics = [#tpu.dimension_semantics<parallel>], iteration_bounds = array<i64: 2>, scalar_prefetch = 0 : i64, scratch_operands = 1 : i64, tpu.core_type = #tpu.core_type<tc>, window_params = [{transform_indices = @transform_0, window_bounds = array<i64: 2, 8, 12>}, {transform_indices = @transform_1, window_bounds = array<i64: 2, 1, 1>}, {pipeline_mode = #tpu.pipeline_mode<synchronous>, transform_indices = @transform_2, window_bounds = array<i64: 12, 128>}, {pipeline_mode = #tpu.pipeline_mode<synchronous>, transform_indices = @transform_3, window_bounds = array<i64: 1, 128>}, {pipeline_mode = #tpu.pipeline_mode<synchronous>, transform_indices = @transform_4, window_bounds = array<i64: 128, 512>}, {pipeline_mode = #tpu.pipeline_mode<synchronous>, transform_indices = @transform_5, window_bounds = array<i64: 1, 512>}, {pipeline_mode = #tpu.pipeline_mode<synchronous>, transform_indices = @transform_6, window_bounds = array<i64: 512, 1536>}, {pipeline_mode = #tpu.pipeline_mode<synchronous>, transform_indices = @transform_7, window_bounds = array<i64: 1, 1536>}, {pipeline_mode = #tpu.pipeline_mode<synchronous>, transform_indices = @transform_8, window_bounds = array<i64: 512, 512>}, {pipeline_mode = #tpu.pipeline_mode<synchronous>, transform_indices = @transform_9, window_bounds = array<i64: 1, 512>}, {transform_indices = @transform_10, window_bounds = array<i64: 2, 8, 512>}]} {
    %c0 = arith.constant 0 : index
    %c0_0 = arith.constant 0 : index
    %c0_1 = arith.constant 0 : index
    %0 = vector.load %arg1[%c0, %c0_0, %c0_1] : memref<2x8x12xf32, #tpu.memory_space<vmem>>, vector<2x8x12xf32>
    %1 = vector.shape_cast %0 : vector<2x8x12xf32> to vector<16x12xf32>
    %2 = arith.truncf %1 : vector<16x12xf32> to vector<16x12xbf16>
    %c0_2 = arith.constant 0 : index
    %c0_3 = arith.constant 0 : index
    %3 = vector.load %arg3[%c0_2, %c0_3] : memref<12x128xbf16, #tpu.memory_space<vmem>>, vector<12x128xbf16>
    %cst = arith.constant dense<0.000000e+00> : vector<16x128xf32>
    %4 = tpu.matmul %2, %3, %cst {dimension_numbers = #tpu.dot_dimension_numbers<[1], [0], [0], [1], [0, 0, 1, 1], [], []>} : vector<16x12xbf16>, vector<12x128xbf16>, vector<16x128xf32> -> vector<16x128xf32>
    %c0_4 = arith.constant 0 : index
    %c0_5 = arith.constant 0 : index
    %5 = vector.load %arg4[%c0_4, %c0_5] : memref<1x128xf32, #tpu.memory_space<vmem>>, vector<1x128xf32>
    %6 = vector.broadcast %5 : vector<1x128xf32> to vector<16x128xf32>
    %7 = arith.addf %4, %6 : vector<16x128xf32>
    %cst_6 = arith.constant 0.000000e+00 : f32
    %8 = vector.broadcast %cst_6 : f32 to vector<16x128xf32>
    %9 = arith.maximumf %7, %8 : vector<16x128xf32>
    %10 = arith.truncf %9 : vector<16x128xf32> to vector<16x128xbf16>
    %c0_7 = arith.constant 0 : index
    %c0_8 = arith.constant 0 : index
    %11 = vector.load %arg5[%c0_7, %c0_8] : memref<128x512xbf16, #tpu.memory_space<vmem>>, vector<128x512xbf16>
    %cst_9 = arith.constant dense<0.000000e+00> : vector<16x512xf32>
    %12 = tpu.matmul %10, %11, %cst_9 {dimension_numbers = #tpu.dot_dimension_numbers<[1], [0], [0], [1], [0, 0, 1, 1], [], []>} : vector<16x128xbf16>, vector<128x512xbf16>, vector<16x512xf32> -> vector<16x512xf32>
    %c0_10 = arith.constant 0 : index
    %c0_11 = arith.constant 0 : index
    %13 = vector.load %arg6[%c0_10, %c0_11] : memref<1x512xf32, #tpu.memory_space<vmem>>, vector<1x512xf32>
    %14 = vector.broadcast %13 : vector<1x512xf32> to vector<16x512xf32>
    %15 = arith.addf %12, %14 : vector<16x512xf32>
    %cst_12 = arith.constant 0.000000e+00 : f32
    %16 = vector.broadcast %cst_12 : f32 to vector<16x512xf32>
    %17 = arith.maximumf %15, %16 : vector<16x512xf32>
    %18 = arith.truncf %17 : vector<16x512xf32> to vector<16x512xbf16>
    %c0_13 = arith.constant 0 : index
    %c0_14 = arith.constant 0 : index
    %19 = vector.load %arg7[%c0_13, %c0_14] : memref<512x1536xbf16, #tpu.memory_space<vmem>>, vector<512x1536xbf16>
    %cst_15 = arith.constant dense<0.000000e+00> : vector<16x1536xf32>
    %20 = tpu.matmul %18, %19, %cst_15 {dimension_numbers = #tpu.dot_dimension_numbers<[1], [0], [0], [1], [0, 0, 1, 1], [], []>} : vector<16x512xbf16>, vector<512x1536xbf16>, vector<16x1536xf32> -> vector<16x1536xf32>
    %c0_16 = arith.constant 0 : index
    %c0_17 = arith.constant 0 : index
    %21 = vector.load %arg8[%c0_16, %c0_17] : memref<1x1536xf32, #tpu.memory_space<vmem>>, vector<1x1536xf32>
    %22 = vector.broadcast %21 : vector<1x1536xf32> to vector<16x1536xf32>
    %23 = arith.addf %20, %22 : vector<16x1536xf32>
    %24 = arith.truncf %23 : vector<16x1536xf32> to vector<16x1536xbf16>
    %25 = vector.extract_strided_slice %24 {offsets = [0, 0], sizes = [16, 512], strides = [1, 1]} : vector<16x1536xbf16> to vector<16x512xbf16>
    %26 = vector.shape_cast %25 : vector<16x512xbf16> to vector<2x8x512xbf16>
    %27 = vector.extract_strided_slice %24 {offsets = [0, 512], sizes = [16, 512], strides = [1, 1]} : vector<16x1536xbf16> to vector<16x512xbf16>
    %28 = vector.shape_cast %27 : vector<16x512xbf16> to vector<2x8x512xbf16>
    %29 = vector.extract_strided_slice %24 {offsets = [0, 1024], sizes = [16, 512], strides = [1, 1]} : vector<16x1536xbf16> to vector<16x512xbf16>
    %30 = vector.shape_cast %29 : vector<16x512xbf16> to vector<2x8x512xbf16>
    %31 = tpu.iota {dimensions = array<i32: 2>} : vector<2x1x8xi32>
    %c0_18 = arith.constant 0 : index
    %c0_19 = arith.constant 0 : index
    %c0_20 = arith.constant 0 : index
    %32 = vector.load %arg2[%c0_18, %c0_19, %c0_20] : memref<2x1x1xi32, #tpu.memory_space<vmem>>, vector<2x1x1xi32>
    %33 = vector.broadcast %32 : vector<2x1x1xi32> to vector<2x1x8xi32>
    %34 = arith.cmpi slt, %31, %33 : vector<2x1x8xi32>
    %cst_21 = arith.constant 0.000000e+00 : f32
    %cst_22 = arith.constant -1.000000e+09 : f32
    %35 = vector.broadcast %cst_21 : f32 to vector<2x1x8xf32>
    %36 = vector.broadcast %cst_22 : f32 to vector<2x1x8xf32>
    %37 = arith.select %34, %35, %36 : vector<2x1x8xi1>, vector<2x1x8xf32>
    %38 = vector.extract_strided_slice %26 {offsets = [0, 0, 0], sizes = [2, 8, 64], strides = [1, 1, 1]} : vector<2x8x512xbf16> to vector<2x8x64xbf16>
    %39 = vector.extract_strided_slice %28 {offsets = [0, 0, 0], sizes = [2, 8, 64], strides = [1, 1, 1]} : vector<2x8x512xbf16> to vector<2x8x64xbf16>
    "tpu.trace_start"() <{level = 10 : i32, message = "bqd,bkd->bqk"}> : () -> ()
    %cst_23 = arith.constant dense<0.000000e+00> : vector<2x8x8xf32>
    %40 = tpu.matmul %38, %39, %cst_23 {dimension_numbers = #tpu.dot_dimension_numbers<[2], [2], [1], [1], [0, 0, 0, 1, 1, 1], [0], [0]>} : vector<2x8x64xbf16>, vector<2x8x64xbf16>, vector<2x8x8xf32> -> vector<2x8x8xf32>
    "tpu.trace_stop"() : () -> ()
    %41 = vector.broadcast %37 : vector<2x1x8xf32> to vector<2x8x8xf32>
    %42 = arith.addf %40, %41 : vector<2x8x8xf32>
    %cst_24 = arith.constant dense<0xFF800000> : vector<2x8xf32>
    %43 = vector.multi_reduction <maximumf>, %42, %cst_24 [2] : vector<2x8x8xf32> to vector<2x8xf32>
    %44 = vector.shape_cast %43 : vector<2x8xf32> to vector<2x8x1xf32>
    %45 = vector.broadcast %44 : vector<2x8x1xf32> to vector<2x8x8xf32>
    %46 = arith.subf %42, %45 : vector<2x8x8xf32>
    %47 = math.exp %46 : vector<2x8x8xf32>
    %cst_25 = arith.constant dense<0.000000e+00> : vector<2x8xf32>
    %48 = vector.multi_reduction <add>, %47, %cst_25 [2] : vector<2x8x8xf32> to vector<2x8xf32>
    %49 = vector.shape_cast %48 : vector<2x8xf32> to vector<2x8x1xf32>
    %50 = tpu.reciprocal %49 {approx = true} : vector<2x8x1xf32> -> vector<2x8x1xf32>
    %51 = vector.broadcast %50 : vector<2x8x1xf32> to vector<2x8x8xf32>
    %52 = arith.mulf %47, %51 : vector<2x8x8xf32>
    %53 = arith.truncf %52 : vector<2x8x8xf32> to vector<2x8x8xbf16>
    %54 = vector.extract_strided_slice %30 {offsets = [0, 0, 0], sizes = [2, 8, 64], strides = [1, 1, 1]} : vector<2x8x512xbf16> to vector<2x8x64xbf16>
    "tpu.trace_start"() <{level = 10 : i32, message = "bqk,bkd->bqd"}> : () -> ()
    %cst_26 = arith.constant dense<0.000000e+00> : vector<2x8x64xf32>
    %55 = tpu.matmul %53, %54, %cst_26 {dimension_numbers = #tpu.dot_dimension_numbers<[2], [1], [1], [2], [0, 0, 0, 1, 1, 2], [0], [0]>} : vector<2x8x8xbf16>, vector<2x8x64xbf16>, vector<2x8x64xf32> -> vector<2x8x64xf32>
    "tpu.trace_stop"() : () -> ()
    %56 = vector.shape_cast %55 : vector<2x8x64xf32> to vector<16x64xf32>
    %57 = arith.truncf %56 : vector<16x64xf32> to vector<16x64xbf16>
    %c0_27 = arith.constant 0 : index
    %c0_28 = arith.constant 0 : index
    %58 = vector.load %arg12[%c0_27, %c0_28] : memref<16x512xbf16, #tpu.memory_space<vmem>>, vector<16x64xbf16>
    tpu.vector_store %arg12[%c0_27, %c0_28], %57 {strides = array<i32>} : memref<16x512xbf16, #tpu.memory_space<vmem>>, vector<16x64xbf16>,
    %59 = vector.extract_strided_slice %26 {offsets = [0, 0, 64], sizes = [2, 8, 64], strides = [1, 1, 1]} : vector<2x8x512xbf16> to vector<2x8x64xbf16>
    %60 = vector.extract_strided_slice %28 {offsets = [0, 0, 64], sizes = [2, 8, 64], strides = [1, 1, 1]} : vector<2x8x512xbf16> to vector<2x8x64xbf16>
    "tpu.trace_start"() <{level = 10 : i32, message = "bqd,bkd->bqk"}> : () -> ()
    %cst_29 = arith.constant dense<0.000000e+00> : vector<2x8x8xf32>
    %61 = tpu.matmul %59, %60, %cst_29 {dimension_numbers = #tpu.dot_dimension_numbers<[2], [2], [1], [1], [0, 0, 0, 1, 1, 1], [0], [0]>} : vector<2x8x64xbf16>, vector<2x8x64xbf16>, vector<2x8x8xf32> -> vector<2x8x8xf32>
    "tpu.trace_stop"() : () -> ()
    %62 = vector.broadcast %37 : vector<2x1x8xf32> to vector<2x8x8xf32>
    %63 = arith.addf %61, %62 : vector<2x8x8xf32>
    %cst_30 = arith.constant dense<0xFF800000> : vector<2x8xf32>
    %64 = vector.multi_reduction <maximumf>, %63, %cst_30 [2] : vector<2x8x8xf32> to vector<2x8xf32>
    %65 = vector.shape_cast %64 : vector<2x8xf32> to vector<2x8x1xf32>
    %66 = vector.broadcast %65 : vector<2x8x1xf32> to vector<2x8x8xf32>
    %67 = arith.subf %63, %66 : vector<2x8x8xf32>
    %68 = math.exp %67 : vector<2x8x8xf32>
    %cst_31 = arith.constant dense<0.000000e+00> : vector<2x8xf32>
    %69 = vector.multi_reduction <add>, %68, %cst_31 [2] : vector<2x8x8xf32> to vector<2x8xf32>
    %70 = vector.shape_cast %69 : vector<2x8xf32> to vector<2x8x1xf32>
    %71 = tpu.reciprocal %70 {approx = true} : vector<2x8x1xf32> -> vector<2x8x1xf32>
    %72 = vector.broadcast %71 : vector<2x8x1xf32> to vector<2x8x8xf32>
    %73 = arith.mulf %68, %72 : vector<2x8x8xf32>
    %74 = arith.truncf %73 : vector<2x8x8xf32> to vector<2x8x8xbf16>
    %75 = vector.extract_strided_slice %30 {offsets = [0, 0, 64], sizes = [2, 8, 64], strides = [1, 1, 1]} : vector<2x8x512xbf16> to vector<2x8x64xbf16>
    "tpu.trace_start"() <{level = 10 : i32, message = "bqk,bkd->bqd"}> : () -> ()
    %cst_32 = arith.constant dense<0.000000e+00> : vector<2x8x64xf32>
    %76 = tpu.matmul %74, %75, %cst_32 {dimension_numbers = #tpu.dot_dimension_numbers<[2], [1], [1], [2], [0, 0, 0, 1, 1, 2], [0], [0]>} : vector<2x8x8xbf16>, vector<2x8x64xbf16>, vector<2x8x64xf32> -> vector<2x8x64xf32>
    "tpu.trace_stop"() : () -> ()
    %77 = vector.shape_cast %76 : vector<2x8x64xf32> to vector<16x64xf32>
    %78 = arith.truncf %77 : vector<16x64xf32> to vector<16x64xbf16>
    %c0_33 = arith.constant 0 : index
    %c64 = arith.constant 64 : index
    %79 = vector.load %arg12[%c0_33, %c64] : memref<16x512xbf16, #tpu.memory_space<vmem>>, vector<16x64xbf16>
    tpu.vector_store %arg12[%c0_33, %c64], %78 {strides = array<i32>} : memref<16x512xbf16, #tpu.memory_space<vmem>>, vector<16x64xbf16>,
    %80 = vector.extract_strided_slice %26 {offsets = [0, 0, 128], sizes = [2, 8, 64], strides = [1, 1, 1]} : vector<2x8x512xbf16> to vector<2x8x64xbf16>
    %81 = vector.extract_strided_slice %28 {offsets = [0, 0, 128], sizes = [2, 8, 64], strides = [1, 1, 1]} : vector<2x8x512xbf16> to vector<2x8x64xbf16>
    "tpu.trace_start"() <{level = 10 : i32, message = "bqd,bkd->bqk"}> : () -> ()
    %cst_34 = arith.constant dense<0.000000e+00> : vector<2x8x8xf32>
    %82 = tpu.matmul %80, %81, %cst_34 {dimension_numbers = #tpu.dot_dimension_numbers<[2], [2], [1], [1], [0, 0, 0, 1, 1, 1], [0], [0]>} : vector<2x8x64xbf16>, vector<2x8x64xbf16>, vector<2x8x8xf32> -> vector<2x8x8xf32>
    "tpu.trace_stop"() : () -> ()
    %83 = vector.broadcast %37 : vector<2x1x8xf32> to vector<2x8x8xf32>
    %84 = arith.addf %82, %83 : vector<2x8x8xf32>
    %cst_35 = arith.constant dense<0xFF800000> : vector<2x8xf32>
    %85 = vector.multi_reduction <maximumf>, %84, %cst_35 [2] : vector<2x8x8xf32> to vector<2x8xf32>
    %86 = vector.shape_cast %85 : vector<2x8xf32> to vector<2x8x1xf32>
    %87 = vector.broadcast %86 : vector<2x8x1xf32> to vector<2x8x8xf32>
    %88 = arith.subf %84, %87 : vector<2x8x8xf32>
    %89 = math.exp %88 : vector<2x8x8xf32>
    %cst_36 = arith.constant dense<0.000000e+00> : vector<2x8xf32>
    %90 = vector.multi_reduction <add>, %89, %cst_36 [2] : vector<2x8x8xf32> to vector<2x8xf32>
    %91 = vector.shape_cast %90 : vector<2x8xf32> to vector<2x8x1xf32>
    %92 = tpu.reciprocal %91 {approx = true} : vector<2x8x1xf32> -> vector<2x8x1xf32>
    %93 = vector.broadcast %92 : vector<2x8x1xf32> to vector<2x8x8xf32>
    %94 = arith.mulf %89, %93 : vector<2x8x8xf32>
    %95 = arith.truncf %94 : vector<2x8x8xf32> to vector<2x8x8xbf16>
    %96 = vector.extract_strided_slice %30 {offsets = [0, 0, 128], sizes = [2, 8, 64], strides = [1, 1, 1]} : vector<2x8x512xbf16> to vector<2x8x64xbf16>
    "tpu.trace_start"() <{level = 10 : i32, message = "bqk,bkd->bqd"}> : () -> ()
    %cst_37 = arith.constant dense<0.000000e+00> : vector<2x8x64xf32>
    %97 = tpu.matmul %95, %96, %cst_37 {dimension_numbers = #tpu.dot_dimension_numbers<[2], [1], [1], [2], [0, 0, 0, 1, 1, 2], [0], [0]>} : vector<2x8x8xbf16>, vector<2x8x64xbf16>, vector<2x8x64xf32> -> vector<2x8x64xf32>
    "tpu.trace_stop"() : () -> ()
    %98 = vector.shape_cast %97 : vector<2x8x64xf32> to vector<16x64xf32>
    %99 = arith.truncf %98 : vector<16x64xf32> to vector<16x64xbf16>
    %c0_38 = arith.constant 0 : index
    %c128 = arith.constant 128 : index
    %100 = vector.load %arg12[%c0_38, %c128] : memref<16x512xbf16, #tpu.memory_space<vmem>>, vector<16x64xbf16>
    tpu.vector_store %arg12[%c0_38, %c128], %99 {strides = array<i32>} : memref<16x512xbf16, #tpu.memory_space<vmem>>, vector<16x64xbf16>,
    %101 = vector.extract_strided_slice %26 {offsets = [0, 0, 192], sizes = [2, 8, 64], strides = [1, 1, 1]} : vector<2x8x512xbf16> to vector<2x8x64xbf16>
    %102 = vector.extract_strided_slice %28 {offsets = [0, 0, 192], sizes = [2, 8, 64], strides = [1, 1, 1]} : vector<2x8x512xbf16> to vector<2x8x64xbf16>
    "tpu.trace_start"() <{level = 10 : i32, message = "bqd,bkd->bqk"}> : () -> ()
    %cst_39 = arith.constant dense<0.000000e+00> : vector<2x8x8xf32>
    %103 = tpu.matmul %101, %102, %cst_39 {dimension_numbers = #tpu.dot_dimension_numbers<[2], [2], [1], [1], [0, 0, 0, 1, 1, 1], [0], [0]>} : vector<2x8x64xbf16>, vector<2x8x64xbf16>, vector<2x8x8xf32> -> vector<2x8x8xf32>
    "tpu.trace_stop"() : () -> ()
    %104 = vector.broadcast %37 : vector<2x1x8xf32> to vector<2x8x8xf32>
    %105 = arith.addf %103, %104 : vector<2x8x8xf32>
    %cst_40 = arith.constant dense<0xFF800000> : vector<2x8xf32>
    %106 = vector.multi_reduction <maximumf>, %105, %cst_40 [2] : vector<2x8x8xf32> to vector<2x8xf32>
    %107 = vector.shape_cast %106 : vector<2x8xf32> to vector<2x8x1xf32>
    %108 = vector.broadcast %107 : vector<2x8x1xf32> to vector<2x8x8xf32>
    %109 = arith.subf %105, %108 : vector<2x8x8xf32>
    %110 = math.exp %109 : vector<2x8x8xf32>
    %cst_41 = arith.constant dense<0.000000e+00> : vector<2x8xf32>
    %111 = vector.multi_reduction <add>, %110, %cst_41 [2] : vector<2x8x8xf32> to vector<2x8xf32>
    %112 = vector.shape_cast %111 : vector<2x8xf32> to vector<2x8x1xf32>
    %113 = tpu.reciprocal %112 {approx = true} : vector<2x8x1xf32> -> vector<2x8x1xf32>
    %114 = vector.broadcast %113 : vector<2x8x1xf32> to vector<2x8x8xf32>
    %115 = arith.mulf %110, %114 : vector<2x8x8xf32>
    %116 = arith.truncf %115 : vector<2x8x8xf32> to vector<2x8x8xbf16>
    %117 = vector.extract_strided_slice %30 {offsets = [0, 0, 192], sizes = [2, 8, 64], strides = [1, 1, 1]} : vector<2x8x512xbf16> to vector<2x8x64xbf16>
    "tpu.trace_start"() <{level = 10 : i32, message = "bqk,bkd->bqd"}> : () -> ()
    %cst_42 = arith.constant dense<0.000000e+00> : vector<2x8x64xf32>
    %118 = tpu.matmul %116, %117, %cst_42 {dimension_numbers = #tpu.dot_dimension_numbers<[2], [1], [1], [2], [0, 0, 0, 1, 1, 2], [0], [0]>} : vector<2x8x8xbf16>, vector<2x8x64xbf16>, vector<2x8x64xf32> -> vector<2x8x64xf32>
    "tpu.trace_stop"() : () -> ()
    %119 = vector.shape_cast %118 : vector<2x8x64xf32> to vector<16x64xf32>
    %120 = arith.truncf %119 : vector<16x64xf32> to vector<16x64xbf16>
    %c0_43 = arith.constant 0 : index
    %c192 = arith.constant 192 : index
    %121 = vector.load %arg12[%c0_43, %c192] : memref<16x512xbf16, #tpu.memory_space<vmem>>, vector<16x64xbf16>
    tpu.vector_store %arg12[%c0_43, %c192], %120 {strides = array<i32>} : memref<16x512xbf16, #tpu.memory_space<vmem>>, vector<16x64xbf16>,
    %122 = vector.extract_strided_slice %26 {offsets = [0, 0, 256], sizes = [2, 8, 64], strides = [1, 1, 1]} : vector<2x8x512xbf16> to vector<2x8x64xbf16>
    %123 = vector.extract_strided_slice %28 {offsets = [0, 0, 256], sizes = [2, 8, 64], strides = [1, 1, 1]} : vector<2x8x512xbf16> to vector<2x8x64xbf16>
    "tpu.trace_start"() <{level = 10 : i32, message = "bqd,bkd->bqk"}> : () -> ()
    %cst_44 = arith.constant dense<0.000000e+00> : vector<2x8x8xf32>
    %124 = tpu.matmul %122, %123, %cst_44 {dimension_numbers = #tpu.dot_dimension_numbers<[2], [2], [1], [1], [0, 0, 0, 1, 1, 1], [0], [0]>} : vector<2x8x64xbf16>, vector<2x8x64xbf16>, vector<2x8x8xf32> -> vector<2x8x8xf32>
    "tpu.trace_stop"() : () -> ()
    %125 = vector.broadcast %37 : vector<2x1x8xf32> to vector<2x8x8xf32>
    %126 = arith.addf %124, %125 : vector<2x8x8xf32>
    %cst_45 = arith.constant dense<0xFF800000> : vector<2x8xf32>
    %127 = vector.multi_reduction <maximumf>, %126, %cst_45 [2] : vector<2x8x8xf32> to vector<2x8xf32>
    %128 = vector.shape_cast %127 : vector<2x8xf32> to vector<2x8x1xf32>
    %129 = vector.broadcast %128 : vector<2x8x1xf32> to vector<2x8x8xf32>
    %130 = arith.subf %126, %129 : vector<2x8x8xf32>
    %131 = math.exp %130 : vector<2x8x8xf32>
    %cst_46 = arith.constant dense<0.000000e+00> : vector<2x8xf32>
    %132 = vector.multi_reduction <add>, %131, %cst_46 [2] : vector<2x8x8xf32> to vector<2x8xf32>
    %133 = vector.shape_cast %132 : vector<2x8xf32> to vector<2x8x1xf32>
    %134 = tpu.reciprocal %133 {approx = true} : vector<2x8x1xf32> -> vector<2x8x1xf32>
    %135 = vector.broadcast %134 : vector<2x8x1xf32> to vector<2x8x8xf32>
    %136 = arith.mulf %131, %135 : vector<2x8x8xf32>
    %137 = arith.truncf %136 : vector<2x8x8xf32> to vector<2x8x8xbf16>
    %138 = vector.extract_strided_slice %30 {offsets = [0, 0, 256], sizes = [2, 8, 64], strides = [1, 1, 1]} : vector<2x8x512xbf16> to vector<2x8x64xbf16>
    "tpu.trace_start"() <{level = 10 : i32, message = "bqk,bkd->bqd"}> : () -> ()
    %cst_47 = arith.constant dense<0.000000e+00> : vector<2x8x64xf32>
    %139 = tpu.matmul %137, %138, %cst_47 {dimension_numbers = #tpu.dot_dimension_numbers<[2], [1], [1], [2], [0, 0, 0, 1, 1, 2], [0], [0]>} : vector<2x8x8xbf16>, vector<2x8x64xbf16>, vector<2x8x64xf32> -> vector<2x8x64xf32>
    "tpu.trace_stop"() : () -> ()
    %140 = vector.shape_cast %139 : vector<2x8x64xf32> to vector<16x64xf32>
    %141 = arith.truncf %140 : vector<16x64xf32> to vector<16x64xbf16>
    %c0_48 = arith.constant 0 : index
    %c256 = arith.constant 256 : index
    %142 = vector.load %arg12[%c0_48, %c256] : memref<16x512xbf16, #tpu.memory_space<vmem>>, vector<16x64xbf16>
    tpu.vector_store %arg12[%c0_48, %c256], %141 {strides = array<i32>} : memref<16x512xbf16, #tpu.memory_space<vmem>>, vector<16x64xbf16>,
    %143 = vector.extract_strided_slice %26 {offsets = [0, 0, 320], sizes = [2, 8, 64], strides = [1, 1, 1]} : vector<2x8x512xbf16> to vector<2x8x64xbf16>
    %144 = vector.extract_strided_slice %28 {offsets = [0, 0, 320], sizes = [2, 8, 64], strides = [1, 1, 1]} : vector<2x8x512xbf16> to vector<2x8x64xbf16>
    "tpu.trace_start"() <{level = 10 : i32, message = "bqd,bkd->bqk"}> : () -> ()
    %cst_49 = arith.constant dense<0.000000e+00> : vector<2x8x8xf32>
    %145 = tpu.matmul %143, %144, %cst_49 {dimension_numbers = #tpu.dot_dimension_numbers<[2], [2], [1], [1], [0, 0, 0, 1, 1, 1], [0], [0]>} : vector<2x8x64xbf16>, vector<2x8x64xbf16>, vector<2x8x8xf32> -> vector<2x8x8xf32>
    "tpu.trace_stop"() : () -> ()
    %146 = vector.broadcast %37 : vector<2x1x8xf32> to vector<2x8x8xf32>
    %147 = arith.addf %145, %146 : vector<2x8x8xf32>
    %cst_50 = arith.constant dense<0xFF800000> : vector<2x8xf32>
    %148 = vector.multi_reduction <maximumf>, %147, %cst_50 [2] : vector<2x8x8xf32> to vector<2x8xf32>
    %149 = vector.shape_cast %148 : vector<2x8xf32> to vector<2x8x1xf32>
    %150 = vector.broadcast %149 : vector<2x8x1xf32> to vector<2x8x8xf32>
    %151 = arith.subf %147, %150 : vector<2x8x8xf32>
    %152 = math.exp %151 : vector<2x8x8xf32>
    %cst_51 = arith.constant dense<0.000000e+00> : vector<2x8xf32>
    %153 = vector.multi_reduction <add>, %152, %cst_51 [2] : vector<2x8x8xf32> to vector<2x8xf32>
    %154 = vector.shape_cast %153 : vector<2x8xf32> to vector<2x8x1xf32>
    %155 = tpu.reciprocal %154 {approx = true} : vector<2x8x1xf32> -> vector<2x8x1xf32>
    %156 = vector.broadcast %155 : vector<2x8x1xf32> to vector<2x8x8xf32>
    %157 = arith.mulf %152, %156 : vector<2x8x8xf32>
    %158 = arith.truncf %157 : vector<2x8x8xf32> to vector<2x8x8xbf16>
    %159 = vector.extract_strided_slice %30 {offsets = [0, 0, 320], sizes = [2, 8, 64], strides = [1, 1, 1]} : vector<2x8x512xbf16> to vector<2x8x64xbf16>
    "tpu.trace_start"() <{level = 10 : i32, message = "bqk,bkd->bqd"}> : () -> ()
    %cst_52 = arith.constant dense<0.000000e+00> : vector<2x8x64xf32>
    %160 = tpu.matmul %158, %159, %cst_52 {dimension_numbers = #tpu.dot_dimension_numbers<[2], [1], [1], [2], [0, 0, 0, 1, 1, 2], [0], [0]>} : vector<2x8x8xbf16>, vector<2x8x64xbf16>, vector<2x8x64xf32> -> vector<2x8x64xf32>
    "tpu.trace_stop"() : () -> ()
    %161 = vector.shape_cast %160 : vector<2x8x64xf32> to vector<16x64xf32>
    %162 = arith.truncf %161 : vector<16x64xf32> to vector<16x64xbf16>
    %c0_53 = arith.constant 0 : index
    %c320 = arith.constant 320 : index
    %163 = vector.load %arg12[%c0_53, %c320] : memref<16x512xbf16, #tpu.memory_space<vmem>>, vector<16x64xbf16>
    tpu.vector_store %arg12[%c0_53, %c320], %162 {strides = array<i32>} : memref<16x512xbf16, #tpu.memory_space<vmem>>, vector<16x64xbf16>,
    %164 = vector.extract_strided_slice %26 {offsets = [0, 0, 384], sizes = [2, 8, 64], strides = [1, 1, 1]} : vector<2x8x512xbf16> to vector<2x8x64xbf16>
    %165 = vector.extract_strided_slice %28 {offsets = [0, 0, 384], sizes = [2, 8, 64], strides = [1, 1, 1]} : vector<2x8x512xbf16> to vector<2x8x64xbf16>
    "tpu.trace_start"() <{level = 10 : i32, message = "bqd,bkd->bqk"}> : () -> ()
    %cst_54 = arith.constant dense<0.000000e+00> : vector<2x8x8xf32>
    %166 = tpu.matmul %164, %165, %cst_54 {dimension_numbers = #tpu.dot_dimension_numbers<[2], [2], [1], [1], [0, 0, 0, 1, 1, 1], [0], [0]>} : vector<2x8x64xbf16>, vector<2x8x64xbf16>, vector<2x8x8xf32> -> vector<2x8x8xf32>
    "tpu.trace_stop"() : () -> ()
    %167 = vector.broadcast %37 : vector<2x1x8xf32> to vector<2x8x8xf32>
    %168 = arith.addf %166, %167 : vector<2x8x8xf32>
    %cst_55 = arith.constant dense<0xFF800000> : vector<2x8xf32>
    %169 = vector.multi_reduction <maximumf>, %168, %cst_55 [2] : vector<2x8x8xf32> to vector<2x8xf32>
    %170 = vector.shape_cast %169 : vector<2x8xf32> to vector<2x8x1xf32>
    %171 = vector.broadcast %170 : vector<2x8x1xf32> to vector<2x8x8xf32>
    %172 = arith.subf %168, %171 : vector<2x8x8xf32>
    %173 = math.exp %172 : vector<2x8x8xf32>
    %cst_56 = arith.constant dense<0.000000e+00> : vector<2x8xf32>
    %174 = vector.multi_reduction <add>, %173, %cst_56 [2] : vector<2x8x8xf32> to vector<2x8xf32>
    %175 = vector.shape_cast %174 : vector<2x8xf32> to vector<2x8x1xf32>
    %176 = tpu.reciprocal %175 {approx = true} : vector<2x8x1xf32> -> vector<2x8x1xf32>
    %177 = vector.broadcast %176 : vector<2x8x1xf32> to vector<2x8x8xf32>
    %178 = arith.mulf %173, %177 : vector<2x8x8xf32>
    %179 = arith.truncf %178 : vector<2x8x8xf32> to vector<2x8x8xbf16>
    %180 = vector.extract_strided_slice %30 {offsets = [0, 0, 384], sizes = [2, 8, 64], strides = [1, 1, 1]} : vector<2x8x512xbf16> to vector<2x8x64xbf16>
    "tpu.trace_start"() <{level = 10 : i32, message = "bqk,bkd->bqd"}> : () -> ()
    %cst_57 = arith.constant dense<0.000000e+00> : vector<2x8x64xf32>
    %181 = tpu.matmul %179, %180, %cst_57 {dimension_numbers = #tpu.dot_dimension_numbers<[2], [1], [1], [2], [0, 0, 0, 1, 1, 2], [0], [0]>} : vector<2x8x8xbf16>, vector<2x8x64xbf16>, vector<2x8x64xf32> -> vector<2x8x64xf32>
    "tpu.trace_stop"() : () -> ()
    %182 = vector.shape_cast %181 : vector<2x8x64xf32> to vector<16x64xf32>
    %183 = arith.truncf %182 : vector<16x64xf32> to vector<16x64xbf16>
    %c0_58 = arith.constant 0 : index
    %c384 = arith.constant 384 : index
    %184 = vector.load %arg12[%c0_58, %c384] : memref<16x512xbf16, #tpu.memory_space<vmem>>, vector<16x64xbf16>
    tpu.vector_store %arg12[%c0_58, %c384], %183 {strides = array<i32>} : memref<16x512xbf16, #tpu.memory_space<vmem>>, vector<16x64xbf16>,
    %185 = vector.extract_strided_slice %26 {offsets = [0, 0, 448], sizes = [2, 8, 64], strides = [1, 1, 1]} : vector<2x8x512xbf16> to vector<2x8x64xbf16>
    %186 = vector.extract_strided_slice %28 {offsets = [0, 0, 448], sizes = [2, 8, 64], strides = [1, 1, 1]} : vector<2x8x512xbf16> to vector<2x8x64xbf16>
    "tpu.trace_start"() <{level = 10 : i32, message = "bqd,bkd->bqk"}> : () -> ()
    %cst_59 = arith.constant dense<0.000000e+00> : vector<2x8x8xf32>
    %187 = tpu.matmul %185, %186, %cst_59 {dimension_numbers = #tpu.dot_dimension_numbers<[2], [2], [1], [1], [0, 0, 0, 1, 1, 1], [0], [0]>} : vector<2x8x64xbf16>, vector<2x8x64xbf16>, vector<2x8x8xf32> -> vector<2x8x8xf32>
    "tpu.trace_stop"() : () -> ()
    %188 = vector.broadcast %37 : vector<2x1x8xf32> to vector<2x8x8xf32>
    %189 = arith.addf %187, %188 : vector<2x8x8xf32>
    %cst_60 = arith.constant dense<0xFF800000> : vector<2x8xf32>
    %190 = vector.multi_reduction <maximumf>, %189, %cst_60 [2] : vector<2x8x8xf32> to vector<2x8xf32>
    %191 = vector.shape_cast %190 : vector<2x8xf32> to vector<2x8x1xf32>
    %192 = vector.broadcast %191 : vector<2x8x1xf32> to vector<2x8x8xf32>
    %193 = arith.subf %189, %192 : vector<2x8x8xf32>
    %194 = math.exp %193 : vector<2x8x8xf32>
    %cst_61 = arith.constant dense<0.000000e+00> : vector<2x8xf32>
    %195 = vector.multi_reduction <add>, %194, %cst_61 [2] : vector<2x8x8xf32> to vector<2x8xf32>
    %196 = vector.shape_cast %195 : vector<2x8xf32> to vector<2x8x1xf32>
    %197 = tpu.reciprocal %196 {approx = true} : vector<2x8x1xf32> -> vector<2x8x1xf32>
    %198 = vector.broadcast %197 : vector<2x8x1xf32> to vector<2x8x8xf32>
    %199 = arith.mulf %194, %198 : vector<2x8x8xf32>
    %200 = arith.truncf %199 : vector<2x8x8xf32> to vector<2x8x8xbf16>
    %201 = vector.extract_strided_slice %30 {offsets = [0, 0, 448], sizes = [2, 8, 64], strides = [1, 1, 1]} : vector<2x8x512xbf16> to vector<2x8x64xbf16>
    "tpu.trace_start"() <{level = 10 : i32, message = "bqk,bkd->bqd"}> : () -> ()
    %cst_62 = arith.constant dense<0.000000e+00> : vector<2x8x64xf32>
    %202 = tpu.matmul %200, %201, %cst_62 {dimension_numbers = #tpu.dot_dimension_numbers<[2], [1], [1], [2], [0, 0, 0, 1, 1, 2], [0], [0]>} : vector<2x8x8xbf16>, vector<2x8x64xbf16>, vector<2x8x64xf32> -> vector<2x8x64xf32>
    "tpu.trace_stop"() : () -> ()
    %203 = vector.shape_cast %202 : vector<2x8x64xf32> to vector<16x64xf32>
    %204 = arith.truncf %203 : vector<16x64xf32> to vector<16x64xbf16>
    %c0_63 = arith.constant 0 : index
    %c448 = arith.constant 448 : index
    %205 = vector.load %arg12[%c0_63, %c448] : memref<16x512xbf16, #tpu.memory_space<vmem>>, vector<16x64xbf16>
    tpu.vector_store %arg12[%c0_63, %c448], %204 {strides = array<i32>} : memref<16x512xbf16, #tpu.memory_space<vmem>>, vector<16x64xbf16>,
    %c0_64 = arith.constant 0 : index
    %c0_65 = arith.constant 0 : index
    %206 = vector.load %arg12[%c0_64, %c0_65] : memref<16x512xbf16, #tpu.memory_space<vmem>>, vector<16x512xbf16>
    %c0_66 = arith.constant 0 : index
    %c0_67 = arith.constant 0 : index
    %207 = vector.load %arg9[%c0_66, %c0_67] : memref<512x512xbf16, #tpu.memory_space<vmem>>, vector<512x512xbf16>
    %cst_68 = arith.constant dense<0.000000e+00> : vector<16x512xf32>
    %208 = tpu.matmul %206, %207, %cst_68 {dimension_numbers = #tpu.dot_dimension_numbers<[1], [0], [0], [1], [0, 0, 1, 1], [], []>} : vector<16x512xbf16>, vector<512x512xbf16>, vector<16x512xf32> -> vector<16x512xf32>
    %c0_69 = arith.constant 0 : index
    %c0_70 = arith.constant 0 : index
    %209 = vector.load %arg10[%c0_69, %c0_70] : memref<1x512xf32, #tpu.memory_space<vmem>>, vector<1x512xf32>
    %210 = vector.broadcast %209 : vector<1x512xf32> to vector<16x512xf32>
    %211 = arith.addf %208, %210 : vector<16x512xf32>
    %212 = vector.shape_cast %211 : vector<16x512xf32> to vector<2x8x512xf32>
    %c0_71 = arith.constant 0 : index
    %c0_72 = arith.constant 0 : index
    %c0_73 = arith.constant 0 : index
    %213 = vector.load %arg11[%c0_71, %c0_72, %c0_73] : memref<2x8x512xf32, #tpu.memory_space<vmem>>, vector<2x8x512xf32>
    tpu.vector_store %arg11[%c0_71, %c0_72, %c0_73], %212 {strides = array<i32>} : memref<2x8x512xf32, #tpu.memory_space<vmem>>, vector<2x8x512xf32>,
    return
  }
  func.func @transform_0(%arg0: i32) -> (i32, i32, i32) {
    %c0_i32 = arith.constant 0 : i32
    %c0_i32_0 = arith.constant 0 : i32
    %c0_i32_1 = arith.constant 0 : i32
    return %arg0, %c0_i32, %c0_i32_0 : i32, i32, i32
  }
  func.func @transform_1(%arg0: i32) -> (i32, i32, i32) {
    %c0_i32 = arith.constant 0 : i32
    %c0_i32_0 = arith.constant 0 : i32
    %c0_i32_1 = arith.constant 0 : i32
    return %arg0, %c0_i32, %c0_i32_0 : i32, i32, i32
  }
  func.func @transform_2(%arg0: i32) -> (i32, i32) {
    %c0_i32 = arith.constant 0 : i32
    %c0_i32_0 = arith.constant 0 : i32
    %c0_i32_1 = arith.constant 0 : i32
    return %c0_i32, %c0_i32_0 : i32, i32
  }
  func.func @transform_3(%arg0: i32) -> (i32, i32) {
    %c0_i32 = arith.constant 0 : i32
    %c0_i32_0 = arith.constant 0 : i32
    %c0_i32_1 = arith.constant 0 : i32
    return %c0_i32, %c0_i32_0 : i32, i32
  }
  func.func @transform_4(%arg0: i32) -> (i32, i32) {
    %c0_i32 = arith.constant 0 : i32
    %c0_i32_0 = arith.constant 0 : i32
    %c0_i32_1 = arith.constant 0 : i32
    return %c0_i32, %c0_i32_0 : i32, i32
  }
  func.func @transform_5(%arg0: i32) -> (i32, i32) {
    %c0_i32 = arith.constant 0 : i32
    %c0_i32_0 = arith.constant 0 : i32
    %c0_i32_1 = arith.constant 0 : i32
    return %c0_i32, %c0_i32_0 : i32, i32
  }
  func.func @transform_6(%arg0: i32) -> (i32, i32) {
    %c0_i32 = arith.constant 0 : i32
    %c0_i32_0 = arith.constant 0 : i32
    %c0_i32_1 = arith.constant 0 : i32
    return %c0_i32, %c0_i32_0 : i32, i32
  }
  func.func @transform_7(%arg0: i32) -> (i32, i32) {
    %c0_i32 = arith.constant 0 : i32
    %c0_i32_0 = arith.constant 0 : i32
    %c0_i32_1 = arith.constant 0 : i32
    return %c0_i32, %c0_i32_0 : i32, i32
  }
  func.func @transform_8(%arg0: i32) -> (i32, i32) {
    %c0_i32 = arith.constant 0 : i32
    %c0_i32_0 = arith.constant 0 : i32
    %c0_i32_1 = arith.constant 0 : i32
    return %c0_i32, %c0_i32_0 : i32, i32
  }
  func.func @transform_9(%arg0: i32) -> (i32, i32) {
    %c0_i32 = arith.constant 0 : i32
    %c0_i32_0 = arith.constant 0 : i32
    %c0_i32_1 = arith.constant 0 : i32
    return %c0_i32, %c0_i32_0 : i32, i32
  }
  func.func @transform_10(%arg0: i32) -> (i32, i32, i32) {
    %c0_i32 = arith.constant 0 : i32
    %c0_i32_0 = arith.constant 0 : i32
    %c0_i32_1 = arith.constant 0 : i32
    return %arg0, %c0_i32, %c0_i32_0 : i32, i32, i32
  }
}

</mosaic_0001>

<llo_original>
// kernel: spatial_edge_self_attn.1
$region0: #{spatial_edge_self_attn.1}
  #allocation0 [shape = 'u32[]', space=smem, size = 0x4, offset = 0x4, fixed_abs, tag = 'smem constant byte address 0x4 - core index']
  #allocation1 [shape = 'u32[144,128]{1,0:T(1,128)}', space=vmem, size = 0x12000, scoped, tag = 'internal scratch']
  #allocation2 [shape = 'bf16[16,512]{1,0:T(8,128)(2,1)}', space=vmem, size = 0x4000, scoped, tag = 'scratch operand']
  %s0 = inlined_call_operand.hbm [shape: f32[4,8,12], index: 0, kind: input, shape index: {}]
  %s1 = inlined_call_operand.vmem [shape: s32[4,1,1], index: 1, kind: input, shape index: {}]
  %s2 = inlined_call_operand.hbm [shape: bf16[12,128], index: 2, kind: input, shape index: {}]
  %s3 = inlined_call_operand.hbm [shape: f32[1,128], index: 3, kind: input, shape index: {}]
  %s4 = inlined_call_operand.hbm [shape: bf16[128,512], index: 4, kind: input, shape index: {}]
  %s5 = inlined_call_operand.hbm [shape: f32[1,512], index: 5, kind: input, shape index: {}]
  %s6 = inlined_call_operand.hbm [shape: bf16[512,1536], index: 6, kind: input, shape index: {}]
  %s7 = inlined_call_operand.hbm [shape: f32[1,1536], index: 7, kind: input, shape index: {}]
  %s8 = inlined_call_operand.hbm [shape: bf16[512,512], index: 8, kind: input, shape index: {}]
  %s9 = inlined_call_operand.hbm [shape: f32[1,512], index: 9, kind: input, shape index: {}]
  %s10 = inlined_call_operand.hbm [shape: f32[4,8,512], index: 10, kind: output, shape index: {}]
  %s11 = sld [smem:[#allocation0]]
  $region109: #{spatial_edge_self_attn.1} parent=0
    _
  %s13 = ssub.s32 1, %s11
  %s14 = scalar_select 0, %s13, %s11
  $region1: #{spatial_edge_self_attn.1} parent=0
    #allocation3 [shape = 'u8[16384]{0}', space=vmem, size = 0x4000, scoped, tag = 'input window, operand 0']
    #allocation4 [shape = 's32[2]{0}', space=sflag, size = 0x8, scoped, tag = 'scoped memory for spatial_edge_self_attn.1']
    #allocation5 [shape = 's32[2]{0}', space=sflag, size = 0x8, scoped, tag = 'scoped memory for spatial_edge_self_attn.1']
    #allocation6 [shape = 'u8[4096]{0}', space=vmem, size = 0x1000, scoped, tag = 'input window, operand 2, single buffered']
    #allocation7 [shape = 's32[1]{0}', space=sflag, size = 0x4, scoped, tag = 'scoped memory for spatial_edge_self_attn.1']
    #allocation8 [shape = 'u8[512]{0}', space=vmem, size = 0x400, scoped, tag = 'input window, operand 3, single buffered']
    #allocation9 [shape = 'u8[131072]{0}', space=vmem, size = 0x20000, scoped, tag = 'input window, operand 4, single buffered']
    #allocation10 [shape = 's32[1]{0}', space=sflag, size = 0x4, scoped, tag = 'scoped memory for spatial_edge_self_attn.1']
    #allocation11 [shape = 'u8[2048]{0}', space=vmem, size = 0x800, scoped, tag = 'input window, operand 5, single buffered']
    #allocation12 [shape = 'u8[1572864]{0}', space=vmem, size = 0x180000, scoped, tag = 'input window, operand 6, single buffered']
    #allocation13 [shape = 's32[1]{0}', space=sflag, size = 0x4, scoped, tag = 'scoped memory for spatial_edge_self_attn.1']
    #allocation14 [shape = 'u8[6144]{0}', space=vmem, size = 0x1800, scoped, tag = 'input window, operand 7, single buffered']
    #allocation15 [shape = 'u8[524288]{0}', space=vmem, size = 0x80000, scoped, tag = 'input window, operand 8, single buffered']
    #allocation16 [shape = 's32[1]{0}', space=sflag, size = 0x4, scoped, tag = 'scoped memory for spatial_edge_self_attn.1']
    #allocation17 [shape = 'u8[2048]{0}', space=vmem, size = 0x800, scoped, tag = 'input window, operand 9, single buffered']
    #allocation18 [shape = 'u8[65536]{0}', space=vmem, size = 0x10000, scoped, tag = 'output window, operand 0']
    %15 = vsyncpa [#allocation4], 0
    %s16 = scalar_lea.sflag [#allocation4], 1
    %17 = vsyncpa %s16, 0
    %18 = vsyncpa [#allocation7], 0
    %19 = vsyncpa [#allocation10], 0
    %20 = vsyncpa [#allocation13], 0
    %21 = vsyncpa [#allocation16], 0
    %22 = vsyncpa [#allocation5], 0
    %s23 = scalar_lea.sflag [#allocation5], 1
    %24 = vsyncpa %s23, 0
    loop: start=0, step=1, limit=4
    $region2: #{spatial_edge_self_attn.1} parent=1 // loop_pre_header
      _
    $region3: #{spatial_edge_self_attn.1} parent=1 // loop_header
      %s26 = sphi 0, %s30
      %p27 = scmp.ge.s32.totalorder %s26, 4
      %s36 = sphi 0, %s38
      %s39 = sphi 0, %s36
      %s40 = sphi 0, %s39
      %s56 = sphi 0, %s40
      %s62 = sphi 0, %s64
      %s65 = sphi 0, %s62
      %s66 = sphi 0, %s65
      %s82 = sphi 0, %s66
      %s86 = sphi 0, %s86
      %s88 = sphi 0, %s86
      %s89 = sphi 0, %s88
      %s103 = sphi 0, %s89
      %s107 = sphi 0, %s107
      %s109 = sphi 0, %s107
      %s110 = sphi 0, %s109
      %s124 = sphi 0, %s110
      %s128 = sphi 0, %s128
      %s130 = sphi 0, %s128
      %s131 = sphi 0, %s130
      %s145 = sphi 0, %s131
      %s149 = sphi 0, %s149
      %s151 = sphi 0, %s149
      %s152 = sphi 0, %s151
      %s166 = sphi 0, %s152
      %s170 = sphi 0, %s170
      %s172 = sphi 0, %s170
      %s173 = sphi 0, %s172
      %s187 = sphi 0, %s173
      %s191 = sphi 0, %s191
      %s193 = sphi 0, %s191
      %s194 = sphi 0, %s193
      %s208 = sphi 0, %s194
      %s212 = sphi 0, %s212
      %s214 = sphi 0, %s212
      %s215 = sphi 0, %s214
      %s229 = sphi 0, %s215
      %s233 = sphi 0, %s233
      %s235 = sphi 0, %s233
      %s236 = sphi 0, %s235
      %s250 = sphi 0, %s236
      %s256 = sphi 0, %s258
      %s259 = sphi 0, %s256
      %s260 = sphi 0, %s259
      %s276 = sphi 0, %s260
    $region4: #{spatial_edge_self_attn.1} parent=1 // loop_header_branch
      %29 = sbr.rel (%p27) target = $region8
    $region5: #{spatial_edge_self_attn.1} parent=1 // loop_body
      %s31 = ssub.s32 %s26, 1
      %s32 = ssub.s32 %s26, 2
      %s33 = sadd.s32 %s26, 1
      %s34 = ssub.s32 %s26, %s33
      %p35 = scmp.eq.s32.totalorder %s34, 0
      %s37 = sadd.s32 %s36, 1
      %s38 = scalar_select %p35, %s36, %s37
      %p41 = pneg %p35
      %p42 = scmp.eq.s32.totalorder %s26, 1
      %p43 = por %p41, %p42
      %p44 = scmp.ne.s32.totalorder %s36, %s39
      %p45 = scmp.eq.s32.totalorder %s26, 0
      %p46 = por %p44, %p45
      %p47 = scmp.ne.s32.totalorder %s36, %s39
      %p48 = scmp.eq.s32.totalorder %s31, 1
      %p49 = por %p47, %p48
      %p50 = scmp.ne.s32.totalorder %s39, %s40
      %p51 = scmp.eq.s32.totalorder %s31, 0
      %p52 = por %p50, %p51
      %p53 = scmp.ne.s32.totalorder %s39, %s40
      %p54 = scmp.eq.s32.totalorder %s32, 1
      %p55 = por %p53, %p54
      %p57 = scmp.ne.s32.totalorder %s40, %s56
      %p58 = scmp.eq.s32.totalorder %s32, 0
      %p59 = por %p57, %p58
      %s60 = ssub.s32 %s26, %s33
      %p61 = scmp.eq.s32.totalorder %s60, 0
      %s63 = sadd.s32 %s62, 1
      %s64 = scalar_select %p61, %s62, %s63
      %p67 = pneg %p61
      %p68 = scmp.eq.s32.totalorder %s26, 1
      %p69 = por %p67, %p68
      %p70 = scmp.ne.s32.totalorder %s62, %s65
      %p71 = scmp.eq.s32.totalorder %s26, 0
      %p72 = por %p70, %p71
      %p73 = scmp.ne.s32.totalorder %s62, %s65
      %p74 = scmp.eq.s32.totalorder %s31, 1
      %p75 = por %p73, %p74
      %p76 = scmp.ne.s32.totalorder %s65, %s66
      %p77 = scmp.eq.s32.totalorder %s31, 0
      %p78 = por %p76, %p77
      %p79 = scmp.ne.s32.totalorder %s65, %s66
      %p80 = scmp.eq.s32.totalorder %s32, 1
      %p81 = por %p79, %p80
      %p83 = scmp.ne.s32.totalorder %s66, %s82
      %p84 = scmp.eq.s32.totalorder %s32, 0
      %p85 = por %p83, %p84
      %s87 = sadd.s32 %s86, 1
      %p90 = scmp.eq.s32.totalorder %s26, 1
      %p91 = scmp.ne.s32.totalorder %s86, %s88
      %p92 = scmp.eq.s32.totalorder %s26, 0
      %p93 = por %p91, %p92
      %p94 = scmp.ne.s32.totalorder %s86, %s88
      %p95 = scmp.eq.s32.totalorder %s31, 1
      %p96 = por %p94, %p95
      %p97 = scmp.ne.s32.totalorder %s88, %s89
      %p98 = scmp.eq.s32.totalorder %s31, 0
      %p99 = por %p97, %p98
      %p100 = scmp.ne.s32.totalorder %s88, %s89
      %p101 = scmp.eq.s32.totalorder %s32, 1
      %p102 = por %p100, %p101
      %p104 = scmp.ne.s32.totalorder %s89, %s103
      %p105 = scmp.eq.s32.totalorder %s32, 0
      %p106 = por %p104, %p105
      %s108 = sadd.s32 %s107, 1
      %p111 = scmp.eq.s32.totalorder %s26, 1
      %p112 = scmp.ne.s32.totalorder %s107, %s109
      %p113 = scmp.eq.s32.totalorder %s26, 0
      %p114 = por %p112, %p113
      %p115 = scmp.ne.s32.totalorder %s107, %s109
      %p116 = scmp.eq.s32.totalorder %s31, 1
      %p117 = por %p115, %p116
      %p118 = scmp.ne.s32.totalorder %s109, %s110
      %p119 = scmp.eq.s32.totalorder %s31, 0
      %p120 = por %p118, %p119
      %p121 = scmp.ne.s32.totalorder %s109, %s110
      %p122 = scmp.eq.s32.totalorder %s32, 1
      %p123 = por %p121, %p122
      %p125 = scmp.ne.s32.totalorder %s110, %s124
      %p126 = scmp.eq.s32.totalorder %s32, 0
      %p127 = por %p125, %p126
      %s129 = sadd.s32 %s128, 1
      %p132 = scmp.eq.s32.totalorder %s26, 1
      %p133 = scmp.ne.s32.totalorder %s128, %s130
      %p134 = scmp.eq.s32.totalorder %s26, 0
      %p135 = por %p133, %p134
      %p136 = scmp.ne.s32.totalorder %s128, %s130
      %p137 = scmp.eq.s32.totalorder %s31, 1
      %p138 = por %p136, %p137
      %p139 = scmp.ne.s32.totalorder %s130, %s131
      %p140 = scmp.eq.s32.totalorder %s31, 0
      %p141 = por %p139, %p140
      %p142 = scmp.ne.s32.totalorder %s130, %s131
      %p143 = scmp.eq.s32.totalorder %s32, 1
      %p144 = por %p142, %p143
      %p146 = scmp.ne.s32.totalorder %s131, %s145
      %p147 = scmp.eq.s32.totalorder %s32, 0
      %p148 = por %p146, %p147
      %s150 = sadd.s32 %s149, 1
      %p153 = scmp.eq.s32.totalorder %s26, 1
      %p154 = scmp.ne.s32.totalorder %s149, %s151
      %p155 = scmp.eq.s32.totalorder %s26, 0
      %p156 = por %p154, %p155
      %p157 = scmp.ne.s32.totalorder %s149, %s151
      %p158 = scmp.eq.s32.totalorder %s31, 1
      %p159 = por %p157, %p158
      %p160 = scmp.ne.s32.totalorder %s151, %s152
      %p161 = scmp.eq.s32.totalorder %s31, 0
      %p162 = por %p160, %p161
      %p163 = scmp.ne.s32.totalorder %s151, %s152
      %p164 = scmp.eq.s32.totalorder %s32, 1
      %p165 = por %p163, %p164
      %p167 = scmp.ne.s32.totalorder %s152, %s166
      %p168 = scmp.eq.s32.totalorder %s32, 0
      %p169 = por %p167, %p168
      %s171 = sadd.s32 %s170, 1
      %p174 = scmp.eq.s32.totalorder %s26, 1
      %p175 = scmp.ne.s32.totalorder %s170, %s172
      %p176 = scmp.eq.s32.totalorder %s26, 0
      %p177 = por %p175, %p176
      %p178 = scmp.ne.s32.totalorder %s170, %s172
      %p179 = scmp.eq.s32.totalorder %s31, 1
      %p180 = por %p178, %p179
      %p181 = scmp.ne.s32.totalorder %s172, %s173
      %p182 = scmp.eq.s32.totalorder %s31, 0
      %p183 = por %p181, %p182
      %p184 = scmp.ne.s32.totalorder %s172, %s173
      %p185 = scmp.eq.s32.totalorder %s32, 1
      %p186 = por %p184, %p185
      %p188 = scmp.ne.s32.totalorder %s173, %s187
      %p189 = scmp.eq.s32.totalorder %s32, 0
      %p190 = por %p188, %p189
      %s192 = sadd.s32 %s191, 1
      %p195 = scmp.eq.s32.totalorder %s26, 1
      %p196 = scmp.ne.s32.totalorder %s191, %s193
      %p197 = scmp.eq.s32.totalorder %s26, 0
      %p198 = por %p196, %p197
      %p199 = scmp.ne.s32.totalorder %s191, %s193
      %p200 = scmp.eq.s32.totalorder %s31, 1
      %p201 = por %p199, %p200
      %p202 = scmp.ne.s32.totalorder %s193, %s194
      %p203 = scmp.eq.s32.totalorder %s31, 0
      %p204 = por %p202, %p203
      %p205 = scmp.ne.s32.totalorder %s193, %s194
      %p206 = scmp.eq.s32.totalorder %s32, 1
      %p207 = por %p205, %p206
      %p209 = scmp.ne.s32.totalorder %s194, %s208
      %p210 = scmp.eq.s32.totalorder %s32, 0
      %p211 = por %p209, %p210
      %s213 = sadd.s32 %s212, 1
      %p216 = scmp.eq.s32.totalorder %s26, 1
      %p217 = scmp.ne.s32.totalorder %s212, %s214
      %p218 = scmp.eq.s32.totalorder %s26, 0
      %p219 = por %p217, %p218
      %p220 = scmp.ne.s32.totalorder %s212, %s214
      %p221 = scmp.eq.s32.totalorder %s31, 1
      %p222 = por %p220, %p221
      %p223 = scmp.ne.s32.totalorder %s214, %s215
      %p224 = scmp.eq.s32.totalorder %s31, 0
      %p225 = por %p223, %p224
      %p226 = scmp.ne.s32.totalorder %s214, %s215
      %p227 = scmp.eq.s32.totalorder %s32, 1
      %p228 = por %p226, %p227
      %p230 = scmp.ne.s32.totalorder %s215, %s229
      %p231 = scmp.eq.s32.totalorder %s32, 0
      %p232 = por %p230, %p231
      %s234 = sadd.s32 %s233, 1
      %p237 = scmp.eq.s32.totalorder %s26, 1
      %p238 = scmp.ne.s32.totalorder %s233, %s235
      %p239 = scmp.eq.s32.totalorder %s26, 0
      %p240 = por %p238, %p239
      %p241 = scmp.ne.s32.totalorder %s233, %s235
      %p242 = scmp.eq.s32.totalorder %s31, 1
      %p243 = por %p241, %p242
      %p244 = scmp.ne.s32.totalorder %s235, %s236
      %p245 = scmp.eq.s32.totalorder %s31, 0
      %p246 = por %p244, %p245
      %p247 = scmp.ne.s32.totalorder %s235, %s236
      %p248 = scmp.eq.s32.totalorder %s32, 1
      %p249 = por %p247, %p248
      %p251 = scmp.ne.s32.totalorder %s236, %s250
      %p252 = scmp.eq.s32.totalorder %s32, 0
      %p253 = por %p251, %p252
      %s254 = ssub.s32 %s26, %s33
      %p255 = scmp.eq.s32.totalorder %s254, 0
      %s257 = sadd.s32 %s256, 1
      %s258 = scalar_select %p255, %s256, %s257
      %p261 = pneg %p255
      %p262 = scmp.eq.s32.totalorder %s26, 1
      %p263 = por %p261, %p262
      %p264 = scmp.ne.s32.totalorder %s256, %s259
      %p265 = scmp.eq.s32.totalorder %s26, 0
      %p266 = por %p264, %p265
      %p267 = scmp.ne.s32.totalorder %s256, %s259
      %p268 = scmp.eq.s32.totalorder %s31, 1
      %p269 = por %p267, %p268
      %p270 = scmp.ne.s32.totalorder %s259, %s260
      %p271 = scmp.eq.s32.totalorder %s31, 0
      %p272 = por %p270, %p271
      %p273 = scmp.ne.s32.totalorder %s259, %s260
      %p274 = scmp.eq.s32.totalorder %s32, 1
      %p275 = por %p273, %p274
      %p277 = scmp.ne.s32.totalorder %s260, %s276
      %p278 = scmp.eq.s32.totalorder %s32, 0
      %p279 = por %p277, %p278
      %p280 = scmp.le.s32.totalorder 1, %s26
      %p281 = scmp.lt.s32.totalorder %s26, 3
      %p282 = pnand %p280, %p281
      %p283 = pneg %p282
      // Predicated region
      $region9: #{spatial_edge_self_attn.1} parent=5 // pred_check
        _
      $region10: #{spatial_edge_self_attn.1} parent=5 // pred_check_branch
        %285 = sbr.rel (%p282) target = $region12
      $region11: #{spatial_edge_self_attn.1} parent=5 // pred_region
        %s286 = ssub.s32 %s26, 1
        // Predicated region
        $region13: #{spatial_edge_self_attn.1} parent=11 // pred_check
          %p287 = pneg %p99
        $region14: #{spatial_edge_self_attn.1} parent=11 // pred_check_branch
          %289 = sbr.rel (%p287) target = $region16
        $region15: #{spatial_edge_self_attn.1} parent=11 // pred_region
          %s291 = ssub.s32 128, 128
          %292 = vsyncadd [#allocation7], %s291
          %s293 = sshll.u32 [#allocation6], 4
          %s294 = int_to_ptr.vmem [resolvable:$true] %s293
          %299 = dma.hbm_to_vmem [thread:$0]  %s2, 128, %s294, [#allocation7], 64, 64, 4
        $region16: #{spatial_edge_self_attn.1} parent=11 // pred_fallthru
          _
        // Predicated region
        $region17: #{spatial_edge_self_attn.1} parent=11 // pred_check
          %p300 = pneg %p120
        $region18: #{spatial_edge_self_attn.1} parent=11 // pred_check_branch
          %302 = sbr.rel (%p300) target = $region20
        $region19: #{spatial_edge_self_attn.1} parent=11 // pred_region
          %s304 = ssub.s32 16, 16
          %305 = vsyncadd [#allocation7], %s304
          %s307 = sshll.u32 [#allocation8], 4
          %s308 = int_to_ptr.vmem [resolvable:$true] %s307
          %310 = dma.hbm_to_vmem [thread:$0]  %s3, 16, %s308, [#allocation7]
        $region20: #{spatial_edge_self_attn.1} parent=11 // pred_fallthru
          _
        // Predicated region
        $region21: #{spatial_edge_self_attn.1} parent=11 // pred_check
          %p311 = pneg %p141
        $region22: #{spatial_edge_self_attn.1} parent=11 // pred_check_branch
          %313 = sbr.rel (%p311) target = $region24
        $region23: #{spatial_edge_self_attn.1} parent=11 // pred_region
          %s315 = ssub.s32 4096, 4096
          %316 = vsyncadd [#allocation10], %s315
          %s317 = sshll.u32 [#allocation9], 4
          %s318 = int_to_ptr.vmem [resolvable:$true] %s317
          %323 = dma.hbm_to_vmem [thread:$0]  %s4, 4096, %s318, [#allocation10], 256, 256, 16
        $region24: #{spatial_edge_self_attn.1} parent=11 // pred_fallthru
          _
        // Predicated region
        $region25: #{spatial_edge_self_attn.1} parent=11 // pred_check
          %p324 = pneg %p162
        $region26: #{spatial_edge_self_attn.1} parent=11 // pred_check_branch
          %326 = sbr.rel (%p324) target = $region28
        $region27: #{spatial_edge_self_attn.1} parent=11 // pred_region
          %s328 = ssub.s32 64, 64
          %329 = vsyncadd [#allocation10], %s328
          %s331 = sshll.u32 [#allocation11], 4
          %s332 = int_to_ptr.vmem [resolvable:$true] %s331
          %334 = dma.hbm_to_vmem [thread:$0]  %s5, 64, %s332, [#allocation10]
        $region28: #{spatial_edge_self_attn.1} parent=11 // pred_fallthru
          _
        // Predicated region
        $region29: #{spatial_edge_self_attn.1} parent=11 // pred_check
          %p335 = pneg %p183
        $region30: #{spatial_edge_self_attn.1} parent=11 // pred_check_branch
          %337 = sbr.rel (%p335) target = $region32
        $region31: #{spatial_edge_self_attn.1} parent=11 // pred_region
          %s339 = ssub.s32 49152, 49152
          %340 = vsyncadd [#allocation13], %s339
          %s341 = sshll.u32 [#allocation12], 4
          %s342 = int_to_ptr.vmem [resolvable:$true] %s341
          %347 = dma.hbm_to_vmem [thread:$0]  %s6, 49152, %s342, [#allocation13], 768, 768, 48
        $region32: #{spatial_edge_self_attn.1} parent=11 // pred_fallthru
          _
        // Predicated region
        $region33: #{spatial_edge_self_attn.1} parent=11 // pred_check
          %p348 = pneg %p204
        $region34: #{spatial_edge_self_attn.1} parent=11 // pred_check_branch
          %350 = sbr.rel (%p348) target = $region36
        $region35: #{spatial_edge_self_attn.1} parent=11 // pred_region
          %s352 = ssub.s32 192, 192
          %353 = vsyncadd [#allocation13], %s352
          %s355 = sshll.u32 [#allocation14], 4
          %s356 = int_to_ptr.vmem [resolvable:$true] %s355
          %358 = dma.hbm_to_vmem [thread:$0]  %s7, 192, %s356, [#allocation13]
        $region36: #{spatial_edge_self_attn.1} parent=11 // pred_fallthru
          _
        // Predicated region
        $region37: #{spatial_edge_self_attn.1} parent=11 // pred_check
          %p359 = pneg %p225
        $region38: #{spatial_edge_self_attn.1} parent=11 // pred_check_branch
          %361 = sbr.rel (%p359) target = $region40
        $region39: #{spatial_edge_self_attn.1} parent=11 // pred_region
          %s363 = ssub.s32 16384, 16384
          %364 = vsyncadd [#allocation16], %s363
          %s365 = sshll.u32 [#allocation15], 4
          %s366 = int_to_ptr.vmem [resolvable:$true] %s365
          %371 = dma.hbm_to_vmem [thread:$0]  %s8, 16384, %s366, [#allocation16], 256, 256, 16
        $region40: #{spatial_edge_self_attn.1} parent=11 // pred_fallthru
          _
        // Predicated region
        $region41: #{spatial_edge_self_attn.1} parent=11 // pred_check
          %p372 = pneg %p246
        $region42: #{spatial_edge_self_attn.1} parent=11 // pred_check_branch
          %374 = sbr.rel (%p372) target = $region44
        $region43: #{spatial_edge_self_attn.1} parent=11 // pred_region
          %s376 = ssub.s32 64, 64
          %377 = vsyncadd [#allocation16], %s376
          %s379 = sshll.u32 [#allocation17], 4
          %s380 = int_to_ptr.vmem [resolvable:$true] %s379
          %382 = dma.hbm_to_vmem [thread:$0]  %s9, 64, %s380, [#allocation16]
        $region44: #{spatial_edge_self_attn.1} parent=11 // pred_fallthru
          _
      $region12: #{spatial_edge_self_attn.1} parent=5 // pred_fallthru
        _
      %p383 = scmp.lt.s32.totalorder %s26, 2
      // Predicated region
      $region45: #{spatial_edge_self_attn.1} parent=5 // pred_check
        %p384 = pneg %p383
      $region46: #{spatial_edge_self_attn.1} parent=5 // pred_check_branch
        %386 = sbr.rel (%p384) target = $region48
      $region47: #{spatial_edge_self_attn.1} parent=5 // pred_region
        // Predicated region
        $region49: #{spatial_edge_self_attn.1} parent=47 // pred_check
          %p387 = pneg %p46
        $region50: #{spatial_edge_self_attn.1} parent=47 // pred_check_branch
          %389 = sbr.rel (%p387) target = $region52
        $region51: #{spatial_edge_self_attn.1} parent=47 // pred_region
          %s390 = sand.u32 %s36, 1
          %s391 = scalar_lea.sflag [#allocation4], %s390
          %s392 = sand.u32 %s36, 1
          %s393 = smul.addr %s392, 16
          %s394 = scalar_lea.vmem [#allocation3], %s393
          %s395 = smul.u32 2, %s26
          %s397 = ssub.s32 256, 256
          %398 = vsyncadd %s391, %s397
          %s399 = smul.addr %s395, 128
          %s400 = scalar_lea.hbm %s0, %s399
          %s401 = sshll.u32 %s394, 4
          %s402 = int_to_ptr.vmem [resolvable:$true] %s401
          %407 = dma.hbm_to_vmem [thread:$0]  %s400, 256, %s402, %s391, 128, 128, 8
        $region52: #{spatial_edge_self_attn.1} parent=47 // pred_fallthru
          _
        // Predicated region
        $region53: #{spatial_edge_self_attn.1} parent=47 // pred_check
          %p408 = pneg %p72
        $region54: #{spatial_edge_self_attn.1} parent=47 // pred_check_branch
          %410 = sbr.rel (%p408) target = $region56
        $region55: #{spatial_edge_self_attn.1} parent=47 // pred_region
          %s411 = smul.u32 2, %s26
          %p412 = scmp.lt.s32.totalorder %s411, 3
          %s413 = scalar_select %p412, %s411, 3
          %s414 = scalar_lea.vmem %s1, %s413
          %s415 = smul.u32 2, %s26
        $region56: #{spatial_edge_self_attn.1} parent=47 // pred_fallthru
          _
      $region48: #{spatial_edge_self_attn.1} parent=5 // pred_fallthru
        _
      %p416 = scmp.le.s32.totalorder 1, %s26
      %p417 = scmp.lt.s32.totalorder %s26, 3
      %p418 = pnand %p416, %p417
      %p419 = pneg %p418
      // Predicated region
      $region57: #{spatial_edge_self_attn.1} parent=5 // pred_check
        _
      $region58: #{spatial_edge_self_attn.1} parent=5 // pred_check_branch
        %421 = sbr.rel (%p418) target = $region60
      $region59: #{spatial_edge_self_attn.1} parent=5 // pred_region
        %s422 = ssub.s32 %s26, 1
        %s423 = sand.u32 %s39, 1
        %s424 = scalar_lea.sflag [#allocation4], %s423
        %s425 = sand.u32 %s39, 1
        %s426 = smul.addr %s425, 16
        %s427 = scalar_lea.vmem [#allocation3], %s426
        // Predicated region
        $region61: #{spatial_edge_self_attn.1} parent=59 // pred_check
          %p428 = pneg %p52
        $region62: #{spatial_edge_self_attn.1} parent=59 // pred_check_branch
          %430 = sbr.rel (%p428) target = $region64
        $region63: #{spatial_edge_self_attn.1} parent=59 // pred_region
          %431 = dma.done %s424, 256
        $region64: #{spatial_edge_self_attn.1} parent=59 // pred_fallthru
          _
        // Predicated region
        $region65: #{spatial_edge_self_attn.1} parent=59 // pred_check
          %p432 = pneg %p99
        $region66: #{spatial_edge_self_attn.1} parent=59 // pred_check_branch
          %434 = sbr.rel (%p432) target = $region68
        $region67: #{spatial_edge_self_attn.1} parent=59 // pred_region
          %435 = dma.done [#allocation7], 128
        $region68: #{spatial_edge_self_attn.1} parent=59 // pred_fallthru
          _
        // Predicated region
        $region69: #{spatial_edge_self_attn.1} parent=59 // pred_check
          %p436 = pneg %p120
        $region70: #{spatial_edge_self_attn.1} parent=59 // pred_check_branch
          %438 = sbr.rel (%p436) target = $region72
        $region71: #{spatial_edge_self_attn.1} parent=59 // pred_region
          %439 = dma.done [#allocation7], 16
        $region72: #{spatial_edge_self_attn.1} parent=59 // pred_fallthru
          _
        // Predicated region
        $region73: #{spatial_edge_self_attn.1} parent=59 // pred_check
          %p440 = pneg %p141
        $region74: #{spatial_edge_self_attn.1} parent=59 // pred_check_branch
          %442 = sbr.rel (%p440) target = $region76
        $region75: #{spatial_edge_self_attn.1} parent=59 // pred_region
          %443 = dma.done [#allocation10], 4096
        $region76: #{spatial_edge_self_attn.1} parent=59 // pred_fallthru
          _
        // Predicated region
        $region77: #{spatial_edge_self_attn.1} parent=59 // pred_check
          %p444 = pneg %p162
        $region78: #{spatial_edge_self_attn.1} parent=59 // pred_check_branch
          %446 = sbr.rel (%p444) target = $region80
        $region79: #{spatial_edge_self_attn.1} parent=59 // pred_region
          %447 = dma.done [#allocation10], 64
        $region80: #{spatial_edge_self_attn.1} parent=59 // pred_fallthru
          _
        // Predicated region
        $region81: #{spatial_edge_self_attn.1} parent=59 // pred_check
          %p448 = pneg %p183
        $region82: #{spatial_edge_self_attn.1} parent=59 // pred_check_branch
          %450 = sbr.rel (%p448) target = $region84
        $region83: #{spatial_edge_self_attn.1} parent=59 // pred_region
          %451 = dma.done [#allocation13], 49152
        $region84: #{spatial_edge_self_attn.1} parent=59 // pred_fallthru
          _
        // Predicated region
        $region85: #{spatial_edge_self_attn.1} parent=59 // pred_check
          %p452 = pneg %p204
        $region86: #{spatial_edge_self_attn.1} parent=59 // pred_check_branch
          %454 = sbr.rel (%p452) target = $region88
        $region87: #{spatial_edge_self_attn.1} parent=59 // pred_region
          %455 = dma.done [#allocation13], 192
        $region88: #{spatial_edge_self_attn.1} parent=59 // pred_fallthru
          _
        // Predicated region
        $region89: #{spatial_edge_self_attn.1} parent=59 // pred_check
          %p456 = pneg %p225
        $region90: #{spatial_edge_self_attn.1} parent=59 // pred_check_branch
          %458 = sbr.rel (%p456) target = $region92
        $region91: #{spatial_edge_self_attn.1} parent=59 // pred_region
          %459 = dma.done [#allocation16], 16384
        $region92: #{spatial_edge_self_attn.1} parent=59 // pred_fallthru
          _
        // Predicated region
        $region93: #{spatial_edge_self_attn.1} parent=59 // pred_check
          %p460 = pneg %p246
        $region94: #{spatial_edge_self_attn.1} parent=59 // pred_check_branch
          %462 = sbr.rel (%p460) target = $region96
        $region95: #{spatial_edge_self_attn.1} parent=59 // pred_region
          %463 = dma.done [#allocation16], 64
        $region96: #{spatial_edge_self_attn.1} parent=59 // pred_fallthru
          _
        %s464 = sand.u32 %s39, 1
        %s465 = scalar_lea.sflag [#allocation4], %s464
        %s466 = sand.u32 %s39, 1
        %s467 = smul.addr %s466, 16
        %s468 = scalar_lea.vmem [#allocation3], %s467
        %p469 = pneg %p52
        %p470 = pneg %p49
        %s471 = smul.u32 2, %s31
        %p472 = scmp.lt.s32.totalorder %s471, 3
        %s473 = scalar_select %p472, %s471, 3
        %s474 = scalar_lea.vmem %s1, %s473
        %p475 = pneg %p78
        %p476 = pneg %p75
        %p477 = pneg %p99
        %p478 = pneg %p96
        %p479 = pneg %p120
        %p480 = pneg %p117
        %p481 = pneg %p141
        %p482 = pneg %p138
        %p483 = pneg %p162
        %p484 = pneg %p159
        %p485 = pneg %p183
        %p486 = pneg %p180
        %p487 = pneg %p204
        %p488 = pneg %p201
        %p489 = pneg %p225
        %p490 = pneg %p222
        %p491 = pneg %p246
        %p492 = pneg %p243
        %p493 = pneg %p272
        %p494 = pneg %p269
        %s495 = sand.u32 %s259, 1
        %s496 = scalar_lea.sflag [#allocation5], %s495
        %s497 = sand.u32 %s259, 1
        %s498 = smul.addr %s497, 64
        %s499 = scalar_lea.vmem [#allocation18], %s498
        %s500 = smul.u32 2, %s31
        %s501 = smul.u32 2, %s31
        %p502 = scmp.lt.s32.totalorder %s501, 3
        %s503 = scalar_select %p502, %s501, 3
        %s504 = scalar_lea.vmem %s1, %s503
        %s505 = smul.u32 2, %s31
        %s506 = smul.u32 2, %s31
        %v508 = vld [vmem:[%s427] sm:$0xff]
        %v509 = vld [vmem:[%s427 + $0x8] sm:$0xff]
        %v510 = vpack.c.bf16 %v509, %v508
        %v511 = vld [vmem:[#allocation6] sm:$0xf]
        %v512 = vld [vmem:[#allocation6 + $0x4] sm:$0x3]
        %v513 = vld [vmem:[#allocation8] sm:$0x1]
        %v515 = vlaneseq
        %v516 = vshrl.u32 %v515, 7
        %v517 = vsub.s32 0, %v516
        %v518 = vrot.slane %v513, %v517
        %v522 = vunpack.c.l.b16 %v511
        %v523 = vunpack.c.l.b16 %v512
        %v524 = vpack.c.b16 %v523, %v522
        %vm525 = vcmask 97280
        %v527 = vsel %vm525, %v510, 0
        %vm529 = vcmask 1045504
        %v531 = vsel %vm529, %v524, 0
        %533 = vmatprep.subr.bf16.mxu0 0
        %534 = vmatpush1.bf16.msra.mxu0 0
        %535 = vmatprep.subr.bf16.mxu0 0
        %536 = vmatpush1.bf16.msra.mxu0 0
        %537 = vmatprep.subr.bf16.mxu0 0
        %538 = vmatpush1.bf16.msra.mxu0 0
        %539 = vmatprep.subr.bf16.mxu0 0
        %540 = vmatpush1.bf16.msra.mxu0 0
        %541 = vmatprep.subr.bf16.mxu0 0
        %542 = vmatpush1.bf16.msra.mxu0 0
        %543 = vmatprep.subr.bf16.mxu0 0
        %544 = vmatpush1.bf16.msra.mxu0 0
        %545 = vmatprep.subr.bf16.mxu0 0
        %546 = vmatpush1.bf16.msra.mxu0 0
        %547 = vmatprep.subr.bf16.mxu0 0
        %548 = vmatpush1.bf16.msra.mxu0 %v531
        %549 = vmatprep.subr.bf16.mxu0 0
        %550 = vmatpush2.bf16.msra.mxu0 0
        %551 = vmatprep.subr.bf16.mxu0 0
        %552 = vmatpush2.bf16.msra.mxu0 0
        %553 = vmatprep.subr.bf16.mxu0 0
        %554 = vmatpush2.bf16.msra.mxu0 0
        %555 = vmatprep.subr.bf16.mxu0 0
        %556 = vmatpush2.bf16.msra.mxu0 0
        %557 = vmatprep.subr.bf16.mxu0 0
        %558 = vmatpush2.bf16.msra.mxu0 0
        %559 = vmatprep.subr.bf16.mxu0 0
        %560 = vmatpush2.bf16.msra.mxu0 0
        %561 = vmatprep.subr.bf16.mxu0 0
        %562 = vmatpush2.bf16.msra.mxu0 0
        %563 = vmatprep.subr.bf16.mxu0 0
        %564 = vmatpush2.bf16.msra.mxu0 0
        %565 = vmatprep.mubr.bf16.mxu0 0
        %566 = vmatmul.mubr.bf16.gmra.mxu0 %v527
        %v567 = vpop.f32.mrf.mxu0
        %v568 = vadd.f32 %v518, %v567
        %v569 = vpop.f32.mrf.mxu0
        %v570 = vpop.f32.mrf.mxu0
        %v571 = vadd.f32 %v518, %v570
        %v572 = vpop.f32.mrf.mxu0
        %573 = vdwg.mxu0
        %v574 = vmax.f32 %v568, 0.0
        %v575 = vmax.f32 %v571, 0.0
        %v576 = vpack.c.bf16 %v575, %v574
        %v577 = vld [vmem:[#allocation9] sm:$0xff]
        %v578 = vld [vmem:[#allocation9 + $0x8] sm:$0xff]
        %v579 = vld [vmem:[#allocation9 + $0x10] sm:$0xff]
        %v580 = vld [vmem:[#allocation9 + $0x18] sm:$0xff]
        %v581 = vld [vmem:[#allocation9 + $0x20] sm:$0xff]
        %v582 = vld [vmem:[#allocation9 + $0x28] sm:$0xff]
        %v583 = vld [vmem:[#allocation9 + $0x30] sm:$0xff]
        %v584 = vld [vmem:[#allocation9 + $0x38] sm:$0xff]
        %v585 = vld [vmem:[#allocation9 + $0x40] sm:$0xff]
        %v586 = vld [vmem:[#allocation9 + $0x48] sm:$0xff]
        %v587 = vld [vmem:[#allocation9 + $0x50] sm:$0xff]
        %v588 = vld [vmem:[#allocation9 + $0x58] sm:$0xff]
        %v589 = vld [vmem:[#allocation9 + $0x60] sm:$0xff]
        %v590 = vld [vmem:[#allocation9 + $0x68] sm:$0xff]
        %v591 = vld [vmem:[#allocation9 + $0x70] sm:$0xff]
        %v592 = vld [vmem:[#allocation9 + $0x78] sm:$0xff]
        %v593 = vld [vmem:[#allocation9 + $0x80] sm:$0xff]
        %v594 = vld [vmem:[#allocation9 + $0x88] sm:$0xff]
        %v595 = vld [vmem:[#allocation9 + $0x90] sm:$0xff]
        %v596 = vld [vmem:[#allocation9 + $0x98] sm:$0xff]
        %v597 = vld [vmem:[#allocation9 + $0xa0] sm:$0xff]
        %v598 = vld [vmem:[#allocation9 + $0xa8] sm:$0xff]
        %v599 = vld [vmem:[#allocation9 + $0xb0] sm:$0xff]
        %v600 = vld [vmem:[#allocation9 + $0xb8] sm:$0xff]
        %v601 = vld [vmem:[#allocation9 + $0xc0] sm:$0xff]
        %v602 = vld [vmem:[#allocation9 + $0xc8] sm:$0xff]
        %v603 = vld [vmem:[#allocation9 + $0xd0] sm:$0xff]
        %v604 = vld [vmem:[#allocation9 + $0xd8] sm:$0xff]
        %v605 = vld [vmem:[#allocation9 + $0xe0] sm:$0xff]
        %v606 = vld [vmem:[#allocation9 + $0xe8] sm:$0xff]
        %v607 = vld [vmem:[#allocation9 + $0xf0] sm:$0xff]
        %v608 = vld [vmem:[#allocation9 + $0xf8] sm:$0xff]
        %v609 = vld [vmem:[#allocation11] sm:$0xf]
        %v611 = vlaneseq
        %v612 = vshrl.u32 %v611, 7
        %v613 = vsub.s32 0, %v612
        %v614 = vrot.slane %v609, %v613
        %v615 = vlaneseq
        %v616 = vshrl.u32 %v615, 7
        %v617 = vsub.s32 1, %v616
        %v618 = vrot.slane %v609, %v617
        %v619 = vlaneseq
        %v620 = vshrl.u32 %v619, 7
        %v621 = vsub.s32 2, %v620
        %v622 = vrot.slane %v609, %v621
        %v623 = vlaneseq
        %v624 = vshrl.u32 %v623, 7
        %v625 = vsub.s32 3, %v624
        %v626 = vrot.slane %v609, %v625
        %v663 = vunpack.c.l.b16 %v577
        %v664 = vunpack.c.h.b16 %v577
        %v665 = vunpack.c.l.b16 %v578
        %v666 = vunpack.c.h.b16 %v578
        %v667 = vunpack.c.l.b16 %v579
        %v668 = vunpack.c.h.b16 %v579
        %v669 = vunpack.c.l.b16 %v580
        %v670 = vunpack.c.h.b16 %v580
        %v671 = vunpack.c.l.b16 %v581
        %v672 = vunpack.c.h.b16 %v581
        %v673 = vunpack.c.l.b16 %v582
        %v674 = vunpack.c.h.b16 %v582
        %v675 = vunpack.c.l.b16 %v583
        %v676 = vunpack.c.h.b16 %v583
        %v677 = vunpack.c.l.b16 %v584
        %v678 = vunpack.c.h.b16 %v584
        %v679 = vunpack.c.l.b16 %v585
        %v680 = vunpack.c.h.b16 %v585
        %v681 = vunpack.c.l.b16 %v586
        %v682 = vunpack.c.h.b16 %v586
        %v683 = vunpack.c.l.b16 %v587
        %v684 = vunpack.c.h.b16 %v587
        %v685 = vunpack.c.l.b16 %v588
        %v686 = vunpack.c.h.b16 %v588
        %v687 = vunpack.c.l.b16 %v589
        %v688 = vunpack.c.h.b16 %v589
        %v689 = vunpack.c.l.b16 %v590
        %v690 = vunpack.c.h.b16 %v590
        %v691 = vunpack.c.l.b16 %v591
        %v692 = vunpack.c.h.b16 %v591
        %v693 = vunpack.c.l.b16 %v592
        %v694 = vunpack.c.h.b16 %v592
        %v695 = vunpack.c.l.b16 %v593
        %v696 = vunpack.c.h.b16 %v593
        %v697 = vunpack.c.l.b16 %v594
        %v698 = vunpack.c.h.b16 %v594
        %v699 = vunpack.c.l.b16 %v595
        %v700 = vunpack.c.h.b16 %v595
        %v701 = vunpack.c.l.b16 %v596
        %v702 = vunpack.c.h.b16 %v596
        %v703 = vunpack.c.l.b16 %v597
        %v704 = vunpack.c.h.b16 %v597
        %v705 = vunpack.c.l.b16 %v598
        %v706 = vunpack.c.h.b16 %v598
        %v707 = vunpack.c.l.b16 %v599
        %v708 = vunpack.c.h.b16 %v599
        %v709 = vunpack.c.l.b16 %v600
        %v710 = vunpack.c.h.b16 %v600
        %v711 = vunpack.c.l.b16 %v601
        %v712 = vunpack.c.h.b16 %v601
        %v713 = vunpack.c.l.b16 %v602
        %v714 = vunpack.c.h.b16 %v602
        %v715 = vunpack.c.l.b16 %v603
        %v716 = vunpack.c.h.b16 %v603
        %v717 = vunpack.c.l.b16 %v604
        %v718 = vunpack.c.h.b16 %v604
        %v719 = vunpack.c.l.b16 %v605
        %v720 = vunpack.c.h.b16 %v605
        %v721 = vunpack.c.l.b16 %v606
        %v722 = vunpack.c.h.b16 %v606
        %v723 = vunpack.c.l.b16 %v607
        %v724 = vunpack.c.h.b16 %v607
        %v725 = vunpack.c.l.b16 %v608
        %v726 = vunpack.c.h.b16 %v608
        %v727 = vpack.c.b16 %v667, %v663
        %v728 = vpack.c.b16 %v668, %v664
        %v729 = vpack.c.b16 %v669, %v665
        %v730 = vpack.c.b16 %v670, %v666
        %v731 = vpack.c.b16 %v675, %v671
        %v732 = vpack.c.b16 %v676, %v672
        %v733 = vpack.c.b16 %v677, %v673
        %v734 = vpack.c.b16 %v678, %v674
        %v735 = vpack.c.b16 %v683, %v679
        %v736 = vpack.c.b16 %v684, %v680
        %v737 = vpack.c.b16 %v685, %v681
        %v738 = vpack.c.b16 %v686, %v682
        %v739 = vpack.c.b16 %v691, %v687
        %v740 = vpack.c.b16 %v692, %v688
        %v741 = vpack.c.b16 %v693, %v689
        %v742 = vpack.c.b16 %v694, %v690
        %v743 = vpack.c.b16 %v699, %v695
        %v744 = vpack.c.b16 %v700, %v696
        %v745 = vpack.c.b16 %v701, %v697
        %v746 = vpack.c.b16 %v702, %v698
        %v747 = vpack.c.b16 %v707, %v703
        %v748 = vpack.c.b16 %v708, %v704
        %v749 = vpack.c.b16 %v709, %v705
        %v750 = vpack.c.b16 %v710, %v706
        %v751 = vpack.c.b16 %v715, %v711
        %v752 = vpack.c.b16 %v716, %v712
        %v753 = vpack.c.b16 %v717, %v713
        %v754 = vpack.c.b16 %v718, %v714
        %v755 = vpack.c.b16 %v723, %v719
        %v756 = vpack.c.b16 %v724, %v720
        %v757 = vpack.c.b16 %v725, %v721
        %v758 = vpack.c.b16 %v726, %v722
        %791 = vmatprep.subr.bf16.mxu0 %v756
        %792 = vmatpush1.bf16.msra.mxu0 %v755
        %793 = vmatprep.subr.bf16.mxu0 %v752
        %794 = vmatpush1.bf16.msra.mxu0 %v751
        %795 = vmatprep.subr.bf16.mxu0 %v748
        %796 = vmatpush1.bf16.msra.mxu0 %v747
        %797 = vmatprep.subr.bf16.mxu0 %v744
        %798 = vmatpush1.bf16.msra.mxu0 %v743
        %799 = vmatprep.subr.bf16.mxu0 %v740
        %800 = vmatpush1.bf16.msra.mxu0 %v739
        %801 = vmatprep.subr.bf16.mxu0 %v736
        %802 = vmatpush1.bf16.msra.mxu0 %v735
        %803 = vmatprep.subr.bf16.mxu0 %v732
        %804 = vmatpush1.bf16.msra.mxu0 %v731
        %805 = vmatprep.subr.bf16.mxu0 %v728
        %806 = vmatpush1.bf16.msra.mxu0 %v727
        %807 = vmatprep.subr.bf16.mxu0 0
        %808 = vmatpush2.bf16.msra.mxu0 0
        %809 = vmatprep.subr.bf16.mxu0 0
        %810 = vmatpush2.bf16.msra.mxu0 0
        %811 = vmatprep.subr.bf16.mxu0 0
        %812 = vmatpush2.bf16.msra.mxu0 0
        %813 = vmatprep.subr.bf16.mxu0 0
        %814 = vmatpush2.bf16.msra.mxu0 0
        %815 = vmatprep.subr.bf16.mxu0 0
        %816 = vmatpush2.bf16.msra.mxu0 0
        %817 = vmatprep.subr.bf16.mxu0 0
        %818 = vmatpush2.bf16.msra.mxu0 0
        %819 = vmatprep.subr.bf16.mxu0 0
        %820 = vmatpush2.bf16.msra.mxu0 0
        %821 = vmatprep.subr.bf16.mxu0 0
        %822 = vmatpush2.bf16.msra.mxu0 0
        %823 = vmatprep.mubr.bf16.mxu0 0
        %824 = vmatmul.mubr.bf16.gmra.mxu0 %v576
        %v825 = vpop.f32.mrf.mxu0
        %v826 = vadd.f32 %v614, %v825
        %v827 = vpop.f32.mrf.mxu0
        %v828 = vadd.f32 %v618, %v827
        %v829 = vpop.f32.mrf.mxu0
        %v830 = vadd.f32 %v614, %v829
        %v831 = vpop.f32.mrf.mxu0
        %v832 = vadd.f32 %v618, %v831
        %833 = vdwg.mxu0
        %834 = vmatprep.subr.bf16.mxu0 %v758
        %835 = vmatpush1.bf16.msra.mxu0 %v757
        %836 = vmatprep.subr.bf16.mxu0 %v754
        %837 = vmatpush1.bf16.msra.mxu0 %v753
        %838 = vmatprep.subr.bf16.mxu0 %v750
        %839 = vmatpush1.bf16.msra.mxu0 %v749
        %840 = vmatprep.subr.bf16.mxu0 %v746
        %841 = vmatpush1.bf16.msra.mxu0 %v745
        %842 = vmatprep.subr.bf16.mxu0 %v742
        %843 = vmatpush1.bf16.msra.mxu0 %v741
        %844 = vmatprep.subr.bf16.mxu0 %v738
        %845 = vmatpush1.bf16.msra.mxu0 %v737
        %846 = vmatprep.subr.bf16.mxu0 %v734
        %847 = vmatpush1.bf16.msra.mxu0 %v733
        %848 = vmatprep.subr.bf16.mxu0 %v730
        %849 = vmatpush1.bf16.msra.mxu0 %v729
        %850 = vmatprep.subr.bf16.mxu0 0
        %851 = vmatpush2.bf16.msra.mxu0 0
        %852 = vmatprep.subr.bf16.mxu0 0
        %853 = vmatpush2.bf16.msra.mxu0 0
        %854 = vmatprep.subr.bf16.mxu0 0
        %855 = vmatpush2.bf16.msra.mxu0 0
        %856 = vmatprep.subr.bf16.mxu0 0
        %857 = vmatpush2.bf16.msra.mxu0 0
        %858 = vmatprep.subr.bf16.mxu0 0
        %859 = vmatpush2.bf16.msra.mxu0 0
        %860 = vmatprep.subr.bf16.mxu0 0
        %861 = vmatpush2.bf16.msra.mxu0 0
        %862 = vmatprep.subr.bf16.mxu0 0
        %863 = vmatpush2.bf16.msra.mxu0 0
        %864 = vmatprep.subr.bf16.mxu0 0
        %865 = vmatpush2.bf16.msra.mxu0 0
        %866 = vmatprep.mubr.bf16.mxu0 0
        %867 = vmatmul.mubr.bf16.gmra.mxu0 %v576
        %v868 = vpop.f32.mrf.mxu0
        %v869 = vadd.f32 %v622, %v868
        %v870 = vpop.f32.mrf.mxu0
        %v871 = vadd.f32 %v626, %v870
        %v872 = vpop.f32.mrf.mxu0
        %v873 = vadd.f32 %v622, %v872
        %v874 = vpop.f32.mrf.mxu0
        %v875 = vadd.f32 %v626, %v874
        %876 = vdwg.mxu0
        %v877 = vmax.f32 %v826, 0.0
        %v878 = vmax.f32 %v828, 0.0
        %v879 = vmax.f32 %v869, 0.0
        %v880 = vmax.f32 %v871, 0.0
        %v881 = vmax.f32 %v830, 0.0
        %v882 = vmax.f32 %v832, 0.0
        %v883 = vmax.f32 %v873, 0.0
        %v884 = vmax.f32 %v875, 0.0
        %v885 = vpack.c.bf16 %v881, %v877
        %v886 = vpack.c.bf16 %v882, %v878
        %v887 = vpack.c.bf16 %v883, %v879
        %v888 = vpack.c.bf16 %v884, %v880
        %v889 = vld [vmem:[#allocation12] sm:$0xff]
        %v890 = vld [vmem:[#allocation12 + $0x8] sm:$0xff]
        %v891 = vld [vmem:[#allocation12 + $0x10] sm:$0xff]
        %v892 = vld [vmem:[#allocation12 + $0x18] sm:$0xff]
        %v893 = vld [vmem:[#allocation12 + $0x20] sm:$0xff]
        %v894 = vld [vmem:[#allocation12 + $0x28] sm:$0xff]
        %v895 = vld [vmem:[#allocation12 + $0x30] sm:$0xff]
        %v896 = vld [vmem:[#allocation12 + $0x38] sm:$0xff]
        %v897 = vld [vmem:[#allocation12 + $0x40] sm:$0xff]
        %v898 = vld [vmem:[#allocation12 + $0x48] sm:$0xff]
        %v899 = vld [vmem:[#allocation12 + $0x50] sm:$0xff]
        %v900 = vld [vmem:[#allocation12 + $0x58] sm:$0xff]
        %v901 = vld [vmem:[#allocation12 + $0x60] sm:$0xff]
        %v902 = vld [vmem:[#allocation12 + $0x68] sm:$0xff]
        %v903 = vld [vmem:[#allocation12 + $0x70] sm:$0xff]
        %v904 = vld [vmem:[#allocation12 + $0x78] sm:$0xff]
        %v905 = vld [vmem:[#allocation12 + $0x80] sm:$0xff]
        %v906 = vld [vmem:[#allocation12 + $0x88] sm:$0xff]
        %v907 = vld [vmem:[#allocation12 + $0x90] sm:$0xff]
        %v908 = vld [vmem:[#allocation12 + $0x98] sm:$0xff]
        %v909 = vld [vmem:[#allocation12 + $0xa0] sm:$0xff]
        %v910 = vld [vmem:[#allocation12 + $0xa8] sm:$0xff]
        %v911 = vld [vmem:[#allocation12 + $0xb0] sm:$0xff]
        %v912 = vld [vmem:[#allocation12 + $0xb8] sm:$0xff]
        %v913 = vld [vmem:[#allocation12 + $0xc0] sm:$0xff]
        %v914 = vld [vmem:[#allocation12 + $0xc8] sm:$0xff]
        %v915 = vld [vmem:[#allocation12 + $0xd0] sm:$0xff]
        %v916 = vld [vmem:[#allocation12 + $0xd8] sm:$0xff]
        %v917 = vld [vmem:[#allocation12 + $0xe0] sm:$0xff]
        %v918 = vld [vmem:[#allocation12 + $0xe8] sm:$0xff]
        %v919 = vld [vmem:[#allocation12 + $0xf0] sm:$0xff]
        %v920 = vld [vmem:[#allocation12 + $0xf8] sm:$0xff]
        %v921 = vld [vmem:[#allocation12 + $0x100] sm:$0xff]
        %v922 = vld [vmem:[#allocation12 + $0x108] sm:$0xff]
        %v923 = vld [vmem:[#allocation12 + $0x110] sm:$0xff]
        %v924 = vld [vmem:[#allocation12 + $0x118] sm:$0xff]
        %v925 = vld [vmem:[#allocation12 + $0x120] sm:$0xff]
        %v926 = vld [vmem:[#allocation12 + $0x128] sm:$0xff]
        %v927 = vld [vmem:[#allocation12 + $0x130] sm:$0xff]
        %v928 = vld [vmem:[#allocation12 + $0x138] sm:$0xff]
        %v929 = vld [vmem:[#allocation12 + $0x140] sm:$0xff]
        %v930 = vld [vmem:[#allocation12 + $0x148] sm:$0xff]
        %v931 = vld [vmem:[#allocation12 + $0x150] sm:$0xff]
        %v932 = vld [vmem:[#allocation12 + $0x158] sm:$0xff]
        %v933 = vld [vmem:[#allocation12 + $0x160] sm:$0xff]
        %v934 = vld [vmem:[#allocation12 + $0x168] sm:$0xff]
        %v935 = vld [vmem:[#allocation12 + $0x170] sm:$0xff]
        %v936 = vld [vmem:[#allocation12 + $0x178] sm:$0xff]
        %v937 = vld [vmem:[#allocation12 + $0x180] sm:$0xff]
        %v938 = vld [vmem:[#allocation12 + $0x188] sm:$0xff]
        %v939 = vld [vmem:[#allocation12 + $0x190] sm:$0xff]
        %v940 = vld [vmem:[#allocation12 + $0x198] sm:$0xff]
        %v941 = vld [vmem:[#allocation12 + $0x1a0] sm:$0xff]
        %v942 = vld [vmem:[#allocation12 + $0x1a8] sm:$0xff]
        %v943 = vld [vmem:[#allocation12 + $0x1b0] sm:$0xff]
        %v944 = vld [vmem:[#allocation12 + $0x1b8] sm:$0xff]
        %v945 = vld [vmem:[#allocation12 + $0x1c0] sm:$0xff]
        %v946 = vld [vmem:[#allocation12 + $0x1c8] sm:$0xff]
        %v947 = vld [vmem:[#allocation12 + $0x1d0] sm:$0xff]
        %v948 = vld [vmem:[#allocation12 + $0x1d8] sm:$0xff]
        %v949 = vld [vmem:[#allocation12 + $0x1e0] sm:$0xff]
        %v950 = vld [vmem:[#allocation12 + $0x1e8] sm:$0xff]
        %v951 = vld [vmem:[#allocation12 + $0x1f0] sm:$0xff]
        %v952 = vld [vmem:[#allocation12 + $0x1f8] sm:$0xff]
        %v953 = vld [vmem:[#allocation12 + $0x200] sm:$0xff]
        %v954 = vld [vmem:[#allocation12 + $0x208] sm:$0xff]
        %v955 = vld [vmem:[#allocation12 + $0x210] sm:$0xff]
        %v956 = vld [vmem:[#allocation12 + $0x218] sm:$0xff]
        %v957 = vld [vmem:[#allocation12 + $0x220] sm:$0xff]
        %v958 = vld [vmem:[#allocation12 + $0x228] sm:$0xff]
        %v959 = vld [vmem:[#allocation12 + $0x230] sm:$0xff]
        %v960 = vld [vmem:[#allocation12 + $0x238] sm:$0xff]
        %v961 = vld [vmem:[#allocation12 + $0x240] sm:$0xff]
        %v962 = vld [vmem:[#allocation12 + $0x248] sm:$0xff]
        %v963 = vld [vmem:[#allocation12 + $0x250] sm:$0xff]
        %v964 = vld [vmem:[#allocation12 + $0x258] sm:$0xff]
        %v965 = vld [vmem:[#allocation12 + $0x260] sm:$0xff]
        %v966 = vld [vmem:[#allocation12 + $0x268] sm:$0xff]
        %v967 = vld [vmem:[#allocation12 + $0x270] sm:$0xff]
        %v968 = vld [vmem:[#allocation12 + $0x278] sm:$0xff]
        %v969 = vld [vmem:[#allocation12 + $0x280] sm:$0xff]
        %v970 = vld [vmem:[#allocation12 + $0x288] sm:$0xff]
        %v971 = vld [vmem:[#allocation12 + $0x290] sm:$0xff]
        %v972 = vld [vmem:[#allocation12 + $0x298] sm:$0xff]
        %v973 = vld [vmem:[#allocation12 + $0x2a0] sm:$0xff]
        %v974 = vld [vmem:[#allocation12 + $0x2a8] sm:$0xff]
        %v975 = vld [vmem:[#allocation12 + $0x2b0] sm:$0xff]
        %v976 = vld [vmem:[#allocation12 + $0x2b8] sm:$0xff]
        %v977 = vld [vmem:[#allocation12 + $0x2c0] sm:$0xff]
        %v978 = vld [vmem:[#allocation12 + $0x2c8] sm:$0xff]
        %v979 = vld [vmem:[#allocation12 + $0x2d0] sm:$0xff]
        %v980 = vld [vmem:[#allocation12 + $0x2d8] sm:$0xff]
        %v981 = vld [vmem:[#allocation12 + $0x2e0] sm:$0xff]
        %v982 = vld [vmem:[#allocation12 + $0x2e8] sm:$0xff]
        %v983 = vld [vmem:[#allocation12 + $0x2f0] sm:$0xff]
        %v984 = vld [vmem:[#allocation12 + $0x2f8] sm:$0xff]
        %v985 = vld [vmem:[#allocation12 + $0x300] sm:$0xff]
        %v986 = vld [vmem:[#allocation12 + $0x308] sm:$0xff]
        %v987 = vld [vmem:[#allocation12 + $0x310] sm:$0xff]
        %v988 = vld [vmem:[#allocation12 + $0x318] sm:$0xff]
        %v989 = vld [vmem:[#allocation12 + $0x320] sm:$0xff]
        %v990 = vld [vmem:[#allocation12 + $0x328] sm:$0xff]
        %v991 = vld [vmem:[#allocation12 + $0x330] sm:$0xff]
        %v992 = vld [vmem:[#allocation12 + $0x338] sm:$0xff]
        %v993 = vld [vmem:[#allocation12 + $0x340] sm:$0xff]
        %v994 = vld [vmem:[#allocation12 + $0x348] sm:$0xff]
        %v995 = vld [vmem:[#allocation12 + $0x350] sm:$0xff]
        %v996 = vld [vmem:[#allocation12 + $0x358] sm:$0xff]
        %v997 = vld [vmem:[#allocation12 + $0x360] sm:$0xff]
        %v998 = vld [vmem:[#allocation12 + $0x368] sm:$0xff]
        %v999 = vld [vmem:[#allocation12 + $0x370] sm:$0xff]
        %v1000 = vld [vmem:[#allocation12 + $0x378] sm:$0xff]
        %v1001 = vld [vmem:[#allocation12 + $0x380] sm:$0xff]
        %v1002 = vld [vmem:[#allocation12 + $0x388] sm:$0xff]
        %v1003 = vld [vmem:[#allocation12 + $0x390] sm:$0xff]
        %v1004 = vld [vmem:[#allocation12 + $0x398] sm:$0xff]
        %v1005 = vld [vmem:[#allocation12 + $0x3a0] sm:$0xff]
        %v1006 = vld [vmem:[#allocation12 + $0x3a8] sm:$0xff]
        %v1007 = vld [vmem:[#allocation12 + $0x3b0] sm:$0xff]
        %v1008 = vld [vmem:[#allocation12 + $0x3b8] sm:$0xff]
        %v1009 = vld [vmem:[#allocation12 + $0x3c0] sm:$0xff]
        %v1010 = vld [vmem:[#allocation12 + $0x3c8] sm:$0xff]
        %v1011 = vld [vmem:[#allocation12 + $0x3d0] sm:$0xff]
        %v1012 = vld [vmem:[#allocation12 + $0x3d8] sm:$0xff]
        %v1013 = vld [vmem:[#allocation12 + $0x3e0] sm:$0xff]
        %v1014 = vld [vmem:[#allocation12 + $0x3e8] sm:$0xff]
        %v1015 = vld [vmem:[#allocation12 + $0x3f0] sm:$0xff]
        %v1016 = vld [vmem:[#allocation12 + $0x3f8] sm:$0xff]
        %v1017 = vld [vmem:[#allocation12 + $0x400] sm:$0xff]
        %v1018 = vld [vmem:[#allocation12 + $0x408] sm:$0xff]
        %v1019 = vld [vmem:[#allocation12 + $0x410] sm:$0xff]
        %v1020 = vld [vmem:[#allocation12 + $0x418] sm:$0xff]
        %v1021 = vld [vmem:[#allocation12 + $0x420] sm:$0xff]
        %v1022 = vld [vmem:[#allocation12 + $0x428] sm:$0xff]
        %v1023 = vld [vmem:[#allocation12 + $0x430] sm:$0xff]
        %v1024 = vld [vmem:[#allocation12 + $0x438] sm:$0xff]
        %v1025 = vld [vmem:[#allocation12 + $0x440] sm:$0xff]
        %v1026 = vld [vmem:[#allocation12 + $0x448] sm:$0xff]
        %v1027 = vld [vmem:[#allocation12 + $0x450] sm:$0xff]
        %v1028 = vld [vmem:[#allocation12 + $0x458] sm:$0xff]
        %v1029 = vld [vmem:[#allocation12 + $0x460] sm:$0xff]
        %v1030 = vld [vmem:[#allocation12 + $0x468] sm:$0xff]
        %v1031 = vld [vmem:[#allocation12 + $0x470] sm:$0xff]
        %v1032 = vld [vmem:[#allocation12 + $0x478] sm:$0xff]
        %v1033 = vld [vmem:[#allocation12 + $0x480] sm:$0xff]
        %v1034 = vld [vmem:[#allocation12 + $0x488] sm:$0xff]
        %v1035 = vld [vmem:[#allocation12 + $0x490] sm:$0xff]
        %v1036 = vld [vmem:[#allocation12 + $0x498] sm:$0xff]
        %v1037 = vld [vmem:[#allocation12 + $0x4a0] sm:$0xff]
        %v1038 = vld [vmem:[#allocation12 + $0x4a8] sm:$0xff]
        %v1039 = vld [vmem:[#allocation12 + $0x4b0] sm:$0xff]
        %v1040 = vld [vmem:[#allocation12 + $0x4b8] sm:$0xff]
        %v1041 = vld [vmem:[#allocation12 + $0x4c0] sm:$0xff]
        %v1042 = vld [vmem:[#allocation12 + $0x4c8] sm:$0xff]
        %v1043 = vld [vmem:[#allocation12 + $0x4d0] sm:$0xff]
        %v1044 = vld [vmem:[#allocation12 + $0x4d8] sm:$0xff]
        %v1045 = vld [vmem:[#allocation12 + $0x4e0] sm:$0xff]
        %v1046 = vld [vmem:[#allocation12 + $0x4e8] sm:$0xff]
        %v1047 = vld [vmem:[#allocation12 + $0x4f0] sm:$0xff]
        %v1048 = vld [vmem:[#allocation12 + $0x4f8] sm:$0xff]
        %v1049 = vld [vmem:[#allocation12 + $0x500] sm:$0xff]
        %v1050 = vld [vmem:[#allocation12 + $0x508] sm:$0xff]
        %v1051 = vld [vmem:[#allocation12 + $0x510] sm:$0xff]
        %v1052 = vld [vmem:[#allocation12 + $0x518] sm:$0xff]
        %v1053 = vld [vmem:[#allocation12 + $0x520] sm:$0xff]
        %v1054 = vld [vmem:[#allocation12 + $0x528] sm:$0xff]
        %v1055 = vld [vmem:[#allocation12 + $0x530] sm:$0xff]
        %v1056 = vld [vmem:[#allocation12 + $0x538] sm:$0xff]
        %v1057 = vld [vmem:[#allocation12 + $0x540] sm:$0xff]
        %v1058 = vld [vmem:[#allocation12 + $0x548] sm:$0xff]
        %v1059 = vld [vmem:[#allocation12 + $0x550] sm:$0xff]
        %v1060 = vld [vmem:[#allocation12 + $0x558] sm:$0xff]
        %v1061 = vld [vmem:[#allocation12 + $0x560] sm:$0xff]
        %v1062 = vld [vmem:[#allocation12 + $0x568] sm:$0xff]
        %v1063 = vld [vmem:[#allocation12 + $0x570] sm:$0xff]
        %v1064 = vld [vmem:[#allocation12 + $0x578] sm:$0xff]
        %v1065 = vld [vmem:[#allocation12 + $0x580] sm:$0xff]
        %v1066 = vld [vmem:[#allocation12 + $0x588] sm:$0xff]
        %v1067 = vld [vmem:[#allocation12 + $0x590] sm:$0xff]
        %v1068 = vld [vmem:[#allocation12 + $0x598] sm:$0xff]
        %v1069 = vld [vmem:[#allocation12 + $0x5a0] sm:$0xff]
        %v1070 = vld [vmem:[#allocation12 + $0x5a8] sm:$0xff]
        %v1071 = vld [vmem:[#allocation12 + $0x5b0] sm:$0xff]
        %v1072 = vld [vmem:[#allocation12 + $0x5b8] sm:$0xff]
        %v1073 = vld [vmem:[#allocation12 + $0x5c0] sm:$0xff]
        %v1074 = vld [vmem:[#allocation12 + $0x5c8] sm:$0xff]
        %v1075 = vld [vmem:[#allocation12 + $0x5d0] sm:$0xff]
        %v1076 = vld [vmem:[#allocation12 + $0x5d8] sm:$0xff]
        %v1077 = vld [vmem:[#allocation12 + $0x5e0] sm:$0xff]
        %v1078 = vld [vmem:[#allocation12 + $0x5e8] sm:$0xff]
        %v1079 = vld [vmem:[#allocation12 + $0x5f0] sm:$0xff]
        %v1080 = vld [vmem:[#allocation12 + $0x5f8] sm:$0xff]
        %v1081 = vld [vmem:[#allocation12 + $0x600] sm:$0xff]
        %v1082 = vld [vmem:[#allocation12 + $0x608] sm:$0xff]
        %v1083 = vld [vmem:[#allocation12 + $0x610] sm:$0xff]
        %v1084 = vld [vmem:[#allocation12 + $0x618] sm:$0xff]
        %v1085 = vld [vmem:[#allocation12 + $0x620] sm:$0xff]
        %v1086 = vld [vmem:[#allocation12 + $0x628] sm:$0xff]
        %v1087 = vld [vmem:[#allocation12 + $0x630] sm:$0xff]
        %v1088 = vld [vmem:[#allocation12 + $0x638] sm:$0xff]
        %v1089 = vld [vmem:[#allocation12 + $0x640] sm:$0xff]
        %v1090 = vld [vmem:[#allocation12 + $0x648] sm:$0xff]
        %v1091 = vld [vmem:[#allocation12 + $0x650] sm:$0xff]
        %v1092 = vld [vmem:[#allocation12 + $0x658] sm:$0xff]
        %v1093 = vld [vmem:[#allocation12 + $0x660] sm:$0xff]
        %v1094 = vld [vmem:[#allocation12 + $0x668] sm:$0xff]
        %v1095 = vld [vmem:[#allocation12 + $0x670] sm:$0xff]
        %v1096 = vld [vmem:[#allocation12 + $0x678] sm:$0xff]
        %v1097 = vld [vmem:[#allocation12 + $0x680] sm:$0xff]
        %v1098 = vld [vmem:[#allocation12 + $0x688] sm:$0xff]
        %v1099 = vld [vmem:[#allocation12 + $0x690] sm:$0xff]
        %v1100 = vld [vmem:[#allocation12 + $0x698] sm:$0xff]
        %v1101 = vld [vmem:[#allocation12 + $0x6a0] sm:$0xff]
        %v1102 = vld [vmem:[#allocation12 + $0x6a8] sm:$0xff]
        %v1103 = vld [vmem:[#allocation12 + $0x6b0] sm:$0xff]
        %v1104 = vld [vmem:[#allocation12 + $0x6b8] sm:$0xff]
        %v1105 = vld [vmem:[#allocation12 + $0x6c0] sm:$0xff]
        %v1106 = vld [vmem:[#allocation12 + $0x6c8] sm:$0xff]
        %v1107 = vld [vmem:[#allocation12 + $0x6d0] sm:$0xff]
        %v1108 = vld [vmem:[#allocation12 + $0x6d8] sm:$0xff]
        %v1109 = vld [vmem:[#allocation12 + $0x6e0] sm:$0xff]
        %v1110 = vld [vmem:[#allocation12 + $0x6e8] sm:$0xff]
        %v1111 = vld [vmem:[#allocation12 + $0x6f0] sm:$0xff]
        %v1112 = vld [vmem:[#allocation12 + $0x6f8] sm:$0xff]
        %v1113 = vld [vmem:[#allocation12 + $0x700] sm:$0xff]
        %v1114 = vld [vmem:[#allocation12 + $0x708] sm:$0xff]
        %v1115 = vld [vmem:[#allocation12 + $0x710] sm:$0xff]
        %v1116 = vld [vmem:[#allocation12 + $0x718] sm:$0xff]
        %v1117 = vld [vmem:[#allocation12 + $0x720] sm:$0xff]
        %v1118 = vld [vmem:[#allocation12 + $0x728] sm:$0xff]
        %v1119 = vld [vmem:[#allocation12 + $0x730] sm:$0xff]
        %v1120 = vld [vmem:[#allocation12 + $0x738] sm:$0xff]
        %v1121 = vld [vmem:[#allocation12 + $0x740] sm:$0xff]
        %v1122 = vld [vmem:[#allocation12 + $0x748] sm:$0xff]
        %v1123 = vld [vmem:[#allocation12 + $0x750] sm:$0xff]
        %v1124 = vld [vmem:[#allocation12 + $0x758] sm:$0xff]
        %v1125 = vld [vmem:[#allocation12 + $0x760] sm:$0xff]
        %v1126 = vld [vmem:[#allocation12 + $0x768] sm:$0xff]
        %v1127 = vld [vmem:[#allocation12 + $0x770] sm:$0xff]
        %v1128 = vld [vmem:[#allocation12 + $0x778] sm:$0xff]
        %v1129 = vld [vmem:[#allocation12 + $0x780] sm:$0xff]
        %v1130 = vld [vmem:[#allocation12 + $0x788] sm:$0xff]
        %v1131 = vld [vmem:[#allocation12 + $0x790] sm:$0xff]
        %v1132 = vld [vmem:[#allocation12 + $0x798] sm:$0xff]
        %v1133 = vld [vmem:[#allocation12 + $0x7a0] sm:$0xff]
        %v1134 = vld [vmem:[#allocation12 + $0x7a8] sm:$0xff]
        %v1135 = vld [vmem:[#allocation12 + $0x7b0] sm:$0xff]
        %v1136 = vld [vmem:[#allocation12 + $0x7b8] sm:$0xff]
        %v1137 = vld [vmem:[#allocation12 + $0x7c0] sm:$0xff]
        %v1138 = vld [vmem:[#allocation12 + $0x7c8] sm:$0xff]
        %v1139 = vld [vmem:[#allocation12 + $0x7d0] sm:$0xff]
        %v1140 = vld [vmem:[#allocation12 + $0x7d8] sm:$0xff]
        %v1141 = vld [vmem:[#allocation12 + $0x7e0] sm:$0xff]
        %v1142 = vld [vmem:[#allocation12 + $0x7e8] sm:$0xff]
        %v1143 = vld [vmem:[#allocation12 + $0x7f0] sm:$0xff]
        %v1144 = vld [vmem:[#allocation12 + $0x7f8] sm:$0xff]
        %v1145 = vld [vmem:[#allocation12 + $0x800] sm:$0xff]
        %v1146 = vld [vmem:[#allocation12 + $0x808] sm:$0xff]
        %v1147 = vld [vmem:[#allocation12 + $0x810] sm:$0xff]
        %v1148 = vld [vmem:[#allocation12 + $0x818] sm:$0xff]
        %v1149 = vld [vmem:[#allocation12 + $0x820] sm:$0xff]
        %v1150 = vld [vmem:[#allocation12 + $0x828] sm:$0xff]
        %v1151 = vld [vmem:[#allocation12 + $0x830] sm:$0xff]
        %v1152 = vld [vmem:[#allocation12 + $0x838] sm:$0xff]
        %v1153 = vld [vmem:[#allocation12 + $0x840] sm:$0xff]
        %v1154 = vld [vmem:[#allocation12 + $0x848] sm:$0xff]
        %v1155 = vld [vmem:[#allocation12 + $0x850] sm:$0xff]
        %v1156 = vld [vmem:[#allocation12 + $0x858] sm:$0xff]
        %v1157 = vld [vmem:[#allocation12 + $0x860] sm:$0xff]
        %v1158 = vld [vmem:[#allocation12 + $0x868] sm:$0xff]
        %v1159 = vld [vmem:[#allocation12 + $0x870] sm:$0xff]
        %v1160 = vld [vmem:[#allocation12 + $0x878] sm:$0xff]
        %v1161 = vld [vmem:[#allocation12 + $0x880] sm:$0xff]
        %v1162 = vld [vmem:[#allocation12 + $0x888] sm:$0xff]
        %v1163 = vld [vmem:[#allocation12 + $0x890] sm:$0xff]
        %v1164 = vld [vmem:[#allocation12 + $0x898] sm:$0xff]
        %v1165 = vld [vmem:[#allocation12 + $0x8a0] sm:$0xff]
        %v1166 = vld [vmem:[#allocation12 + $0x8a8] sm:$0xff]
        %v1167 = vld [vmem:[#allocation12 + $0x8b0] sm:$0xff]
        %v1168 = vld [vmem:[#allocation12 + $0x8b8] sm:$0xff]
        %v1169 = vld [vmem:[#allocation12 + $0x8c0] sm:$0xff]
        %v1170 = vld [vmem:[#allocation12 + $0x8c8] sm:$0xff]
        %v1171 = vld [vmem:[#allocation12 + $0x8d0] sm:$0xff]
        %v1172 = vld [vmem:[#allocation12 + $0x8d8] sm:$0xff]
        %v1173 = vld [vmem:[#allocation12 + $0x8e0] sm:$0xff]
        %v1174 = vld [vmem:[#allocation12 + $0x8e8] sm:$0xff]
        %v1175 = vld [vmem:[#allocation12 + $0x8f0] sm:$0xff]
        %v1176 = vld [vmem:[#allocation12 + $0x8f8] sm:$0xff]
        %v1177 = vld [vmem:[#allocation12 + $0x900] sm:$0xff]
        %v1178 = vld [vmem:[#allocation12 + $0x908] sm:$0xff]
        %v1179 = vld [vmem:[#allocation12 + $0x910] sm:$0xff]
        %v1180 = vld [vmem:[#allocation12 + $0x918] sm:$0xff]
        %v1181 = vld [vmem:[#allocation12 + $0x920] sm:$0xff]
        %v1182 = vld [vmem:[#allocation12 + $0x928] sm:$0xff]
        %v1183 = vld [vmem:[#allocation12 + $0x930] sm:$0xff]
        %v1184 = vld [vmem:[#allocation12 + $0x938] sm:$0xff]
        %v1185 = vld [vmem:[#allocation12 + $0x940] sm:$0xff]
        %v1186 = vld [vmem:[#allocation12 + $0x948] sm:$0xff]
        %v1187 = vld [vmem:[#allocation12 + $0x950] sm:$0xff]
        %v1188 = vld [vmem:[#allocation12 + $0x958] sm:$0xff]
        %v1189 = vld [vmem:[#allocation12 + $0x960] sm:$0xff]
        %v1190 = vld [vmem:[#allocation12 + $0x968] sm:$0xff]
        %v1191 = vld [vmem:[#allocation12 + $0x970] sm:$0xff]
        %v1192 = vld [vmem:[#allocation12 + $0x978] sm:$0xff]
        %v1193 = vld [vmem:[#allocation12 + $0x980] sm:$0xff]
        %v1194 = vld [vmem:[#allocation12 + $0x988] sm:$0xff]
        %v1195 = vld [vmem:[#allocation12 + $0x990] sm:$0xff]
        %v1196 = vld [vmem:[#allocation12 + $0x998] sm:$0xff]
        %v1197 = vld [vmem:[#allocation12 + $0x9a0] sm:$0xff]
        %v1198 = vld [vmem:[#allocation12 + $0x9a8] sm:$0xff]
        %v1199 = vld [vmem:[#allocation12 + $0x9b0] sm:$0xff]
        %v1200 = vld [vmem:[#allocation12 + $0x9b8] sm:$0xff]
        %v1201 = vld [vmem:[#allocation12 + $0x9c0] sm:$0xff]
        %v1202 = vld [vmem:[#allocation12 + $0x9c8] sm:$0xff]
        %v1203 = vld [vmem:[#allocation12 + $0x9d0] sm:$0xff]
        %v1204 = vld [vmem:[#allocation12 + $0x9d8] sm:$0xff]
        %v1205 = vld [vmem:[#allocation12 + $0x9e0] sm:$0xff]
        %v1206 = vld [vmem:[#allocation12 + $0x9e8] sm:$0xff]
        %v1207 = vld [vmem:[#allocation12 + $0x9f0] sm:$0xff]
        %v1208 = vld [vmem:[#allocation12 + $0x9f8] sm:$0xff]
        %v1209 = vld [vmem:[#allocation12 + $0xa00] sm:$0xff]
        %v1210 = vld [vmem:[#allocation12 + $0xa08] sm:$0xff]
        %v1211 = vld [vmem:[#allocation12 + $0xa10] sm:$0xff]
        %v1212 = vld [vmem:[#allocation12 + $0xa18] sm:$0xff]
        %v1213 = vld [vmem:[#allocation12 + $0xa20] sm:$0xff]
        %v1214 = vld [vmem:[#allocation12 + $0xa28] sm:$0xff]
        %v1215 = vld [vmem:[#allocation12 + $0xa30] sm:$0xff]
        %v1216 = vld [vmem:[#allocation12 + $0xa38] sm:$0xff]
        %v1217 = vld [vmem:[#allocation12 + $0xa40] sm:$0xff]
        %v1218 = vld [vmem:[#allocation12 + $0xa48] sm:$0xff]
        %v1219 = vld [vmem:[#allocation12 + $0xa50] sm:$0xff]
        %v1220 = vld [vmem:[#allocation12 + $0xa58] sm:$0xff]
        %v1221 = vld [vmem:[#allocation12 + $0xa60] sm:$0xff]
        %v1222 = vld [vmem:[#allocation12 + $0xa68] sm:$0xff]
        %v1223 = vld [vmem:[#allocation12 + $0xa70] sm:$0xff]
        %v1224 = vld [vmem:[#allocation12 + $0xa78] sm:$0xff]
        %v1225 = vld [vmem:[#allocation12 + $0xa80] sm:$0xff]
        %v1226 = vld [vmem:[#allocation12 + $0xa88] sm:$0xff]
        %v1227 = vld [vmem:[#allocation12 + $0xa90] sm:$0xff]
        %v1228 = vld [vmem:[#allocation12 + $0xa98] sm:$0xff]
        %v1229 = vld [vmem:[#allocation12 + $0xaa0] sm:$0xff]
        %v1230 = vld [vmem:[#allocation12 + $0xaa8] sm:$0xff]
        %v1231 = vld [vmem:[#allocation12 + $0xab0] sm:$0xff]
        %v1232 = vld [vmem:[#allocation12 + $0xab8] sm:$0xff]
        %v1233 = vld [vmem:[#allocation12 + $0xac0] sm:$0xff]
        %v1234 = vld [vmem:[#allocation12 + $0xac8] sm:$0xff]
        %v1235 = vld [vmem:[#allocation12 + $0xad0] sm:$0xff]
        %v1236 = vld [vmem:[#allocation12 + $0xad8] sm:$0xff]
        %v1237 = vld [vmem:[#allocation12 + $0xae0] sm:$0xff]
        %v1238 = vld [vmem:[#allocation12 + $0xae8] sm:$0xff]
        %v1239 = vld [vmem:[#allocation12 + $0xaf0] sm:$0xff]
        %v1240 = vld [vmem:[#allocation12 + $0xaf8] sm:$0xff]
        %v1241 = vld [vmem:[#allocation12 + $0xb00] sm:$0xff]
        %v1242 = vld [vmem:[#allocation12 + $0xb08] sm:$0xff]
        %v1243 = vld [vmem:[#allocation12 + $0xb10] sm:$0xff]
        %v1244 = vld [vmem:[#allocation12 + $0xb18] sm:$0xff]
        %v1245 = vld [vmem:[#allocation12 + $0xb20] sm:$0xff]
        %v1246 = vld [vmem:[#allocation12 + $0xb28] sm:$0xff]
        %v1247 = vld [vmem:[#allocation12 + $0xb30] sm:$0xff]
        %v1248 = vld [vmem:[#allocation12 + $0xb38] sm:$0xff]
        %v1249 = vld [vmem:[#allocation12 + $0xb40] sm:$0xff]
        %v1250 = vld [vmem:[#allocation12 + $0xb48] sm:$0xff]
        %v1251 = vld [vmem:[#allocation12 + $0xb50] sm:$0xff]
        %v1252 = vld [vmem:[#allocation12 + $0xb58] sm:$0xff]
        %v1253 = vld [vmem:[#allocation12 + $0xb60] sm:$0xff]
        %v1254 = vld [vmem:[#allocation12 + $0xb68] sm:$0xff]
        %v1255 = vld [vmem:[#allocation12 + $0xb70] sm:$0xff]
        %v1256 = vld [vmem:[#allocation12 + $0xb78] sm:$0xff]
        %v1257 = vld [vmem:[#allocation12 + $0xb80] sm:$0xff]
        %v1258 = vld [vmem:[#allocation12 + $0xb88] sm:$0xff]
        %v1259 = vld [vmem:[#allocation12 + $0xb90] sm:$0xff]
        %v1260 = vld [vmem:[#allocation12 + $0xb98] sm:$0xff]
        %v1261 = vld [vmem:[#allocation12 + $0xba0] sm:$0xff]
        %v1262 = vld [vmem:[#allocation12 + $0xba8] sm:$0xff]
        %v1263 = vld [vmem:[#allocation12 + $0xbb0] sm:$0xff]
        %v1264 = vld [vmem:[#allocation12 + $0xbb8] sm:$0xff]
        %v1265 = vld [vmem:[#allocation12 + $0xbc0] sm:$0xff]
        %v1266 = vld [vmem:[#allocation12 + $0xbc8] sm:$0xff]
        %v1267 = vld [vmem:[#allocation12 + $0xbd0] sm:$0xff]
        %v1268 = vld [vmem:[#allocation12 + $0xbd8] sm:$0xff]
        %v1269 = vld [vmem:[#allocation12 + $0xbe0] sm:$0xff]
        %v1270 = vld [vmem:[#allocation12 + $0xbe8] sm:$0xff]
        %v1271 = vld [vmem:[#allocation12 + $0xbf0] sm:$0xff]
        %v1272 = vld [vmem:[#allocation12 + $0xbf8] sm:$0xff]
        %v1273 = vld [vmem:[#allocation14] sm:$0xff]
        %v1274 = vld [vmem:[#allocation14 + $0x8] sm:$0xf]
        %v1277 = vlaneseq
        %v1278 = vshrl.u32 %v1277, 7
        %v1279 = vsub.s32 0, %v1278
        %v1280 = vrot.slane %v1273, %v1279
        %v1281 = vlaneseq
        %v1282 = vshrl.u32 %v1281, 7
        %v1283 = vsub.s32 1, %v1282
        %v1284 = vrot.slane %v1273, %v1283
        %v1285 = vlaneseq
        %v1286 = vshrl.u32 %v1285, 7
        %v1287 = vsub.s32 2, %v1286
        %v1288 = vrot.slane %v1273, %v1287
        %v1289 = vlaneseq
        %v1290 = vshrl.u32 %v1289, 7
        %v1291 = vsub.s32 3, %v1290
        %v1292 = vrot.slane %v1273, %v1291
        %v1293 = vlaneseq
        %v1294 = vshrl.u32 %v1293, 7
        %v1295 = vsub.s32 4, %v1294
        %v1296 = vrot.slane %v1273, %v1295
        %v1297 = vlaneseq
        %v1298 = vshrl.u32 %v1297, 7
        %v1299 = vsub.s32 5, %v1298
        %v1300 = vrot.slane %v1273, %v1299
        %v1301 = vlaneseq
        %v1302 = vshrl.u32 %v1301, 7
        %v1303 = vsub.s32 6, %v1302
        %v1304 = vrot.slane %v1273, %v1303
        %v1305 = vlaneseq
        %v1306 = vshrl.u32 %v1305, 7
        %v1307 = vsub.s32 7, %v1306
        %v1308 = vrot.slane %v1273, %v1307
        %v1309 = vlaneseq
        %v1310 = vshrl.u32 %v1309, 7
        %v1311 = vsub.s32 0, %v1310
        %v1312 = vrot.slane %v1274, %v1311
        %v1313 = vlaneseq
        %v1314 = vshrl.u32 %v1313, 7
        %v1315 = vsub.s32 1, %v1314
        %v1316 = vrot.slane %v1274, %v1315
        %v1317 = vlaneseq
        %v1318 = vshrl.u32 %v1317, 7
        %v1319 = vsub.s32 2, %v1318
        %v1320 = vrot.slane %v1274, %v1319
        %v1321 = vlaneseq
        %v1322 = vshrl.u32 %v1321, 7
        %v1323 = vsub.s32 3, %v1322
        %v1324 = vrot.slane %v1274, %v1323
        %v1721 = vunpack.c.l.b16 %v889
        %v1722 = vunpack.c.h.b16 %v889
        %v1723 = vunpack.c.l.b16 %v890
        %v1724 = vunpack.c.h.b16 %v890
        %v1725 = vunpack.c.l.b16 %v891
        %v1726 = vunpack.c.h.b16 %v891
        %v1727 = vunpack.c.l.b16 %v892
        %v1728 = vunpack.c.h.b16 %v892
        %v1729 = vunpack.c.l.b16 %v893
        %v1730 = vunpack.c.h.b16 %v893
        %v1731 = vunpack.c.l.b16 %v894
        %v1732 = vunpack.c.h.b16 %v894
        %v1733 = vunpack.c.l.b16 %v895
        %v1734 = vunpack.c.h.b16 %v895
        %v1735 = vunpack.c.l.b16 %v896
        %v1736 = vunpack.c.h.b16 %v896
        %v1737 = vunpack.c.l.b16 %v897
        %v1738 = vunpack.c.h.b16 %v897
        %v1739 = vunpack.c.l.b16 %v898
        %v1740 = vunpack.c.h.b16 %v898
        %v1741 = vunpack.c.l.b16 %v899
        %v1742 = vunpack.c.h.b16 %v899
        %v1743 = vunpack.c.l.b16 %v900
        %v1744 = vunpack.c.h.b16 %v900
        %v1745 = vunpack.c.l.b16 %v901
        %v1746 = vunpack.c.h.b16 %v901
        %v1747 = vunpack.c.l.b16 %v902
        %v1748 = vunpack.c.h.b16 %v902
        %v1749 = vunpack.c.l.b16 %v903
        %v1750 = vunpack.c.h.b16 %v903
        %v1751 = vunpack.c.l.b16 %v904
        %v1752 = vunpack.c.h.b16 %v904
        %v1753 = vunpack.c.l.b16 %v905
        %v1754 = vunpack.c.h.b16 %v905
        %v1755 = vunpack.c.l.b16 %v906
        %v1756 = vunpack.c.h.b16 %v906
        %v1757 = vunpack.c.l.b16 %v907
        %v1758 = vunpack.c.h.b16 %v907
        %v1759 = vunpack.c.l.b16 %v908
        %v1760 = vunpack.c.h.b16 %v908
        %v1761 = vunpack.c.l.b16 %v909
        %v1762 = vunpack.c.h.b16 %v909
        %v1763 = vunpack.c.l.b16 %v910
        %v1764 = vunpack.c.h.b16 %v910
        %v1765 = vunpack.c.l.b16 %v911
        %v1766 = vunpack.c.h.b16 %v911
        %v1767 = vunpack.c.l.b16 %v912
        %v1768 = vunpack.c.h.b16 %v912
        %v1769 = vunpack.c.l.b16 %v913
        %v1770 = vunpack.c.h.b16 %v913
        %v1771 = vunpack.c.l.b16 %v914
        %v1772 = vunpack.c.h.b16 %v914
        %v1773 = vunpack.c.l.b16 %v915
        %v1774 = vunpack.c.h.b16 %v915
        %v1775 = vunpack.c.l.b16 %v916
        %v1776 = vunpack.c.h.b16 %v916
        %v1777 = vunpack.c.l.b16 %v917
        %v1778 = vunpack.c.h.b16 %v917
        %v1779 = vunpack.c.l.b16 %v918
        %v1780 = vunpack.c.h.b16 %v918
        %v1781 = vunpack.c.l.b16 %v919
        %v1782 = vunpack.c.h.b16 %v919
        %v1783 = vunpack.c.l.b16 %v920
        %v1784 = vunpack.c.h.b16 %v920
        %v1785 = vunpack.c.l.b16 %v921
        %v1786 = vunpack.c.h.b16 %v921
        %v1787 = vunpack.c.l.b16 %v922
        %v1788 = vunpack.c.h.b16 %v922
        %v1789 = vunpack.c.l.b16 %v923
        %v1790 = vunpack.c.h.b16 %v923
        %v1791 = vunpack.c.l.b16 %v924
        %v1792 = vunpack.c.h.b16 %v924
        %v1793 = vunpack.c.l.b16 %v925
        %v1794 = vunpack.c.h.b16 %v925
        %v1795 = vunpack.c.l.b16 %v926
        %v1796 = vunpack.c.h.b16 %v926
        %v1797 = vunpack.c.l.b16 %v927
        %v1798 = vunpack.c.h.b16 %v927
        %v1799 = vunpack.c.l.b16 %v928
        %v1800 = vunpack.c.h.b16 %v928
        %v1801 = vunpack.c.l.b16 %v929
        %v1802 = vunpack.c.h.b16 %v929
        %v1803 = vunpack.c.l.b16 %v930
        %v1804 = vunpack.c.h.b16 %v930
        %v1805 = vunpack.c.l.b16 %v931
        %v1806 = vunpack.c.h.b16 %v931
        %v1807 = vunpack.c.l.b16 %v932
        %v1808 = vunpack.c.h.b16 %v932
        %v1809 = vunpack.c.l.b16 %v933
        %v1810 = vunpack.c.h.b16 %v933
        %v1811 = vunpack.c.l.b16 %v934
        %v1812 = vunpack.c.h.b16 %v934
        %v1813 = vunpack.c.l.b16 %v935
        %v1814 = vunpack.c.h.b16 %v935
        %v1815 = vunpack.c.l.b16 %v936
        %v1816 = vunpack.c.h.b16 %v936
        %v1817 = vunpack.c.l.b16 %v937
        %v1818 = vunpack.c.h.b16 %v937
        %v1819 = vunpack.c.l.b16 %v938
        %v1820 = vunpack.c.h.b16 %v938
        %v1821 = vunpack.c.l.b16 %v939
        %v1822 = vunpack.c.h.b16 %v939
        %v1823 = vunpack.c.l.b16 %v940
        %v1824 = vunpack.c.h.b16 %v940
        %v1825 = vunpack.c.l.b16 %v941
        %v1826 = vunpack.c.h.b16 %v941
        %v1827 = vunpack.c.l.b16 %v942
        %v1828 = vunpack.c.h.b16 %v942
        %v1829 = vunpack.c.l.b16 %v943
        %v1830 = vunpack.c.h.b16 %v943
        %v1831 = vunpack.c.l.b16 %v944
        %v1832 = vunpack.c.h.b16 %v944
        %v1833 = vunpack.c.l.b16 %v945
        %v1834 = vunpack.c.h.b16 %v945
        %v1835 = vunpack.c.l.b16 %v946
        %v1836 = vunpack.c.h.b16 %v946
        %v1837 = vunpack.c.l.b16 %v947
        %v1838 = vunpack.c.h.b16 %v947
        %v1839 = vunpack.c.l.b16 %v948
        %v1840 = vunpack.c.h.b16 %v948
        %v1841 = vunpack.c.l.b16 %v949
        %v1842 = vunpack.c.h.b16 %v949
        %v1843 = vunpack.c.l.b16 %v950
        %v1844 = vunpack.c.h.b16 %v950
        %v1845 = vunpack.c.l.b16 %v951
        %v1846 = vunpack.c.h.b16 %v951
        %v1847 = vunpack.c.l.b16 %v952
        %v1848 = vunpack.c.h.b16 %v952
        %v1849 = vunpack.c.l.b16 %v953
        %v1850 = vunpack.c.h.b16 %v953
        %v1851 = vunpack.c.l.b16 %v954
        %v1852 = vunpack.c.h.b16 %v954
        %v1853 = vunpack.c.l.b16 %v955
        %v1854 = vunpack.c.h.b16 %v955
        %v1855 = vunpack.c.l.b16 %v956
        %v1856 = vunpack.c.h.b16 %v956
        %v1857 = vunpack.c.l.b16 %v957
        %v1858 = vunpack.c.h.b16 %v957
        %v1859 = vunpack.c.l.b16 %v958
        %v1860 = vunpack.c.h.b16 %v958
        %v1861 = vunpack.c.l.b16 %v959
        %v1862 = vunpack.c.h.b16 %v959
        %v1863 = vunpack.c.l.b16 %v960
        %v1864 = vunpack.c.h.b16 %v960
        %v1865 = vunpack.c.l.b16 %v961
        %v1866 = vunpack.c.h.b16 %v961
        %v1867 = vunpack.c.l.b16 %v962
        %v1868 = vunpack.c.h.b16 %v962
        %v1869 = vunpack.c.l.b16 %v963
        %v1870 = vunpack.c.h.b16 %v963
        %v1871 = vunpack.c.l.b16 %v964
        %v1872 = vunpack.c.h.b16 %v964
        %v1873 = vunpack.c.l.b16 %v965
        %v1874 = vunpack.c.h.b16 %v965
        %v1875 = vunpack.c.l.b16 %v966
        %v1876 = vunpack.c.h.b16 %v966
        %v1877 = vunpack.c.l.b16 %v967
        %v1878 = vunpack.c.h.b16 %v967
        %v1879 = vunpack.c.l.b16 %v968
        %v1880 = vunpack.c.h.b16 %v968
        %v1881 = vunpack.c.l.b16 %v969
        %v1882 = vunpack.c.h.b16 %v969
        %v1883 = vunpack.c.l.b16 %v970
        %v1884 = vunpack.c.h.b16 %v970
        %v1885 = vunpack.c.l.b16 %v971
        %v1886 = vunpack.c.h.b16 %v971
        %v1887 = vunpack.c.l.b16 %v972
        %v1888 = vunpack.c.h.b16 %v972
        %v1889 = vunpack.c.l.b16 %v973
        %v1890 = vunpack.c.h.b16 %v973
        %v1891 = vunpack.c.l.b16 %v974
        %v1892 = vunpack.c.h.b16 %v974
        %v1893 = vunpack.c.l.b16 %v975
        %v1894 = vunpack.c.h.b16 %v975
        %v1895 = vunpack.c.l.b16 %v976
        %v1896 = vunpack.c.h.b16 %v976
        %v1897 = vunpack.c.l.b16 %v977
        %v1898 = vunpack.c.h.b16 %v977
        %v1899 = vunpack.c.l.b16 %v978
        %v1900 = vunpack.c.h.b16 %v978
        %v1901 = vunpack.c.l.b16 %v979
        %v1902 = vunpack.c.h.b16 %v979
        %v1903 = vunpack.c.l.b16 %v980
        %v1904 = vunpack.c.h.b16 %v980
        %v1905 = vunpack.c.l.b16 %v981
        %v1906 = vunpack.c.h.b16 %v981
        %v1907 = vunpack.c.l.b16 %v982
        %v1908 = vunpack.c.h.b16 %v982
        %v1909 = vunpack.c.l.b16 %v983
        %v1910 = vunpack.c.h.b16 %v983
        %v1911 = vunpack.c.l.b16 %v984
        %v1912 = vunpack.c.h.b16 %v984
        %v1913 = vunpack.c.l.b16 %v985
        %v1914 = vunpack.c.h.b16 %v985
        %v1915 = vunpack.c.l.b16 %v986
        %v1916 = vunpack.c.h.b16 %v986
        %v1917 = vunpack.c.l.b16 %v987
        %v1918 = vunpack.c.h.b16 %v987
        %v1919 = vunpack.c.l.b16 %v988
        %v1920 = vunpack.c.h.b16 %v988
        %v1921 = vunpack.c.l.b16 %v989
        %v1922 = vunpack.c.h.b16 %v989
        %v1923 = vunpack.c.l.b16 %v990
        %v1924 = vunpack.c.h.b16 %v990
        %v1925 = vunpack.c.l.b16 %v991
        %v1926 = vunpack.c.h.b16 %v991
        %v1927 = vunpack.c.l.b16 %v992
        %v1928 = vunpack.c.h.b16 %v992
        %v1929 = vunpack.c.l.b16 %v993
        %v1930 = vunpack.c.h.b16 %v993
        %v1931 = vunpack.c.l.b16 %v994
        %v1932 = vunpack.c.h.b16 %v994
        %v1933 = vunpack.c.l.b16 %v995
        %v1934 = vunpack.c.h.b16 %v995
        %v1935 = vunpack.c.l.b16 %v996
        %v1936 = vunpack.c.h.b16 %v996
        %v1937 = vunpack.c.l.b16 %v997
        %v1938 = vunpack.c.h.b16 %v997
        %v1939 = vunpack.c.l.b16 %v998
        %v1940 = vunpack.c.h.b16 %v998
        %v1941 = vunpack.c.l.b16 %v999
        %v1942 = vunpack.c.h.b16 %v999
        %v1943 = vunpack.c.l.b16 %v1000
        %v1944 = vunpack.c.h.b16 %v1000
        %v1945 = vunpack.c.l.b16 %v1001
        %v1946 = vunpack.c.h.b16 %v1001
        %v1947 = vunpack.c.l.b16 %v1002
        %v1948 = vunpack.c.h.b16 %v1002
        %v1949 = vunpack.c.l.b16 %v1003
        %v1950 = vunpack.c.h.b16 %v1003
        %v1951 = vunpack.c.l.b16 %v1004
        %v1952 = vunpack.c.h.b16 %v1004
        %v1953 = vunpack.c.l.b16 %v1005
        %v1954 = vunpack.c.h.b16 %v1005
        %v1955 = vunpack.c.l.b16 %v1006
        %v1956 = vunpack.c.h.b16 %v1006
        %v1957 = vunpack.c.l.b16 %v1007
        %v1958 = vunpack.c.h.b16 %v1007
        %v1959 = vunpack.c.l.b16 %v1008
        %v1960 = vunpack.c.h.b16 %v1008
        %v1961 = vunpack.c.l.b16 %v1009
        %v1962 = vunpack.c.h.b16 %v1009
        %v1963 = vunpack.c.l.b16 %v1010
        %v1964 = vunpack.c.h.b16 %v1010
        %v1965 = vunpack.c.l.b16 %v1011
        %v1966 = vunpack.c.h.b16 %v1011
        %v1967 = vunpack.c.l.b16 %v1012
        %v1968 = vunpack.c.h.b16 %v1012
        %v1969 = vunpack.c.l.b16 %v1013
        %v1970 = vunpack.c.h.b16 %v1013
        %v1971 = vunpack.c.l.b16 %v1014
        %v1972 = vunpack.c.h.b16 %v1014
        %v1973 = vunpack.c.l.b16 %v1015
        %v1974 = vunpack.c.h.b16 %v1015
        %v1975 = vunpack.c.l.b16 %v1016
        %v1976 = vunpack.c.h.b16 %v1016
        %v1977 = vunpack.c.l.b16 %v1017
        %v1978 = vunpack.c.h.b16 %v1017
        %v1979 = vunpack.c.l.b16 %v1018
        %v1980 = vunpack.c.h.b16 %v1018
        %v1981 = vunpack.c.l.b16 %v1019
        %v1982 = vunpack.c.h.b16 %v1019
        %v1983 = vunpack.c.l.b16 %v1020
        %v1984 = vunpack.c.h.b16 %v1020
        %v1985 = vunpack.c.l.b16 %v1021
        %v1986 = vunpack.c.h.b16 %v1021
        %v1987 = vunpack.c.l.b16 %v1022
        %v1988 = vunpack.c.h.b16 %v1022
        %v1989 = vunpack.c.l.b16 %v1023
        %v1990 = vunpack.c.h.b16 %v1023
        %v1991 = vunpack.c.l.b16 %v1024
        %v1992 = vunpack.c.h.b16 %v1024
        %v1993 = vunpack.c.l.b16 %v1025
        %v1994 = vunpack.c.h.b16 %v1025
        %v1995 = vunpack.c.l.b16 %v1026
        %v1996 = vunpack.c.h.b16 %v1026
        %v1997 = vunpack.c.l.b16 %v1027
        %v1998 = vunpack.c.h.b16 %v1027
        %v1999 = vunpack.c.l.b16 %v1028
        %v2000 = vunpack.c.h.b16 %v1028
        %v2001 = vunpack.c.l.b16 %v1029
        %v2002 = vunpack.c.h.b16 %v1029
        %v2003 = vunpack.c.l.b16 %v1030
        %v2004 = vunpack.c.h.b16 %v1030
        %v2005 = vunpack.c.l.b16 %v1031
        %v2006 = vunpack.c.h.b16 %v1031
        %v2007 = vunpack.c.l.b16 %v1032
        %v2008 = vunpack.c.h.b16 %v1032
        %v2009 = vunpack.c.l.b16 %v1033
        %v2010 = vunpack.c.h.b16 %v1033
        %v2011 = vunpack.c.l.b16 %v1034
        %v2012 = vunpack.c.h.b16 %v1034
        %v2013 = vunpack.c.l.b16 %v1035
        %v2014 = vunpack.c.h.b16 %v1035
        %v2015 = vunpack.c.l.b16 %v1036
        %v2016 = vunpack.c.h.b16 %v1036
        %v2017 = vunpack.c.l.b16 %v1037
        %v2018 = vunpack.c.h.b16 %v1037
        %v2019 = vunpack.c.l.b16 %v1038
        %v2020 = vunpack.c.h.b16 %v1038
        %v2021 = vunpack.c.l.b16 %v1039
        %v2022 = vunpack.c.h.b16 %v1039
        %v2023 = vunpack.c.l.b16 %v1040
        %v2024 = vunpack.c.h.b16 %v1040
        %v2025 = vunpack.c.l.b16 %v1041
        %v2026 = vunpack.c.h.b16 %v1041
        %v2027 = vunpack.c.l.b16 %v1042
        %v2028 = vunpack.c.h.b16 %v1042
        %v2029 = vunpack.c.l.b16 %v1043
        %v2030 = vunpack.c.h.b16 %v1043
        %v2031 = vunpack.c.l.b16 %v1044
        %v2032 = vunpack.c.h.b16 %v1044
        %v2033 = vunpack.c.l.b16 %v1045
        %v2034 = vunpack.c.h.b16 %v1045
        %v2035 = vunpack.c.l.b16 %v1046
        %v2036 = vunpack.c.h.b16 %v1046
        %v2037 = vunpack.c.l.b16 %v1047
        %v2038 = vunpack.c.h.b16 %v1047
        %v2039 = vunpack.c.l.b16 %v1048
        %v2040 = vunpack.c.h.b16 %v1048
        %v2041 = vunpack.c.l.b16 %v1049
        %v2042 = vunpack.c.h.b16 %v1049
        %v2043 = vunpack.c.l.b16 %v1050
        %v2044 = vunpack.c.h.b16 %v1050
        %v2045 = vunpack.c.l.b16 %v1051
        %v2046 = vunpack.c.h.b16 %v1051
        %v2047 = vunpack.c.l.b16 %v1052
        %v2048 = vunpack.c.h.b16 %v1052
        %v2049 = vunpack.c.l.b16 %v1053
        %v2050 = vunpack.c.h.b16 %v1053
        %v2051 = vunpack.c.l.b16 %v1054
        %v2052 = vunpack.c.h.b16 %v1054
        %v2053 = vunpack.c.l.b16 %v1055
        %v2054 = vunpack.c.h.b16 %v1055
        %v2055 = vunpack.c.l.b16 %v1056
        %v2056 = vunpack.c.h.b16 %v1056
        %v2057 = vunpack.c.l.b16 %v1057
        %v2058 = vunpack.c.h.b16 %v1057
        %v2059 = vunpack.c.l.b16 %v1058
        %v2060 = vunpack.c.h.b16 %v1058
        %v2061 = vunpack.c.l.b16 %v1059
        %v2062 = vunpack.c.h.b16 %v1059
        %v2063 = vunpack.c.l.b16 %v1060
        %v2064 = vunpack.c.h.b16 %v1060
        %v2065 = vunpack.c.l.b16 %v1061
        %v2066 = vunpack.c.h.b16 %v1061
        %v2067 = vunpack.c.l.b16 %v1062
        %v2068 = vunpack.c.h.b16 %v1062
        %v2069 = vunpack.c.l.b16 %v1063
        %v2070 = vunpack.c.h.b16 %v1063
        %v2071 = vunpack.c.l.b16 %v1064
        %v2072 = vunpack.c.h.b16 %v1064
        %v2073 = vunpack.c.l.b16 %v1065
        %v2074 = vunpack.c.h.b16 %v1065
        %v2075 = vunpack.c.l.b16 %v1066
        %v2076 = vunpack.c.h.b16 %v1066
        %v2077 = vunpack.c.l.b16 %v1067
        %v2078 = vunpack.c.h.b16 %v1067
        %v2079 = vunpack.c.l.b16 %v1068
        %v2080 = vunpack.c.h.b16 %v1068
        %v2081 = vunpack.c.l.b16 %v1069
        %v2082 = vunpack.c.h.b16 %v1069
        %v2083 = vunpack.c.l.b16 %v1070
        %v2084 = vunpack.c.h.b16 %v1070
        %v2085 = vunpack.c.l.b16 %v1071
        %v2086 = vunpack.c.h.b16 %v1071
        %v2087 = vunpack.c.l.b16 %v1072
        %v2088 = vunpack.c.h.b16 %v1072
        %v2089 = vunpack.c.l.b16 %v1073
        %v2090 = vunpack.c.h.b16 %v1073
        %v2091 = vunpack.c.l.b16 %v1074
        %v2092 = vunpack.c.h.b16 %v1074
        %v2093 = vunpack.c.l.b16 %v1075
        %v2094 = vunpack.c.h.b16 %v1075
        %v2095 = vunpack.c.l.b16 %v1076
        %v2096 = vunpack.c.h.b16 %v1076
        %v2097 = vunpack.c.l.b16 %v1077
        %v2098 = vunpack.c.h.b16 %v1077
        %v2099 = vunpack.c.l.b16 %v1078
        %v2100 = vunpack.c.h.b16 %v1078
        %v2101 = vunpack.c.l.b16 %v1079
        %v2102 = vunpack.c.h.b16 %v1079
        %v2103 = vunpack.c.l.b16 %v1080
        %v2104 = vunpack.c.h.b16 %v1080
        %v2105 = vunpack.c.l.b16 %v1081
        %v2106 = vunpack.c.h.b16 %v1081
        %v2107 = vunpack.c.l.b16 %v1082
        %v2108 = vunpack.c.h.b16 %v1082
        %v2109 = vunpack.c.l.b16 %v1083
        %v2110 = vunpack.c.h.b16 %v1083
        %v2111 = vunpack.c.l.b16 %v1084
        %v2112 = vunpack.c.h.b16 %v1084
        %v2113 = vunpack.c.l.b16 %v1085
        %v2114 = vunpack.c.h.b16 %v1085
        %v2115 = vunpack.c.l.b16 %v1086
        %v2116 = vunpack.c.h.b16 %v1086
        %v2117 = vunpack.c.l.b16 %v1087
        %v2118 = vunpack.c.h.b16 %v1087
        %v2119 = vunpack.c.l.b16 %v1088
        %v2120 = vunpack.c.h.b16 %v1088
        %v2121 = vunpack.c.l.b16 %v1089
        %v2122 = vunpack.c.h.b16 %v1089
        %v2123 = vunpack.c.l.b16 %v1090
        %v2124 = vunpack.c.h.b16 %v1090
        %v2125 = vunpack.c.l.b16 %v1091
        %v2126 = vunpack.c.h.b16 %v1091
        %v2127 = vunpack.c.l.b16 %v1092
        %v2128 = vunpack.c.h.b16 %v1092
        %v2129 = vunpack.c.l.b16 %v1093
        %v2130 = vunpack.c.h.b16 %v1093
        %v2131 = vunpack.c.l.b16 %v1094
        %v2132 = vunpack.c.h.b16 %v1094
        %v2133 = vunpack.c.l.b16 %v1095
        %v2134 = vunpack.c.h.b16 %v1095
        %v2135 = vunpack.c.l.b16 %v1096
        %v2136 = vunpack.c.h.b16 %v1096
        %v2137 = vunpack.c.l.b16 %v1097
        %v2138 = vunpack.c.h.b16 %v1097
        %v2139 = vunpack.c.l.b16 %v1098
        %v2140 = vunpack.c.h.b16 %v1098
        %v2141 = vunpack.c.l.b16 %v1099
        %v2142 = vunpack.c.h.b16 %v1099
        %v2143 = vunpack.c.l.b16 %v1100
        %v2144 = vunpack.c.h.b16 %v1100
        %v2145 = vunpack.c.l.b16 %v1101
        %v2146 = vunpack.c.h.b16 %v1101
        %v2147 = vunpack.c.l.b16 %v1102
        %v2148 = vunpack.c.h.b16 %v1102
        %v2149 = vunpack.c.l.b16 %v1103
        %v2150 = vunpack.c.h.b16 %v1103
        %v2151 = vunpack.c.l.b16 %v1104
        %v2152 = vunpack.c.h.b16 %v1104
        %v2153 = vunpack.c.l.b16 %v1105
        %v2154 = vunpack.c.h.b16 %v1105
        %v2155 = vunpack.c.l.b16 %v1106
        %v2156 = vunpack.c.h.b16 %v1106
        %v2157 = vunpack.c.l.b16 %v1107
        %v2158 = vunpack.c.h.b16 %v1107
        %v2159 = vunpack.c.l.b16 %v1108
        %v2160 = vunpack.c.h.b16 %v1108
        %v2161 = vunpack.c.l.b16 %v1109
        %v2162 = vunpack.c.h.b16 %v1109
        %v2163 = vunpack.c.l.b16 %v1110
        %v2164 = vunpack.c.h.b16 %v1110
        %v2165 = vunpack.c.l.b16 %v1111
        %v2166 = vunpack.c.h.b16 %v1111
        %v2167 = vunpack.c.l.b16 %v1112
        %v2168 = vunpack.c.h.b16 %v1112
        %v2169 = vunpack.c.l.b16 %v1113
        %v2170 = vunpack.c.h.b16 %v1113
        %v2171 = vunpack.c.l.b16 %v1114
        %v2172 = vunpack.c.h.b16 %v1114
        %v2173 = vunpack.c.l.b16 %v1115
        %v2174 = vunpack.c.h.b16 %v1115
        %v2175 = vunpack.c.l.b16 %v1116
        %v2176 = vunpack.c.h.b16 %v1116
        %v2177 = vunpack.c.l.b16 %v1117
        %v2178 = vunpack.c.h.b16 %v1117
        %v2179 = vunpack.c.l.b16 %v1118
        %v2180 = vunpack.c.h.b16 %v1118
        %v2181 = vunpack.c.l.b16 %v1119
        %v2182 = vunpack.c.h.b16 %v1119
        %v2183 = vunpack.c.l.b16 %v1120
        %v2184 = vunpack.c.h.b16 %v1120
        %v2185 = vunpack.c.l.b16 %v1121
        %v2186 = vunpack.c.h.b16 %v1121
        %v2187 = vunpack.c.l.b16 %v1122
        %v2188 = vunpack.c.h.b16 %v1122
        %v2189 = vunpack.c.l.b16 %v1123
        %v2190 = vunpack.c.h.b16 %v1123
        %v2191 = vunpack.c.l.b16 %v1124
        %v2192 = vunpack.c.h.b16 %v1124
        %v2193 = vunpack.c.l.b16 %v1125
        %v2194 = vunpack.c.h.b16 %v1125
        %v2195 = vunpack.c.l.b16 %v1126
        %v2196 = vunpack.c.h.b16 %v1126
        %v2197 = vunpack.c.l.b16 %v1127
        %v2198 = vunpack.c.h.b16 %v1127
        %v2199 = vunpack.c.l.b16 %v1128
        %v2200 = vunpack.c.h.b16 %v1128
        %v2201 = vunpack.c.l.b16 %v1129
        %v2202 = vunpack.c.h.b16 %v1129
        %v2203 = vunpack.c.l.b16 %v1130
        %v2204 = vunpack.c.h.b16 %v1130
        %v2205 = vunpack.c.l.b16 %v1131
        %v2206 = vunpack.c.h.b16 %v1131
        %v2207 = vunpack.c.l.b16 %v1132
        %v2208 = vunpack.c.h.b16 %v1132
        %v2209 = vunpack.c.l.b16 %v1133
        %v2210 = vunpack.c.h.b16 %v1133
        %v2211 = vunpack.c.l.b16 %v1134
        %v2212 = vunpack.c.h.b16 %v1134
        %v2213 = vunpack.c.l.b16 %v1135
        %v2214 = vunpack.c.h.b16 %v1135
        %v2215 = vunpack.c.l.b16 %v1136
        %v2216 = vunpack.c.h.b16 %v1136
        %v2217 = vunpack.c.l.b16 %v1137
        %v2218 = vunpack.c.h.b16 %v1137
        %v2219 = vunpack.c.l.b16 %v1138
        %v2220 = vunpack.c.h.b16 %v1138
        %v2221 = vunpack.c.l.b16 %v1139
        %v2222 = vunpack.c.h.b16 %v1139
        %v2223 = vunpack.c.l.b16 %v1140
        %v2224 = vunpack.c.h.b16 %v1140
        %v2225 = vunpack.c.l.b16 %v1141
        %v2226 = vunpack.c.h.b16 %v1141
        %v2227 = vunpack.c.l.b16 %v1142
        %v2228 = vunpack.c.h.b16 %v1142
        %v2229 = vunpack.c.l.b16 %v1143
        %v2230 = vunpack.c.h.b16 %v1143
        %v2231 = vunpack.c.l.b16 %v1144
        %v2232 = vunpack.c.h.b16 %v1144
        %v2233 = vunpack.c.l.b16 %v1145
        %v2234 = vunpack.c.h.b16 %v1145
        %v2235 = vunpack.c.l.b16 %v1146
        %v2236 = vunpack.c.h.b16 %v1146
        %v2237 = vunpack.c.l.b16 %v1147
        %v2238 = vunpack.c.h.b16 %v1147
        %v2239 = vunpack.c.l.b16 %v1148
        %v2240 = vunpack.c.h.b16 %v1148
        %v2241 = vunpack.c.l.b16 %v1149
        %v2242 = vunpack.c.h.b16 %v1149
        %v2243 = vunpack.c.l.b16 %v1150
        %v2244 = vunpack.c.h.b16 %v1150
        %v2245 = vunpack.c.l.b16 %v1151
        %v2246 = vunpack.c.h.b16 %v1151
        %v2247 = vunpack.c.l.b16 %v1152
        %v2248 = vunpack.c.h.b16 %v1152
        %v2249 = vunpack.c.l.b16 %v1153
        %v2250 = vunpack.c.h.b16 %v1153
        %v2251 = vunpack.c.l.b16 %v1154
        %v2252 = vunpack.c.h.b16 %v1154
        %v2253 = vunpack.c.l.b16 %v1155
        %v2254 = vunpack.c.h.b16 %v1155
        %v2255 = vunpack.c.l.b16 %v1156
        %v2256 = vunpack.c.h.b16 %v1156
        %v2257 = vunpack.c.l.b16 %v1157
        %v2258 = vunpack.c.h.b16 %v1157
        %v2259 = vunpack.c.l.b16 %v1158
        %v2260 = vunpack.c.h.b16 %v1158
        %v2261 = vunpack.c.l.b16 %v1159
        %v2262 = vunpack.c.h.b16 %v1159
        %v2263 = vunpack.c.l.b16 %v1160
        %v2264 = vunpack.c.h.b16 %v1160
        %v2265 = vunpack.c.l.b16 %v1161
        %v2266 = vunpack.c.h.b16 %v1161
        %v2267 = vunpack.c.l.b16 %v1162
        %v2268 = vunpack.c.h.b16 %v1162
        %v2269 = vunpack.c.l.b16 %v1163
        %v2270 = vunpack.c.h.b16 %v1163
        %v2271 = vunpack.c.l.b16 %v1164
        %v2272 = vunpack.c.h.b16 %v1164
        %v2273 = vunpack.c.l.b16 %v1165
        %v2274 = vunpack.c.h.b16 %v1165
        %v2275 = vunpack.c.l.b16 %v1166
        %v2276 = vunpack.c.h.b16 %v1166
        %v2277 = vunpack.c.l.b16 %v1167
        %v2278 = vunpack.c.h.b16 %v1167
        %v2279 = vunpack.c.l.b16 %v1168
        %v2280 = vunpack.c.h.b16 %v1168
        %v2281 = vunpack.c.l.b16 %v1169
        %v2282 = vunpack.c.h.b16 %v1169
        %v2283 = vunpack.c.l.b16 %v1170
        %v2284 = vunpack.c.h.b16 %v1170
        %v2285 = vunpack.c.l.b16 %v1171
        %v2286 = vunpack.c.h.b16 %v1171
        %v2287 = vunpack.c.l.b16 %v1172
        %v2288 = vunpack.c.h.b16 %v1172
        %v2289 = vunpack.c.l.b16 %v1173
        %v2290 = vunpack.c.h.b16 %v1173
        %v2291 = vunpack.c.l.b16 %v1174
        %v2292 = vunpack.c.h.b16 %v1174
        %v2293 = vunpack.c.l.b16 %v1175
        %v2294 = vunpack.c.h.b16 %v1175
        %v2295 = vunpack.c.l.b16 %v1176
        %v2296 = vunpack.c.h.b16 %v1176
        %v2297 = vunpack.c.l.b16 %v1177
        %v2298 = vunpack.c.h.b16 %v1177
        %v2299 = vunpack.c.l.b16 %v1178
        %v2300 = vunpack.c.h.b16 %v1178
        %v2301 = vunpack.c.l.b16 %v1179
        %v2302 = vunpack.c.h.b16 %v1179
        %v2303 = vunpack.c.l.b16 %v1180
        %v2304 = vunpack.c.h.b16 %v1180
        %v2305 = vunpack.c.l.b16 %v1181
        %v2306 = vunpack.c.h.b16 %v1181
        %v2307 = vunpack.c.l.b16 %v1182
        %v2308 = vunpack.c.h.b16 %v1182
        %v2309 = vunpack.c.l.b16 %v1183
        %v2310 = vunpack.c.h.b16 %v1183
        %v2311 = vunpack.c.l.b16 %v1184
        %v2312 = vunpack.c.h.b16 %v1184
        %v2313 = vunpack.c.l.b16 %v1185
        %v2314 = vunpack.c.h.b16 %v1185
        %v2315 = vunpack.c.l.b16 %v1186
        %v2316 = vunpack.c.h.b16 %v1186
        %v2317 = vunpack.c.l.b16 %v1187
        %v2318 = vunpack.c.h.b16 %v1187
        %v2319 = vunpack.c.l.b16 %v1188
        %v2320 = vunpack.c.h.b16 %v1188
        %v2321 = vunpack.c.l.b16 %v1189
        %v2322 = vunpack.c.h.b16 %v1189
        %v2323 = vunpack.c.l.b16 %v1190
        %v2324 = vunpack.c.h.b16 %v1190
        %v2325 = vunpack.c.l.b16 %v1191
        %v2326 = vunpack.c.h.b16 %v1191
        %v2327 = vunpack.c.l.b16 %v1192
        %v2328 = vunpack.c.h.b16 %v1192
        %v2329 = vunpack.c.l.b16 %v1193
        %v2330 = vunpack.c.h.b16 %v1193
        %v2331 = vunpack.c.l.b16 %v1194
        %v2332 = vunpack.c.h.b16 %v1194
        %v2333 = vunpack.c.l.b16 %v1195
        %v2334 = vunpack.c.h.b16 %v1195
        %v2335 = vunpack.c.l.b16 %v1196
        %v2336 = vunpack.c.h.b16 %v1196
        %v2337 = vunpack.c.l.b16 %v1197
        %v2338 = vunpack.c.h.b16 %v1197
        %v2339 = vunpack.c.l.b16 %v1198
        %v2340 = vunpack.c.h.b16 %v1198
        %v2341 = vunpack.c.l.b16 %v1199
        %v2342 = vunpack.c.h.b16 %v1199
        %v2343 = vunpack.c.l.b16 %v1200
        %v2344 = vunpack.c.h.b16 %v1200
        %v2345 = vunpack.c.l.b16 %v1201
        %v2346 = vunpack.c.h.b16 %v1201
        %v2347 = vunpack.c.l.b16 %v1202
        %v2348 = vunpack.c.h.b16 %v1202
        %v2349 = vunpack.c.l.b16 %v1203
        %v2350 = vunpack.c.h.b16 %v1203
        %v2351 = vunpack.c.l.b16 %v1204
        %v2352 = vunpack.c.h.b16 %v1204
        %v2353 = vunpack.c.l.b16 %v1205
        %v2354 = vunpack.c.h.b16 %v1205
        %v2355 = vunpack.c.l.b16 %v1206
        %v2356 = vunpack.c.h.b16 %v1206
        %v2357 = vunpack.c.l.b16 %v1207
        %v2358 = vunpack.c.h.b16 %v1207
        %v2359 = vunpack.c.l.b16 %v1208
        %v2360 = vunpack.c.h.b16 %v1208
        %v2361 = vunpack.c.l.b16 %v1209
        %v2362 = vunpack.c.h.b16 %v1209
        %v2363 = vunpack.c.l.b16 %v1210
        %v2364 = vunpack.c.h.b16 %v1210
        %v2365 = vunpack.c.l.b16 %v1211
        %v2366 = vunpack.c.h.b16 %v1211
        %v2367 = vunpack.c.l.b16 %v1212
        %v2368 = vunpack.c.h.b16 %v1212
        %v2369 = vunpack.c.l.b16 %v1213
        %v2370 = vunpack.c.h.b16 %v1213
        %v2371 = vunpack.c.l.b16 %v1214
        %v2372 = vunpack.c.h.b16 %v1214
        %v2373 = vunpack.c.l.b16 %v1215
        %v2374 = vunpack.c.h.b16 %v1215
        %v2375 = vunpack.c.l.b16 %v1216
        %v2376 = vunpack.c.h.b16 %v1216
        %v2377 = vunpack.c.l.b16 %v1217
        %v2378 = vunpack.c.h.b16 %v1217
        %v2379 = vunpack.c.l.b16 %v1218
        %v2380 = vunpack.c.h.b16 %v1218
        %v2381 = vunpack.c.l.b16 %v1219
        %v2382 = vunpack.c.h.b16 %v1219
        %v2383 = vunpack.c.l.b16 %v1220
        %v2384 = vunpack.c.h.b16 %v1220
        %v2385 = vunpack.c.l.b16 %v1221
        %v2386 = vunpack.c.h.b16 %v1221
        %v2387 = vunpack.c.l.b16 %v1222
        %v2388 = vunpack.c.h.b16 %v1222
        %v2389 = vunpack.c.l.b16 %v1223
        %v2390 = vunpack.c.h.b16 %v1223
        %v2391 = vunpack.c.l.b16 %v1224
        %v2392 = vunpack.c.h.b16 %v1224
        %v2393 = vunpack.c.l.b16 %v1225
        %v2394 = vunpack.c.h.b16 %v1225
        %v2395 = vunpack.c.l.b16 %v1226
        %v2396 = vunpack.c.h.b16 %v1226
        %v2397 = vunpack.c.l.b16 %v1227
        %v2398 = vunpack.c.h.b16 %v1227
        %v2399 = vunpack.c.l.b16 %v1228
        %v2400 = vunpack.c.h.b16 %v1228
        %v2401 = vunpack.c.l.b16 %v1229
        %v2402 = vunpack.c.h.b16 %v1229
        %v2403 = vunpack.c.l.b16 %v1230
        %v2404 = vunpack.c.h.b16 %v1230
        %v2405 = vunpack.c.l.b16 %v1231
        %v2406 = vunpack.c.h.b16 %v1231
        %v2407 = vunpack.c.l.b16 %v1232
        %v2408 = vunpack.c.h.b16 %v1232
        %v2409 = vunpack.c.l.b16 %v1233
        %v2410 = vunpack.c.h.b16 %v1233
        %v2411 = vunpack.c.l.b16 %v1234
        %v2412 = vunpack.c.h.b16 %v1234
        %v2413 = vunpack.c.l.b16 %v1235
        %v2414 = vunpack.c.h.b16 %v1235
        %v2415 = vunpack.c.l.b16 %v1236
        %v2416 = vunpack.c.h.b16 %v1236
        %v2417 = vunpack.c.l.b16 %v1237
        %v2418 = vunpack.c.h.b16 %v1237
        %v2419 = vunpack.c.l.b16 %v1238
        %v2420 = vunpack.c.h.b16 %v1238
        %v2421 = vunpack.c.l.b16 %v1239
        %v2422 = vunpack.c.h.b16 %v1239
        %v2423 = vunpack.c.l.b16 %v1240
        %v2424 = vunpack.c.h.b16 %v1240
        %v2425 = vunpack.c.l.b16 %v1241
        %v2426 = vunpack.c.h.b16 %v1241
        %v2427 = vunpack.c.l.b16 %v1242
        %v2428 = vunpack.c.h.b16 %v1242
        %v2429 = vunpack.c.l.b16 %v1243
        %v2430 = vunpack.c.h.b16 %v1243
        %v2431 = vunpack.c.l.b16 %v1244
        %v2432 = vunpack.c.h.b16 %v1244
        %v2433 = vunpack.c.l.b16 %v1245
        %v2434 = vunpack.c.h.b16 %v1245
        %v2435 = vunpack.c.l.b16 %v1246
        %v2436 = vunpack.c.h.b16 %v1246
        %v2437 = vunpack.c.l.b16 %v1247
        %v2438 = vunpack.c.h.b16 %v1247
        %v2439 = vunpack.c.l.b16 %v1248
        %v2440 = vunpack.c.h.b16 %v1248
        %v2441 = vunpack.c.l.b16 %v1249
        %v2442 = vunpack.c.h.b16 %v1249
        %v2443 = vunpack.c.l.b16 %v1250
        %v2444 = vunpack.c.h.b16 %v1250
        %v2445 = vunpack.c.l.b16 %v1251
        %v2446 = vunpack.c.h.b16 %v1251
        %v2447 = vunpack.c.l.b16 %v1252
        %v2448 = vunpack.c.h.b16 %v1252
        %v2449 = vunpack.c.l.b16 %v1253
        %v2450 = vunpack.c.h.b16 %v1253
        %v2451 = vunpack.c.l.b16 %v1254
        %v2452 = vunpack.c.h.b16 %v1254
        %v2453 = vunpack.c.l.b16 %v1255
        %v2454 = vunpack.c.h.b16 %v1255
        %v2455 = vunpack.c.l.b16 %v1256
        %v2456 = vunpack.c.h.b16 %v1256
        %v2457 = vunpack.c.l.b16 %v1257
        %v2458 = vunpack.c.h.b16 %v1257
        %v2459 = vunpack.c.l.b16 %v1258
        %v2460 = vunpack.c.h.b16 %v1258
        %v2461 = vunpack.c.l.b16 %v1259
        %v2462 = vunpack.c.h.b16 %v1259
        %v2463 = vunpack.c.l.b16 %v1260
        %v2464 = vunpack.c.h.b16 %v1260
        %v2465 = vunpack.c.l.b16 %v1261
        %v2466 = vunpack.c.h.b16 %v1261
        %v2467 = vunpack.c.l.b16 %v1262
        %v2468 = vunpack.c.h.b16 %v1262
        %v2469 = vunpack.c.l.b16 %v1263
        %v2470 = vunpack.c.h.b16 %v1263
        %v2471 = vunpack.c.l.b16 %v1264
        %v2472 = vunpack.c.h.b16 %v1264
        %v2473 = vunpack.c.l.b16 %v1265
        %v2474 = vunpack.c.h.b16 %v1265
        %v2475 = vunpack.c.l.b16 %v1266
        %v2476 = vunpack.c.h.b16 %v1266
        %v2477 = vunpack.c.l.b16 %v1267
        %v2478 = vunpack.c.h.b16 %v1267
        %v2479 = vunpack.c.l.b16 %v1268
        %v2480 = vunpack.c.h.b16 %v1268
        %v2481 = vunpack.c.l.b16 %v1269
        %v2482 = vunpack.c.h.b16 %v1269
        %v2483 = vunpack.c.l.b16 %v1270
        %v2484 = vunpack.c.h.b16 %v1270
        %v2485 = vunpack.c.l.b16 %v1271
        %v2486 = vunpack.c.h.b16 %v1271
        %v2487 = vunpack.c.l.b16 %v1272
        %v2488 = vunpack.c.h.b16 %v1272
        %v2489 = vpack.c.b16 %v1733, %v1721
        %v2490 = vpack.c.b16 %v1734, %v1722
        %v2491 = vpack.c.b16 %v1735, %v1723
        %v2492 = vpack.c.b16 %v1736, %v1724
        %v2493 = vpack.c.b16 %v1737, %v1725
        %v2494 = vpack.c.b16 %v1738, %v1726
        %v2495 = vpack.c.b16 %v1739, %v1727
        %v2496 = vpack.c.b16 %v1740, %v1728
        %v2497 = vpack.c.b16 %v1741, %v1729
        %v2498 = vpack.c.b16 %v1742, %v1730
        %v2499 = vpack.c.b16 %v1743, %v1731
        %v2500 = vpack.c.b16 %v1744, %v1732
        %v2501 = vpack.c.b16 %v1757, %v1745
        %v2502 = vpack.c.b16 %v1758, %v1746
        %v2503 = vpack.c.b16 %v1759, %v1747
        %v2504 = vpack.c.b16 %v1760, %v1748
        %v2505 = vpack.c.b16 %v1761, %v1749
        %v2506 = vpack.c.b16 %v1762, %v1750
        %v2507 = vpack.c.b16 %v1763, %v1751
        %v2508 = vpack.c.b16 %v1764, %v1752
        %v2509 = vpack.c.b16 %v1765, %v1753
        %v2510 = vpack.c.b16 %v1766, %v1754
        %v2511 = vpack.c.b16 %v1767, %v1755
        %v2512 = vpack.c.b16 %v1768, %v1756
        %v2513 = vpack.c.b16 %v1781, %v1769
        %v2514 = vpack.c.b16 %v1782, %v1770
        %v2515 = vpack.c.b16 %v1783, %v1771
        %v2516 = vpack.c.b16 %v1784, %v1772
        %v2517 = vpack.c.b16 %v1785, %v1773
        %v2518 = vpack.c.b16 %v1786, %v1774
        %v2519 = vpack.c.b16 %v1787, %v1775
        %v2520 = vpack.c.b16 %v1788, %v1776
        %v2521 = vpack.c.b16 %v1789, %v1777
        %v2522 = vpack.c.b16 %v1790, %v1778
        %v2523 = vpack.c.b16 %v1791, %v1779
        %v2524 = vpack.c.b16 %v1792, %v1780
        %v2525 = vpack.c.b16 %v1805, %v1793
        %v2526 = vpack.c.b16 %v1806, %v1794
        %v2527 = vpack.c.b16 %v1807, %v1795
        %v2528 = vpack.c.b16 %v1808, %v1796
        %v2529 = vpack.c.b16 %v1809, %v1797
        %v2530 = vpack.c.b16 %v1810, %v1798
        %v2531 = vpack.c.b16 %v1811, %v1799
        %v2532 = vpack.c.b16 %v1812, %v1800
        %v2533 = vpack.c.b16 %v1813, %v1801
        %v2534 = vpack.c.b16 %v1814, %v1802
        %v2535 = vpack.c.b16 %v1815, %v1803
        %v2536 = vpack.c.b16 %v1816, %v1804
        %v2537 = vpack.c.b16 %v1829, %v1817
        %v2538 = vpack.c.b16 %v1830, %v1818
        %v2539 = vpack.c.b16 %v1831, %v1819
        %v2540 = vpack.c.b16 %v1832, %v1820
        %v2541 = vpack.c.b16 %v1833, %v1821
        %v2542 = vpack.c.b16 %v1834, %v1822
        %v2543 = vpack.c.b16 %v1835, %v1823
        %v2544 = vpack.c.b16 %v1836, %v1824
        %v2545 = vpack.c.b16 %v1837, %v1825
        %v2546 = vpack.c.b16 %v1838, %v1826
        %v2547 = vpack.c.b16 %v1839, %v1827
        %v2548 = vpack.c.b16 %v1840, %v1828
        %v2549 = vpack.c.b16 %v1853, %v1841
        %v2550 = vpack.c.b16 %v1854, %v1842
        %v2551 = vpack.c.b16 %v1855, %v1843
        %v2552 = vpack.c.b16 %v1856, %v1844
        %v2553 = vpack.c.b16 %v1857, %v1845
        %v2554 = vpack.c.b16 %v1858, %v1846
        %v2555 = vpack.c.b16 %v1859, %v1847
        %v2556 = vpack.c.b16 %v1860, %v1848
        %v2557 = vpack.c.b16 %v1861, %v1849
        %v2558 = vpack.c.b16 %v1862, %v1850
        %v2559 = vpack.c.b16 %v1863, %v1851
        %v2560 = vpack.c.b16 %v1864, %v1852
        %v2561 = vpack.c.b16 %v1877, %v1865
        %v2562 = vpack.c.b16 %v1878, %v1866
        %v2563 = vpack.c.b16 %v1879, %v1867
        %v2564 = vpack.c.b16 %v1880, %v1868
        %v2565 = vpack.c.b16 %v1881, %v1869
        %v2566 = vpack.c.b16 %v1882, %v1870
        %v2567 = vpack.c.b16 %v1883, %v1871
        %v2568 = vpack.c.b16 %v1884, %v1872
        %v2569 = vpack.c.b16 %v1885, %v1873
        %v2570 = vpack.c.b16 %v1886, %v1874
        %v2571 = vpack.c.b16 %v1887, %v1875
        %v2572 = vpack.c.b16 %v1888, %v1876
        %v2573 = vpack.c.b16 %v1901, %v1889
        %v2574 = vpack.c.b16 %v1902, %v1890
        %v2575 = vpack.c.b16 %v1903, %v1891
        %v2576 = vpack.c.b16 %v1904, %v1892
        %v2577 = vpack.c.b16 %v1905, %v1893
        %v2578 = vpack.c.b16 %v1906, %v1894
        %v2579 = vpack.c.b16 %v1907, %v1895
        %v2580 = vpack.c.b16 %v1908, %v1896
        %v2581 = vpack.c.b16 %v1909, %v1897
        %v2582 = vpack.c.b16 %v1910, %v1898
        %v2583 = vpack.c.b16 %v1911, %v1899
        %v2584 = vpack.c.b16 %v1912, %v1900
        %v2585 = vpack.c.b16 %v1925, %v1913
        %v2586 = vpack.c.b16 %v1926, %v1914
        %v2587 = vpack.c.b16 %v1927, %v1915
        %v2588 = vpack.c.b16 %v1928, %v1916
        %v2589 = vpack.c.b16 %v1929, %v1917
        %v2590 = vpack.c.b16 %v1930, %v1918
        %v2591 = vpack.c.b16 %v1931, %v1919
        %v2592 = vpack.c.b16 %v1932, %v1920
        %v2593 = vpack.c.b16 %v1933, %v1921
        %v2594 = vpack.c.b16 %v1934, %v1922
        %v2595 = vpack.c.b16 %v1935, %v1923
        %v2596 = vpack.c.b16 %v1936, %v1924
        %v2597 = vpack.c.b16 %v1949, %v1937
        %v2598 = vpack.c.b16 %v1950, %v1938
        %v2599 = vpack.c.b16 %v1951, %v1939
        %v2600 = vpack.c.b16 %v1952, %v1940
        %v2601 = vpack.c.b16 %v1953, %v1941
        %v2602 = vpack.c.b16 %v1954, %v1942
        %v2603 = vpack.c.b16 %v1955, %v1943
        %v2604 = vpack.c.b16 %v1956, %v1944
        %v2605 = vpack.c.b16 %v1957, %v1945
        %v2606 = vpack.c.b16 %v1958, %v1946
        %v2607 = vpack.c.b16 %v1959, %v1947
        %v2608 = vpack.c.b16 %v1960, %v1948
        %v2609 = vpack.c.b16 %v1973, %v1961
        %v2610 = vpack.c.b16 %v1974, %v1962
        %v2611 = vpack.c.b16 %v1975, %v1963
        %v2612 = vpack.c.b16 %v1976, %v1964
        %v2613 = vpack.c.b16 %v1977, %v1965
        %v2614 = vpack.c.b16 %v1978, %v1966
        %v2615 = vpack.c.b16 %v1979, %v1967
        %v2616 = vpack.c.b16 %v1980, %v1968
        %v2617 = vpack.c.b16 %v1981, %v1969
        %v2618 = vpack.c.b16 %v1982, %v1970
        %v2619 = vpack.c.b16 %v1983, %v1971
        %v2620 = vpack.c.b16 %v1984, %v1972
        %v2621 = vpack.c.b16 %v1997, %v1985
        %v2622 = vpack.c.b16 %v1998, %v1986
        %v2623 = vpack.c.b16 %v1999, %v1987
        %v2624 = vpack.c.b16 %v2000, %v1988
        %v2625 = vpack.c.b16 %v2001, %v1989
        %v2626 = vpack.c.b16 %v2002, %v1990
        %v2627 = vpack.c.b16 %v2003, %v1991
        %v2628 = vpack.c.b16 %v2004, %v1992
        %v2629 = vpack.c.b16 %v2005, %v1993
        %v2630 = vpack.c.b16 %v2006, %v1994
        %v2631 = vpack.c.b16 %v2007, %v1995
        %v2632 = vpack.c.b16 %v2008, %v1996
        %v2633 = vpack.c.b16 %v2021, %v2009
        %v2634 = vpack.c.b16 %v2022, %v2010
        %v2635 = vpack.c.b16 %v2023, %v2011
        %v2636 = vpack.c.b16 %v2024, %v2012
        %v2637 = vpack.c.b16 %v2025, %v2013
        %v2638 = vpack.c.b16 %v2026, %v2014
        %v2639 = vpack.c.b16 %v2027, %v2015
        %v2640 = vpack.c.b16 %v2028, %v2016
        %v2641 = vpack.c.b16 %v2029, %v2017
        %v2642 = vpack.c.b16 %v2030, %v2018
        %v2643 = vpack.c.b16 %v2031, %v2019
        %v2644 = vpack.c.b16 %v2032, %v2020
        %v2645 = vpack.c.b16 %v2045, %v2033
        %v2646 = vpack.c.b16 %v2046, %v2034
        %v2647 = vpack.c.b16 %v2047, %v2035
        %v2648 = vpack.c.b16 %v2048, %v2036
        %v2649 = vpack.c.b16 %v2049, %v2037
        %v2650 = vpack.c.b16 %v2050, %v2038
        %v2651 = vpack.c.b16 %v2051, %v2039
        %v2652 = vpack.c.b16 %v2052, %v2040
        %v2653 = vpack.c.b16 %v2053, %v2041
        %v2654 = vpack.c.b16 %v2054, %v2042
        %v2655 = vpack.c.b16 %v2055, %v2043
        %v2656 = vpack.c.b16 %v2056, %v2044
        %v2657 = vpack.c.b16 %v2069, %v2057
        %v2658 = vpack.c.b16 %v2070, %v2058
        %v2659 = vpack.c.b16 %v2071, %v2059
        %v2660 = vpack.c.b16 %v2072, %v2060
        %v2661 = vpack.c.b16 %v2073, %v2061
        %v2662 = vpack.c.b16 %v2074, %v2062
        %v2663 = vpack.c.b16 %v2075, %v2063
        %v2664 = vpack.c.b16 %v2076, %v2064
        %v2665 = vpack.c.b16 %v2077, %v2065
        %v2666 = vpack.c.b16 %v2078, %v2066
        %v2667 = vpack.c.b16 %v2079, %v2067
        %v2668 = vpack.c.b16 %v2080, %v2068
        %v2669 = vpack.c.b16 %v2093, %v2081
        %v2670 = vpack.c.b16 %v2094, %v2082
        %v2671 = vpack.c.b16 %v2095, %v2083
        %v2672 = vpack.c.b16 %v2096, %v2084
        %v2673 = vpack.c.b16 %v2097, %v2085
        %v2674 = vpack.c.b16 %v2098, %v2086
        %v2675 = vpack.c.b16 %v2099, %v2087
        %v2676 = vpack.c.b16 %v2100, %v2088
        %v2677 = vpack.c.b16 %v2101, %v2089
        %v2678 = vpack.c.b16 %v2102, %v2090
        %v2679 = vpack.c.b16 %v2103, %v2091
        %v2680 = vpack.c.b16 %v2104, %v2092
        %v2681 = vpack.c.b16 %v2117, %v2105
        %v2682 = vpack.c.b16 %v2118, %v2106
        %v2683 = vpack.c.b16 %v2119, %v2107
        %v2684 = vpack.c.b16 %v2120, %v2108
        %v2685 = vpack.c.b16 %v2121, %v2109
        %v2686 = vpack.c.b16 %v2122, %v2110
        %v2687 = vpack.c.b16 %v2123, %v2111
        %v2688 = vpack.c.b16 %v2124, %v2112
        %v2689 = vpack.c.b16 %v2125, %v2113
        %v2690 = vpack.c.b16 %v2126, %v2114
        %v2691 = vpack.c.b16 %v2127, %v2115
        %v2692 = vpack.c.b16 %v2128, %v2116
        %v2693 = vpack.c.b16 %v2141, %v2129
        %v2694 = vpack.c.b16 %v2142, %v2130
        %v2695 = vpack.c.b16 %v2143, %v2131
        %v2696 = vpack.c.b16 %v2144, %v2132
        %v2697 = vpack.c.b16 %v2145, %v2133
        %v2698 = vpack.c.b16 %v2146, %v2134
        %v2699 = vpack.c.b16 %v2147, %v2135
        %v2700 = vpack.c.b16 %v2148, %v2136
        %v2701 = vpack.c.b16 %v2149, %v2137
        %v2702 = vpack.c.b16 %v2150, %v2138
        %v2703 = vpack.c.b16 %v2151, %v2139
        %v2704 = vpack.c.b16 %v2152, %v2140
        %v2705 = vpack.c.b16 %v2165, %v2153
        %v2706 = vpack.c.b16 %v2166, %v2154
        %v2707 = vpack.c.b16 %v2167, %v2155
        %v2708 = vpack.c.b16 %v2168, %v2156
        %v2709 = vpack.c.b16 %v2169, %v2157
        %v2710 = vpack.c.b16 %v2170, %v2158
        %v2711 = vpack.c.b16 %v2171, %v2159
        %v2712 = vpack.c.b16 %v2172, %v2160
        %v2713 = vpack.c.b16 %v2173, %v2161
        %v2714 = vpack.c.b16 %v2174, %v2162
        %v2715 = vpack.c.b16 %v2175, %v2163
        %v2716 = vpack.c.b16 %v2176, %v2164
        %v2717 = vpack.c.b16 %v2189, %v2177
        %v2718 = vpack.c.b16 %v2190, %v2178
        %v2719 = vpack.c.b16 %v2191, %v2179
        %v2720 = vpack.c.b16 %v2192, %v2180
        %v2721 = vpack.c.b16 %v2193, %v2181
        %v2722 = vpack.c.b16 %v2194, %v2182
        %v2723 = vpack.c.b16 %v2195, %v2183
        %v2724 = vpack.c.b16 %v2196, %v2184
        %v2725 = vpack.c.b16 %v2197, %v2185
        %v2726 = vpack.c.b16 %v2198, %v2186
        %v2727 = vpack.c.b16 %v2199, %v2187
        %v2728 = vpack.c.b16 %v2200, %v2188
        %v2729 = vpack.c.b16 %v2213, %v2201
        %v2730 = vpack.c.b16 %v2214, %v2202
        %v2731 = vpack.c.b16 %v2215, %v2203
        %v2732 = vpack.c.b16 %v2216, %v2204
        %v2733 = vpack.c.b16 %v2217, %v2205
        %v2734 = vpack.c.b16 %v2218, %v2206
        %v2735 = vpack.c.b16 %v2219, %v2207
        %v2736 = vpack.c.b16 %v2220, %v2208
        %v2737 = vpack.c.b16 %v2221, %v2209
        %v2738 = vpack.c.b16 %v2222, %v2210
        %v2739 = vpack.c.b16 %v2223, %v2211
        %v2740 = vpack.c.b16 %v2224, %v2212
        %v2741 = vpack.c.b16 %v2237, %v2225
        %v2742 = vpack.c.b16 %v2238, %v2226
        %v2743 = vpack.c.b16 %v2239, %v2227
        %v2744 = vpack.c.b16 %v2240, %v2228
        %v2745 = vpack.c.b16 %v2241, %v2229
        %v2746 = vpack.c.b16 %v2242, %v2230
        %v2747 = vpack.c.b16 %v2243, %v2231
        %v2748 = vpack.c.b16 %v2244, %v2232
        %v2749 = vpack.c.b16 %v2245, %v2233
        %v2750 = vpack.c.b16 %v2246, %v2234
        %v2751 = vpack.c.b16 %v2247, %v2235
        %v2752 = vpack.c.b16 %v2248, %v2236
        %v2753 = vpack.c.b16 %v2261, %v2249
        %v2754 = vpack.c.b16 %v2262, %v2250
        %v2755 = vpack.c.b16 %v2263, %v2251
        %v2756 = vpack.c.b16 %v2264, %v2252
        %v2757 = vpack.c.b16 %v2265, %v2253
        %v2758 = vpack.c.b16 %v2266, %v2254
        %v2759 = vpack.c.b16 %v2267, %v2255
        %v2760 = vpack.c.b16 %v2268, %v2256
        %v2761 = vpack.c.b16 %v2269, %v2257
        %v2762 = vpack.c.b16 %v2270, %v2258
        %v2763 = vpack.c.b16 %v2271, %v2259
        %v2764 = vpack.c.b16 %v2272, %v2260
        %v2765 = vpack.c.b16 %v2285, %v2273
        %v2766 = vpack.c.b16 %v2286, %v2274
        %v2767 = vpack.c.b16 %v2287, %v2275
        %v2768 = vpack.c.b16 %v2288, %v2276
        %v2769 = vpack.c.b16 %v2289, %v2277
        %v2770 = vpack.c.b16 %v2290, %v2278
        %v2771 = vpack.c.b16 %v2291, %v2279
        %v2772 = vpack.c.b16 %v2292, %v2280
        %v2773 = vpack.c.b16 %v2293, %v2281
        %v2774 = vpack.c.b16 %v2294, %v2282
        %v2775 = vpack.c.b16 %v2295, %v2283
        %v2776 = vpack.c.b16 %v2296, %v2284
        %v2777 = vpack.c.b16 %v2309, %v2297
        %v2778 = vpack.c.b16 %v2310, %v2298
        %v2779 = vpack.c.b16 %v2311, %v2299
        %v2780 = vpack.c.b16 %v2312, %v2300
        %v2781 = vpack.c.b16 %v2313, %v2301
        %v2782 = vpack.c.b16 %v2314, %v2302
        %v2783 = vpack.c.b16 %v2315, %v2303
        %v2784 = vpack.c.b16 %v2316, %v2304
        %v2785 = vpack.c.b16 %v2317, %v2305
        %v2786 = vpack.c.b16 %v2318, %v2306
        %v2787 = vpack.c.b16 %v2319, %v2307
        %v2788 = vpack.c.b16 %v2320, %v2308
        %v2789 = vpack.c.b16 %v2333, %v2321
        %v2790 = vpack.c.b16 %v2334, %v2322
        %v2791 = vpack.c.b16 %v2335, %v2323
        %v2792 = vpack.c.b16 %v2336, %v2324
        %v2793 = vpack.c.b16 %v2337, %v2325
        %v2794 = vpack.c.b16 %v2338, %v2326
        %v2795 = vpack.c.b16 %v2339, %v2327
        %v2796 = vpack.c.b16 %v2340, %v2328
        %v2797 = vpack.c.b16 %v2341, %v2329
        %v2798 = vpack.c.b16 %v2342, %v2330
        %v2799 = vpack.c.b16 %v2343, %v2331
        %v2800 = vpack.c.b16 %v2344, %v2332
        %v2801 = vpack.c.b16 %v2357, %v2345
        %v2802 = vpack.c.b16 %v2358, %v2346
        %v2803 = vpack.c.b16 %v2359, %v2347
        %v2804 = vpack.c.b16 %v2360, %v2348
        %v2805 = vpack.c.b16 %v2361, %v2349
        %v2806 = vpack.c.b16 %v2362, %v2350
        %v2807 = vpack.c.b16 %v2363, %v2351
        %v2808 = vpack.c.b16 %v2364, %v2352
        %v2809 = vpack.c.b16 %v2365, %v2353
        %v2810 = vpack.c.b16 %v2366, %v2354
        %v2811 = vpack.c.b16 %v2367, %v2355
        %v2812 = vpack.c.b16 %v2368, %v2356
        %v2813 = vpack.c.b16 %v2381, %v2369
        %v2814 = vpack.c.b16 %v2382, %v2370
        %v2815 = vpack.c.b16 %v2383, %v2371
        %v2816 = vpack.c.b16 %v2384, %v2372
        %v2817 = vpack.c.b16 %v2385, %v2373
        %v2818 = vpack.c.b16 %v2386, %v2374
        %v2819 = vpack.c.b16 %v2387, %v2375
        %v2820 = vpack.c.b16 %v2388, %v2376
        %v2821 = vpack.c.b16 %v2389, %v2377
        %v2822 = vpack.c.b16 %v2390, %v2378
        %v2823 = vpack.c.b16 %v2391, %v2379
        %v2824 = vpack.c.b16 %v2392, %v2380
        %v2825 = vpack.c.b16 %v2405, %v2393
        %v2826 = vpack.c.b16 %v2406, %v2394
        %v2827 = vpack.c.b16 %v2407, %v2395
        %v2828 = vpack.c.b16 %v2408, %v2396
        %v2829 = vpack.c.b16 %v2409, %v2397
        %v2830 = vpack.c.b16 %v2410, %v2398
        %v2831 = vpack.c.b16 %v2411, %v2399
        %v2832 = vpack.c.b16 %v2412, %v2400
        %v2833 = vpack.c.b16 %v2413, %v2401
        %v2834 = vpack.c.b16 %v2414, %v2402
        %v2835 = vpack.c.b16 %v2415, %v2403
        %v2836 = vpack.c.b16 %v2416, %v2404
        %v2837 = vpack.c.b16 %v2429, %v2417
        %v2838 = vpack.c.b16 %v2430, %v2418
        %v2839 = vpack.c.b16 %v2431, %v2419
        %v2840 = vpack.c.b16 %v2432, %v2420
        %v2841 = vpack.c.b16 %v2433, %v2421
        %v2842 = vpack.c.b16 %v2434, %v2422
        %v2843 = vpack.c.b16 %v2435, %v2423
        %v2844 = vpack.c.b16 %v2436, %v2424
        %v2845 = vpack.c.b16 %v2437, %v2425
        %v2846 = vpack.c.b16 %v2438, %v2426
        %v2847 = vpack.c.b16 %v2439, %v2427
        %v2848 = vpack.c.b16 %v2440, %v2428
        %v2849 = vpack.c.b16 %v2453, %v2441
        %v2850 = vpack.c.b16 %v2454, %v2442
        %v2851 = vpack.c.b16 %v2455, %v2443
        %v2852 = vpack.c.b16 %v2456, %v2444
        %v2853 = vpack.c.b16 %v2457, %v2445
        %v2854 = vpack.c.b16 %v2458, %v2446
        %v2855 = vpack.c.b16 %v2459, %v2447
        %v2856 = vpack.c.b16 %v2460, %v2448
        %v2857 = vpack.c.b16 %v2461, %v2449
        %v2858 = vpack.c.b16 %v2462, %v2450
        %v2859 = vpack.c.b16 %v2463, %v2451
        %v2860 = vpack.c.b16 %v2464, %v2452
        %v2861 = vpack.c.b16 %v2477, %v2465
        %v2862 = vpack.c.b16 %v2478, %v2466
        %v2863 = vpack.c.b16 %v2479, %v2467
        %v2864 = vpack.c.b16 %v2480, %v2468
        %v2865 = vpack.c.b16 %v2481, %v2469
        %v2866 = vpack.c.b16 %v2482, %v2470
        %v2867 = vpack.c.b16 %v2483, %v2471
        %v2868 = vpack.c.b16 %v2484, %v2472
        %v2869 = vpack.c.b16 %v2485, %v2473
        %v2870 = vpack.c.b16 %v2486, %v2474
        %v2871 = vpack.c.b16 %v2487, %v2475
        %v2872 = vpack.c.b16 %v2488, %v2476
        %3257 = vmatprep.subr.bf16.mxu0 %v2574
        %3258 = vmatpush1.bf16.msra.mxu0 %v2573
        %3259 = vmatprep.subr.bf16.mxu0 %v2562
        %3260 = vmatpush1.bf16.msra.mxu0 %v2561
        %3261 = vmatprep.subr.bf16.mxu0 %v2550
        %3262 = vmatpush1.bf16.msra.mxu0 %v2549
        %3263 = vmatprep.subr.bf16.mxu0 %v2538
        %3264 = vmatpush1.bf16.msra.mxu0 %v2537
        %3265 = vmatprep.subr.bf16.mxu0 %v2526
        %3266 = vmatpush1.bf16.msra.mxu0 %v2525
        %3267 = vmatprep.subr.bf16.mxu0 %v2514
        %3268 = vmatpush1.bf16.msra.mxu0 %v2513
        %3269 = vmatprep.subr.bf16.mxu0 %v2502
        %3270 = vmatpush1.bf16.msra.mxu0 %v2501
        %3271 = vmatprep.subr.bf16.mxu0 %v2490
        %3272 = vmatpush1.bf16.msra.mxu0 %v2489
        %3273 = vmatprep.subr.bf16.mxu0 %v2670
        %3274 = vmatpush2.bf16.msra.mxu0 %v2669
        %3275 = vmatprep.subr.bf16.mxu0 %v2658
        %3276 = vmatpush2.bf16.msra.mxu0 %v2657
        %3277 = vmatprep.subr.bf16.mxu0 %v2646
        %3278 = vmatpush2.bf16.msra.mxu0 %v2645
        %3279 = vmatprep.subr.bf16.mxu0 %v2634
        %3280 = vmatpush2.bf16.msra.mxu0 %v2633
        %3281 = vmatprep.subr.bf16.mxu0 %v2622
        %3282 = vmatpush2.bf16.msra.mxu0 %v2621
        %3283 = vmatprep.subr.bf16.mxu0 %v2610
        %3284 = vmatpush2.bf16.msra.mxu0 %v2609
        %3285 = vmatprep.subr.bf16.mxu0 %v2598
        %3286 = vmatpush2.bf16.msra.mxu0 %v2597
        %3287 = vmatprep.subr.bf16.mxu0 %v2586
        %3288 = vmatpush2.bf16.msra.mxu0 %v2585
        %3289 = vmatprep.mubr.bf16.mxu0 %v886
        %3290 = vmatmul.mubr.bf16.gmra.mxu0 %v885
        %v3291 = vpop.f32.mrf.mxu0
        %v3292 = vadd.f32 %v1280, %v3291
        %v3293 = vpop.f32.mrf.mxu0
        %v3294 = vadd.f32 %v1284, %v3293
        %v3295 = vpop.f32.mrf.mxu0
        %v3296 = vadd.f32 %v1280, %v3295
        %v3297 = vpop.f32.mrf.mxu0
        %v3298 = vadd.f32 %v1284, %v3297
        %3299 = vdwg.mxu0
        %3300 = vmatprep.subr.bf16.mxu0 %v2766
        %3301 = vmatpush1.bf16.msra.mxu0 %v2765
        %3302 = vmatprep.subr.bf16.mxu0 %v2754
        %3303 = vmatpush1.bf16.msra.mxu0 %v2753
        %3304 = vmatprep.subr.bf16.mxu0 %v2742
        %3305 = vmatpush1.bf16.msra.mxu0 %v2741
        %3306 = vmatprep.subr.bf16.mxu0 %v2730
        %3307 = vmatpush1.bf16.msra.mxu0 %v2729
        %3308 = vmatprep.subr.bf16.mxu0 %v2718
        %3309 = vmatpush1.bf16.msra.mxu0 %v2717
        %3310 = vmatprep.subr.bf16.mxu0 %v2706
        %3311 = vmatpush1.bf16.msra.mxu0 %v2705
        %3312 = vmatprep.subr.bf16.mxu0 %v2694
        %3313 = vmatpush1.bf16.msra.mxu0 %v2693
        %3314 = vmatprep.subr.bf16.mxu0 %v2682
        %3315 = vmatpush1.bf16.msra.mxu0 %v2681
        %3316 = vmatprep.subr.bf16.mxu0 %v2862
        %3317 = vmatpush2.bf16.msra.mxu0 %v2861
        %3318 = vmatprep.subr.bf16.mxu0 %v2850
        %3319 = vmatpush2.bf16.msra.mxu0 %v2849
        %3320 = vmatprep.subr.bf16.mxu0 %v2838
        %3321 = vmatpush2.bf16.msra.mxu0 %v2837
        %3322 = vmatprep.subr.bf16.mxu0 %v2826
        %3323 = vmatpush2.bf16.msra.mxu0 %v2825
        %3324 = vmatprep.subr.bf16.mxu0 %v2814
        %3325 = vmatpush2.bf16.msra.mxu0 %v2813
        %3326 = vmatprep.subr.bf16.mxu0 %v2802
        %3327 = vmatpush2.bf16.msra.mxu0 %v2801
        %3328 = vmatprep.subr.bf16.mxu0 %v2790
        %3329 = vmatpush2.bf16.msra.mxu0 %v2789
        %3330 = vmatprep.subr.bf16.mxu0 %v2778
        %3331 = vmatpush2.bf16.msra.mxu0 %v2777
        %3332 = vmatprep.mubr.bf16.mxu0 %v888
        %3333 = vmatmul.mubr.bf16.gmra.mxu0 %v887
        %v3334 = vpop.f32.mrf.mxu0
        %v3335 = vadd.f32 %v3292, %v3334
        %v3336 = vpop.f32.mrf.mxu0
        %v3337 = vadd.f32 %v3294, %v3336
        %v3338 = vpop.f32.mrf.mxu0
        %v3339 = vadd.f32 %v3296, %v3338
        %v3340 = vpop.f32.mrf.mxu0
        %v3341 = vadd.f32 %v3298, %v3340
        %3342 = vdwg.mxu0
        %3343 = vmatprep.subr.bf16.mxu0 %v2576
        %3344 = vmatpush1.bf16.msra.mxu0 %v2575
        %3345 = vmatprep.subr.bf16.mxu0 %v2564
        %3346 = vmatpush1.bf16.msra.mxu0 %v2563
        %3347 = vmatprep.subr.bf16.mxu0 %v2552
        %3348 = vmatpush1.bf16.msra.mxu0 %v2551
        %3349 = vmatprep.subr.bf16.mxu0 %v2540
        %3350 = vmatpush1.bf16.msra.mxu0 %v2539
        %3351 = vmatprep.subr.bf16.mxu0 %v2528
        %3352 = vmatpush1.bf16.msra.mxu0 %v2527
        %3353 = vmatprep.subr.bf16.mxu0 %v2516
        %3354 = vmatpush1.bf16.msra.mxu0 %v2515
        %3355 = vmatprep.subr.bf16.mxu0 %v2504
        %3356 = vmatpush1.bf16.msra.mxu0 %v2503
        %3357 = vmatprep.subr.bf16.mxu0 %v2492
        %3358 = vmatpush1.bf16.msra.mxu0 %v2491
        %3359 = vmatprep.subr.bf16.mxu0 %v2672
        %3360 = vmatpush2.bf16.msra.mxu0 %v2671
        %3361 = vmatprep.subr.bf16.mxu0 %v2660
        %3362 = vmatpush2.bf16.msra.mxu0 %v2659
        %3363 = vmatprep.subr.bf16.mxu0 %v2648
        %3364 = vmatpush2.bf16.msra.mxu0 %v2647
        %3365 = vmatprep.subr.bf16.mxu0 %v2636
        %3366 = vmatpush2.bf16.msra.mxu0 %v2635
        %3367 = vmatprep.subr.bf16.mxu0 %v2624
        %3368 = vmatpush2.bf16.msra.mxu0 %v2623
        %3369 = vmatprep.subr.bf16.mxu0 %v2612
        %3370 = vmatpush2.bf16.msra.mxu0 %v2611
        %3371 = vmatprep.subr.bf16.mxu0 %v2600
        %3372 = vmatpush2.bf16.msra.mxu0 %v2599
        %3373 = vmatprep.subr.bf16.mxu0 %v2588
        %3374 = vmatpush2.bf16.msra.mxu0 %v2587
        %3375 = vmatprep.mubr.bf16.mxu0 %v886
        %3376 = vmatmul.mubr.bf16.gmra.mxu0 %v885
        %v3377 = vpop.f32.mrf.mxu0
        %v3378 = vadd.f32 %v1288, %v3377
        %v3379 = vpop.f32.mrf.mxu0
        %v3380 = vadd.f32 %v1292, %v3379
        %v3381 = vpop.f32.mrf.mxu0
        %v3382 = vadd.f32 %v1288, %v3381
        %v3383 = vpop.f32.mrf.mxu0
        %v3384 = vadd.f32 %v1292, %v3383
        %3385 = vdwg.mxu0
        %3386 = vmatprep.subr.bf16.mxu0 %v2768
        %3387 = vmatpush1.bf16.msra.mxu0 %v2767
        %3388 = vmatprep.subr.bf16.mxu0 %v2756
        %3389 = vmatpush1.bf16.msra.mxu0 %v2755
        %3390 = vmatprep.subr.bf16.mxu0 %v2744
        %3391 = vmatpush1.bf16.msra.mxu0 %v2743
        %3392 = vmatprep.subr.bf16.mxu0 %v2732
        %3393 = vmatpush1.bf16.msra.mxu0 %v2731
        %3394 = vmatprep.subr.bf16.mxu0 %v2720
        %3395 = vmatpush1.bf16.msra.mxu0 %v2719
        %3396 = vmatprep.subr.bf16.mxu0 %v2708
        %3397 = vmatpush1.bf16.msra.mxu0 %v2707
        %3398 = vmatprep.subr.bf16.mxu0 %v2696
        %3399 = vmatpush1.bf16.msra.mxu0 %v2695
        %3400 = vmatprep.subr.bf16.mxu0 %v2684
        %3401 = vmatpush1.bf16.msra.mxu0 %v2683
        %3402 = vmatprep.subr.bf16.mxu0 %v2864
        %3403 = vmatpush2.bf16.msra.mxu0 %v2863
        %3404 = vmatprep.subr.bf16.mxu0 %v2852
        %3405 = vmatpush2.bf16.msra.mxu0 %v2851
        %3406 = vmatprep.subr.bf16.mxu0 %v2840
        %3407 = vmatpush2.bf16.msra.mxu0 %v2839
        %3408 = vmatprep.subr.bf16.mxu0 %v2828
        %3409 = vmatpush2.bf16.msra.mxu0 %v2827
        %3410 = vmatprep.subr.bf16.mxu0 %v2816
        %3411 = vmatpush2.bf16.msra.mxu0 %v2815
        %3412 = vmatprep.subr.bf16.mxu0 %v2804
        %3413 = vmatpush2.bf16.msra.mxu0 %v2803
        %3414 = vmatprep.subr.bf16.mxu0 %v2792
        %3415 = vmatpush2.bf16.msra.mxu0 %v2791
        %3416 = vmatprep.subr.bf16.mxu0 %v2780
        %3417 = vmatpush2.bf16.msra.mxu0 %v2779
        %3418 = vmatprep.mubr.bf16.mxu0 %v888
        %3419 = vmatmul.mubr.bf16.gmra.mxu0 %v887
        %v3420 = vpop.f32.mrf.mxu0
        %v3421 = vadd.f32 %v3378, %v3420
        %v3422 = vpop.f32.mrf.mxu0
        %v3423 = vadd.f32 %v3380, %v3422
        %v3424 = vpop.f32.mrf.mxu0
        %v3425 = vadd.f32 %v3382, %v3424
        %v3426 = vpop.f32.mrf.mxu0
        %v3427 = vadd.f32 %v3384, %v3426
        %3428 = vdwg.mxu0
        %3429 = vmatprep.subr.bf16.mxu0 %v2578
        %3430 = vmatpush1.bf16.msra.mxu0 %v2577
        %3431 = vmatprep.subr.bf16.mxu0 %v2566
        %3432 = vmatpush1.bf16.msra.mxu0 %v2565
        %3433 = vmatprep.subr.bf16.mxu0 %v2554
        %3434 = vmatpush1.bf16.msra.mxu0 %v2553
        %3435 = vmatprep.subr.bf16.mxu0 %v2542
        %3436 = vmatpush1.bf16.msra.mxu0 %v2541
        %3437 = vmatprep.subr.bf16.mxu0 %v2530
        %3438 = vmatpush1.bf16.msra.mxu0 %v2529
        %3439 = vmatprep.subr.bf16.mxu0 %v2518
        %3440 = vmatpush1.bf16.msra.mxu0 %v2517
        %3441 = vmatprep.subr.bf16.mxu0 %v2506
        %3442 = vmatpush1.bf16.msra.mxu0 %v2505
        %3443 = vmatprep.subr.bf16.mxu0 %v2494
        %3444 = vmatpush1.bf16.msra.mxu0 %v2493
        %3445 = vmatprep.subr.bf16.mxu0 %v2674
        %3446 = vmatpush2.bf16.msra.mxu0 %v2673
        %3447 = vmatprep.subr.bf16.mxu0 %v2662
        %3448 = vmatpush2.bf16.msra.mxu0 %v2661
        %3449 = vmatprep.subr.bf16.mxu0 %v2650
        %3450 = vmatpush2.bf16.msra.mxu0 %v2649
        %3451 = vmatprep.subr.bf16.mxu0 %v2638
        %3452 = vmatpush2.bf16.msra.mxu0 %v2637
        %3453 = vmatprep.subr.bf16.mxu0 %v2626
        %3454 = vmatpush2.bf16.msra.mxu0 %v2625
        %3455 = vmatprep.subr.bf16.mxu0 %v2614
        %3456 = vmatpush2.bf16.msra.mxu0 %v2613
        %3457 = vmatprep.subr.bf16.mxu0 %v2602
        %3458 = vmatpush2.bf16.msra.mxu0 %v2601
        %3459 = vmatprep.subr.bf16.mxu0 %v2590
        %3460 = vmatpush2.bf16.msra.mxu0 %v2589
        %3461 = vmatprep.mubr.bf16.mxu0 %v886
        %3462 = vmatmul.mubr.bf16.gmra.mxu0 %v885
        %v3463 = vpop.f32.mrf.mxu0
        %v3464 = vadd.f32 %v1296, %v3463
        %v3465 = vpop.f32.mrf.mxu0
        %v3466 = vadd.f32 %v1300, %v3465
        %v3467 = vpop.f32.mrf.mxu0
        %v3468 = vadd.f32 %v1296, %v3467
        %v3469 = vpop.f32.mrf.mxu0
        %v3470 = vadd.f32 %v1300, %v3469
        %3471 = vdwg.mxu0
        %3472 = vmatprep.subr.bf16.mxu0 %v2770
        %3473 = vmatpush1.bf16.msra.mxu0 %v2769
        %3474 = vmatprep.subr.bf16.mxu0 %v2758
        %3475 = vmatpush1.bf16.msra.mxu0 %v2757
        %3476 = vmatprep.subr.bf16.mxu0 %v2746
        %3477 = vmatpush1.bf16.msra.mxu0 %v2745
        %3478 = vmatprep.subr.bf16.mxu0 %v2734
        %3479 = vmatpush1.bf16.msra.mxu0 %v2733
        %3480 = vmatprep.subr.bf16.mxu0 %v2722
        %3481 = vmatpush1.bf16.msra.mxu0 %v2721
        %3482 = vmatprep.subr.bf16.mxu0 %v2710
        %3483 = vmatpush1.bf16.msra.mxu0 %v2709
        %3484 = vmatprep.subr.bf16.mxu0 %v2698
        %3485 = vmatpush1.bf16.msra.mxu0 %v2697
        %3486 = vmatprep.subr.bf16.mxu0 %v2686
        %3487 = vmatpush1.bf16.msra.mxu0 %v2685
        %3488 = vmatprep.subr.bf16.mxu0 %v2866
        %3489 = vmatpush2.bf16.msra.mxu0 %v2865
        %3490 = vmatprep.subr.bf16.mxu0 %v2854
        %3491 = vmatpush2.bf16.msra.mxu0 %v2853
        %3492 = vmatprep.subr.bf16.mxu0 %v2842
        %3493 = vmatpush2.bf16.msra.mxu0 %v2841
        %3494 = vmatprep.subr.bf16.mxu0 %v2830
        %3495 = vmatpush2.bf16.msra.mxu0 %v2829
        %3496 = vmatprep.subr.bf16.mxu0 %v2818
        %3497 = vmatpush2.bf16.msra.mxu0 %v2817
        %3498 = vmatprep.subr.bf16.mxu0 %v2806
        %3499 = vmatpush2.bf16.msra.mxu0 %v2805
        %3500 = vmatprep.subr.bf16.mxu0 %v2794
        %3501 = vmatpush2.bf16.msra.mxu0 %v2793
        %3502 = vmatprep.subr.bf16.mxu0 %v2782
        %3503 = vmatpush2.bf16.msra.mxu0 %v2781
        %3504 = vmatprep.mubr.bf16.mxu0 %v888
        %3505 = vmatmul.mubr.bf16.gmra.mxu0 %v887
        %v3506 = vpop.f32.mrf.mxu0
        %v3507 = vadd.f32 %v3464, %v3506
        %v3508 = vpop.f32.mrf.mxu0
        %v3509 = vadd.f32 %v3466, %v3508
        %v3510 = vpop.f32.mrf.mxu0
        %v3511 = vadd.f32 %v3468, %v3510
        %v3512 = vpop.f32.mrf.mxu0
        %v3513 = vadd.f32 %v3470, %v3512
        %3514 = vdwg.mxu0
        %3515 = vmatprep.subr.bf16.mxu0 %v2580
        %3516 = vmatpush1.bf16.msra.mxu0 %v2579
        %3517 = vmatprep.subr.bf16.mxu0 %v2568
        %3518 = vmatpush1.bf16.msra.mxu0 %v2567
        %3519 = vmatprep.subr.bf16.mxu0 %v2556
        %3520 = vmatpush1.bf16.msra.mxu0 %v2555
        %3521 = vmatprep.subr.bf16.mxu0 %v2544
        %3522 = vmatpush1.bf16.msra.mxu0 %v2543
        %3523 = vmatprep.subr.bf16.mxu0 %v2532
        %3524 = vmatpush1.bf16.msra.mxu0 %v2531
        %3525 = vmatprep.subr.bf16.mxu0 %v2520
        %3526 = vmatpush1.bf16.msra.mxu0 %v2519
        %3527 = vmatprep.subr.bf16.mxu0 %v2508
        %3528 = vmatpush1.bf16.msra.mxu0 %v2507
        %3529 = vmatprep.subr.bf16.mxu0 %v2496
        %3530 = vmatpush1.bf16.msra.mxu0 %v2495
        %3531 = vmatprep.subr.bf16.mxu0 %v2676
        %3532 = vmatpush2.bf16.msra.mxu0 %v2675
        %3533 = vmatprep.subr.bf16.mxu0 %v2664
        %3534 = vmatpush2.bf16.msra.mxu0 %v2663
        %3535 = vmatprep.subr.bf16.mxu0 %v2652
        %3536 = vmatpush2.bf16.msra.mxu0 %v2651
        %3537 = vmatprep.subr.bf16.mxu0 %v2640
        %3538 = vmatpush2.bf16.msra.mxu0 %v2639
        %3539 = vmatprep.subr.bf16.mxu0 %v2628
        %3540 = vmatpush2.bf16.msra.mxu0 %v2627
        %3541 = vmatprep.subr.bf16.mxu0 %v2616
        %3542 = vmatpush2.bf16.msra.mxu0 %v2615
        %3543 = vmatprep.subr.bf16.mxu0 %v2604
        %3544 = vmatpush2.bf16.msra.mxu0 %v2603
        %3545 = vmatprep.subr.bf16.mxu0 %v2592
        %3546 = vmatpush2.bf16.msra.mxu0 %v2591
        %3547 = vmatprep.mubr.bf16.mxu0 %v886
        %3548 = vmatmul.mubr.bf16.gmra.mxu0 %v885
        %v3549 = vpop.f32.mrf.mxu0
        %v3550 = vadd.f32 %v1304, %v3549
        %v3551 = vpop.f32.mrf.mxu0
        %v3552 = vadd.f32 %v1308, %v3551
        %v3553 = vpop.f32.mrf.mxu0
        %v3554 = vadd.f32 %v1304, %v3553
        %v3555 = vpop.f32.mrf.mxu0
        %v3556 = vadd.f32 %v1308, %v3555
        %3557 = vdwg.mxu0
        %3558 = vmatprep.subr.bf16.mxu0 %v2772
        %3559 = vmatpush1.bf16.msra.mxu0 %v2771
        %3560 = vmatprep.subr.bf16.mxu0 %v2760
        %3561 = vmatpush1.bf16.msra.mxu0 %v2759
        %3562 = vmatprep.subr.bf16.mxu0 %v2748
        %3563 = vmatpush1.bf16.msra.mxu0 %v2747
        %3564 = vmatprep.subr.bf16.mxu0 %v2736
        %3565 = vmatpush1.bf16.msra.mxu0 %v2735
        %3566 = vmatprep.subr.bf16.mxu0 %v2724
        %3567 = vmatpush1.bf16.msra.mxu0 %v2723
        %3568 = vmatprep.subr.bf16.mxu0 %v2712
        %3569 = vmatpush1.bf16.msra.mxu0 %v2711
        %3570 = vmatprep.subr.bf16.mxu0 %v2700
        %3571 = vmatpush1.bf16.msra.mxu0 %v2699
        %3572 = vmatprep.subr.bf16.mxu0 %v2688
        %3573 = vmatpush1.bf16.msra.mxu0 %v2687
        %3574 = vmatprep.subr.bf16.mxu0 %v2868
        %3575 = vmatpush2.bf16.msra.mxu0 %v2867
        %3576 = vmatprep.subr.bf16.mxu0 %v2856
        %3577 = vmatpush2.bf16.msra.mxu0 %v2855
        %3578 = vmatprep.subr.bf16.mxu0 %v2844
        %3579 = vmatpush2.bf16.msra.mxu0 %v2843
        %3580 = vmatprep.subr.bf16.mxu0 %v2832
        %3581 = vmatpush2.bf16.msra.mxu0 %v2831
        %3582 = vmatprep.subr.bf16.mxu0 %v2820
        %3583 = vmatpush2.bf16.msra.mxu0 %v2819
        %3584 = vmatprep.subr.bf16.mxu0 %v2808
        %3585 = vmatpush2.bf16.msra.mxu0 %v2807
        %3586 = vmatprep.subr.bf16.mxu0 %v2796
        %3587 = vmatpush2.bf16.msra.mxu0 %v2795
        %3588 = vmatprep.subr.bf16.mxu0 %v2784
        %3589 = vmatpush2.bf16.msra.mxu0 %v2783
        %3590 = vmatprep.mubr.bf16.mxu0 %v888
        %3591 = vmatmul.mubr.bf16.gmra.mxu0 %v887
        %v3592 = vpop.f32.mrf.mxu0
        %v3593 = vadd.f32 %v3550, %v3592
        %v3594 = vpop.f32.mrf.mxu0
        %v3595 = vadd.f32 %v3552, %v3594
        %v3596 = vpop.f32.mrf.mxu0
        %v3597 = vadd.f32 %v3554, %v3596
        %v3598 = vpop.f32.mrf.mxu0
        %v3599 = vadd.f32 %v3556, %v3598
        %3600 = vdwg.mxu0
        %3601 = vmatprep.subr.bf16.mxu0 %v2582
        %3602 = vmatpush1.bf16.msra.mxu0 %v2581
        %3603 = vmatprep.subr.bf16.mxu0 %v2570
        %3604 = vmatpush1.bf16.msra.mxu0 %v2569
        %3605 = vmatprep.subr.bf16.mxu0 %v2558
        %3606 = vmatpush1.bf16.msra.mxu0 %v2557
        %3607 = vmatprep.subr.bf16.mxu0 %v2546
        %3608 = vmatpush1.bf16.msra.mxu0 %v2545
        %3609 = vmatprep.subr.bf16.mxu0 %v2534
        %3610 = vmatpush1.bf16.msra.mxu0 %v2533
        %3611 = vmatprep.subr.bf16.mxu0 %v2522
        %3612 = vmatpush1.bf16.msra.mxu0 %v2521
        %3613 = vmatprep.subr.bf16.mxu0 %v2510
        %3614 = vmatpush1.bf16.msra.mxu0 %v2509
        %3615 = vmatprep.subr.bf16.mxu0 %v2498
        %3616 = vmatpush1.bf16.msra.mxu0 %v2497
        %3617 = vmatprep.subr.bf16.mxu0 %v2678
        %3618 = vmatpush2.bf16.msra.mxu0 %v2677
        %3619 = vmatprep.subr.bf16.mxu0 %v2666
        %3620 = vmatpush2.bf16.msra.mxu0 %v2665
        %3621 = vmatprep.subr.bf16.mxu0 %v2654
        %3622 = vmatpush2.bf16.msra.mxu0 %v2653
        %3623 = vmatprep.subr.bf16.mxu0 %v2642
        %3624 = vmatpush2.bf16.msra.mxu0 %v2641
        %3625 = vmatprep.subr.bf16.mxu0 %v2630
        %3626 = vmatpush2.bf16.msra.mxu0 %v2629
        %3627 = vmatprep.subr.bf16.mxu0 %v2618
        %3628 = vmatpush2.bf16.msra.mxu0 %v2617
        %3629 = vmatprep.subr.bf16.mxu0 %v2606
        %3630 = vmatpush2.bf16.msra.mxu0 %v2605
        %3631 = vmatprep.subr.bf16.mxu0 %v2594
        %3632 = vmatpush2.bf16.msra.mxu0 %v2593
        %3633 = vmatprep.mubr.bf16.mxu0 %v886
        %3634 = vmatmul.mubr.bf16.gmra.mxu0 %v885
        %v3635 = vpop.f32.mrf.mxu0
        %v3636 = vadd.f32 %v1312, %v3635
        %v3637 = vpop.f32.mrf.mxu0
        %v3638 = vadd.f32 %v1316, %v3637
        %v3639 = vpop.f32.mrf.mxu0
        %v3640 = vadd.f32 %v1312, %v3639
        %v3641 = vpop.f32.mrf.mxu0
        %v3642 = vadd.f32 %v1316, %v3641
        %3643 = vdwg.mxu0
        %3644 = vmatprep.subr.bf16.mxu0 %v2774
        %3645 = vmatpush1.bf16.msra.mxu0 %v2773
        %3646 = vmatprep.subr.bf16.mxu0 %v2762
        %3647 = vmatpush1.bf16.msra.mxu0 %v2761
        %3648 = vmatprep.subr.bf16.mxu0 %v2750
        %3649 = vmatpush1.bf16.msra.mxu0 %v2749
        %3650 = vmatprep.subr.bf16.mxu0 %v2738
        %3651 = vmatpush1.bf16.msra.mxu0 %v2737
        %3652 = vmatprep.subr.bf16.mxu0 %v2726
        %3653 = vmatpush1.bf16.msra.mxu0 %v2725
        %3654 = vmatprep.subr.bf16.mxu0 %v2714
        %3655 = vmatpush1.bf16.msra.mxu0 %v2713
        %3656 = vmatprep.subr.bf16.mxu0 %v2702
        %3657 = vmatpush1.bf16.msra.mxu0 %v2701
        %3658 = vmatprep.subr.bf16.mxu0 %v2690
        %3659 = vmatpush1.bf16.msra.mxu0 %v2689
        %3660 = vmatprep.subr.bf16.mxu0 %v2870
        %3661 = vmatpush2.bf16.msra.mxu0 %v2869
        %3662 = vmatprep.subr.bf16.mxu0 %v2858
        %3663 = vmatpush2.bf16.msra.mxu0 %v2857
        %3664 = vmatprep.subr.bf16.mxu0 %v2846
        %3665 = vmatpush2.bf16.msra.mxu0 %v2845
        %3666 = vmatprep.subr.bf16.mxu0 %v2834
        %3667 = vmatpush2.bf16.msra.mxu0 %v2833
        %3668 = vmatprep.subr.bf16.mxu0 %v2822
        %3669 = vmatpush2.bf16.msra.mxu0 %v2821
        %3670 = vmatprep.subr.bf16.mxu0 %v2810
        %3671 = vmatpush2.bf16.msra.mxu0 %v2809
        %3672 = vmatprep.subr.bf16.mxu0 %v2798
        %3673 = vmatpush2.bf16.msra.mxu0 %v2797
        %3674 = vmatprep.subr.bf16.mxu0 %v2786
        %3675 = vmatpush2.bf16.msra.mxu0 %v2785
        %3676 = vmatprep.mubr.bf16.mxu0 %v888
        %3677 = vmatmul.mubr.bf16.gmra.mxu0 %v887
        %v3678 = vpop.f32.mrf.mxu0
        %v3679 = vadd.f32 %v3636, %v3678
        %v3680 = vpop.f32.mrf.mxu0
        %v3681 = vadd.f32 %v3638, %v3680
        %v3682 = vpop.f32.mrf.mxu0
        %v3683 = vadd.f32 %v3640, %v3682
        %v3684 = vpop.f32.mrf.mxu0
        %v3685 = vadd.f32 %v3642, %v3684
        %3686 = vdwg.mxu0
        %3687 = vmatprep.subr.bf16.mxu0 %v2584
        %3688 = vmatpush1.bf16.msra.mxu0 %v2583
        %3689 = vmatprep.subr.bf16.mxu0 %v2572
        %3690 = vmatpush1.bf16.msra.mxu0 %v2571
        %3691 = vmatprep.subr.bf16.mxu0 %v2560
        %3692 = vmatpush1.bf16.msra.mxu0 %v2559
        %3693 = vmatprep.subr.bf16.mxu0 %v2548
        %3694 = vmatpush1.bf16.msra.mxu0 %v2547
        %3695 = vmatprep.subr.bf16.mxu0 %v2536
        %3696 = vmatpush1.bf16.msra.mxu0 %v2535
        %3697 = vmatprep.subr.bf16.mxu0 %v2524
        %3698 = vmatpush1.bf16.msra.mxu0 %v2523
        %3699 = vmatprep.subr.bf16.mxu0 %v2512
        %3700 = vmatpush1.bf16.msra.mxu0 %v2511
        %3701 = vmatprep.subr.bf16.mxu0 %v2500
        %3702 = vmatpush1.bf16.msra.mxu0 %v2499
        %3703 = vmatprep.subr.bf16.mxu0 %v2680
        %3704 = vmatpush2.bf16.msra.mxu0 %v2679
        %3705 = vmatprep.subr.bf16.mxu0 %v2668
        %3706 = vmatpush2.bf16.msra.mxu0 %v2667
        %3707 = vmatprep.subr.bf16.mxu0 %v2656
        %3708 = vmatpush2.bf16.msra.mxu0 %v2655
        %3709 = vmatprep.subr.bf16.mxu0 %v2644
        %3710 = vmatpush2.bf16.msra.mxu0 %v2643
        %3711 = vmatprep.subr.bf16.mxu0 %v2632
        %3712 = vmatpush2.bf16.msra.mxu0 %v2631
        %3713 = vmatprep.subr.bf16.mxu0 %v2620
        %3714 = vmatpush2.bf16.msra.mxu0 %v2619
        %3715 = vmatprep.subr.bf16.mxu0 %v2608
        %3716 = vmatpush2.bf16.msra.mxu0 %v2607
        %3717 = vmatprep.subr.bf16.mxu0 %v2596
        %3718 = vmatpush2.bf16.msra.mxu0 %v2595
        %3719 = vmatprep.mubr.bf16.mxu0 %v886
        %3720 = vmatmul.mubr.bf16.gmra.mxu0 %v885
        %v3721 = vpop.f32.mrf.mxu0
        %v3722 = vadd.f32 %v1320, %v3721
        %v3723 = vpop.f32.mrf.mxu0
        %v3724 = vadd.f32 %v1324, %v3723
        %v3725 = vpop.f32.mrf.mxu0
        %v3726 = vadd.f32 %v1320, %v3725
        %v3727 = vpop.f32.mrf.mxu0
        %v3728 = vadd.f32 %v1324, %v3727
        %3729 = vdwg.mxu0
        %3730 = vmatprep.subr.bf16.mxu0 %v2776
        %3731 = vmatpush1.bf16.msra.mxu0 %v2775
        %3732 = vmatprep.subr.bf16.mxu0 %v2764
        %3733 = vmatpush1.bf16.msra.mxu0 %v2763
        %3734 = vmatprep.subr.bf16.mxu0 %v2752
        %3735 = vmatpush1.bf16.msra.mxu0 %v2751
        %3736 = vmatprep.subr.bf16.mxu0 %v2740
        %3737 = vmatpush1.bf16.msra.mxu0 %v2739
        %3738 = vmatprep.subr.bf16.mxu0 %v2728
        %3739 = vmatpush1.bf16.msra.mxu0 %v2727
        %3740 = vmatprep.subr.bf16.mxu0 %v2716
        %3741 = vmatpush1.bf16.msra.mxu0 %v2715
        %3742 = vmatprep.subr.bf16.mxu0 %v2704
        %3743 = vmatpush1.bf16.msra.mxu0 %v2703
        %3744 = vmatprep.subr.bf16.mxu0 %v2692
        %3745 = vmatpush1.bf16.msra.mxu0 %v2691
        %3746 = vmatprep.subr.bf16.mxu0 %v2872
        %3747 = vmatpush2.bf16.msra.mxu0 %v2871
        %3748 = vmatprep.subr.bf16.mxu0 %v2860
        %3749 = vmatpush2.bf16.msra.mxu0 %v2859
        %3750 = vmatprep.subr.bf16.mxu0 %v2848
        %3751 = vmatpush2.bf16.msra.mxu0 %v2847
        %3752 = vmatprep.subr.bf16.mxu0 %v2836
        %3753 = vmatpush2.bf16.msra.mxu0 %v2835
        %3754 = vmatprep.subr.bf16.mxu0 %v2824
        %3755 = vmatpush2.bf16.msra.mxu0 %v2823
        %3756 = vmatprep.subr.bf16.mxu0 %v2812
        %3757 = vmatpush2.bf16.msra.mxu0 %v2811
        %3758 = vmatprep.subr.bf16.mxu0 %v2800
        %3759 = vmatpush2.bf16.msra.mxu0 %v2799
        %3760 = vmatprep.subr.bf16.mxu0 %v2788
        %3761 = vmatpush2.bf16.msra.mxu0 %v2787
        %3762 = vmatprep.mubr.bf16.mxu0 %v888
        %3763 = vmatmul.mubr.bf16.gmra.mxu0 %v887
        %v3764 = vpop.f32.mrf.mxu0
        %v3765 = vadd.f32 %v3722, %v3764
        %v3766 = vpop.f32.mrf.mxu0
        %v3767 = vadd.f32 %v3724, %v3766
        %v3768 = vpop.f32.mrf.mxu0
        %v3769 = vadd.f32 %v3726, %v3768
        %v3770 = vpop.f32.mrf.mxu0
        %v3771 = vadd.f32 %v3728, %v3770
        %3772 = vdwg.mxu0
        %v3773 = vpack.c.bf16 %v3339, %v3335
        %v3774 = vpack.c.bf16 %v3341, %v3337
        %v3775 = vpack.c.bf16 %v3425, %v3421
        %v3776 = vpack.c.bf16 %v3427, %v3423
        %v3777 = vpack.c.bf16 %v3511, %v3507
        %v3778 = vpack.c.bf16 %v3513, %v3509
        %v3779 = vpack.c.bf16 %v3597, %v3593
        %v3780 = vpack.c.bf16 %v3599, %v3595
        %v3781 = vpack.c.bf16 %v3683, %v3679
        %v3782 = vpack.c.bf16 %v3685, %v3681
        %v3783 = vpack.c.bf16 %v3769, %v3765
        %v3784 = vpack.c.bf16 %v3771, %v3767
        %v3789 = vunpack.c.l.b16 %v3773
        %v3790 = vunpack.c.l.b16 %v3774
        %v3791 = vunpack.c.l.b16 %v3775
        %v3792 = vunpack.c.l.b16 %v3776
        %v3793 = vunpack.c.h.b16 %v3773
        %v3794 = vunpack.c.h.b16 %v3774
        %v3795 = vunpack.c.h.b16 %v3775
        %v3796 = vunpack.c.h.b16 %v3776
        %v3797 = vpack.c.b16 %v3790, %v3789
        %v3798 = vpack.c.b16 %v3792, %v3791
        %v3799 = vpack.c.b16 %v3794, %v3793
        %v3800 = vpack.c.b16 %v3796, %v3795
        %v3805 = vunpack.c.l.b16 %v3777
        %v3806 = vunpack.c.l.b16 %v3778
        %v3807 = vunpack.c.l.b16 %v3779
        %v3808 = vunpack.c.l.b16 %v3780
        %v3809 = vunpack.c.h.b16 %v3777
        %v3810 = vunpack.c.h.b16 %v3778
        %v3811 = vunpack.c.h.b16 %v3779
        %v3812 = vunpack.c.h.b16 %v3780
        %v3813 = vpack.c.b16 %v3806, %v3805
        %v3814 = vpack.c.b16 %v3808, %v3807
        %v3815 = vpack.c.b16 %v3810, %v3809
        %v3816 = vpack.c.b16 %v3812, %v3811
        %v3821 = vunpack.c.l.b16 %v3781
        %v3822 = vunpack.c.l.b16 %v3782
        %v3823 = vunpack.c.l.b16 %v3783
        %v3824 = vunpack.c.l.b16 %v3784
        %v3825 = vunpack.c.h.b16 %v3781
        %v3826 = vunpack.c.h.b16 %v3782
        %v3827 = vunpack.c.h.b16 %v3783
        %v3828 = vunpack.c.h.b16 %v3784
        %v3829 = vpack.c.b16 %v3822, %v3821
        %v3830 = vpack.c.b16 %v3824, %v3823
        %v3831 = vpack.c.b16 %v3826, %v3825
        %v3832 = vpack.c.b16 %v3828, %v3827
        %v3833 = vlaneseq
        %v3834 = vand.u32 %v3833, 127
        %v3835 = vld [vmem:[%s504] sm:$0x1]
        %v3836 = vld [vmem:[%s504 + $0x1] sm:$0x1]
        %3837 = vset.pattern.permute.xlu0 0
        %3838 = vperm.xlu0 %3837, %v3835
        %v3839 = vpop.permute.xlu0 %3838
        %v3840 = vlaneseq
        %v3841 = vshrl.u32 %v3840, 7
        %v3842 = vsub.s32 0, %v3841
        %v3843 = vrot.slane %v3839, %v3842
        %3844 = vset.pattern.permute.xlu0 0
        %3845 = vperm.xlu0 %3844, %v3836
        %v3846 = vpop.permute.xlu0 %3845
        %v3847 = vlaneseq
        %v3848 = vshrl.u32 %v3847, 7
        %v3849 = vsub.s32 0, %v3848
        %v3850 = vrot.slane %v3846, %v3849
        %vm3851 = vcmp.lt.s32.totalorder %v3834, %v3843
        %vm3852 = vcmp.lt.s32.totalorder %v3834, %v3850
        %v3853 = vsel %vm3851, 0.0, -1e+09
        %v3854 = vsel %vm3852, 0.0, -1e+09
        %vm3855 = vcmask 523264
        %v3857 = vsel %vm3855, %v3797, 0
        %v3860 = vsel %vm3855, %v3813, 0
        %3862 = vmatprep.subr.bf16.mxu0 0
        %3863 = vmatpush1.bf16.xpose.msra.mxu0 0
        %3864 = vmatprep.subr.bf16.mxu0 0
        %3865 = vmatpush1.bf16.xpose.msra.mxu0 0
        %3866 = vmatprep.subr.bf16.mxu0 0
        %3867 = vmatpush1.bf16.xpose.msra.mxu0 0
        %3868 = vmatprep.subr.bf16.mxu0 0
        %3869 = vmatpush1.bf16.xpose.msra.mxu0 0
        %3870 = vmatprep.subr.bf16.mxu0 0
        %3871 = vmatpush1.bf16.xpose.msra.mxu0 0
        %3872 = vmatprep.subr.bf16.mxu0 0
        %3873 = vmatpush1.bf16.xpose.msra.mxu0 0
        %3874 = vmatprep.subr.bf16.mxu0 0
        %3875 = vmatpush1.bf16.xpose.msra.mxu0 0
        %3876 = vmatprep.subr.bf16.mxu0 0
        %3877 = vmatpush1.bf16.xpose.msra.mxu0 %v3860
        %3878 = vmatprep.subr.bf16.mxu0 0
        %3879 = vmatpush2.bf16.xpose.msra.mxu0 0
        %3880 = vmatprep.subr.bf16.mxu0 0
        %3881 = vmatpush2.bf16.xpose.msra.mxu0 0
        %3882 = vmatprep.subr.bf16.mxu0 0
        %3883 = vmatpush2.bf16.xpose.msra.mxu0 0
        %3884 = vmatprep.subr.bf16.mxu0 0
        %3885 = vmatpush2.bf16.xpose.msra.mxu0 0
        %3886 = vmatprep.subr.bf16.mxu0 0
        %3887 = vmatpush2.bf16.xpose.msra.mxu0 0
        %3888 = vmatprep.subr.bf16.mxu0 0
        %3889 = vmatpush2.bf16.xpose.msra.mxu0 0
        %3890 = vmatprep.subr.bf16.mxu0 0
        %3891 = vmatpush2.bf16.xpose.msra.mxu0 0
        %3892 = vmatprep.subr.bf16.mxu0 0
        %3893 = vmatpush2.bf16.xpose.msra.mxu0 0
        %3894 = vmatprep.mubr.bf16.mxu0 0
        %3895 = vmatmul.mubr.bf16.gmra.mxu0 %v3857
        %v3896 = vpop.f32.mrf.mxu0
        %v3897 = vadd.f32 %v3853, %v3896
        %v3898 = vpop.f32.mrf.mxu0
        %v3899 = vpop.f32.mrf.mxu0
        %v3900 = vpop.f32.mrf.mxu0
        %3901 = vdwg.mxu0
        %v3903 = vsel %vm3855, %v3799, 0
        %v3906 = vsel %vm3855, %v3815, 0
        %3908 = vmatprep.subr.bf16.mxu0 0
        %3909 = vmatpush1.bf16.xpose.msra.mxu0 0
        %3910 = vmatprep.subr.bf16.mxu0 0
        %3911 = vmatpush1.bf16.xpose.msra.mxu0 0
        %3912 = vmatprep.subr.bf16.mxu0 0
        %3913 = vmatpush1.bf16.xpose.msra.mxu0 0
        %3914 = vmatprep.subr.bf16.mxu0 0
        %3915 = vmatpush1.bf16.xpose.msra.mxu0 0
        %3916 = vmatprep.subr.bf16.mxu0 0
        %3917 = vmatpush1.bf16.xpose.msra.mxu0 0
        %3918 = vmatprep.subr.bf16.mxu0 0
        %3919 = vmatpush1.bf16.xpose.msra.mxu0 0
        %3920 = vmatprep.subr.bf16.mxu0 0
        %3921 = vmatpush1.bf16.xpose.msra.mxu0 0
        %3922 = vmatprep.subr.bf16.mxu0 0
        %3923 = vmatpush1.bf16.xpose.msra.mxu0 %v3906
        %3924 = vmatprep.subr.bf16.mxu0 0
        %3925 = vmatpush2.bf16.xpose.msra.mxu0 0
        %3926 = vmatprep.subr.bf16.mxu0 0
        %3927 = vmatpush2.bf16.xpose.msra.mxu0 0
        %3928 = vmatprep.subr.bf16.mxu0 0
        %3929 = vmatpush2.bf16.xpose.msra.mxu0 0
        %3930 = vmatprep.subr.bf16.mxu0 0
        %3931 = vmatpush2.bf16.xpose.msra.mxu0 0
        %3932 = vmatprep.subr.bf16.mxu0 0
        %3933 = vmatpush2.bf16.xpose.msra.mxu0 0
        %3934 = vmatprep.subr.bf16.mxu0 0
        %3935 = vmatpush2.bf16.xpose.msra.mxu0 0
        %3936 = vmatprep.subr.bf16.mxu0 0
        %3937 = vmatpush2.bf16.xpose.msra.mxu0 0
        %3938 = vmatprep.subr.bf16.mxu0 0
        %3939 = vmatpush2.bf16.xpose.msra.mxu0 0
        %3940 = vmatprep.mubr.bf16.mxu0 0
        %3941 = vmatmul.mubr.bf16.gmra.mxu0 %v3903
        %v3942 = vpop.f32.mrf.mxu0
        %v3943 = vadd.f32 %v3854, %v3942
        %v3944 = vpop.f32.mrf.mxu0
        %v3945 = vpop.f32.mrf.mxu0
        %v3946 = vpop.f32.mrf.mxu0
        %3947 = vdwg.mxu0
        %vm3948 = vcmask 64512
        %v3949 = vsel %vm3948, %v3897, -inf
        %3950 = vmax.xlane.f32.xlu0 %v3949
        %v3951 = vpop.xlane.xlu0 %3950
        %v3952 = vsel %vm3948, %v3943, -inf
        %3953 = vmax.xlane.f32.xlu0 %v3952
        %v3954 = vpop.xlane.xlu0 %3953
        %v3955 = vsub.f32 %v3897, %v3951
        %v3956 = vsub.f32 %v3943, %v3954
        %v3957 = vmul.f32 %v3955, 1.442695
        %v3958 = vpow.pop %v3957
        %v3959 = vmul.f32 %v3956, 1.442695
        %v3960 = vpow.pop %v3959
        %v3961 = vsel %vm3948, %v3958, 0.0
        %3962 = vadd.xlane.f32.xlu0 %v3961
        %v3963 = vpop.xlane.xlu0 %3962
        %v3964 = vsel %vm3948, %v3960, 0.0
        %3965 = vadd.xlane.f32.xlu0 %v3964
        %v3966 = vpop.xlane.xlu0 %3965
        %v3967 = vrcp.pop %v3963
        %v3968 = vrcp.pop %v3966
        %v3969 = vmul.f32 %v3958, %v3967
        %v3970 = vmul.f32 %v3960, %v3968
        %v3971 = vpack.c.bf16 %v3969, %v3969
        %v3972 = vpack.c.bf16 %v3970, %v3970
        %v3974 = vsel %vm3948, %v3971, 0
        %vm3976 = vcmask 1043456
        %v3978 = vsel %vm3976, %v3829, 0
        %3980 = vmatprep.subr.bf16.mxu0 0
        %3981 = vmatpush1.bf16.msra.mxu0 0
        %3982 = vmatprep.subr.bf16.mxu0 0
        %3983 = vmatpush1.bf16.msra.mxu0 0
        %3984 = vmatprep.subr.bf16.mxu0 0
        %3985 = vmatpush1.bf16.msra.mxu0 0
        %3986 = vmatprep.subr.bf16.mxu0 0
        %3987 = vmatpush1.bf16.msra.mxu0 0
        %3988 = vmatprep.subr.bf16.mxu0 0
        %3989 = vmatpush1.bf16.msra.mxu0 0
        %3990 = vmatprep.subr.bf16.mxu0 0
        %3991 = vmatpush1.bf16.msra.mxu0 0
        %3992 = vmatprep.subr.bf16.mxu0 0
        %3993 = vmatpush1.bf16.msra.mxu0 0
        %3994 = vmatprep.subr.bf16.mxu0 0
        %3995 = vmatpush1.bf16.msra.mxu0 %v3978
        %3996 = vmatprep.subr.bf16.mxu0 0
        %3997 = vmatpush2.bf16.msra.mxu0 0
        %3998 = vmatprep.subr.bf16.mxu0 0
        %3999 = vmatpush2.bf16.msra.mxu0 0
        %4000 = vmatprep.subr.bf16.mxu0 0
        %4001 = vmatpush2.bf16.msra.mxu0 0
        %4002 = vmatprep.subr.bf16.mxu0 0
        %4003 = vmatpush2.bf16.msra.mxu0 0
        %4004 = vmatprep.subr.bf16.mxu0 0
        %4005 = vmatpush2.bf16.msra.mxu0 0
        %4006 = vmatprep.subr.bf16.mxu0 0
        %4007 = vmatpush2.bf16.msra.mxu0 0
        %4008 = vmatprep.subr.bf16.mxu0 0
        %4009 = vmatpush2.bf16.msra.mxu0 0
        %4010 = vmatprep.subr.bf16.mxu0 0
        %4011 = vmatpush2.bf16.msra.mxu0 0
        %4012 = vmatprep.mubr.bf16.mxu0 0
        %4013 = vmatmul.mubr.bf16.gmra.mxu0 %v3974
        %v4014 = vpop.f32.mrf.mxu0
        %v4015 = vadd.f32 0.0, %v4014
        %v4016 = vpop.f32.mrf.mxu0
        %v4017 = vpop.f32.mrf.mxu0
        %v4018 = vpop.f32.mrf.mxu0
        %4019 = vdwg.mxu0
        %v4021 = vsel %vm3948, %v3972, 0
        %v4024 = vsel %vm3976, %v3831, 0
        %4026 = vmatprep.subr.bf16.mxu0 0
        %4027 = vmatpush1.bf16.msra.mxu0 0
        %4028 = vmatprep.subr.bf16.mxu0 0
        %4029 = vmatpush1.bf16.msra.mxu0 0
        %4030 = vmatprep.subr.bf16.mxu0 0
        %4031 = vmatpush1.bf16.msra.mxu0 0
        %4032 = vmatprep.subr.bf16.mxu0 0
        %4033 = vmatpush1.bf16.msra.mxu0 0
        %4034 = vmatprep.subr.bf16.mxu0 0
        %4035 = vmatpush1.bf16.msra.mxu0 0
        %4036 = vmatprep.subr.bf16.mxu0 0
        %4037 = vmatpush1.bf16.msra.mxu0 0
        %4038 = vmatprep.subr.bf16.mxu0 0
        %4039 = vmatpush1.bf16.msra.mxu0 0
        %4040 = vmatprep.subr.bf16.mxu0 0
        %4041 = vmatpush1.bf16.msra.mxu0 %v4024
        %4042 = vmatprep.subr.bf16.mxu0 0
        %4043 = vmatpush2.bf16.msra.mxu0 0
        %4044 = vmatprep.subr.bf16.mxu0 0
        %4045 = vmatpush2.bf16.msra.mxu0 0
        %4046 = vmatprep.subr.bf16.mxu0 0
        %4047 = vmatpush2.bf16.msra.mxu0 0
        %4048 = vmatprep.subr.bf16.mxu0 0
        %4049 = vmatpush2.bf16.msra.mxu0 0
        %4050 = vmatprep.subr.bf16.mxu0 0
        %4051 = vmatpush2.bf16.msra.mxu0 0
        %4052 = vmatprep.subr.bf16.mxu0 0
        %4053 = vmatpush2.bf16.msra.mxu0 0
        %4054 = vmatprep.subr.bf16.mxu0 0
        %4055 = vmatpush2.bf16.msra.mxu0 0
        %4056 = vmatprep.subr.bf16.mxu0 0
        %4057 = vmatpush2.bf16.msra.mxu0 0
        %4058 = vmatprep.mubr.bf16.mxu0 0
        %4059 = vmatmul.mubr.bf16.gmra.mxu0 %v4021
        %v4060 = vpop.f32.mrf.mxu0
        %v4061 = vadd.f32 0.0, %v4060
        %v4062 = vpop.f32.mrf.mxu0
        %v4063 = vpop.f32.mrf.mxu0
        %v4064 = vpop.f32.mrf.mxu0
        %4065 = vdwg.mxu0
        %v4066 = vpack.c.bf16 %v4061, %v4015
        %v4068 = vunpack.c.l.b16 %v4066
        %v4069 = vunpack.c.h.b16 %v4066
        %v4070 = vpack.c.b16 %v4068, %v4068
        %v4071 = vpack.c.b16 %v4069, %v4069
        %vm4074 = vcmask 519168
        %4075 = vst.msk [vmem:[#allocation2] sm:$0xf] %vm4074, %v4070
        %4076 = vst.msk [vmem:[#allocation2 + $0x10] sm:$0xf] %vm4074, %v4071
        %v4077 = vpack.c.b16 %v3789, %v3789
        %4078 = vrot.lane.b32.xlu0 %v4077, 64
        %v4079 = vpop.permute.xlu0 %4078
        %v4080 = vpack.c.b16 %v3805, %v3805
        %4081 = vrot.lane.b32.xlu0 %v4080, 64
        %v4082 = vpop.permute.xlu0 %4081
        %v4084 = vsel %vm3855, %v4079, 0
        %v4087 = vsel %vm3855, %v4082, 0
        %4089 = vmatprep.subr.bf16.mxu0 0
        %4090 = vmatpush1.bf16.xpose.msra.mxu0 0
        %4091 = vmatprep.subr.bf16.mxu0 0
        %4092 = vmatpush1.bf16.xpose.msra.mxu0 0
        %4093 = vmatprep.subr.bf16.mxu0 0
        %4094 = vmatpush1.bf16.xpose.msra.mxu0 0
        %4095 = vmatprep.subr.bf16.mxu0 0
        %4096 = vmatpush1.bf16.xpose.msra.mxu0 0
        %4097 = vmatprep.subr.bf16.mxu0 0
        %4098 = vmatpush1.bf16.xpose.msra.mxu0 0
        %4099 = vmatprep.subr.bf16.mxu0 0
        %4100 = vmatpush1.bf16.xpose.msra.mxu0 0
        %4101 = vmatprep.subr.bf16.mxu0 0
        %4102 = vmatpush1.bf16.xpose.msra.mxu0 0
        %4103 = vmatprep.subr.bf16.mxu0 0
        %4104 = vmatpush1.bf16.xpose.msra.mxu0 %v4087
        %4105 = vmatprep.subr.bf16.mxu0 0
        %4106 = vmatpush2.bf16.xpose.msra.mxu0 0
        %4107 = vmatprep.subr.bf16.mxu0 0
        %4108 = vmatpush2.bf16.xpose.msra.mxu0 0
        %4109 = vmatprep.subr.bf16.mxu0 0
        %4110 = vmatpush2.bf16.xpose.msra.mxu0 0
        %4111 = vmatprep.subr.bf16.mxu0 0
        %4112 = vmatpush2.bf16.xpose.msra.mxu0 0
        %4113 = vmatprep.subr.bf16.mxu0 0
        %4114 = vmatpush2.bf16.xpose.msra.mxu0 0
        %4115 = vmatprep.subr.bf16.mxu0 0
        %4116 = vmatpush2.bf16.xpose.msra.mxu0 0
        %4117 = vmatprep.subr.bf16.mxu0 0
        %4118 = vmatpush2.bf16.xpose.msra.mxu0 0
        %4119 = vmatprep.subr.bf16.mxu0 0
        %4120 = vmatpush2.bf16.xpose.msra.mxu0 0
        %4121 = vmatprep.mubr.bf16.mxu0 0
        %4122 = vmatmul.mubr.bf16.gmra.mxu0 %v4084
        %v4123 = vpop.f32.mrf.mxu0
        %v4124 = vadd.f32 %v3853, %v4123
        %v4125 = vpop.f32.mrf.mxu0
        %v4126 = vpop.f32.mrf.mxu0
        %v4127 = vpop.f32.mrf.mxu0
        %4128 = vdwg.mxu0
        %v4129 = vpack.c.b16 %v3793, %v3793
        %4130 = vrot.lane.b32.xlu0 %v4129, 64
        %v4131 = vpop.permute.xlu0 %4130
        %v4132 = vpack.c.b16 %v3809, %v3809
        %4133 = vrot.lane.b32.xlu0 %v4132, 64
        %v4134 = vpop.permute.xlu0 %4133
        %v4136 = vsel %vm3855, %v4131, 0
        %v4139 = vsel %vm3855, %v4134, 0
        %4141 = vmatprep.subr.bf16.mxu0 0
        %4142 = vmatpush1.bf16.xpose.msra.mxu0 0
        %4143 = vmatprep.subr.bf16.mxu0 0
        %4144 = vmatpush1.bf16.xpose.msra.mxu0 0
        %4145 = vmatprep.subr.bf16.mxu0 0
        %4146 = vmatpush1.bf16.xpose.msra.mxu0 0
        %4147 = vmatprep.subr.bf16.mxu0 0
        %4148 = vmatpush1.bf16.xpose.msra.mxu0 0
        %4149 = vmatprep.subr.bf16.mxu0 0
        %4150 = vmatpush1.bf16.xpose.msra.mxu0 0
        %4151 = vmatprep.subr.bf16.mxu0 0
        %4152 = vmatpush1.bf16.xpose.msra.mxu0 0
        %4153 = vmatprep.subr.bf16.mxu0 0
        %4154 = vmatpush1.bf16.xpose.msra.mxu0 0
        %4155 = vmatprep.subr.bf16.mxu0 0
        %4156 = vmatpush1.bf16.xpose.msra.mxu0 %v4139
        %4157 = vmatprep.subr.bf16.mxu0 0
        %4158 = vmatpush2.bf16.xpose.msra.mxu0 0
        %4159 = vmatprep.subr.bf16.mxu0 0
        %4160 = vmatpush2.bf16.xpose.msra.mxu0 0
        %4161 = vmatprep.subr.bf16.mxu0 0
        %4162 = vmatpush2.bf16.xpose.msra.mxu0 0
        %4163 = vmatprep.subr.bf16.mxu0 0
        %4164 = vmatpush2.bf16.xpose.msra.mxu0 0
        %4165 = vmatprep.subr.bf16.mxu0 0
        %4166 = vmatpush2.bf16.xpose.msra.mxu0 0
        %4167 = vmatprep.subr.bf16.mxu0 0
        %4168 = vmatpush2.bf16.xpose.msra.mxu0 0
        %4169 = vmatprep.subr.bf16.mxu0 0
        %4170 = vmatpush2.bf16.xpose.msra.mxu0 0
        %4171 = vmatprep.subr.bf16.mxu0 0
        %4172 = vmatpush2.bf16.xpose.msra.mxu0 0
        %4173 = vmatprep.mubr.bf16.mxu0 0
        %4174 = vmatmul.mubr.bf16.gmra.mxu0 %v4136
        %v4175 = vpop.f32.mrf.mxu0
        %v4176 = vadd.f32 %v3854, %v4175
        %v4177 = vpop.f32.mrf.mxu0
        %v4178 = vpop.f32.mrf.mxu0
        %v4179 = vpop.f32.mrf.mxu0
        %4180 = vdwg.mxu0
        %v4181 = vsel %vm3948, %v4124, -inf
        %4182 = vmax.xlane.f32.xlu0 %v4181
        %v4183 = vpop.xlane.xlu0 %4182
        %v4184 = vsel %vm3948, %v4176, -inf
        %4185 = vmax.xlane.f32.xlu0 %v4184
        %v4186 = vpop.xlane.xlu0 %4185
        %v4187 = vsub.f32 %v4124, %v4183
        %v4188 = vsub.f32 %v4176, %v4186
        %v4189 = vmul.f32 %v4187, 1.442695
        %v4190 = vpow.pop %v4189
        %v4191 = vmul.f32 %v4188, 1.442695
        %v4192 = vpow.pop %v4191
        %v4193 = vsel %vm3948, %v4190, 0.0
        %4194 = vadd.xlane.f32.xlu0 %v4193
        %v4195 = vpop.xlane.xlu0 %4194
        %v4196 = vsel %vm3948, %v4192, 0.0
        %4197 = vadd.xlane.f32.xlu0 %v4196
        %v4198 = vpop.xlane.xlu0 %4197
        %v4199 = vrcp.pop %v4195
        %v4200 = vrcp.pop %v4198
        %v4201 = vmul.f32 %v4190, %v4199
        %v4202 = vmul.f32 %v4192, %v4200
        %v4203 = vpack.c.bf16 %v4201, %v4201
        %v4204 = vpack.c.bf16 %v4202, %v4202
        %v4205 = vpack.c.b16 %v3821, %v3821
        %4206 = vrot.lane.b32.xlu0 %v4205, 64
        %v4207 = vpop.permute.xlu0 %4206
        %v4209 = vsel %vm3948, %v4203, 0
        %v4212 = vsel %vm3976, %v4207, 0
        %4214 = vmatprep.subr.bf16.mxu0 0
        %4215 = vmatpush1.bf16.msra.mxu0 0
        %4216 = vmatprep.subr.bf16.mxu0 0
        %4217 = vmatpush1.bf16.msra.mxu0 0
        %4218 = vmatprep.subr.bf16.mxu0 0
        %4219 = vmatpush1.bf16.msra.mxu0 0
        %4220 = vmatprep.subr.bf16.mxu0 0
        %4221 = vmatpush1.bf16.msra.mxu0 0
        %4222 = vmatprep.subr.bf16.mxu0 0
        %4223 = vmatpush1.bf16.msra.mxu0 0
        %4224 = vmatprep.subr.bf16.mxu0 0
        %4225 = vmatpush1.bf16.msra.mxu0 0
        %4226 = vmatprep.subr.bf16.mxu0 0
        %4227 = vmatpush1.bf16.msra.mxu0 0
        %4228 = vmatprep.subr.bf16.mxu0 0
        %4229 = vmatpush1.bf16.msra.mxu0 %v4212
        %4230 = vmatprep.subr.bf16.mxu0 0
        %4231 = vmatpush2.bf16.msra.mxu0 0
        %4232 = vmatprep.subr.bf16.mxu0 0
        %4233 = vmatpush2.bf16.msra.mxu0 0
        %4234 = vmatprep.subr.bf16.mxu0 0
        %4235 = vmatpush2.bf16.msra.mxu0 0
        %4236 = vmatprep.subr.bf16.mxu0 0
        %4237 = vmatpush2.bf16.msra.mxu0 0
        %4238 = vmatprep.subr.bf16.mxu0 0
        %4239 = vmatpush2.bf16.msra.mxu0 0
        %4240 = vmatprep.subr.bf16.mxu0 0
        %4241 = vmatpush2.bf16.msra.mxu0 0
        %4242 = vmatprep.subr.bf16.mxu0 0
        %4243 = vmatpush2.bf16.msra.mxu0 0
        %4244 = vmatprep.subr.bf16.mxu0 0
        %4245 = vmatpush2.bf16.msra.mxu0 0
        %4246 = vmatprep.mubr.bf16.mxu0 0
        %4247 = vmatmul.mubr.bf16.gmra.mxu0 %v4209
        %v4248 = vpop.f32.mrf.mxu0
        %v4249 = vadd.f32 0.0, %v4248
        %v4250 = vpop.f32.mrf.mxu0
        %v4251 = vpop.f32.mrf.mxu0
        %v4252 = vpop.f32.mrf.mxu0
        %4253 = vdwg.mxu0
        %v4254 = vpack.c.b16 %v3825, %v3825
        %4255 = vrot.lane.b32.xlu0 %v4254, 64
        %v4256 = vpop.permute.xlu0 %4255
        %v4258 = vsel %vm3948, %v4204, 0
        %v4261 = vsel %vm3976, %v4256, 0
        %4263 = vmatprep.subr.bf16.mxu0 0
        %4264 = vmatpush1.bf16.msra.mxu0 0
        %4265 = vmatprep.subr.bf16.mxu0 0
        %4266 = vmatpush1.bf16.msra.mxu0 0
        %4267 = vmatprep.subr.bf16.mxu0 0
        %4268 = vmatpush1.bf16.msra.mxu0 0
        %4269 = vmatprep.subr.bf16.mxu0 0
        %4270 = vmatpush1.bf16.msra.mxu0 0
        %4271 = vmatprep.subr.bf16.mxu0 0
        %4272 = vmatpush1.bf16.msra.mxu0 0
        %4273 = vmatprep.subr.bf16.mxu0 0
        %4274 = vmatpush1.bf16.msra.mxu0 0
        %4275 = vmatprep.subr.bf16.mxu0 0
        %4276 = vmatpush1.bf16.msra.mxu0 0
        %4277 = vmatprep.subr.bf16.mxu0 0
        %4278 = vmatpush1.bf16.msra.mxu0 %v4261
        %4279 = vmatprep.subr.bf16.mxu0 0
        %4280 = vmatpush2.bf16.msra.mxu0 0
        %4281 = vmatprep.subr.bf16.mxu0 0
        %4282 = vmatpush2.bf16.msra.mxu0 0
        %4283 = vmatprep.subr.bf16.mxu0 0
        %4284 = vmatpush2.bf16.msra.mxu0 0
        %4285 = vmatprep.subr.bf16.mxu0 0
        %4286 = vmatpush2.bf16.msra.mxu0 0
        %4287 = vmatprep.subr.bf16.mxu0 0
        %4288 = vmatpush2.bf16.msra.mxu0 0
        %4289 = vmatprep.subr.bf16.mxu0 0
        %4290 = vmatpush2.bf16.msra.mxu0 0
        %4291 = vmatprep.subr.bf16.mxu0 0
        %4292 = vmatpush2.bf16.msra.mxu0 0
        %4293 = vmatprep.subr.bf16.mxu0 0
        %4294 = vmatpush2.bf16.msra.mxu0 0
        %4295 = vmatprep.mubr.bf16.mxu0 0
        %4296 = vmatmul.mubr.bf16.gmra.mxu0 %v4258
        %v4297 = vpop.f32.mrf.mxu0
        %v4298 = vadd.f32 0.0, %v4297
        %v4299 = vpop.f32.mrf.mxu0
        %v4300 = vpop.f32.mrf.mxu0
        %v4301 = vpop.f32.mrf.mxu0
        %4302 = vdwg.mxu0
        %v4303 = vpack.c.bf16 %v4298, %v4249
        %v4305 = vunpack.c.l.b16 %v4303
        %v4306 = vunpack.c.h.b16 %v4303
        %v4307 = vpack.c.b16 %v4305, %v4305
        %v4308 = vpack.c.b16 %v4306, %v4306
        %4309 = vrot.lane.b32.xlu0 %v4307, 64
        %v4310 = vpop.permute.xlu0 %4309
        %4311 = vrot.lane.b32.xlu0 %v4308, 64
        %v4312 = vpop.permute.xlu0 %4311
        %vm4315 = vcmask 1043968
        %4316 = vst.msk [vmem:[#allocation2] sm:$0xf] %vm4315, %v4310
        %4317 = vst.msk [vmem:[#allocation2 + $0x10] sm:$0xf] %vm4315, %v4312
        %v4318 = vrot.slane %v3797, 4
        %v4319 = vrot.slane %v3813, 4
        %v4321 = vsel %vm3855, %v4318, 0
        %v4324 = vsel %vm3855, %v4319, 0
        %4326 = vmatprep.subr.bf16.mxu0 0
        %4327 = vmatpush1.bf16.xpose.msra.mxu0 0
        %4328 = vmatprep.subr.bf16.mxu0 0
        %4329 = vmatpush1.bf16.xpose.msra.mxu0 0
        %4330 = vmatprep.subr.bf16.mxu0 0
        %4331 = vmatpush1.bf16.xpose.msra.mxu0 0
        %4332 = vmatprep.subr.bf16.mxu0 0
        %4333 = vmatpush1.bf16.xpose.msra.mxu0 0
        %4334 = vmatprep.subr.bf16.mxu0 0
        %4335 = vmatpush1.bf16.xpose.msra.mxu0 0
        %4336 = vmatprep.subr.bf16.mxu0 0
        %4337 = vmatpush1.bf16.xpose.msra.mxu0 0
        %4338 = vmatprep.subr.bf16.mxu0 0
        %4339 = vmatpush1.bf16.xpose.msra.mxu0 0
        %4340 = vmatprep.subr.bf16.mxu0 0
        %4341 = vmatpush1.bf16.xpose.msra.mxu0 %v4324
        %4342 = vmatprep.subr.bf16.mxu0 0
        %4343 = vmatpush2.bf16.xpose.msra.mxu0 0
        %4344 = vmatprep.subr.bf16.mxu0 0
        %4345 = vmatpush2.bf16.xpose.msra.mxu0 0
        %4346 = vmatprep.subr.bf16.mxu0 0
        %4347 = vmatpush2.bf16.xpose.msra.mxu0 0
        %4348 = vmatprep.subr.bf16.mxu0 0
        %4349 = vmatpush2.bf16.xpose.msra.mxu0 0
        %4350 = vmatprep.subr.bf16.mxu0 0
        %4351 = vmatpush2.bf16.xpose.msra.mxu0 0
        %4352 = vmatprep.subr.bf16.mxu0 0
        %4353 = vmatpush2.bf16.xpose.msra.mxu0 0
        %4354 = vmatprep.subr.bf16.mxu0 0
        %4355 = vmatpush2.bf16.xpose.msra.mxu0 0
        %4356 = vmatprep.subr.bf16.mxu0 0
        %4357 = vmatpush2.bf16.xpose.msra.mxu0 0
        %4358 = vmatprep.mubr.bf16.mxu0 0
        %4359 = vmatmul.mubr.bf16.gmra.mxu0 %v4321
        %v4360 = vpop.f32.mrf.mxu0
        %v4361 = vadd.f32 %v3853, %v4360
        %v4362 = vpop.f32.mrf.mxu0
        %v4363 = vpop.f32.mrf.mxu0
        %v4364 = vpop.f32.mrf.mxu0
        %4365 = vdwg.mxu0
        %v4366 = vrot.slane %v3799, 4
        %v4367 = vrot.slane %v3815, 4
        %v4369 = vsel %vm3855, %v4366, 0
        %v4372 = vsel %vm3855, %v4367, 0
        %4374 = vmatprep.subr.bf16.mxu0 0
        %4375 = vmatpush1.bf16.xpose.msra.mxu0 0
        %4376 = vmatprep.subr.bf16.mxu0 0
        %4377 = vmatpush1.bf16.xpose.msra.mxu0 0
        %4378 = vmatprep.subr.bf16.mxu0 0
        %4379 = vmatpush1.bf16.xpose.msra.mxu0 0
        %4380 = vmatprep.subr.bf16.mxu0 0
        %4381 = vmatpush1.bf16.xpose.msra.mxu0 0
        %4382 = vmatprep.subr.bf16.mxu0 0
        %4383 = vmatpush1.bf16.xpose.msra.mxu0 0
        %4384 = vmatprep.subr.bf16.mxu0 0
        %4385 = vmatpush1.bf16.xpose.msra.mxu0 0
        %4386 = vmatprep.subr.bf16.mxu0 0
        %4387 = vmatpush1.bf16.xpose.msra.mxu0 0
        %4388 = vmatprep.subr.bf16.mxu0 0
        %4389 = vmatpush1.bf16.xpose.msra.mxu0 %v4372
        %4390 = vmatprep.subr.bf16.mxu0 0
        %4391 = vmatpush2.bf16.xpose.msra.mxu0 0
        %4392 = vmatprep.subr.bf16.mxu0 0
        %4393 = vmatpush2.bf16.xpose.msra.mxu0 0
        %4394 = vmatprep.subr.bf16.mxu0 0
        %4395 = vmatpush2.bf16.xpose.msra.mxu0 0
        %4396 = vmatprep.subr.bf16.mxu0 0
        %4397 = vmatpush2.bf16.xpose.msra.mxu0 0
        %4398 = vmatprep.subr.bf16.mxu0 0
        %4399 = vmatpush2.bf16.xpose.msra.mxu0 0
        %4400 = vmatprep.subr.bf16.mxu0 0
        %4401 = vmatpush2.bf16.xpose.msra.mxu0 0
        %4402 = vmatprep.subr.bf16.mxu0 0
        %4403 = vmatpush2.bf16.xpose.msra.mxu0 0
        %4404 = vmatprep.subr.bf16.mxu0 0
        %4405 = vmatpush2.bf16.xpose.msra.mxu0 0
        %4406 = vmatprep.mubr.bf16.mxu0 0
        %4407 = vmatmul.mubr.bf16.gmra.mxu0 %v4369
        %v4408 = vpop.f32.mrf.mxu0
        %v4409 = vadd.f32 %v3854, %v4408
        %v4410 = vpop.f32.mrf.mxu0
        %v4411 = vpop.f32.mrf.mxu0
        %v4412 = vpop.f32.mrf.mxu0
        %4413 = vdwg.mxu0
        %v4414 = vsel %vm3948, %v4361, -inf
        %4415 = vmax.xlane.f32.xlu0 %v4414
        %v4416 = vpop.xlane.xlu0 %4415
        %v4417 = vsel %vm3948, %v4409, -inf
        %4418 = vmax.xlane.f32.xlu0 %v4417
        %v4419 = vpop.xlane.xlu0 %4418
        %v4420 = vsub.f32 %v4361, %v4416
        %v4421 = vsub.f32 %v4409, %v4419
        %v4422 = vmul.f32 %v4420, 1.442695
        %v4423 = vpow.pop %v4422
        %v4424 = vmul.f32 %v4421, 1.442695
        %v4425 = vpow.pop %v4424
        %v4426 = vsel %vm3948, %v4423, 0.0
        %4427 = vadd.xlane.f32.xlu0 %v4426
        %v4428 = vpop.xlane.xlu0 %4427
        %v4429 = vsel %vm3948, %v4425, 0.0
        %4430 = vadd.xlane.f32.xlu0 %v4429
        %v4431 = vpop.xlane.xlu0 %4430
        %v4432 = vrcp.pop %v4428
        %v4433 = vrcp.pop %v4431
        %v4434 = vmul.f32 %v4423, %v4432
        %v4435 = vmul.f32 %v4425, %v4433
        %v4436 = vpack.c.bf16 %v4434, %v4434
        %v4437 = vpack.c.bf16 %v4435, %v4435
        %v4438 = vrot.slane %v3829, 4
        %v4440 = vsel %vm3948, %v4436, 0
        %v4443 = vsel %vm3976, %v4438, 0
        %4445 = vmatprep.subr.bf16.mxu0 0
        %4446 = vmatpush1.bf16.msra.mxu0 0
        %4447 = vmatprep.subr.bf16.mxu0 0
        %4448 = vmatpush1.bf16.msra.mxu0 0
        %4449 = vmatprep.subr.bf16.mxu0 0
        %4450 = vmatpush1.bf16.msra.mxu0 0
        %4451 = vmatprep.subr.bf16.mxu0 0
        %4452 = vmatpush1.bf16.msra.mxu0 0
        %4453 = vmatprep.subr.bf16.mxu0 0
        %4454 = vmatpush1.bf16.msra.mxu0 0
        %4455 = vmatprep.subr.bf16.mxu0 0
        %4456 = vmatpush1.bf16.msra.mxu0 0
        %4457 = vmatprep.subr.bf16.mxu0 0
        %4458 = vmatpush1.bf16.msra.mxu0 0
        %4459 = vmatprep.subr.bf16.mxu0 0
        %4460 = vmatpush1.bf16.msra.mxu0 %v4443
        %4461 = vmatprep.subr.bf16.mxu0 0
        %4462 = vmatpush2.bf16.msra.mxu0 0
        %4463 = vmatprep.subr.bf16.mxu0 0
        %4464 = vmatpush2.bf16.msra.mxu0 0
        %4465 = vmatprep.subr.bf16.mxu0 0
        %4466 = vmatpush2.bf16.msra.mxu0 0
        %4467 = vmatprep.subr.bf16.mxu0 0
        %4468 = vmatpush2.bf16.msra.mxu0 0
        %4469 = vmatprep.subr.bf16.mxu0 0
        %4470 = vmatpush2.bf16.msra.mxu0 0
        %4471 = vmatprep.subr.bf16.mxu0 0
        %4472 = vmatpush2.bf16.msra.mxu0 0
        %4473 = vmatprep.subr.bf16.mxu0 0
        %4474 = vmatpush2.bf16.msra.mxu0 0
        %4475 = vmatprep.subr.bf16.mxu0 0
        %4476 = vmatpush2.bf16.msra.mxu0 0
        %4477 = vmatprep.mubr.bf16.mxu0 0
        %4478 = vmatmul.mubr.bf16.gmra.mxu0 %v4440
        %v4479 = vpop.f32.mrf.mxu0
        %v4480 = vadd.f32 0.0, %v4479
        %v4481 = vpop.f32.mrf.mxu0
        %v4482 = vpop.f32.mrf.mxu0
        %v4483 = vpop.f32.mrf.mxu0
        %4484 = vdwg.mxu0
        %v4485 = vrot.slane %v3831, 4
        %v4487 = vsel %vm3948, %v4437, 0
        %v4490 = vsel %vm3976, %v4485, 0
        %4492 = vmatprep.subr.bf16.mxu0 0
        %4493 = vmatpush1.bf16.msra.mxu0 0
        %4494 = vmatprep.subr.bf16.mxu0 0
        %4495 = vmatpush1.bf16.msra.mxu0 0
        %4496 = vmatprep.subr.bf16.mxu0 0
        %4497 = vmatpush1.bf16.msra.mxu0 0
        %4498 = vmatprep.subr.bf16.mxu0 0
        %4499 = vmatpush1.bf16.msra.mxu0 0
        %4500 = vmatprep.subr.bf16.mxu0 0
        %4501 = vmatpush1.bf16.msra.mxu0 0
        %4502 = vmatprep.subr.bf16.mxu0 0
        %4503 = vmatpush1.bf16.msra.mxu0 0
        %4504 = vmatprep.subr.bf16.mxu0 0
        %4505 = vmatpush1.bf16.msra.mxu0 0
        %4506 = vmatprep.subr.bf16.mxu0 0
        %4507 = vmatpush1.bf16.msra.mxu0 %v4490
        %4508 = vmatprep.subr.bf16.mxu0 0
        %4509 = vmatpush2.bf16.msra.mxu0 0
        %4510 = vmatprep.subr.bf16.mxu0 0
        %4511 = vmatpush2.bf16.msra.mxu0 0
        %4512 = vmatprep.subr.bf16.mxu0 0
        %4513 = vmatpush2.bf16.msra.mxu0 0
        %4514 = vmatprep.subr.bf16.mxu0 0
        %4515 = vmatpush2.bf16.msra.mxu0 0
        %4516 = vmatprep.subr.bf16.mxu0 0
        %4517 = vmatpush2.bf16.msra.mxu0 0
        %4518 = vmatprep.subr.bf16.mxu0 0
        %4519 = vmatpush2.bf16.msra.mxu0 0
        %4520 = vmatprep.subr.bf16.mxu0 0
        %4521 = vmatpush2.bf16.msra.mxu0 0
        %4522 = vmatprep.subr.bf16.mxu0 0
        %4523 = vmatpush2.bf16.msra.mxu0 0
        %4524 = vmatprep.mubr.bf16.mxu0 0
        %4525 = vmatmul.mubr.bf16.gmra.mxu0 %v4487
        %v4526 = vpop.f32.mrf.mxu0
        %v4527 = vadd.f32 0.0, %v4526
        %v4528 = vpop.f32.mrf.mxu0
        %v4529 = vpop.f32.mrf.mxu0
        %v4530 = vpop.f32.mrf.mxu0
        %4531 = vdwg.mxu0
        %v4532 = vpack.c.bf16 %v4527, %v4480
        %v4534 = vunpack.c.l.b16 %v4532
        %v4535 = vunpack.c.h.b16 %v4532
        %v4536 = vpack.c.b16 %v4534, %v4534
        %v4537 = vpack.c.b16 %v4535, %v4535
        %4540 = vst.msk [vmem:[#allocation2 + $0x4] sm:$0xf] %vm4074, %v4536
        %4541 = vst.msk [vmem:[#allocation2 + $0x14] sm:$0xf] %vm4074, %v4537
        %4542 = vrot.lane.b32.xlu0 %v3797, 64
        %v4543 = vpop.permute.xlu0 %4542
        %v4544 = vrot.slane %v4543, 4
        %4545 = vrot.lane.b32.xlu0 %v3813, 64
        %v4546 = vpop.permute.xlu0 %4545
        %v4547 = vrot.slane %v4546, 4
        %v4549 = vsel %vm3855, %v4544, 0
        %v4552 = vsel %vm3855, %v4547, 0
        %4554 = vmatprep.subr.bf16.mxu0 0
        %4555 = vmatpush1.bf16.xpose.msra.mxu0 0
        %4556 = vmatprep.subr.bf16.mxu0 0
        %4557 = vmatpush1.bf16.xpose.msra.mxu0 0
        %4558 = vmatprep.subr.bf16.mxu0 0
        %4559 = vmatpush1.bf16.xpose.msra.mxu0 0
        %4560 = vmatprep.subr.bf16.mxu0 0
        %4561 = vmatpush1.bf16.xpose.msra.mxu0 0
        %4562 = vmatprep.subr.bf16.mxu0 0
        %4563 = vmatpush1.bf16.xpose.msra.mxu0 0
        %4564 = vmatprep.subr.bf16.mxu0 0
        %4565 = vmatpush1.bf16.xpose.msra.mxu0 0
        %4566 = vmatprep.subr.bf16.mxu0 0
        %4567 = vmatpush1.bf16.xpose.msra.mxu0 0
        %4568 = vmatprep.subr.bf16.mxu0 0
        %4569 = vmatpush1.bf16.xpose.msra.mxu0 %v4552
        %4570 = vmatprep.subr.bf16.mxu0 0
        %4571 = vmatpush2.bf16.xpose.msra.mxu0 0
        %4572 = vmatprep.subr.bf16.mxu0 0
        %4573 = vmatpush2.bf16.xpose.msra.mxu0 0
        %4574 = vmatprep.subr.bf16.mxu0 0
        %4575 = vmatpush2.bf16.xpose.msra.mxu0 0
        %4576 = vmatprep.subr.bf16.mxu0 0
        %4577 = vmatpush2.bf16.xpose.msra.mxu0 0
        %4578 = vmatprep.subr.bf16.mxu0 0
        %4579 = vmatpush2.bf16.xpose.msra.mxu0 0
        %4580 = vmatprep.subr.bf16.mxu0 0
        %4581 = vmatpush2.bf16.xpose.msra.mxu0 0
        %4582 = vmatprep.subr.bf16.mxu0 0
        %4583 = vmatpush2.bf16.xpose.msra.mxu0 0
        %4584 = vmatprep.subr.bf16.mxu0 0
        %4585 = vmatpush2.bf16.xpose.msra.mxu0 0
        %4586 = vmatprep.mubr.bf16.mxu0 0
        %4587 = vmatmul.mubr.bf16.gmra.mxu0 %v4549
        %v4588 = vpop.f32.mrf.mxu0
        %v4589 = vadd.f32 %v3853, %v4588
        %v4590 = vpop.f32.mrf.mxu0
        %v4591 = vpop.f32.mrf.mxu0
        %v4592 = vpop.f32.mrf.mxu0
        %4593 = vdwg.mxu0
        %4594 = vrot.lane.b32.xlu0 %v3799, 64
        %v4595 = vpop.permute.xlu0 %4594
        %v4596 = vrot.slane %v4595, 4
        %4597 = vrot.lane.b32.xlu0 %v3815, 64
        %v4598 = vpop.permute.xlu0 %4597
        %v4599 = vrot.slane %v4598, 4
        %v4601 = vsel %vm3855, %v4596, 0
        %v4604 = vsel %vm3855, %v4599, 0
        %4606 = vmatprep.subr.bf16.mxu0 0
        %4607 = vmatpush1.bf16.xpose.msra.mxu0 0
        %4608 = vmatprep.subr.bf16.mxu0 0
        %4609 = vmatpush1.bf16.xpose.msra.mxu0 0
        %4610 = vmatprep.subr.bf16.mxu0 0
        %4611 = vmatpush1.bf16.xpose.msra.mxu0 0
        %4612 = vmatprep.subr.bf16.mxu0 0
        %4613 = vmatpush1.bf16.xpose.msra.mxu0 0
        %4614 = vmatprep.subr.bf16.mxu0 0
        %4615 = vmatpush1.bf16.xpose.msra.mxu0 0
        %4616 = vmatprep.subr.bf16.mxu0 0
        %4617 = vmatpush1.bf16.xpose.msra.mxu0 0
        %4618 = vmatprep.subr.bf16.mxu0 0
        %4619 = vmatpush1.bf16.xpose.msra.mxu0 0
        %4620 = vmatprep.subr.bf16.mxu0 0
        %4621 = vmatpush1.bf16.xpose.msra.mxu0 %v4604
        %4622 = vmatprep.subr.bf16.mxu0 0
        %4623 = vmatpush2.bf16.xpose.msra.mxu0 0
        %4624 = vmatprep.subr.bf16.mxu0 0
        %4625 = vmatpush2.bf16.xpose.msra.mxu0 0
        %4626 = vmatprep.subr.bf16.mxu0 0
        %4627 = vmatpush2.bf16.xpose.msra.mxu0 0
        %4628 = vmatprep.subr.bf16.mxu0 0
        %4629 = vmatpush2.bf16.xpose.msra.mxu0 0
        %4630 = vmatprep.subr.bf16.mxu0 0
        %4631 = vmatpush2.bf16.xpose.msra.mxu0 0
        %4632 = vmatprep.subr.bf16.mxu0 0
        %4633 = vmatpush2.bf16.xpose.msra.mxu0 0
        %4634 = vmatprep.subr.bf16.mxu0 0
        %4635 = vmatpush2.bf16.xpose.msra.mxu0 0
        %4636 = vmatprep.subr.bf16.mxu0 0
        %4637 = vmatpush2.bf16.xpose.msra.mxu0 0
        %4638 = vmatprep.mubr.bf16.mxu0 0
        %4639 = vmatmul.mubr.bf16.gmra.mxu0 %v4601
        %v4640 = vpop.f32.mrf.mxu0
        %v4641 = vadd.f32 %v3854, %v4640
        %v4642 = vpop.f32.mrf.mxu0
        %v4643 = vpop.f32.mrf.mxu0
        %v4644 = vpop.f32.mrf.mxu0
        %4645 = vdwg.mxu0
        %v4646 = vsel %vm3948, %v4589, -inf
        %4647 = vmax.xlane.f32.xlu0 %v4646
        %v4648 = vpop.xlane.xlu0 %4647
        %v4649 = vsel %vm3948, %v4641, -inf
        %4650 = vmax.xlane.f32.xlu0 %v4649
        %v4651 = vpop.xlane.xlu0 %4650
        %v4652 = vsub.f32 %v4589, %v4648
        %v4653 = vsub.f32 %v4641, %v4651
        %v4654 = vmul.f32 %v4652, 1.442695
        %v4655 = vpow.pop %v4654
        %v4656 = vmul.f32 %v4653, 1.442695
        %v4657 = vpow.pop %v4656
        %v4658 = vsel %vm3948, %v4655, 0.0
        %4659 = vadd.xlane.f32.xlu0 %v4658
        %v4660 = vpop.xlane.xlu0 %4659
        %v4661 = vsel %vm3948, %v4657, 0.0
        %4662 = vadd.xlane.f32.xlu0 %v4661
        %v4663 = vpop.xlane.xlu0 %4662
        %v4664 = vrcp.pop %v4660
        %v4665 = vrcp.pop %v4663
        %v4666 = vmul.f32 %v4655, %v4664
        %v4667 = vmul.f32 %v4657, %v4665
        %v4668 = vpack.c.bf16 %v4666, %v4666
        %v4669 = vpack.c.bf16 %v4667, %v4667
        %4670 = vrot.lane.b32.xlu0 %v3829, 64
        %v4671 = vpop.permute.xlu0 %4670
        %v4672 = vrot.slane %v4671, 4
        %v4674 = vsel %vm3948, %v4668, 0
        %v4677 = vsel %vm3976, %v4672, 0
        %4679 = vmatprep.subr.bf16.mxu0 0
        %4680 = vmatpush1.bf16.msra.mxu0 0
        %4681 = vmatprep.subr.bf16.mxu0 0
        %4682 = vmatpush1.bf16.msra.mxu0 0
        %4683 = vmatprep.subr.bf16.mxu0 0
        %4684 = vmatpush1.bf16.msra.mxu0 0
        %4685 = vmatprep.subr.bf16.mxu0 0
        %4686 = vmatpush1.bf16.msra.mxu0 0
        %4687 = vmatprep.subr.bf16.mxu0 0
        %4688 = vmatpush1.bf16.msra.mxu0 0
        %4689 = vmatprep.subr.bf16.mxu0 0
        %4690 = vmatpush1.bf16.msra.mxu0 0
        %4691 = vmatprep.subr.bf16.mxu0 0
        %4692 = vmatpush1.bf16.msra.mxu0 0
        %4693 = vmatprep.subr.bf16.mxu0 0
        %4694 = vmatpush1.bf16.msra.mxu0 %v4677
        %4695 = vmatprep.subr.bf16.mxu0 0
        %4696 = vmatpush2.bf16.msra.mxu0 0
        %4697 = vmatprep.subr.bf16.mxu0 0
        %4698 = vmatpush2.bf16.msra.mxu0 0
        %4699 = vmatprep.subr.bf16.mxu0 0
        %4700 = vmatpush2.bf16.msra.mxu0 0
        %4701 = vmatprep.subr.bf16.mxu0 0
        %4702 = vmatpush2.bf16.msra.mxu0 0
        %4703 = vmatprep.subr.bf16.mxu0 0
        %4704 = vmatpush2.bf16.msra.mxu0 0
        %4705 = vmatprep.subr.bf16.mxu0 0
        %4706 = vmatpush2.bf16.msra.mxu0 0
        %4707 = vmatprep.subr.bf16.mxu0 0
        %4708 = vmatpush2.bf16.msra.mxu0 0
        %4709 = vmatprep.subr.bf16.mxu0 0
        %4710 = vmatpush2.bf16.msra.mxu0 0
        %4711 = vmatprep.mubr.bf16.mxu0 0
        %4712 = vmatmul.mubr.bf16.gmra.mxu0 %v4674
        %v4713 = vpop.f32.mrf.mxu0
        %v4714 = vadd.f32 0.0, %v4713
        %v4715 = vpop.f32.mrf.mxu0
        %v4716 = vpop.f32.mrf.mxu0
        %v4717 = vpop.f32.mrf.mxu0
        %4718 = vdwg.mxu0
        %4719 = vrot.lane.b32.xlu0 %v3831, 64
        %v4720 = vpop.permute.xlu0 %4719
        %v4721 = vrot.slane %v4720, 4
        %v4723 = vsel %vm3948, %v4669, 0
        %v4726 = vsel %vm3976, %v4721, 0
        %4728 = vmatprep.subr.bf16.mxu0 0
        %4729 = vmatpush1.bf16.msra.mxu0 0
        %4730 = vmatprep.subr.bf16.mxu0 0
        %4731 = vmatpush1.bf16.msra.mxu0 0
        %4732 = vmatprep.subr.bf16.mxu0 0
        %4733 = vmatpush1.bf16.msra.mxu0 0
        %4734 = vmatprep.subr.bf16.mxu0 0
        %4735 = vmatpush1.bf16.msra.mxu0 0
        %4736 = vmatprep.subr.bf16.mxu0 0
        %4737 = vmatpush1.bf16.msra.mxu0 0
        %4738 = vmatprep.subr.bf16.mxu0 0
        %4739 = vmatpush1.bf16.msra.mxu0 0
        %4740 = vmatprep.subr.bf16.mxu0 0
        %4741 = vmatpush1.bf16.msra.mxu0 0
        %4742 = vmatprep.subr.bf16.mxu0 0
        %4743 = vmatpush1.bf16.msra.mxu0 %v4726
        %4744 = vmatprep.subr.bf16.mxu0 0
        %4745 = vmatpush2.bf16.msra.mxu0 0
        %4746 = vmatprep.subr.bf16.mxu0 0
        %4747 = vmatpush2.bf16.msra.mxu0 0
        %4748 = vmatprep.subr.bf16.mxu0 0
        %4749 = vmatpush2.bf16.msra.mxu0 0
        %4750 = vmatprep.subr.bf16.mxu0 0
        %4751 = vmatpush2.bf16.msra.mxu0 0
        %4752 = vmatprep.subr.bf16.mxu0 0
        %4753 = vmatpush2.bf16.msra.mxu0 0
        %4754 = vmatprep.subr.bf16.mxu0 0
        %4755 = vmatpush2.bf16.msra.mxu0 0
        %4756 = vmatprep.subr.bf16.mxu0 0
        %4757 = vmatpush2.bf16.msra.mxu0 0
        %4758 = vmatprep.subr.bf16.mxu0 0
        %4759 = vmatpush2.bf16.msra.mxu0 0
        %4760 = vmatprep.mubr.bf16.mxu0 0
        %4761 = vmatmul.mubr.bf16.gmra.mxu0 %v4723
        %v4762 = vpop.f32.mrf.mxu0
        %v4763 = vadd.f32 0.0, %v4762
        %v4764 = vpop.f32.mrf.mxu0
        %v4765 = vpop.f32.mrf.mxu0
        %v4766 = vpop.f32.mrf.mxu0
        %4767 = vdwg.mxu0
        %v4768 = vpack.c.bf16 %v4763, %v4714
        %v4770 = vunpack.c.l.b16 %v4768
        %v4771 = vunpack.c.h.b16 %v4768
        %v4772 = vpack.c.b16 %v4770, %v4770
        %v4773 = vpack.c.b16 %v4771, %v4771
        %4774 = vrot.lane.b32.xlu0 %v4772, 64
        %v4775 = vpop.permute.xlu0 %4774
        %4776 = vrot.lane.b32.xlu0 %v4773, 64
        %v4777 = vpop.permute.xlu0 %4776
        %4780 = vst.msk [vmem:[#allocation2 + $0x4] sm:$0xf] %vm4315, %v4775
        %4781 = vst.msk [vmem:[#allocation2 + $0x14] sm:$0xf] %vm4315, %v4777
        %v4783 = vsel %vm3855, %v3798, 0
        %v4786 = vsel %vm3855, %v3814, 0
        %4788 = vmatprep.subr.bf16.mxu0 0
        %4789 = vmatpush1.bf16.xpose.msra.mxu0 0
        %4790 = vmatprep.subr.bf16.mxu0 0
        %4791 = vmatpush1.bf16.xpose.msra.mxu0 0
        %4792 = vmatprep.subr.bf16.mxu0 0
        %4793 = vmatpush1.bf16.xpose.msra.mxu0 0
        %4794 = vmatprep.subr.bf16.mxu0 0
        %4795 = vmatpush1.bf16.xpose.msra.mxu0 0
        %4796 = vmatprep.subr.bf16.mxu0 0
        %4797 = vmatpush1.bf16.xpose.msra.mxu0 0
        %4798 = vmatprep.subr.bf16.mxu0 0
        %4799 = vmatpush1.bf16.xpose.msra.mxu0 0
        %4800 = vmatprep.subr.bf16.mxu0 0
        %4801 = vmatpush1.bf16.xpose.msra.mxu0 0
        %4802 = vmatprep.subr.bf16.mxu0 0
        %4803 = vmatpush1.bf16.xpose.msra.mxu0 %v4786
        %4804 = vmatprep.subr.bf16.mxu0 0
        %4805 = vmatpush2.bf16.xpose.msra.mxu0 0
        %4806 = vmatprep.subr.bf16.mxu0 0
        %4807 = vmatpush2.bf16.xpose.msra.mxu0 0
        %4808 = vmatprep.subr.bf16.mxu0 0
        %4809 = vmatpush2.bf16.xpose.msra.mxu0 0
        %4810 = vmatprep.subr.bf16.mxu0 0
        %4811 = vmatpush2.bf16.xpose.msra.mxu0 0
        %4812 = vmatprep.subr.bf16.mxu0 0
        %4813 = vmatpush2.bf16.xpose.msra.mxu0 0
        %4814 = vmatprep.subr.bf16.mxu0 0
        %4815 = vmatpush2.bf16.xpose.msra.mxu0 0
        %4816 = vmatprep.subr.bf16.mxu0 0
        %4817 = vmatpush2.bf16.xpose.msra.mxu0 0
        %4818 = vmatprep.subr.bf16.mxu0 0
        %4819 = vmatpush2.bf16.xpose.msra.mxu0 0
        %4820 = vmatprep.mubr.bf16.mxu0 0
        %4821 = vmatmul.mubr.bf16.gmra.mxu0 %v4783
        %v4822 = vpop.f32.mrf.mxu0
        %v4823 = vadd.f32 %v3853, %v4822
        %v4824 = vpop.f32.mrf.mxu0
        %v4825 = vpop.f32.mrf.mxu0
        %v4826 = vpop.f32.mrf.mxu0
        %4827 = vdwg.mxu0
        %v4829 = vsel %vm3855, %v3800, 0
        %v4832 = vsel %vm3855, %v3816, 0
        %4834 = vmatprep.subr.bf16.mxu0 0
        %4835 = vmatpush1.bf16.xpose.msra.mxu0 0
        %4836 = vmatprep.subr.bf16.mxu0 0
        %4837 = vmatpush1.bf16.xpose.msra.mxu0 0
        %4838 = vmatprep.subr.bf16.mxu0 0
        %4839 = vmatpush1.bf16.xpose.msra.mxu0 0
        %4840 = vmatprep.subr.bf16.mxu0 0
        %4841 = vmatpush1.bf16.xpose.msra.mxu0 0
        %4842 = vmatprep.subr.bf16.mxu0 0
        %4843 = vmatpush1.bf16.xpose.msra.mxu0 0
        %4844 = vmatprep.subr.bf16.mxu0 0
        %4845 = vmatpush1.bf16.xpose.msra.mxu0 0
        %4846 = vmatprep.subr.bf16.mxu0 0
        %4847 = vmatpush1.bf16.xpose.msra.mxu0 0
        %4848 = vmatprep.subr.bf16.mxu0 0
        %4849 = vmatpush1.bf16.xpose.msra.mxu0 %v4832
        %4850 = vmatprep.subr.bf16.mxu0 0
        %4851 = vmatpush2.bf16.xpose.msra.mxu0 0
        %4852 = vmatprep.subr.bf16.mxu0 0
        %4853 = vmatpush2.bf16.xpose.msra.mxu0 0
        %4854 = vmatprep.subr.bf16.mxu0 0
        %4855 = vmatpush2.bf16.xpose.msra.mxu0 0
        %4856 = vmatprep.subr.bf16.mxu0 0
        %4857 = vmatpush2.bf16.xpose.msra.mxu0 0
        %4858 = vmatprep.subr.bf16.mxu0 0
        %4859 = vmatpush2.bf16.xpose.msra.mxu0 0
        %4860 = vmatprep.subr.bf16.mxu0 0
        %4861 = vmatpush2.bf16.xpose.msra.mxu0 0
        %4862 = vmatprep.subr.bf16.mxu0 0
        %4863 = vmatpush2.bf16.xpose.msra.mxu0 0
        %4864 = vmatprep.subr.bf16.mxu0 0
        %4865 = vmatpush2.bf16.xpose.msra.mxu0 0
        %4866 = vmatprep.mubr.bf16.mxu0 0
        %4867 = vmatmul.mubr.bf16.gmra.mxu0 %v4829
        %v4868 = vpop.f32.mrf.mxu0
        %v4869 = vadd.f32 %v3854, %v4868
        %v4870 = vpop.f32.mrf.mxu0
        %v4871 = vpop.f32.mrf.mxu0
        %v4872 = vpop.f32.mrf.mxu0
        %4873 = vdwg.mxu0
        %v4874 = vsel %vm3948, %v4823, -inf
        %4875 = vmax.xlane.f32.xlu0 %v4874
        %v4876 = vpop.xlane.xlu0 %4875
        %v4877 = vsel %vm3948, %v4869, -inf
        %4878 = vmax.xlane.f32.xlu0 %v4877
        %v4879 = vpop.xlane.xlu0 %4878
        %v4880 = vsub.f32 %v4823, %v4876
        %v4881 = vsub.f32 %v4869, %v4879
        %v4882 = vmul.f32 %v4880, 1.442695
        %v4883 = vpow.pop %v4882
        %v4884 = vmul.f32 %v4881, 1.442695
        %v4885 = vpow.pop %v4884
        %v4886 = vsel %vm3948, %v4883, 0.0
        %4887 = vadd.xlane.f32.xlu0 %v4886
        %v4888 = vpop.xlane.xlu0 %4887
        %v4889 = vsel %vm3948, %v4885, 0.0
        %4890 = vadd.xlane.f32.xlu0 %v4889
        %v4891 = vpop.xlane.xlu0 %4890
        %v4892 = vrcp.pop %v4888
        %v4893 = vrcp.pop %v4891
        %v4894 = vmul.f32 %v4883, %v4892
        %v4895 = vmul.f32 %v4885, %v4893
        %v4896 = vpack.c.bf16 %v4894, %v4894
        %v4897 = vpack.c.bf16 %v4895, %v4895
        %v4899 = vsel %vm3948, %v4896, 0
        %v4902 = vsel %vm3976, %v3830, 0
        %4904 = vmatprep.subr.bf16.mxu0 0
        %4905 = vmatpush1.bf16.msra.mxu0 0
        %4906 = vmatprep.subr.bf16.mxu0 0
        %4907 = vmatpush1.bf16.msra.mxu0 0
        %4908 = vmatprep.subr.bf16.mxu0 0
        %4909 = vmatpush1.bf16.msra.mxu0 0
        %4910 = vmatprep.subr.bf16.mxu0 0
        %4911 = vmatpush1.bf16.msra.mxu0 0
        %4912 = vmatprep.subr.bf16.mxu0 0
        %4913 = vmatpush1.bf16.msra.mxu0 0
        %4914 = vmatprep.subr.bf16.mxu0 0
        %4915 = vmatpush1.bf16.msra.mxu0 0
        %4916 = vmatprep.subr.bf16.mxu0 0
        %4917 = vmatpush1.bf16.msra.mxu0 0
        %4918 = vmatprep.subr.bf16.mxu0 0
        %4919 = vmatpush1.bf16.msra.mxu0 %v4902
        %4920 = vmatprep.subr.bf16.mxu0 0
        %4921 = vmatpush2.bf16.msra.mxu0 0
        %4922 = vmatprep.subr.bf16.mxu0 0
        %4923 = vmatpush2.bf16.msra.mxu0 0
        %4924 = vmatprep.subr.bf16.mxu0 0
        %4925 = vmatpush2.bf16.msra.mxu0 0
        %4926 = vmatprep.subr.bf16.mxu0 0
        %4927 = vmatpush2.bf16.msra.mxu0 0
        %4928 = vmatprep.subr.bf16.mxu0 0
        %4929 = vmatpush2.bf16.msra.mxu0 0
        %4930 = vmatprep.subr.bf16.mxu0 0
        %4931 = vmatpush2.bf16.msra.mxu0 0
        %4932 = vmatprep.subr.bf16.mxu0 0
        %4933 = vmatpush2.bf16.msra.mxu0 0
        %4934 = vmatprep.subr.bf16.mxu0 0
        %4935 = vmatpush2.bf16.msra.mxu0 0
        %4936 = vmatprep.mubr.bf16.mxu0 0
        %4937 = vmatmul.mubr.bf16.gmra.mxu0 %v4899
        %v4938 = vpop.f32.mrf.mxu0
        %v4939 = vadd.f32 0.0, %v4938
        %v4940 = vpop.f32.mrf.mxu0
        %v4941 = vpop.f32.mrf.mxu0
        %v4942 = vpop.f32.mrf.mxu0
        %4943 = vdwg.mxu0
        %v4945 = vsel %vm3948, %v4897, 0
        %v4948 = vsel %vm3976, %v3832, 0
        %4950 = vmatprep.subr.bf16.mxu0 0
        %4951 = vmatpush1.bf16.msra.mxu0 0
        %4952 = vmatprep.subr.bf16.mxu0 0
        %4953 = vmatpush1.bf16.msra.mxu0 0
        %4954 = vmatprep.subr.bf16.mxu0 0
        %4955 = vmatpush1.bf16.msra.mxu0 0
        %4956 = vmatprep.subr.bf16.mxu0 0
        %4957 = vmatpush1.bf16.msra.mxu0 0
        %4958 = vmatprep.subr.bf16.mxu0 0
        %4959 = vmatpush1.bf16.msra.mxu0 0
        %4960 = vmatprep.subr.bf16.mxu0 0
        %4961 = vmatpush1.bf16.msra.mxu0 0
        %4962 = vmatprep.subr.bf16.mxu0 0
        %4963 = vmatpush1.bf16.msra.mxu0 0
        %4964 = vmatprep.subr.bf16.mxu0 0
        %4965 = vmatpush1.bf16.msra.mxu0 %v4948
        %4966 = vmatprep.subr.bf16.mxu0 0
        %4967 = vmatpush2.bf16.msra.mxu0 0
        %4968 = vmatprep.subr.bf16.mxu0 0
        %4969 = vmatpush2.bf16.msra.mxu0 0
        %4970 = vmatprep.subr.bf16.mxu0 0
        %4971 = vmatpush2.bf16.msra.mxu0 0
        %4972 = vmatprep.subr.bf16.mxu0 0
        %4973 = vmatpush2.bf16.msra.mxu0 0
        %4974 = vmatprep.subr.bf16.mxu0 0
        %4975 = vmatpush2.bf16.msra.mxu0 0
        %4976 = vmatprep.subr.bf16.mxu0 0
        %4977 = vmatpush2.bf16.msra.mxu0 0
        %4978 = vmatprep.subr.bf16.mxu0 0
        %4979 = vmatpush2.bf16.msra.mxu0 0
        %4980 = vmatprep.subr.bf16.mxu0 0
        %4981 = vmatpush2.bf16.msra.mxu0 0
        %4982 = vmatprep.mubr.bf16.mxu0 0
        %4983 = vmatmul.mubr.bf16.gmra.mxu0 %v4945
        %v4984 = vpop.f32.mrf.mxu0
        %v4985 = vadd.f32 0.0, %v4984
        %v4986 = vpop.f32.mrf.mxu0
        %v4987 = vpop.f32.mrf.mxu0
        %v4988 = vpop.f32.mrf.mxu0
        %4989 = vdwg.mxu0
        %v4990 = vpack.c.bf16 %v4985, %v4939
        %v4992 = vunpack.c.l.b16 %v4990
        %v4993 = vunpack.c.h.b16 %v4990
        %v4994 = vpack.c.b16 %v4992, %v4992
        %v4995 = vpack.c.b16 %v4993, %v4993
        %4998 = vst.msk [vmem:[#allocation2 + $0x8] sm:$0xf] %vm4074, %v4994
        %4999 = vst.msk [vmem:[#allocation2 + $0x18] sm:$0xf] %vm4074, %v4995
        %v5000 = vpack.c.b16 %v3791, %v3791
        %5001 = vrot.lane.b32.xlu0 %v5000, 64
        %v5002 = vpop.permute.xlu0 %5001
        %v5003 = vpack.c.b16 %v3807, %v3807
        %5004 = vrot.lane.b32.xlu0 %v5003, 64
        %v5005 = vpop.permute.xlu0 %5004
        %v5007 = vsel %vm3855, %v5002, 0
        %v5010 = vsel %vm3855, %v5005, 0
        %5012 = vmatprep.subr.bf16.mxu0 0
        %5013 = vmatpush1.bf16.xpose.msra.mxu0 0
        %5014 = vmatprep.subr.bf16.mxu0 0
        %5015 = vmatpush1.bf16.xpose.msra.mxu0 0
        %5016 = vmatprep.subr.bf16.mxu0 0
        %5017 = vmatpush1.bf16.xpose.msra.mxu0 0
        %5018 = vmatprep.subr.bf16.mxu0 0
        %5019 = vmatpush1.bf16.xpose.msra.mxu0 0
        %5020 = vmatprep.subr.bf16.mxu0 0
        %5021 = vmatpush1.bf16.xpose.msra.mxu0 0
        %5022 = vmatprep.subr.bf16.mxu0 0
        %5023 = vmatpush1.bf16.xpose.msra.mxu0 0
        %5024 = vmatprep.subr.bf16.mxu0 0
        %5025 = vmatpush1.bf16.xpose.msra.mxu0 0
        %5026 = vmatprep.subr.bf16.mxu0 0
        %5027 = vmatpush1.bf16.xpose.msra.mxu0 %v5010
        %5028 = vmatprep.subr.bf16.mxu0 0
        %5029 = vmatpush2.bf16.xpose.msra.mxu0 0
        %5030 = vmatprep.subr.bf16.mxu0 0
        %5031 = vmatpush2.bf16.xpose.msra.mxu0 0
        %5032 = vmatprep.subr.bf16.mxu0 0
        %5033 = vmatpush2.bf16.xpose.msra.mxu0 0
        %5034 = vmatprep.subr.bf16.mxu0 0
        %5035 = vmatpush2.bf16.xpose.msra.mxu0 0
        %5036 = vmatprep.subr.bf16.mxu0 0
        %5037 = vmatpush2.bf16.xpose.msra.mxu0 0
        %5038 = vmatprep.subr.bf16.mxu0 0
        %5039 = vmatpush2.bf16.xpose.msra.mxu0 0
        %5040 = vmatprep.subr.bf16.mxu0 0
        %5041 = vmatpush2.bf16.xpose.msra.mxu0 0
        %5042 = vmatprep.subr.bf16.mxu0 0
        %5043 = vmatpush2.bf16.xpose.msra.mxu0 0
        %5044 = vmatprep.mubr.bf16.mxu0 0
        %5045 = vmatmul.mubr.bf16.gmra.mxu0 %v5007
        %v5046 = vpop.f32.mrf.mxu0
        %v5047 = vadd.f32 %v3853, %v5046
        %v5048 = vpop.f32.mrf.mxu0
        %v5049 = vpop.f32.mrf.mxu0
        %v5050 = vpop.f32.mrf.mxu0
        %5051 = vdwg.mxu0
        %v5052 = vpack.c.b16 %v3795, %v3795
        %5053 = vrot.lane.b32.xlu0 %v5052, 64
        %v5054 = vpop.permute.xlu0 %5053
        %v5055 = vpack.c.b16 %v3811, %v3811
        %5056 = vrot.lane.b32.xlu0 %v5055, 64
        %v5057 = vpop.permute.xlu0 %5056
        %v5059 = vsel %vm3855, %v5054, 0
        %v5062 = vsel %vm3855, %v5057, 0
        %5064 = vmatprep.subr.bf16.mxu0 0
        %5065 = vmatpush1.bf16.xpose.msra.mxu0 0
        %5066 = vmatprep.subr.bf16.mxu0 0
        %5067 = vmatpush1.bf16.xpose.msra.mxu0 0
        %5068 = vmatprep.subr.bf16.mxu0 0
        %5069 = vmatpush1.bf16.xpose.msra.mxu0 0
        %5070 = vmatprep.subr.bf16.mxu0 0
        %5071 = vmatpush1.bf16.xpose.msra.mxu0 0
        %5072 = vmatprep.subr.bf16.mxu0 0
        %5073 = vmatpush1.bf16.xpose.msra.mxu0 0
        %5074 = vmatprep.subr.bf16.mxu0 0
        %5075 = vmatpush1.bf16.xpose.msra.mxu0 0
        %5076 = vmatprep.subr.bf16.mxu0 0
        %5077 = vmatpush1.bf16.xpose.msra.mxu0 0
        %5078 = vmatprep.subr.bf16.mxu0 0
        %5079 = vmatpush1.bf16.xpose.msra.mxu0 %v5062
        %5080 = vmatprep.subr.bf16.mxu0 0
        %5081 = vmatpush2.bf16.xpose.msra.mxu0 0
        %5082 = vmatprep.subr.bf16.mxu0 0
        %5083 = vmatpush2.bf16.xpose.msra.mxu0 0
        %5084 = vmatprep.subr.bf16.mxu0 0
        %5085 = vmatpush2.bf16.xpose.msra.mxu0 0
        %5086 = vmatprep.subr.bf16.mxu0 0
        %5087 = vmatpush2.bf16.xpose.msra.mxu0 0
        %5088 = vmatprep.subr.bf16.mxu0 0
        %5089 = vmatpush2.bf16.xpose.msra.mxu0 0
        %5090 = vmatprep.subr.bf16.mxu0 0
        %5091 = vmatpush2.bf16.xpose.msra.mxu0 0
        %5092 = vmatprep.subr.bf16.mxu0 0
        %5093 = vmatpush2.bf16.xpose.msra.mxu0 0
        %5094 = vmatprep.subr.bf16.mxu0 0
        %5095 = vmatpush2.bf16.xpose.msra.mxu0 0
        %5096 = vmatprep.mubr.bf16.mxu0 0
        %5097 = vmatmul.mubr.bf16.gmra.mxu0 %v5059
        %v5098 = vpop.f32.mrf.mxu0
        %v5099 = vadd.f32 %v3854, %v5098
        %v5100 = vpop.f32.mrf.mxu0
        %v5101 = vpop.f32.mrf.mxu0
        %v5102 = vpop.f32.mrf.mxu0
        %5103 = vdwg.mxu0
        %v5104 = vsel %vm3948, %v5047, -inf
        %5105 = vmax.xlane.f32.xlu0 %v5104
        %v5106 = vpop.xlane.xlu0 %5105
        %v5107 = vsel %vm3948, %v5099, -inf
        %5108 = vmax.xlane.f32.xlu0 %v5107
        %v5109 = vpop.xlane.xlu0 %5108
        %v5110 = vsub.f32 %v5047, %v5106
        %v5111 = vsub.f32 %v5099, %v5109
        %v5112 = vmul.f32 %v5110, 1.442695
        %v5113 = vpow.pop %v5112
        %v5114 = vmul.f32 %v5111, 1.442695
        %v5115 = vpow.pop %v5114
        %v5116 = vsel %vm3948, %v5113, 0.0
        %5117 = vadd.xlane.f32.xlu0 %v5116
        %v5118 = vpop.xlane.xlu0 %5117
        %v5119 = vsel %vm3948, %v5115, 0.0
        %5120 = vadd.xlane.f32.xlu0 %v5119
        %v5121 = vpop.xlane.xlu0 %5120
        %v5122 = vrcp.pop %v5118
        %v5123 = vrcp.pop %v5121
        %v5124 = vmul.f32 %v5113, %v5122
        %v5125 = vmul.f32 %v5115, %v5123
        %v5126 = vpack.c.bf16 %v5124, %v5124
        %v5127 = vpack.c.bf16 %v5125, %v5125
        %v5128 = vpack.c.b16 %v3823, %v3823
        %5129 = vrot.lane.b32.xlu0 %v5128, 64
        %v5130 = vpop.permute.xlu0 %5129
        %v5132 = vsel %vm3948, %v5126, 0
        %v5135 = vsel %vm3976, %v5130, 0
        %5137 = vmatprep.subr.bf16.mxu0 0
        %5138 = vmatpush1.bf16.msra.mxu0 0
        %5139 = vmatprep.subr.bf16.mxu0 0
        %5140 = vmatpush1.bf16.msra.mxu0 0
        %5141 = vmatprep.subr.bf16.mxu0 0
        %5142 = vmatpush1.bf16.msra.mxu0 0
        %5143 = vmatprep.subr.bf16.mxu0 0
        %5144 = vmatpush1.bf16.msra.mxu0 0
        %5145 = vmatprep.subr.bf16.mxu0 0
        %5146 = vmatpush1.bf16.msra.mxu0 0
        %5147 = vmatprep.subr.bf16.mxu0 0
        %5148 = vmatpush1.bf16.msra.mxu0 0
        %5149 = vmatprep.subr.bf16.mxu0 0
        %5150 = vmatpush1.bf16.msra.mxu0 0
        %5151 = vmatprep.subr.bf16.mxu0 0
        %5152 = vmatpush1.bf16.msra.mxu0 %v5135
        %5153 = vmatprep.subr.bf16.mxu0 0
        %5154 = vmatpush2.bf16.msra.mxu0 0
        %5155 = vmatprep.subr.bf16.mxu0 0
        %5156 = vmatpush2.bf16.msra.mxu0 0
        %5157 = vmatprep.subr.bf16.mxu0 0
        %5158 = vmatpush2.bf16.msra.mxu0 0
        %5159 = vmatprep.subr.bf16.mxu0 0
        %5160 = vmatpush2.bf16.msra.mxu0 0
        %5161 = vmatprep.subr.bf16.mxu0 0
        %5162 = vmatpush2.bf16.msra.mxu0 0
        %5163 = vmatprep.subr.bf16.mxu0 0
        %5164 = vmatpush2.bf16.msra.mxu0 0
        %5165 = vmatprep.subr.bf16.mxu0 0
        %5166 = vmatpush2.bf16.msra.mxu0 0
        %5167 = vmatprep.subr.bf16.mxu0 0
        %5168 = vmatpush2.bf16.msra.mxu0 0
        %5169 = vmatprep.mubr.bf16.mxu0 0
        %5170 = vmatmul.mubr.bf16.gmra.mxu0 %v5132
        %v5171 = vpop.f32.mrf.mxu0
        %v5172 = vadd.f32 0.0, %v5171
        %v5173 = vpop.f32.mrf.mxu0
        %v5174 = vpop.f32.mrf.mxu0
        %v5175 = vpop.f32.mrf.mxu0
        %5176 = vdwg.mxu0
        %v5177 = vpack.c.b16 %v3827, %v3827
        %5178 = vrot.lane.b32.xlu0 %v5177, 64
        %v5179 = vpop.permute.xlu0 %5178
        %v5181 = vsel %vm3948, %v5127, 0
        %v5184 = vsel %vm3976, %v5179, 0
        %5186 = vmatprep.subr.bf16.mxu0 0
        %5187 = vmatpush1.bf16.msra.mxu0 0
        %5188 = vmatprep.subr.bf16.mxu0 0
        %5189 = vmatpush1.bf16.msra.mxu0 0
        %5190 = vmatprep.subr.bf16.mxu0 0
        %5191 = vmatpush1.bf16.msra.mxu0 0
        %5192 = vmatprep.subr.bf16.mxu0 0
        %5193 = vmatpush1.bf16.msra.mxu0 0
        %5194 = vmatprep.subr.bf16.mxu0 0
        %5195 = vmatpush1.bf16.msra.mxu0 0
        %5196 = vmatprep.subr.bf16.mxu0 0
        %5197 = vmatpush1.bf16.msra.mxu0 0
        %5198 = vmatprep.subr.bf16.mxu0 0
        %5199 = vmatpush1.bf16.msra.mxu0 0
        %5200 = vmatprep.subr.bf16.mxu0 0
        %5201 = vmatpush1.bf16.msra.mxu0 %v5184
        %5202 = vmatprep.subr.bf16.mxu0 0
        %5203 = vmatpush2.bf16.msra.mxu0 0
        %5204 = vmatprep.subr.bf16.mxu0 0
        %5205 = vmatpush2.bf16.msra.mxu0 0
        %5206 = vmatprep.subr.bf16.mxu0 0
        %5207 = vmatpush2.bf16.msra.mxu0 0
        %5208 = vmatprep.subr.bf16.mxu0 0
        %5209 = vmatpush2.bf16.msra.mxu0 0
        %5210 = vmatprep.subr.bf16.mxu0 0
        %5211 = vmatpush2.bf16.msra.mxu0 0
        %5212 = vmatprep.subr.bf16.mxu0 0
        %5213 = vmatpush2.bf16.msra.mxu0 0
        %5214 = vmatprep.subr.bf16.mxu0 0
        %5215 = vmatpush2.bf16.msra.mxu0 0
        %5216 = vmatprep.subr.bf16.mxu0 0
        %5217 = vmatpush2.bf16.msra.mxu0 0
        %5218 = vmatprep.mubr.bf16.mxu0 0
        %5219 = vmatmul.mubr.bf16.gmra.mxu0 %v5181
        %v5220 = vpop.f32.mrf.mxu0
        %v5221 = vadd.f32 0.0, %v5220
        %v5222 = vpop.f32.mrf.mxu0
        %v5223 = vpop.f32.mrf.mxu0
        %v5224 = vpop.f32.mrf.mxu0
        %5225 = vdwg.mxu0
        %v5226 = vpack.c.bf16 %v5221, %v5172
        %v5228 = vunpack.c.l.b16 %v5226
        %v5229 = vunpack.c.h.b16 %v5226
        %v5230 = vpack.c.b16 %v5228, %v5228
        %v5231 = vpack.c.b16 %v5229, %v5229
        %5232 = vrot.lane.b32.xlu0 %v5230, 64
        %v5233 = vpop.permute.xlu0 %5232
        %5234 = vrot.lane.b32.xlu0 %v5231, 64
        %v5235 = vpop.permute.xlu0 %5234
        %5238 = vst.msk [vmem:[#allocation2 + $0x8] sm:$0xf] %vm4315, %v5233
        %5239 = vst.msk [vmem:[#allocation2 + $0x18] sm:$0xf] %vm4315, %v5235
        %v5240 = vrot.slane %v3798, 4
        %v5241 = vrot.slane %v3814, 4
        %v5243 = vsel %vm3855, %v5240, 0
        %v5246 = vsel %vm3855, %v5241, 0
        %5248 = vmatprep.subr.bf16.mxu0 0
        %5249 = vmatpush1.bf16.xpose.msra.mxu0 0
        %5250 = vmatprep.subr.bf16.mxu0 0
        %5251 = vmatpush1.bf16.xpose.msra.mxu0 0
        %5252 = vmatprep.subr.bf16.mxu0 0
        %5253 = vmatpush1.bf16.xpose.msra.mxu0 0
        %5254 = vmatprep.subr.bf16.mxu0 0
        %5255 = vmatpush1.bf16.xpose.msra.mxu0 0
        %5256 = vmatprep.subr.bf16.mxu0 0
        %5257 = vmatpush1.bf16.xpose.msra.mxu0 0
        %5258 = vmatprep.subr.bf16.mxu0 0
        %5259 = vmatpush1.bf16.xpose.msra.mxu0 0
        %5260 = vmatprep.subr.bf16.mxu0 0
        %5261 = vmatpush1.bf16.xpose.msra.mxu0 0
        %5262 = vmatprep.subr.bf16.mxu0 0
        %5263 = vmatpush1.bf16.xpose.msra.mxu0 %v5246
        %5264 = vmatprep.subr.bf16.mxu0 0
        %5265 = vmatpush2.bf16.xpose.msra.mxu0 0
        %5266 = vmatprep.subr.bf16.mxu0 0
        %5267 = vmatpush2.bf16.xpose.msra.mxu0 0
        %5268 = vmatprep.subr.bf16.mxu0 0
        %5269 = vmatpush2.bf16.xpose.msra.mxu0 0
        %5270 = vmatprep.subr.bf16.mxu0 0
        %5271 = vmatpush2.bf16.xpose.msra.mxu0 0
        %5272 = vmatprep.subr.bf16.mxu0 0
        %5273 = vmatpush2.bf16.xpose.msra.mxu0 0
        %5274 = vmatprep.subr.bf16.mxu0 0
        %5275 = vmatpush2.bf16.xpose.msra.mxu0 0
        %5276 = vmatprep.subr.bf16.mxu0 0
        %5277 = vmatpush2.bf16.xpose.msra.mxu0 0
        %5278 = vmatprep.subr.bf16.mxu0 0
        %5279 = vmatpush2.bf16.xpose.msra.mxu0 0
        %5280 = vmatprep.mubr.bf16.mxu0 0
        %5281 = vmatmul.mubr.bf16.gmra.mxu0 %v5243
        %v5282 = vpop.f32.mrf.mxu0
        %v5283 = vadd.f32 %v3853, %v5282
        %v5284 = vpop.f32.mrf.mxu0
        %v5285 = vpop.f32.mrf.mxu0
        %v5286 = vpop.f32.mrf.mxu0
        %5287 = vdwg.mxu0
        %v5288 = vrot.slane %v3800, 4
        %v5289 = vrot.slane %v3816, 4
        %v5291 = vsel %vm3855, %v5288, 0
        %v5294 = vsel %vm3855, %v5289, 0
        %5296 = vmatprep.subr.bf16.mxu0 0
        %5297 = vmatpush1.bf16.xpose.msra.mxu0 0
        %5298 = vmatprep.subr.bf16.mxu0 0
        %5299 = vmatpush1.bf16.xpose.msra.mxu0 0
        %5300 = vmatprep.subr.bf16.mxu0 0
        %5301 = vmatpush1.bf16.xpose.msra.mxu0 0
        %5302 = vmatprep.subr.bf16.mxu0 0
        %5303 = vmatpush1.bf16.xpose.msra.mxu0 0
        %5304 = vmatprep.subr.bf16.mxu0 0
        %5305 = vmatpush1.bf16.xpose.msra.mxu0 0
        %5306 = vmatprep.subr.bf16.mxu0 0
        %5307 = vmatpush1.bf16.xpose.msra.mxu0 0
        %5308 = vmatprep.subr.bf16.mxu0 0
        %5309 = vmatpush1.bf16.xpose.msra.mxu0 0
        %5310 = vmatprep.subr.bf16.mxu0 0
        %5311 = vmatpush1.bf16.xpose.msra.mxu0 %v5294
        %5312 = vmatprep.subr.bf16.mxu0 0
        %5313 = vmatpush2.bf16.xpose.msra.mxu0 0
        %5314 = vmatprep.subr.bf16.mxu0 0
        %5315 = vmatpush2.bf16.xpose.msra.mxu0 0
        %5316 = vmatprep.subr.bf16.mxu0 0
        %5317 = vmatpush2.bf16.xpose.msra.mxu0 0
        %5318 = vmatprep.subr.bf16.mxu0 0
        %5319 = vmatpush2.bf16.xpose.msra.mxu0 0
        %5320 = vmatprep.subr.bf16.mxu0 0
        %5321 = vmatpush2.bf16.xpose.msra.mxu0 0
        %5322 = vmatprep.subr.bf16.mxu0 0
        %5323 = vmatpush2.bf16.xpose.msra.mxu0 0
        %5324 = vmatprep.subr.bf16.mxu0 0
        %5325 = vmatpush2.bf16.xpose.msra.mxu0 0
        %5326 = vmatprep.subr.bf16.mxu0 0
        %5327 = vmatpush2.bf16.xpose.msra.mxu0 0
        %5328 = vmatprep.mubr.bf16.mxu0 0
        %5329 = vmatmul.mubr.bf16.gmra.mxu0 %v5291
        %v5330 = vpop.f32.mrf.mxu0
        %v5331 = vadd.f32 %v3854, %v5330
        %v5332 = vpop.f32.mrf.mxu0
        %v5333 = vpop.f32.mrf.mxu0
        %v5334 = vpop.f32.mrf.mxu0
        %5335 = vdwg.mxu0
        %v5336 = vsel %vm3948, %v5283, -inf
        %5337 = vmax.xlane.f32.xlu0 %v5336
        %v5338 = vpop.xlane.xlu0 %5337
        %v5339 = vsel %vm3948, %v5331, -inf
        %5340 = vmax.xlane.f32.xlu0 %v5339
        %v5341 = vpop.xlane.xlu0 %5340
        %v5342 = vsub.f32 %v5283, %v5338
        %v5343 = vsub.f32 %v5331, %v5341
        %v5344 = vmul.f32 %v5342, 1.442695
        %v5345 = vpow.pop %v5344
        %v5346 = vmul.f32 %v5343, 1.442695
        %v5347 = vpow.pop %v5346
        %v5348 = vsel %vm3948, %v5345, 0.0
        %5349 = vadd.xlane.f32.xlu0 %v5348
        %v5350 = vpop.xlane.xlu0 %5349
        %v5351 = vsel %vm3948, %v5347, 0.0
        %5352 = vadd.xlane.f32.xlu0 %v5351
        %v5353 = vpop.xlane.xlu0 %5352
        %v5354 = vrcp.pop %v5350
        %v5355 = vrcp.pop %v5353
        %v5356 = vmul.f32 %v5345, %v5354
        %v5357 = vmul.f32 %v5347, %v5355
        %v5358 = vpack.c.bf16 %v5356, %v5356
        %v5359 = vpack.c.bf16 %v5357, %v5357
        %v5360 = vrot.slane %v3830, 4
        %v5362 = vsel %vm3948, %v5358, 0
        %v5365 = vsel %vm3976, %v5360, 0
        %5367 = vmatprep.subr.bf16.mxu0 0
        %5368 = vmatpush1.bf16.msra.mxu0 0
        %5369 = vmatprep.subr.bf16.mxu0 0
        %5370 = vmatpush1.bf16.msra.mxu0 0
        %5371 = vmatprep.subr.bf16.mxu0 0
        %5372 = vmatpush1.bf16.msra.mxu0 0
        %5373 = vmatprep.subr.bf16.mxu0 0
        %5374 = vmatpush1.bf16.msra.mxu0 0
        %5375 = vmatprep.subr.bf16.mxu0 0
        %5376 = vmatpush1.bf16.msra.mxu0 0
        %5377 = vmatprep.subr.bf16.mxu0 0
        %5378 = vmatpush1.bf16.msra.mxu0 0
        %5379 = vmatprep.subr.bf16.mxu0 0
        %5380 = vmatpush1.bf16.msra.mxu0 0
        %5381 = vmatprep.subr.bf16.mxu0 0
        %5382 = vmatpush1.bf16.msra.mxu0 %v5365
        %5383 = vmatprep.subr.bf16.mxu0 0
        %5384 = vmatpush2.bf16.msra.mxu0 0
        %5385 = vmatprep.subr.bf16.mxu0 0
        %5386 = vmatpush2.bf16.msra.mxu0 0
        %5387 = vmatprep.subr.bf16.mxu0 0
        %5388 = vmatpush2.bf16.msra.mxu0 0
        %5389 = vmatprep.subr.bf16.mxu0 0
        %5390 = vmatpush2.bf16.msra.mxu0 0
        %5391 = vmatprep.subr.bf16.mxu0 0
        %5392 = vmatpush2.bf16.msra.mxu0 0
        %5393 = vmatprep.subr.bf16.mxu0 0
        %5394 = vmatpush2.bf16.msra.mxu0 0
        %5395 = vmatprep.subr.bf16.mxu0 0
        %5396 = vmatpush2.bf16.msra.mxu0 0
        %5397 = vmatprep.subr.bf16.mxu0 0
        %5398 = vmatpush2.bf16.msra.mxu0 0
        %5399 = vmatprep.mubr.bf16.mxu0 0
        %5400 = vmatmul.mubr.bf16.gmra.mxu0 %v5362
        %v5401 = vpop.f32.mrf.mxu0
        %v5402 = vadd.f32 0.0, %v5401
        %v5403 = vpop.f32.mrf.mxu0
        %v5404 = vpop.f32.mrf.mxu0
        %v5405 = vpop.f32.mrf.mxu0
        %5406 = vdwg.mxu0
        %v5407 = vrot.slane %v3832, 4
        %v5409 = vsel %vm3948, %v5359, 0
        %v5412 = vsel %vm3976, %v5407, 0
        %5414 = vmatprep.subr.bf16.mxu0 0
        %5415 = vmatpush1.bf16.msra.mxu0 0
        %5416 = vmatprep.subr.bf16.mxu0 0
        %5417 = vmatpush1.bf16.msra.mxu0 0
        %5418 = vmatprep.subr.bf16.mxu0 0
        %5419 = vmatpush1.bf16.msra.mxu0 0
        %5420 = vmatprep.subr.bf16.mxu0 0
        %5421 = vmatpush1.bf16.msra.mxu0 0
        %5422 = vmatprep.subr.bf16.mxu0 0
        %5423 = vmatpush1.bf16.msra.mxu0 0
        %5424 = vmatprep.subr.bf16.mxu0 0
        %5425 = vmatpush1.bf16.msra.mxu0 0
        %5426 = vmatprep.subr.bf16.mxu0 0
        %5427 = vmatpush1.bf16.msra.mxu0 0
        %5428 = vmatprep.subr.bf16.mxu0 0
        %5429 = vmatpush1.bf16.msra.mxu0 %v5412
        %5430 = vmatprep.subr.bf16.mxu0 0
        %5431 = vmatpush2.bf16.msra.mxu0 0
        %5432 = vmatprep.subr.bf16.mxu0 0
        %5433 = vmatpush2.bf16.msra.mxu0 0
        %5434 = vmatprep.subr.bf16.mxu0 0
        %5435 = vmatpush2.bf16.msra.mxu0 0
        %5436 = vmatprep.subr.bf16.mxu0 0
        %5437 = vmatpush2.bf16.msra.mxu0 0
        %5438 = vmatprep.subr.bf16.mxu0 0
        %5439 = vmatpush2.bf16.msra.mxu0 0
        %5440 = vmatprep.subr.bf16.mxu0 0
        %5441 = vmatpush2.bf16.msra.mxu0 0
        %5442 = vmatprep.subr.bf16.mxu0 0
        %5443 = vmatpush2.bf16.msra.mxu0 0
        %5444 = vmatprep.subr.bf16.mxu0 0
        %5445 = vmatpush2.bf16.msra.mxu0 0
        %5446 = vmatprep.mubr.bf16.mxu0 0
        %5447 = vmatmul.mubr.bf16.gmra.mxu0 %v5409
        %v5448 = vpop.f32.mrf.mxu0
        %v5449 = vadd.f32 0.0, %v5448
        %v5450 = vpop.f32.mrf.mxu0
        %v5451 = vpop.f32.mrf.mxu0
        %v5452 = vpop.f32.mrf.mxu0
        %5453 = vdwg.mxu0
        %v5454 = vpack.c.bf16 %v5449, %v5402
        %v5456 = vunpack.c.l.b16 %v5454
        %v5457 = vunpack.c.h.b16 %v5454
        %v5458 = vpack.c.b16 %v5456, %v5456
        %v5459 = vpack.c.b16 %v5457, %v5457
        %5462 = vst.msk [vmem:[#allocation2 + $0xc] sm:$0xf] %vm4074, %v5458
        %5463 = vst.msk [vmem:[#allocation2 + $0x1c] sm:$0xf] %vm4074, %v5459
        %5464 = vrot.lane.b32.xlu0 %v3798, 64
        %v5465 = vpop.permute.xlu0 %5464
        %v5466 = vrot.slane %v5465, 4
        %5467 = vrot.lane.b32.xlu0 %v3814, 64
        %v5468 = vpop.permute.xlu0 %5467
        %v5469 = vrot.slane %v5468, 4
        %v5471 = vsel %vm3855, %v5466, 0
        %v5474 = vsel %vm3855, %v5469, 0
        %5476 = vmatprep.subr.bf16.mxu0 0
        %5477 = vmatpush1.bf16.xpose.msra.mxu0 0
        %5478 = vmatprep.subr.bf16.mxu0 0
        %5479 = vmatpush1.bf16.xpose.msra.mxu0 0
        %5480 = vmatprep.subr.bf16.mxu0 0
        %5481 = vmatpush1.bf16.xpose.msra.mxu0 0
        %5482 = vmatprep.subr.bf16.mxu0 0
        %5483 = vmatpush1.bf16.xpose.msra.mxu0 0
        %5484 = vmatprep.subr.bf16.mxu0 0
        %5485 = vmatpush1.bf16.xpose.msra.mxu0 0
        %5486 = vmatprep.subr.bf16.mxu0 0
        %5487 = vmatpush1.bf16.xpose.msra.mxu0 0
        %5488 = vmatprep.subr.bf16.mxu0 0
        %5489 = vmatpush1.bf16.xpose.msra.mxu0 0
        %5490 = vmatprep.subr.bf16.mxu0 0
        %5491 = vmatpush1.bf16.xpose.msra.mxu0 %v5474
        %5492 = vmatprep.subr.bf16.mxu0 0
        %5493 = vmatpush2.bf16.xpose.msra.mxu0 0
        %5494 = vmatprep.subr.bf16.mxu0 0
        %5495 = vmatpush2.bf16.xpose.msra.mxu0 0
        %5496 = vmatprep.subr.bf16.mxu0 0
        %5497 = vmatpush2.bf16.xpose.msra.mxu0 0
        %5498 = vmatprep.subr.bf16.mxu0 0
        %5499 = vmatpush2.bf16.xpose.msra.mxu0 0
        %5500 = vmatprep.subr.bf16.mxu0 0
        %5501 = vmatpush2.bf16.xpose.msra.mxu0 0
        %5502 = vmatprep.subr.bf16.mxu0 0
        %5503 = vmatpush2.bf16.xpose.msra.mxu0 0
        %5504 = vmatprep.subr.bf16.mxu0 0
        %5505 = vmatpush2.bf16.xpose.msra.mxu0 0
        %5506 = vmatprep.subr.bf16.mxu0 0
        %5507 = vmatpush2.bf16.xpose.msra.mxu0 0
        %5508 = vmatprep.mubr.bf16.mxu0 0
        %5509 = vmatmul.mubr.bf16.gmra.mxu0 %v5471
        %v5510 = vpop.f32.mrf.mxu0
        %v5511 = vadd.f32 %v3853, %v5510
        %v5512 = vpop.f32.mrf.mxu0
        %v5513 = vpop.f32.mrf.mxu0
        %v5514 = vpop.f32.mrf.mxu0
        %5515 = vdwg.mxu0
        %5516 = vrot.lane.b32.xlu0 %v3800, 64
        %v5517 = vpop.permute.xlu0 %5516
        %v5518 = vrot.slane %v5517, 4
        %5519 = vrot.lane.b32.xlu0 %v3816, 64
        %v5520 = vpop.permute.xlu0 %5519
        %v5521 = vrot.slane %v5520, 4
        %v5523 = vsel %vm3855, %v5518, 0
        %v5526 = vsel %vm3855, %v5521, 0
        %5528 = vmatprep.subr.bf16.mxu0 0
        %5529 = vmatpush1.bf16.xpose.msra.mxu0 0
        %5530 = vmatprep.subr.bf16.mxu0 0
        %5531 = vmatpush1.bf16.xpose.msra.mxu0 0
        %5532 = vmatprep.subr.bf16.mxu0 0
        %5533 = vmatpush1.bf16.xpose.msra.mxu0 0
        %5534 = vmatprep.subr.bf16.mxu0 0
        %5535 = vmatpush1.bf16.xpose.msra.mxu0 0
        %5536 = vmatprep.subr.bf16.mxu0 0
        %5537 = vmatpush1.bf16.xpose.msra.mxu0 0
        %5538 = vmatprep.subr.bf16.mxu0 0
        %5539 = vmatpush1.bf16.xpose.msra.mxu0 0
        %5540 = vmatprep.subr.bf16.mxu0 0
        %5541 = vmatpush1.bf16.xpose.msra.mxu0 0
        %5542 = vmatprep.subr.bf16.mxu0 0
        %5543 = vmatpush1.bf16.xpose.msra.mxu0 %v5526
        %5544 = vmatprep.subr.bf16.mxu0 0
        %5545 = vmatpush2.bf16.xpose.msra.mxu0 0
        %5546 = vmatprep.subr.bf16.mxu0 0
        %5547 = vmatpush2.bf16.xpose.msra.mxu0 0
        %5548 = vmatprep.subr.bf16.mxu0 0
        %5549 = vmatpush2.bf16.xpose.msra.mxu0 0
        %5550 = vmatprep.subr.bf16.mxu0 0
        %5551 = vmatpush2.bf16.xpose.msra.mxu0 0
        %5552 = vmatprep.subr.bf16.mxu0 0
        %5553 = vmatpush2.bf16.xpose.msra.mxu0 0
        %5554 = vmatprep.subr.bf16.mxu0 0
        %5555 = vmatpush2.bf16.xpose.msra.mxu0 0
        %5556 = vmatprep.subr.bf16.mxu0 0
        %5557 = vmatpush2.bf16.xpose.msra.mxu0 0
        %5558 = vmatprep.subr.bf16.mxu0 0
        %5559 = vmatpush2.bf16.xpose.msra.mxu0 0
        %5560 = vmatprep.mubr.bf16.mxu0 0
        %5561 = vmatmul.mubr.bf16.gmra.mxu0 %v5523
        %v5562 = vpop.f32.mrf.mxu0
        %v5563 = vadd.f32 %v3854, %v5562
        %v5564 = vpop.f32.mrf.mxu0
        %v5565 = vpop.f32.mrf.mxu0
        %v5566 = vpop.f32.mrf.mxu0
        %5567 = vdwg.mxu0
        %v5568 = vsel %vm3948, %v5511, -inf
        %5569 = vmax.xlane.f32.xlu0 %v5568
        %v5570 = vpop.xlane.xlu0 %5569
        %v5571 = vsel %vm3948, %v5563, -inf
        %5572 = vmax.xlane.f32.xlu0 %v5571
        %v5573 = vpop.xlane.xlu0 %5572
        %v5574 = vsub.f32 %v5511, %v5570
        %v5575 = vsub.f32 %v5563, %v5573
        %v5576 = vmul.f32 %v5574, 1.442695
        %v5577 = vpow.pop %v5576
        %v5578 = vmul.f32 %v5575, 1.442695
        %v5579 = vpow.pop %v5578
        %v5580 = vsel %vm3948, %v5577, 0.0
        %5581 = vadd.xlane.f32.xlu0 %v5580
        %v5582 = vpop.xlane.xlu0 %5581
        %v5583 = vsel %vm3948, %v5579, 0.0
        %5584 = vadd.xlane.f32.xlu0 %v5583
        %v5585 = vpop.xlane.xlu0 %5584
        %v5586 = vrcp.pop %v5582
        %v5587 = vrcp.pop %v5585
        %v5588 = vmul.f32 %v5577, %v5586
        %v5589 = vmul.f32 %v5579, %v5587
        %v5590 = vpack.c.bf16 %v5588, %v5588
        %v5591 = vpack.c.bf16 %v5589, %v5589
        %5592 = vrot.lane.b32.xlu0 %v3830, 64
        %v5593 = vpop.permute.xlu0 %5592
        %v5594 = vrot.slane %v5593, 4
        %v5596 = vsel %vm3948, %v5590, 0
        %v5599 = vsel %vm3976, %v5594, 0
        %5601 = vmatprep.subr.bf16.mxu0 0
        %5602 = vmatpush1.bf16.msra.mxu0 0
        %5603 = vmatprep.subr.bf16.mxu0 0
        %5604 = vmatpush1.bf16.msra.mxu0 0
        %5605 = vmatprep.subr.bf16.mxu0 0
        %5606 = vmatpush1.bf16.msra.mxu0 0
        %5607 = vmatprep.subr.bf16.mxu0 0
        %5608 = vmatpush1.bf16.msra.mxu0 0
        %5609 = vmatprep.subr.bf16.mxu0 0
        %5610 = vmatpush1.bf16.msra.mxu0 0
        %5611 = vmatprep.subr.bf16.mxu0 0
        %5612 = vmatpush1.bf16.msra.mxu0 0
        %5613 = vmatprep.subr.bf16.mxu0 0
        %5614 = vmatpush1.bf16.msra.mxu0 0
        %5615 = vmatprep.subr.bf16.mxu0 0
        %5616 = vmatpush1.bf16.msra.mxu0 %v5599
        %5617 = vmatprep.subr.bf16.mxu0 0
        %5618 = vmatpush2.bf16.msra.mxu0 0
        %5619 = vmatprep.subr.bf16.mxu0 0
        %5620 = vmatpush2.bf16.msra.mxu0 0
        %5621 = vmatprep.subr.bf16.mxu0 0
        %5622 = vmatpush2.bf16.msra.mxu0 0
        %5623 = vmatprep.subr.bf16.mxu0 0
        %5624 = vmatpush2.bf16.msra.mxu0 0
        %5625 = vmatprep.subr.bf16.mxu0 0
        %5626 = vmatpush2.bf16.msra.mxu0 0
        %5627 = vmatprep.subr.bf16.mxu0 0
        %5628 = vmatpush2.bf16.msra.mxu0 0
        %5629 = vmatprep.subr.bf16.mxu0 0
        %5630 = vmatpush2.bf16.msra.mxu0 0
        %5631 = vmatprep.subr.bf16.mxu0 0
        %5632 = vmatpush2.bf16.msra.mxu0 0
        %5633 = vmatprep.mubr.bf16.mxu0 0
        %5634 = vmatmul.mubr.bf16.gmra.mxu0 %v5596
        %v5635 = vpop.f32.mrf.mxu0
        %v5636 = vadd.f32 0.0, %v5635
        %v5637 = vpop.f32.mrf.mxu0
        %v5638 = vpop.f32.mrf.mxu0
        %v5639 = vpop.f32.mrf.mxu0
        %5640 = vdwg.mxu0
        %5641 = vrot.lane.b32.xlu0 %v3832, 64
        %v5642 = vpop.permute.xlu0 %5641
        %v5643 = vrot.slane %v5642, 4
        %v5645 = vsel %vm3948, %v5591, 0
        %v5648 = vsel %vm3976, %v5643, 0
        %5650 = vmatprep.subr.bf16.mxu0 0
        %5651 = vmatpush1.bf16.msra.mxu0 0
        %5652 = vmatprep.subr.bf16.mxu0 0
        %5653 = vmatpush1.bf16.msra.mxu0 0
        %5654 = vmatprep.subr.bf16.mxu0 0
        %5655 = vmatpush1.bf16.msra.mxu0 0
        %5656 = vmatprep.subr.bf16.mxu0 0
        %5657 = vmatpush1.bf16.msra.mxu0 0
        %5658 = vmatprep.subr.bf16.mxu0 0
        %5659 = vmatpush1.bf16.msra.mxu0 0
        %5660 = vmatprep.subr.bf16.mxu0 0
        %5661 = vmatpush1.bf16.msra.mxu0 0
        %5662 = vmatprep.subr.bf16.mxu0 0
        %5663 = vmatpush1.bf16.msra.mxu0 0
        %5664 = vmatprep.subr.bf16.mxu0 0
        %5665 = vmatpush1.bf16.msra.mxu0 %v5648
        %5666 = vmatprep.subr.bf16.mxu0 0
        %5667 = vmatpush2.bf16.msra.mxu0 0
        %5668 = vmatprep.subr.bf16.mxu0 0
        %5669 = vmatpush2.bf16.msra.mxu0 0
        %5670 = vmatprep.subr.bf16.mxu0 0
        %5671 = vmatpush2.bf16.msra.mxu0 0
        %5672 = vmatprep.subr.bf16.mxu0 0
        %5673 = vmatpush2.bf16.msra.mxu0 0
        %5674 = vmatprep.subr.bf16.mxu0 0
        %5675 = vmatpush2.bf16.msra.mxu0 0
        %5676 = vmatprep.subr.bf16.mxu0 0
        %5677 = vmatpush2.bf16.msra.mxu0 0
        %5678 = vmatprep.subr.bf16.mxu0 0
        %5679 = vmatpush2.bf16.msra.mxu0 0
        %5680 = vmatprep.subr.bf16.mxu0 0
        %5681 = vmatpush2.bf16.msra.mxu0 0
        %5682 = vmatprep.mubr.bf16.mxu0 0
        %5683 = vmatmul.mubr.bf16.gmra.mxu0 %v5645
        %v5684 = vpop.f32.mrf.mxu0
        %v5685 = vadd.f32 0.0, %v5684
        %v5686 = vpop.f32.mrf.mxu0
        %v5687 = vpop.f32.mrf.mxu0
        %v5688 = vpop.f32.mrf.mxu0
        %5689 = vdwg.mxu0
        %v5690 = vpack.c.bf16 %v5685, %v5636
        %v5692 = vunpack.c.l.b16 %v5690
        %v5693 = vunpack.c.h.b16 %v5690
        %v5694 = vpack.c.b16 %v5692, %v5692
        %v5695 = vpack.c.b16 %v5693, %v5693
        %5696 = vrot.lane.b32.xlu0 %v5694, 64
        %v5697 = vpop.permute.xlu0 %5696
        %5698 = vrot.lane.b32.xlu0 %v5695, 64
        %v5699 = vpop.permute.xlu0 %5698
        %5702 = vst.msk [vmem:[#allocation2 + $0xc] sm:$0xf] %vm4315, %v5697
        %5703 = vst.msk [vmem:[#allocation2 + $0x1c] sm:$0xf] %vm4315, %v5699
        %v5704 = vld [vmem:[#allocation2] sm:$0xff]
        %v5705 = vld [vmem:[#allocation2 + $0x8] sm:$0xff]
        %v5706 = vld [vmem:[#allocation2 + $0x10] sm:$0xff]
        %v5707 = vld [vmem:[#allocation2 + $0x18] sm:$0xff]
        %v5708 = vld [vmem:[#allocation15] sm:$0xff]
        %v5709 = vld [vmem:[#allocation15 + $0x8] sm:$0xff]
        %v5710 = vld [vmem:[#allocation15 + $0x10] sm:$0xff]
        %v5711 = vld [vmem:[#allocation15 + $0x18] sm:$0xff]
        %v5712 = vld [vmem:[#allocation15 + $0x20] sm:$0xff]
        %v5713 = vld [vmem:[#allocation15 + $0x28] sm:$0xff]
        %v5714 = vld [vmem:[#allocation15 + $0x30] sm:$0xff]
        %v5715 = vld [vmem:[#allocation15 + $0x38] sm:$0xff]
        %v5716 = vld [vmem:[#allocation15 + $0x40] sm:$0xff]
        %v5717 = vld [vmem:[#allocation15 + $0x48] sm:$0xff]
        %v5718 = vld [vmem:[#allocation15 + $0x50] sm:$0xff]
        %v5719 = vld [vmem:[#allocation15 + $0x58] sm:$0xff]
        %v5720 = vld [vmem:[#allocation15 + $0x60] sm:$0xff]
        %v5721 = vld [vmem:[#allocation15 + $0x68] sm:$0xff]
        %v5722 = vld [vmem:[#allocation15 + $0x70] sm:$0xff]
        %v5723 = vld [vmem:[#allocation15 + $0x78] sm:$0xff]
        %v5724 = vld [vmem:[#allocation15 + $0x80] sm:$0xff]
        %v5725 = vld [vmem:[#allocation15 + $0x88] sm:$0xff]
        %v5726 = vld [vmem:[#allocation15 + $0x90] sm:$0xff]
        %v5727 = vld [vmem:[#allocation15 + $0x98] sm:$0xff]
        %v5728 = vld [vmem:[#allocation15 + $0xa0] sm:$0xff]
        %v5729 = vld [vmem:[#allocation15 + $0xa8] sm:$0xff]
        %v5730 = vld [vmem:[#allocation15 + $0xb0] sm:$0xff]
        %v5731 = vld [vmem:[#allocation15 + $0xb8] sm:$0xff]
        %v5732 = vld [vmem:[#allocation15 + $0xc0] sm:$0xff]
        %v5733 = vld [vmem:[#allocation15 + $0xc8] sm:$0xff]
        %v5734 = vld [vmem:[#allocation15 + $0xd0] sm:$0xff]
        %v5735 = vld [vmem:[#allocation15 + $0xd8] sm:$0xff]
        %v5736 = vld [vmem:[#allocation15 + $0xe0] sm:$0xff]
        %v5737 = vld [vmem:[#allocation15 + $0xe8] sm:$0xff]
        %v5738 = vld [vmem:[#allocation15 + $0xf0] sm:$0xff]
        %v5739 = vld [vmem:[#allocation15 + $0xf8] sm:$0xff]
        %v5740 = vld [vmem:[#allocation15 + $0x100] sm:$0xff]
        %v5741 = vld [vmem:[#allocation15 + $0x108] sm:$0xff]
        %v5742 = vld [vmem:[#allocation15 + $0x110] sm:$0xff]
        %v5743 = vld [vmem:[#allocation15 + $0x118] sm:$0xff]
        %v5744 = vld [vmem:[#allocation15 + $0x120] sm:$0xff]
        %v5745 = vld [vmem:[#allocation15 + $0x128] sm:$0xff]
        %v5746 = vld [vmem:[#allocation15 + $0x130] sm:$0xff]
        %v5747 = vld [vmem:[#allocation15 + $0x138] sm:$0xff]
        %v5748 = vld [vmem:[#allocation15 + $0x140] sm:$0xff]
        %v5749 = vld [vmem:[#allocation15 + $0x148] sm:$0xff]
        %v5750 = vld [vmem:[#allocation15 + $0x150] sm:$0xff]
        %v5751 = vld [vmem:[#allocation15 + $0x158] sm:$0xff]
        %v5752 = vld [vmem:[#allocation15 + $0x160] sm:$0xff]
        %v5753 = vld [vmem:[#allocation15 + $0x168] sm:$0xff]
        %v5754 = vld [vmem:[#allocation15 + $0x170] sm:$0xff]
        %v5755 = vld [vmem:[#allocation15 + $0x178] sm:$0xff]
        %v5756 = vld [vmem:[#allocation15 + $0x180] sm:$0xff]
        %v5757 = vld [vmem:[#allocation15 + $0x188] sm:$0xff]
        %v5758 = vld [vmem:[#allocation15 + $0x190] sm:$0xff]
        %v5759 = vld [vmem:[#allocation15 + $0x198] sm:$0xff]
        %v5760 = vld [vmem:[#allocation15 + $0x1a0] sm:$0xff]
        %v5761 = vld [vmem:[#allocation15 + $0x1a8] sm:$0xff]
        %v5762 = vld [vmem:[#allocation15 + $0x1b0] sm:$0xff]
        %v5763 = vld [vmem:[#allocation15 + $0x1b8] sm:$0xff]
        %v5764 = vld [vmem:[#allocation15 + $0x1c0] sm:$0xff]
        %v5765 = vld [vmem:[#allocation15 + $0x1c8] sm:$0xff]
        %v5766 = vld [vmem:[#allocation15 + $0x1d0] sm:$0xff]
        %v5767 = vld [vmem:[#allocation15 + $0x1d8] sm:$0xff]
        %v5768 = vld [vmem:[#allocation15 + $0x1e0] sm:$0xff]
        %v5769 = vld [vmem:[#allocation15 + $0x1e8] sm:$0xff]
        %v5770 = vld [vmem:[#allocation15 + $0x1f0] sm:$0xff]
        %v5771 = vld [vmem:[#allocation15 + $0x1f8] sm:$0xff]
        %v5772 = vld [vmem:[#allocation15 + $0x200] sm:$0xff]
        %v5773 = vld [vmem:[#allocation15 + $0x208] sm:$0xff]
        %v5774 = vld [vmem:[#allocation15 + $0x210] sm:$0xff]
        %v5775 = vld [vmem:[#allocation15 + $0x218] sm:$0xff]
        %v5776 = vld [vmem:[#allocation15 + $0x220] sm:$0xff]
        %v5777 = vld [vmem:[#allocation15 + $0x228] sm:$0xff]
        %v5778 = vld [vmem:[#allocation15 + $0x230] sm:$0xff]
        %v5779 = vld [vmem:[#allocation15 + $0x238] sm:$0xff]
        %v5780 = vld [vmem:[#allocation15 + $0x240] sm:$0xff]
        %v5781 = vld [vmem:[#allocation15 + $0x248] sm:$0xff]
        %v5782 = vld [vmem:[#allocation15 + $0x250] sm:$0xff]
        %v5783 = vld [vmem:[#allocation15 + $0x258] sm:$0xff]
        %v5784 = vld [vmem:[#allocation15 + $0x260] sm:$0xff]
        %v5785 = vld [vmem:[#allocation15 + $0x268] sm:$0xff]
        %v5786 = vld [vmem:[#allocation15 + $0x270] sm:$0xff]
        %v5787 = vld [vmem:[#allocation15 + $0x278] sm:$0xff]
        %v5788 = vld [vmem:[#allocation15 + $0x280] sm:$0xff]
        %v5789 = vld [vmem:[#allocation15 + $0x288] sm:$0xff]
        %v5790 = vld [vmem:[#allocation15 + $0x290] sm:$0xff]
        %v5791 = vld [vmem:[#allocation15 + $0x298] sm:$0xff]
        %v5792 = vld [vmem:[#allocation15 + $0x2a0] sm:$0xff]
        %v5793 = vld [vmem:[#allocation15 + $0x2a8] sm:$0xff]
        %v5794 = vld [vmem:[#allocation15 + $0x2b0] sm:$0xff]
        %v5795 = vld [vmem:[#allocation15 + $0x2b8] sm:$0xff]
        %v5796 = vld [vmem:[#allocation15 + $0x2c0] sm:$0xff]
        %v5797 = vld [vmem:[#allocation15 + $0x2c8] sm:$0xff]
        %v5798 = vld [vmem:[#allocation15 + $0x2d0] sm:$0xff]
        %v5799 = vld [vmem:[#allocation15 + $0x2d8] sm:$0xff]
        %v5800 = vld [vmem:[#allocation15 + $0x2e0] sm:$0xff]
        %v5801 = vld [vmem:[#allocation15 + $0x2e8] sm:$0xff]
        %v5802 = vld [vmem:[#allocation15 + $0x2f0] sm:$0xff]
        %v5803 = vld [vmem:[#allocation15 + $0x2f8] sm:$0xff]
        %v5804 = vld [vmem:[#allocation15 + $0x300] sm:$0xff]
        %v5805 = vld [vmem:[#allocation15 + $0x308] sm:$0xff]
        %v5806 = vld [vmem:[#allocation15 + $0x310] sm:$0xff]
        %v5807 = vld [vmem:[#allocation15 + $0x318] sm:$0xff]
        %v5808 = vld [vmem:[#allocation15 + $0x320] sm:$0xff]
        %v5809 = vld [vmem:[#allocation15 + $0x328] sm:$0xff]
        %v5810 = vld [vmem:[#allocation15 + $0x330] sm:$0xff]
        %v5811 = vld [vmem:[#allocation15 + $0x338] sm:$0xff]
        %v5812 = vld [vmem:[#allocation15 + $0x340] sm:$0xff]
        %v5813 = vld [vmem:[#allocation15 + $0x348] sm:$0xff]
        %v5814 = vld [vmem:[#allocation15 + $0x350] sm:$0xff]
        %v5815 = vld [vmem:[#allocation15 + $0x358] sm:$0xff]
        %v5816 = vld [vmem:[#allocation15 + $0x360] sm:$0xff]
        %v5817 = vld [vmem:[#allocation15 + $0x368] sm:$0xff]
        %v5818 = vld [vmem:[#allocation15 + $0x370] sm:$0xff]
        %v5819 = vld [vmem:[#allocation15 + $0x378] sm:$0xff]
        %v5820 = vld [vmem:[#allocation15 + $0x380] sm:$0xff]
        %v5821 = vld [vmem:[#allocation15 + $0x388] sm:$0xff]
        %v5822 = vld [vmem:[#allocation15 + $0x390] sm:$0xff]
        %v5823 = vld [vmem:[#allocation15 + $0x398] sm:$0xff]
        %v5824 = vld [vmem:[#allocation15 + $0x3a0] sm:$0xff]
        %v5825 = vld [vmem:[#allocation15 + $0x3a8] sm:$0xff]
        %v5826 = vld [vmem:[#allocation15 + $0x3b0] sm:$0xff]
        %v5827 = vld [vmem:[#allocation15 + $0x3b8] sm:$0xff]
        %v5828 = vld [vmem:[#allocation15 + $0x3c0] sm:$0xff]
        %v5829 = vld [vmem:[#allocation15 + $0x3c8] sm:$0xff]
        %v5830 = vld [vmem:[#allocation15 + $0x3d0] sm:$0xff]
        %v5831 = vld [vmem:[#allocation15 + $0x3d8] sm:$0xff]
        %v5832 = vld [vmem:[#allocation15 + $0x3e0] sm:$0xff]
        %v5833 = vld [vmem:[#allocation15 + $0x3e8] sm:$0xff]
        %v5834 = vld [vmem:[#allocation15 + $0x3f0] sm:$0xff]
        %v5835 = vld [vmem:[#allocation15 + $0x3f8] sm:$0xff]
        %v5836 = vld [vmem:[#allocation17] sm:$0xf]
        %v5838 = vlaneseq
        %v5839 = vshrl.u32 %v5838, 7
        %v5840 = vsub.s32 0, %v5839
        %v5841 = vrot.slane %v5836, %v5840
        %v5842 = vlaneseq
        %v5843 = vshrl.u32 %v5842, 7
        %v5844 = vsub.s32 1, %v5843
        %v5845 = vrot.slane %v5836, %v5844
        %v5846 = vlaneseq
        %v5847 = vshrl.u32 %v5846, 7
        %v5848 = vsub.s32 2, %v5847
        %v5849 = vrot.slane %v5836, %v5848
        %v5850 = vlaneseq
        %v5851 = vshrl.u32 %v5850, 7
        %v5852 = vsub.s32 3, %v5851
        %v5853 = vrot.slane %v5836, %v5852
        %v5862 = vunpack.c.l.b16 %v5704
        %v5863 = vunpack.c.h.b16 %v5704
        %v5864 = vunpack.c.l.b16 %v5705
        %v5865 = vunpack.c.h.b16 %v5705
        %v5866 = vunpack.c.l.b16 %v5706
        %v5867 = vunpack.c.h.b16 %v5706
        %v5868 = vunpack.c.l.b16 %v5707
        %v5869 = vunpack.c.h.b16 %v5707
        %v5870 = vpack.c.b16 %v5866, %v5862
        %v5871 = vpack.c.b16 %v5867, %v5863
        %v5872 = vpack.c.b16 %v5868, %v5864
        %v5873 = vpack.c.b16 %v5869, %v5865
        %v6006 = vunpack.c.l.b16 %v5708
        %v6007 = vunpack.c.h.b16 %v5708
        %v6008 = vunpack.c.l.b16 %v5709
        %v6009 = vunpack.c.h.b16 %v5709
        %v6010 = vunpack.c.l.b16 %v5710
        %v6011 = vunpack.c.h.b16 %v5710
        %v6012 = vunpack.c.l.b16 %v5711
        %v6013 = vunpack.c.h.b16 %v5711
        %v6014 = vunpack.c.l.b16 %v5712
        %v6015 = vunpack.c.h.b16 %v5712
        %v6016 = vunpack.c.l.b16 %v5713
        %v6017 = vunpack.c.h.b16 %v5713
        %v6018 = vunpack.c.l.b16 %v5714
        %v6019 = vunpack.c.h.b16 %v5714
        %v6020 = vunpack.c.l.b16 %v5715
        %v6021 = vunpack.c.h.b16 %v5715
        %v6022 = vunpack.c.l.b16 %v5716
        %v6023 = vunpack.c.h.b16 %v5716
        %v6024 = vunpack.c.l.b16 %v5717
        %v6025 = vunpack.c.h.b16 %v5717
        %v6026 = vunpack.c.l.b16 %v5718
        %v6027 = vunpack.c.h.b16 %v5718
        %v6028 = vunpack.c.l.b16 %v5719
        %v6029 = vunpack.c.h.b16 %v5719
        %v6030 = vunpack.c.l.b16 %v5720
        %v6031 = vunpack.c.h.b16 %v5720
        %v6032 = vunpack.c.l.b16 %v5721
        %v6033 = vunpack.c.h.b16 %v5721
        %v6034 = vunpack.c.l.b16 %v5722
        %v6035 = vunpack.c.h.b16 %v5722
        %v6036 = vunpack.c.l.b16 %v5723
        %v6037 = vunpack.c.h.b16 %v5723
        %v6038 = vunpack.c.l.b16 %v5724
        %v6039 = vunpack.c.h.b16 %v5724
        %v6040 = vunpack.c.l.b16 %v5725
        %v6041 = vunpack.c.h.b16 %v5725
        %v6042 = vunpack.c.l.b16 %v5726
        %v6043 = vunpack.c.h.b16 %v5726
        %v6044 = vunpack.c.l.b16 %v5727
        %v6045 = vunpack.c.h.b16 %v5727
        %v6046 = vunpack.c.l.b16 %v5728
        %v6047 = vunpack.c.h.b16 %v5728
        %v6048 = vunpack.c.l.b16 %v5729
        %v6049 = vunpack.c.h.b16 %v5729
        %v6050 = vunpack.c.l.b16 %v5730
        %v6051 = vunpack.c.h.b16 %v5730
        %v6052 = vunpack.c.l.b16 %v5731
        %v6053 = vunpack.c.h.b16 %v5731
        %v6054 = vunpack.c.l.b16 %v5732
        %v6055 = vunpack.c.h.b16 %v5732
        %v6056 = vunpack.c.l.b16 %v5733
        %v6057 = vunpack.c.h.b16 %v5733
        %v6058 = vunpack.c.l.b16 %v5734
        %v6059 = vunpack.c.h.b16 %v5734
        %v6060 = vunpack.c.l.b16 %v5735
        %v6061 = vunpack.c.h.b16 %v5735
        %v6062 = vunpack.c.l.b16 %v5736
        %v6063 = vunpack.c.h.b16 %v5736
        %v6064 = vunpack.c.l.b16 %v5737
        %v6065 = vunpack.c.h.b16 %v5737
        %v6066 = vunpack.c.l.b16 %v5738
        %v6067 = vunpack.c.h.b16 %v5738
        %v6068 = vunpack.c.l.b16 %v5739
        %v6069 = vunpack.c.h.b16 %v5739
        %v6070 = vunpack.c.l.b16 %v5740
        %v6071 = vunpack.c.h.b16 %v5740
        %v6072 = vunpack.c.l.b16 %v5741
        %v6073 = vunpack.c.h.b16 %v5741
        %v6074 = vunpack.c.l.b16 %v5742
        %v6075 = vunpack.c.h.b16 %v5742
        %v6076 = vunpack.c.l.b16 %v5743
        %v6077 = vunpack.c.h.b16 %v5743
        %v6078 = vunpack.c.l.b16 %v5744
        %v6079 = vunpack.c.h.b16 %v5744
        %v6080 = vunpack.c.l.b16 %v5745
        %v6081 = vunpack.c.h.b16 %v5745
        %v6082 = vunpack.c.l.b16 %v5746
        %v6083 = vunpack.c.h.b16 %v5746
        %v6084 = vunpack.c.l.b16 %v5747
        %v6085 = vunpack.c.h.b16 %v5747
        %v6086 = vunpack.c.l.b16 %v5748
        %v6087 = vunpack.c.h.b16 %v5748
        %v6088 = vunpack.c.l.b16 %v5749
        %v6089 = vunpack.c.h.b16 %v5749
        %v6090 = vunpack.c.l.b16 %v5750
        %v6091 = vunpack.c.h.b16 %v5750
        %v6092 = vunpack.c.l.b16 %v5751
        %v6093 = vunpack.c.h.b16 %v5751
        %v6094 = vunpack.c.l.b16 %v5752
        %v6095 = vunpack.c.h.b16 %v5752
        %v6096 = vunpack.c.l.b16 %v5753
        %v6097 = vunpack.c.h.b16 %v5753
        %v6098 = vunpack.c.l.b16 %v5754
        %v6099 = vunpack.c.h.b16 %v5754
        %v6100 = vunpack.c.l.b16 %v5755
        %v6101 = vunpack.c.h.b16 %v5755
        %v6102 = vunpack.c.l.b16 %v5756
        %v6103 = vunpack.c.h.b16 %v5756
        %v6104 = vunpack.c.l.b16 %v5757
        %v6105 = vunpack.c.h.b16 %v5757
        %v6106 = vunpack.c.l.b16 %v5758
        %v6107 = vunpack.c.h.b16 %v5758
        %v6108 = vunpack.c.l.b16 %v5759
        %v6109 = vunpack.c.h.b16 %v5759
        %v6110 = vunpack.c.l.b16 %v5760
        %v6111 = vunpack.c.h.b16 %v5760
        %v6112 = vunpack.c.l.b16 %v5761
        %v6113 = vunpack.c.h.b16 %v5761
        %v6114 = vunpack.c.l.b16 %v5762
        %v6115 = vunpack.c.h.b16 %v5762
        %v6116 = vunpack.c.l.b16 %v5763
        %v6117 = vunpack.c.h.b16 %v5763
        %v6118 = vunpack.c.l.b16 %v5764
        %v6119 = vunpack.c.h.b16 %v5764
        %v6120 = vunpack.c.l.b16 %v5765
        %v6121 = vunpack.c.h.b16 %v5765
        %v6122 = vunpack.c.l.b16 %v5766
        %v6123 = vunpack.c.h.b16 %v5766
        %v6124 = vunpack.c.l.b16 %v5767
        %v6125 = vunpack.c.h.b16 %v5767
        %v6126 = vunpack.c.l.b16 %v5768
        %v6127 = vunpack.c.h.b16 %v5768
        %v6128 = vunpack.c.l.b16 %v5769
        %v6129 = vunpack.c.h.b16 %v5769
        %v6130 = vunpack.c.l.b16 %v5770
        %v6131 = vunpack.c.h.b16 %v5770
        %v6132 = vunpack.c.l.b16 %v5771
        %v6133 = vunpack.c.h.b16 %v5771
        %v6134 = vunpack.c.l.b16 %v5772
        %v6135 = vunpack.c.h.b16 %v5772
        %v6136 = vunpack.c.l.b16 %v5773
        %v6137 = vunpack.c.h.b16 %v5773
        %v6138 = vunpack.c.l.b16 %v5774
        %v6139 = vunpack.c.h.b16 %v5774
        %v6140 = vunpack.c.l.b16 %v5775
        %v6141 = vunpack.c.h.b16 %v5775
        %v6142 = vunpack.c.l.b16 %v5776
        %v6143 = vunpack.c.h.b16 %v5776
        %v6144 = vunpack.c.l.b16 %v5777
        %v6145 = vunpack.c.h.b16 %v5777
        %v6146 = vunpack.c.l.b16 %v5778
        %v6147 = vunpack.c.h.b16 %v5778
        %v6148 = vunpack.c.l.b16 %v5779
        %v6149 = vunpack.c.h.b16 %v5779
        %v6150 = vunpack.c.l.b16 %v5780
        %v6151 = vunpack.c.h.b16 %v5780
        %v6152 = vunpack.c.l.b16 %v5781
        %v6153 = vunpack.c.h.b16 %v5781
        %v6154 = vunpack.c.l.b16 %v5782
        %v6155 = vunpack.c.h.b16 %v5782
        %v6156 = vunpack.c.l.b16 %v5783
        %v6157 = vunpack.c.h.b16 %v5783
        %v6158 = vunpack.c.l.b16 %v5784
        %v6159 = vunpack.c.h.b16 %v5784
        %v6160 = vunpack.c.l.b16 %v5785
        %v6161 = vunpack.c.h.b16 %v5785
        %v6162 = vunpack.c.l.b16 %v5786
        %v6163 = vunpack.c.h.b16 %v5786
        %v6164 = vunpack.c.l.b16 %v5787
        %v6165 = vunpack.c.h.b16 %v5787
        %v6166 = vunpack.c.l.b16 %v5788
        %v6167 = vunpack.c.h.b16 %v5788
        %v6168 = vunpack.c.l.b16 %v5789
        %v6169 = vunpack.c.h.b16 %v5789
        %v6170 = vunpack.c.l.b16 %v5790
        %v6171 = vunpack.c.h.b16 %v5790
        %v6172 = vunpack.c.l.b16 %v5791
        %v6173 = vunpack.c.h.b16 %v5791
        %v6174 = vunpack.c.l.b16 %v5792
        %v6175 = vunpack.c.h.b16 %v5792
        %v6176 = vunpack.c.l.b16 %v5793
        %v6177 = vunpack.c.h.b16 %v5793
        %v6178 = vunpack.c.l.b16 %v5794
        %v6179 = vunpack.c.h.b16 %v5794
        %v6180 = vunpack.c.l.b16 %v5795
        %v6181 = vunpack.c.h.b16 %v5795
        %v6182 = vunpack.c.l.b16 %v5796
        %v6183 = vunpack.c.h.b16 %v5796
        %v6184 = vunpack.c.l.b16 %v5797
        %v6185 = vunpack.c.h.b16 %v5797
        %v6186 = vunpack.c.l.b16 %v5798
        %v6187 = vunpack.c.h.b16 %v5798
        %v6188 = vunpack.c.l.b16 %v5799
        %v6189 = vunpack.c.h.b16 %v5799
        %v6190 = vunpack.c.l.b16 %v5800
        %v6191 = vunpack.c.h.b16 %v5800
        %v6192 = vunpack.c.l.b16 %v5801
        %v6193 = vunpack.c.h.b16 %v5801
        %v6194 = vunpack.c.l.b16 %v5802
        %v6195 = vunpack.c.h.b16 %v5802
        %v6196 = vunpack.c.l.b16 %v5803
        %v6197 = vunpack.c.h.b16 %v5803
        %v6198 = vunpack.c.l.b16 %v5804
        %v6199 = vunpack.c.h.b16 %v5804
        %v6200 = vunpack.c.l.b16 %v5805
        %v6201 = vunpack.c.h.b16 %v5805
        %v6202 = vunpack.c.l.b16 %v5806
        %v6203 = vunpack.c.h.b16 %v5806
        %v6204 = vunpack.c.l.b16 %v5807
        %v6205 = vunpack.c.h.b16 %v5807
        %v6206 = vunpack.c.l.b16 %v5808
        %v6207 = vunpack.c.h.b16 %v5808
        %v6208 = vunpack.c.l.b16 %v5809
        %v6209 = vunpack.c.h.b16 %v5809
        %v6210 = vunpack.c.l.b16 %v5810
        %v6211 = vunpack.c.h.b16 %v5810
        %v6212 = vunpack.c.l.b16 %v5811
        %v6213 = vunpack.c.h.b16 %v5811
        %v6214 = vunpack.c.l.b16 %v5812
        %v6215 = vunpack.c.h.b16 %v5812
        %v6216 = vunpack.c.l.b16 %v5813
        %v6217 = vunpack.c.h.b16 %v5813
        %v6218 = vunpack.c.l.b16 %v5814
        %v6219 = vunpack.c.h.b16 %v5814
        %v6220 = vunpack.c.l.b16 %v5815
        %v6221 = vunpack.c.h.b16 %v5815
        %v6222 = vunpack.c.l.b16 %v5816
        %v6223 = vunpack.c.h.b16 %v5816
        %v6224 = vunpack.c.l.b16 %v5817
        %v6225 = vunpack.c.h.b16 %v5817
        %v6226 = vunpack.c.l.b16 %v5818
        %v6227 = vunpack.c.h.b16 %v5818
        %v6228 = vunpack.c.l.b16 %v5819
        %v6229 = vunpack.c.h.b16 %v5819
        %v6230 = vunpack.c.l.b16 %v5820
        %v6231 = vunpack.c.h.b16 %v5820
        %v6232 = vunpack.c.l.b16 %v5821
        %v6233 = vunpack.c.h.b16 %v5821
        %v6234 = vunpack.c.l.b16 %v5822
        %v6235 = vunpack.c.h.b16 %v5822
        %v6236 = vunpack.c.l.b16 %v5823
        %v6237 = vunpack.c.h.b16 %v5823
        %v6238 = vunpack.c.l.b16 %v5824
        %v6239 = vunpack.c.h.b16 %v5824
        %v6240 = vunpack.c.l.b16 %v5825
        %v6241 = vunpack.c.h.b16 %v5825
        %v6242 = vunpack.c.l.b16 %v5826
        %v6243 = vunpack.c.h.b16 %v5826
        %v6244 = vunpack.c.l.b16 %v5827
        %v6245 = vunpack.c.h.b16 %v5827
        %v6246 = vunpack.c.l.b16 %v5828
        %v6247 = vunpack.c.h.b16 %v5828
        %v6248 = vunpack.c.l.b16 %v5829
        %v6249 = vunpack.c.h.b16 %v5829
        %v6250 = vunpack.c.l.b16 %v5830
        %v6251 = vunpack.c.h.b16 %v5830
        %v6252 = vunpack.c.l.b16 %v5831
        %v6253 = vunpack.c.h.b16 %v5831
        %v6254 = vunpack.c.l.b16 %v5832
        %v6255 = vunpack.c.h.b16 %v5832
        %v6256 = vunpack.c.l.b16 %v5833
        %v6257 = vunpack.c.h.b16 %v5833
        %v6258 = vunpack.c.l.b16 %v5834
        %v6259 = vunpack.c.h.b16 %v5834
        %v6260 = vunpack.c.l.b16 %v5835
        %v6261 = vunpack.c.h.b16 %v5835
        %v6262 = vpack.c.b16 %v6010, %v6006
        %v6263 = vpack.c.b16 %v6011, %v6007
        %v6264 = vpack.c.b16 %v6012, %v6008
        %v6265 = vpack.c.b16 %v6013, %v6009
        %v6266 = vpack.c.b16 %v6018, %v6014
        %v6267 = vpack.c.b16 %v6019, %v6015
        %v6268 = vpack.c.b16 %v6020, %v6016
        %v6269 = vpack.c.b16 %v6021, %v6017
        %v6270 = vpack.c.b16 %v6026, %v6022
        %v6271 = vpack.c.b16 %v6027, %v6023
        %v6272 = vpack.c.b16 %v6028, %v6024
        %v6273 = vpack.c.b16 %v6029, %v6025
        %v6274 = vpack.c.b16 %v6034, %v6030
        %v6275 = vpack.c.b16 %v6035, %v6031
        %v6276 = vpack.c.b16 %v6036, %v6032
        %v6277 = vpack.c.b16 %v6037, %v6033
        %v6278 = vpack.c.b16 %v6042, %v6038
        %v6279 = vpack.c.b16 %v6043, %v6039
        %v6280 = vpack.c.b16 %v6044, %v6040
        %v6281 = vpack.c.b16 %v6045, %v6041
        %v6282 = vpack.c.b16 %v6050, %v6046
        %v6283 = vpack.c.b16 %v6051, %v6047
        %v6284 = vpack.c.b16 %v6052, %v6048
        %v6285 = vpack.c.b16 %v6053, %v6049
        %v6286 = vpack.c.b16 %v6058, %v6054
        %v6287 = vpack.c.b16 %v6059, %v6055
        %v6288 = vpack.c.b16 %v6060, %v6056
        %v6289 = vpack.c.b16 %v6061, %v6057
        %v6290 = vpack.c.b16 %v6066, %v6062
        %v6291 = vpack.c.b16 %v6067, %v6063
        %v6292 = vpack.c.b16 %v6068, %v6064
        %v6293 = vpack.c.b16 %v6069, %v6065
        %v6294 = vpack.c.b16 %v6074, %v6070
        %v6295 = vpack.c.b16 %v6075, %v6071
        %v6296 = vpack.c.b16 %v6076, %v6072
        %v6297 = vpack.c.b16 %v6077, %v6073
        %v6298 = vpack.c.b16 %v6082, %v6078
        %v6299 = vpack.c.b16 %v6083, %v6079
        %v6300 = vpack.c.b16 %v6084, %v6080
        %v6301 = vpack.c.b16 %v6085, %v6081
        %v6302 = vpack.c.b16 %v6090, %v6086
        %v6303 = vpack.c.b16 %v6091, %v6087
        %v6304 = vpack.c.b16 %v6092, %v6088
        %v6305 = vpack.c.b16 %v6093, %v6089
        %v6306 = vpack.c.b16 %v6098, %v6094
        %v6307 = vpack.c.b16 %v6099, %v6095
        %v6308 = vpack.c.b16 %v6100, %v6096
        %v6309 = vpack.c.b16 %v6101, %v6097
        %v6310 = vpack.c.b16 %v6106, %v6102
        %v6311 = vpack.c.b16 %v6107, %v6103
        %v6312 = vpack.c.b16 %v6108, %v6104
        %v6313 = vpack.c.b16 %v6109, %v6105
        %v6314 = vpack.c.b16 %v6114, %v6110
        %v6315 = vpack.c.b16 %v6115, %v6111
        %v6316 = vpack.c.b16 %v6116, %v6112
        %v6317 = vpack.c.b16 %v6117, %v6113
        %v6318 = vpack.c.b16 %v6122, %v6118
        %v6319 = vpack.c.b16 %v6123, %v6119
        %v6320 = vpack.c.b16 %v6124, %v6120
        %v6321 = vpack.c.b16 %v6125, %v6121
        %v6322 = vpack.c.b16 %v6130, %v6126
        %v6323 = vpack.c.b16 %v6131, %v6127
        %v6324 = vpack.c.b16 %v6132, %v6128
        %v6325 = vpack.c.b16 %v6133, %v6129
        %v6326 = vpack.c.b16 %v6138, %v6134
        %v6327 = vpack.c.b16 %v6139, %v6135
        %v6328 = vpack.c.b16 %v6140, %v6136
        %v6329 = vpack.c.b16 %v6141, %v6137
        %v6330 = vpack.c.b16 %v6146, %v6142
        %v6331 = vpack.c.b16 %v6147, %v6143
        %v6332 = vpack.c.b16 %v6148, %v6144
        %v6333 = vpack.c.b16 %v6149, %v6145
        %v6334 = vpack.c.b16 %v6154, %v6150
        %v6335 = vpack.c.b16 %v6155, %v6151
        %v6336 = vpack.c.b16 %v6156, %v6152
        %v6337 = vpack.c.b16 %v6157, %v6153
        %v6338 = vpack.c.b16 %v6162, %v6158
        %v6339 = vpack.c.b16 %v6163, %v6159
        %v6340 = vpack.c.b16 %v6164, %v6160
        %v6341 = vpack.c.b16 %v6165, %v6161
        %v6342 = vpack.c.b16 %v6170, %v6166
        %v6343 = vpack.c.b16 %v6171, %v6167
        %v6344 = vpack.c.b16 %v6172, %v6168
        %v6345 = vpack.c.b16 %v6173, %v6169
        %v6346 = vpack.c.b16 %v6178, %v6174
        %v6347 = vpack.c.b16 %v6179, %v6175
        %v6348 = vpack.c.b16 %v6180, %v6176
        %v6349 = vpack.c.b16 %v6181, %v6177
        %v6350 = vpack.c.b16 %v6186, %v6182
        %v6351 = vpack.c.b16 %v6187, %v6183
        %v6352 = vpack.c.b16 %v6188, %v6184
        %v6353 = vpack.c.b16 %v6189, %v6185
        %v6354 = vpack.c.b16 %v6194, %v6190
        %v6355 = vpack.c.b16 %v6195, %v6191
        %v6356 = vpack.c.b16 %v6196, %v6192
        %v6357 = vpack.c.b16 %v6197, %v6193
        %v6358 = vpack.c.b16 %v6202, %v6198
        %v6359 = vpack.c.b16 %v6203, %v6199
        %v6360 = vpack.c.b16 %v6204, %v6200
        %v6361 = vpack.c.b16 %v6205, %v6201
        %v6362 = vpack.c.b16 %v6210, %v6206
        %v6363 = vpack.c.b16 %v6211, %v6207
        %v6364 = vpack.c.b16 %v6212, %v6208
        %v6365 = vpack.c.b16 %v6213, %v6209
        %v6366 = vpack.c.b16 %v6218, %v6214
        %v6367 = vpack.c.b16 %v6219, %v6215
        %v6368 = vpack.c.b16 %v6220, %v6216
        %v6369 = vpack.c.b16 %v6221, %v6217
        %v6370 = vpack.c.b16 %v6226, %v6222
        %v6371 = vpack.c.b16 %v6227, %v6223
        %v6372 = vpack.c.b16 %v6228, %v6224
        %v6373 = vpack.c.b16 %v6229, %v6225
        %v6374 = vpack.c.b16 %v6234, %v6230
        %v6375 = vpack.c.b16 %v6235, %v6231
        %v6376 = vpack.c.b16 %v6236, %v6232
        %v6377 = vpack.c.b16 %v6237, %v6233
        %v6378 = vpack.c.b16 %v6242, %v6238
        %v6379 = vpack.c.b16 %v6243, %v6239
        %v6380 = vpack.c.b16 %v6244, %v6240
        %v6381 = vpack.c.b16 %v6245, %v6241
        %v6382 = vpack.c.b16 %v6250, %v6246
        %v6383 = vpack.c.b16 %v6251, %v6247
        %v6384 = vpack.c.b16 %v6252, %v6248
        %v6385 = vpack.c.b16 %v6253, %v6249
        %v6386 = vpack.c.b16 %v6258, %v6254
        %v6387 = vpack.c.b16 %v6259, %v6255
        %v6388 = vpack.c.b16 %v6260, %v6256
        %v6389 = vpack.c.b16 %v6261, %v6257
        %6518 = vmatprep.subr.bf16.mxu0 %v6291
        %6519 = vmatpush1.bf16.msra.mxu0 %v6290
        %6520 = vmatprep.subr.bf16.mxu0 %v6287
        %6521 = vmatpush1.bf16.msra.mxu0 %v6286
        %6522 = vmatprep.subr.bf16.mxu0 %v6283
        %6523 = vmatpush1.bf16.msra.mxu0 %v6282
        %6524 = vmatprep.subr.bf16.mxu0 %v6279
        %6525 = vmatpush1.bf16.msra.mxu0 %v6278
        %6526 = vmatprep.subr.bf16.mxu0 %v6275
        %6527 = vmatpush1.bf16.msra.mxu0 %v6274
        %6528 = vmatprep.subr.bf16.mxu0 %v6271
        %6529 = vmatpush1.bf16.msra.mxu0 %v6270
        %6530 = vmatprep.subr.bf16.mxu0 %v6267
        %6531 = vmatpush1.bf16.msra.mxu0 %v6266
        %6532 = vmatprep.subr.bf16.mxu0 %v6263
        %6533 = vmatpush1.bf16.msra.mxu0 %v6262
        %6534 = vmatprep.subr.bf16.mxu0 %v6323
        %6535 = vmatpush2.bf16.msra.mxu0 %v6322
        %6536 = vmatprep.subr.bf16.mxu0 %v6319
        %6537 = vmatpush2.bf16.msra.mxu0 %v6318
        %6538 = vmatprep.subr.bf16.mxu0 %v6315
        %6539 = vmatpush2.bf16.msra.mxu0 %v6314
        %6540 = vmatprep.subr.bf16.mxu0 %v6311
        %6541 = vmatpush2.bf16.msra.mxu0 %v6310
        %6542 = vmatprep.subr.bf16.mxu0 %v6307
        %6543 = vmatpush2.bf16.msra.mxu0 %v6306
        %6544 = vmatprep.subr.bf16.mxu0 %v6303
        %6545 = vmatpush2.bf16.msra.mxu0 %v6302
        %6546 = vmatprep.subr.bf16.mxu0 %v6299
        %6547 = vmatpush2.bf16.msra.mxu0 %v6298
        %6548 = vmatprep.subr.bf16.mxu0 %v6295
        %6549 = vmatpush2.bf16.msra.mxu0 %v6294
        %6550 = vmatprep.mubr.bf16.mxu0 %v5871
        %6551 = vmatmul.mubr.bf16.gmra.mxu0 %v5870
        %v6552 = vpop.f32.mrf.mxu0
        %v6553 = vadd.f32 %v5841, %v6552
        %v6554 = vpop.f32.mrf.mxu0
        %v6555 = vadd.f32 %v5845, %v6554
        %v6556 = vpop.f32.mrf.mxu0
        %v6557 = vadd.f32 %v5841, %v6556
        %v6558 = vpop.f32.mrf.mxu0
        %v6559 = vadd.f32 %v5845, %v6558
        %6560 = vdwg.mxu0
        %6561 = vmatprep.subr.bf16.mxu0 %v6355
        %6562 = vmatpush1.bf16.msra.mxu0 %v6354
        %6563 = vmatprep.subr.bf16.mxu0 %v6351
        %6564 = vmatpush1.bf16.msra.mxu0 %v6350
        %6565 = vmatprep.subr.bf16.mxu0 %v6347
        %6566 = vmatpush1.bf16.msra.mxu0 %v6346
        %6567 = vmatprep.subr.bf16.mxu0 %v6343
        %6568 = vmatpush1.bf16.msra.mxu0 %v6342
        %6569 = vmatprep.subr.bf16.mxu0 %v6339
        %6570 = vmatpush1.bf16.msra.mxu0 %v6338
        %6571 = vmatprep.subr.bf16.mxu0 %v6335
        %6572 = vmatpush1.bf16.msra.mxu0 %v6334
        %6573 = vmatprep.subr.bf16.mxu0 %v6331
        %6574 = vmatpush1.bf16.msra.mxu0 %v6330
        %6575 = vmatprep.subr.bf16.mxu0 %v6327
        %6576 = vmatpush1.bf16.msra.mxu0 %v6326
        %6577 = vmatprep.subr.bf16.mxu0 %v6387
        %6578 = vmatpush2.bf16.msra.mxu0 %v6386
        %6579 = vmatprep.subr.bf16.mxu0 %v6383
        %6580 = vmatpush2.bf16.msra.mxu0 %v6382
        %6581 = vmatprep.subr.bf16.mxu0 %v6379
        %6582 = vmatpush2.bf16.msra.mxu0 %v6378
        %6583 = vmatprep.subr.bf16.mxu0 %v6375
        %6584 = vmatpush2.bf16.msra.mxu0 %v6374
        %6585 = vmatprep.subr.bf16.mxu0 %v6371
        %6586 = vmatpush2.bf16.msra.mxu0 %v6370
        %6587 = vmatprep.subr.bf16.mxu0 %v6367
        %6588 = vmatpush2.bf16.msra.mxu0 %v6366
        %6589 = vmatprep.subr.bf16.mxu0 %v6363
        %6590 = vmatpush2.bf16.msra.mxu0 %v6362
        %6591 = vmatprep.subr.bf16.mxu0 %v6359
        %6592 = vmatpush2.bf16.msra.mxu0 %v6358
        %6593 = vmatprep.mubr.bf16.mxu0 %v5873
        %6594 = vmatmul.mubr.bf16.gmra.mxu0 %v5872
        %v6595 = vpop.f32.mrf.mxu0
        %v6596 = vadd.f32 %v6553, %v6595
        %v6597 = vpop.f32.mrf.mxu0
        %v6598 = vadd.f32 %v6555, %v6597
        %v6599 = vpop.f32.mrf.mxu0
        %v6600 = vadd.f32 %v6557, %v6599
        %v6601 = vpop.f32.mrf.mxu0
        %v6602 = vadd.f32 %v6559, %v6601
        %6603 = vdwg.mxu0
        %6604 = vmatprep.subr.bf16.mxu0 %v6293
        %6605 = vmatpush1.bf16.msra.mxu0 %v6292
        %6606 = vmatprep.subr.bf16.mxu0 %v6289
        %6607 = vmatpush1.bf16.msra.mxu0 %v6288
        %6608 = vmatprep.subr.bf16.mxu0 %v6285
        %6609 = vmatpush1.bf16.msra.mxu0 %v6284
        %6610 = vmatprep.subr.bf16.mxu0 %v6281
        %6611 = vmatpush1.bf16.msra.mxu0 %v6280
        %6612 = vmatprep.subr.bf16.mxu0 %v6277
        %6613 = vmatpush1.bf16.msra.mxu0 %v6276
        %6614 = vmatprep.subr.bf16.mxu0 %v6273
        %6615 = vmatpush1.bf16.msra.mxu0 %v6272
        %6616 = vmatprep.subr.bf16.mxu0 %v6269
        %6617 = vmatpush1.bf16.msra.mxu0 %v6268
        %6618 = vmatprep.subr.bf16.mxu0 %v6265
        %6619 = vmatpush1.bf16.msra.mxu0 %v6264
        %6620 = vmatprep.subr.bf16.mxu0 %v6325
        %6621 = vmatpush2.bf16.msra.mxu0 %v6324
        %6622 = vmatprep.subr.bf16.mxu0 %v6321
        %6623 = vmatpush2.bf16.msra.mxu0 %v6320
        %6624 = vmatprep.subr.bf16.mxu0 %v6317
        %6625 = vmatpush2.bf16.msra.mxu0 %v6316
        %6626 = vmatprep.subr.bf16.mxu0 %v6313
        %6627 = vmatpush2.bf16.msra.mxu0 %v6312
        %6628 = vmatprep.subr.bf16.mxu0 %v6309
        %6629 = vmatpush2.bf16.msra.mxu0 %v6308
        %6630 = vmatprep.subr.bf16.mxu0 %v6305
        %6631 = vmatpush2.bf16.msra.mxu0 %v6304
        %6632 = vmatprep.subr.bf16.mxu0 %v6301
        %6633 = vmatpush2.bf16.msra.mxu0 %v6300
        %6634 = vmatprep.subr.bf16.mxu0 %v6297
        %6635 = vmatpush2.bf16.msra.mxu0 %v6296
        %6636 = vmatprep.mubr.bf16.mxu0 %v5871
        %6637 = vmatmul.mubr.bf16.gmra.mxu0 %v5870
        %v6638 = vpop.f32.mrf.mxu0
        %v6639 = vadd.f32 %v5849, %v6638
        %v6640 = vpop.f32.mrf.mxu0
        %v6641 = vadd.f32 %v5853, %v6640
        %v6642 = vpop.f32.mrf.mxu0
        %v6643 = vadd.f32 %v5849, %v6642
        %v6644 = vpop.f32.mrf.mxu0
        %v6645 = vadd.f32 %v5853, %v6644
        %6646 = vdwg.mxu0
        %6647 = vmatprep.subr.bf16.mxu0 %v6357
        %6648 = vmatpush1.bf16.msra.mxu0 %v6356
        %6649 = vmatprep.subr.bf16.mxu0 %v6353
        %6650 = vmatpush1.bf16.msra.mxu0 %v6352
        %6651 = vmatprep.subr.bf16.mxu0 %v6349
        %6652 = vmatpush1.bf16.msra.mxu0 %v6348
        %6653 = vmatprep.subr.bf16.mxu0 %v6345
        %6654 = vmatpush1.bf16.msra.mxu0 %v6344
        %6655 = vmatprep.subr.bf16.mxu0 %v6341
        %6656 = vmatpush1.bf16.msra.mxu0 %v6340
        %6657 = vmatprep.subr.bf16.mxu0 %v6337
        %6658 = vmatpush1.bf16.msra.mxu0 %v6336
        %6659 = vmatprep.subr.bf16.mxu0 %v6333
        %6660 = vmatpush1.bf16.msra.mxu0 %v6332
        %6661 = vmatprep.subr.bf16.mxu0 %v6329
        %6662 = vmatpush1.bf16.msra.mxu0 %v6328
        %6663 = vmatprep.subr.bf16.mxu0 %v6389
        %6664 = vmatpush2.bf16.msra.mxu0 %v6388
        %6665 = vmatprep.subr.bf16.mxu0 %v6385
        %6666 = vmatpush2.bf16.msra.mxu0 %v6384
        %6667 = vmatprep.subr.bf16.mxu0 %v6381
        %6668 = vmatpush2.bf16.msra.mxu0 %v6380
        %6669 = vmatprep.subr.bf16.mxu0 %v6377
        %6670 = vmatpush2.bf16.msra.mxu0 %v6376
        %6671 = vmatprep.subr.bf16.mxu0 %v6373
        %6672 = vmatpush2.bf16.msra.mxu0 %v6372
        %6673 = vmatprep.subr.bf16.mxu0 %v6369
        %6674 = vmatpush2.bf16.msra.mxu0 %v6368
        %6675 = vmatprep.subr.bf16.mxu0 %v6365
        %6676 = vmatpush2.bf16.msra.mxu0 %v6364
        %6677 = vmatprep.subr.bf16.mxu0 %v6361
        %6678 = vmatpush2.bf16.msra.mxu0 %v6360
        %6679 = vmatprep.mubr.bf16.mxu0 %v5873
        %6680 = vmatmul.mubr.bf16.gmra.mxu0 %v5872
        %v6681 = vpop.f32.mrf.mxu0
        %v6682 = vadd.f32 %v6639, %v6681
        %v6683 = vpop.f32.mrf.mxu0
        %v6684 = vadd.f32 %v6641, %v6683
        %v6685 = vpop.f32.mrf.mxu0
        %v6686 = vadd.f32 %v6643, %v6685
        %v6687 = vpop.f32.mrf.mxu0
        %v6688 = vadd.f32 %v6645, %v6687
        %6689 = vdwg.mxu0
        %6690 = vst [vmem:[%s499] sm:$0xff] %v6596
        %6691 = vst [vmem:[%s499 + $0x8] sm:$0xff] %v6598
        %6692 = vst [vmem:[%s499 + $0x10] sm:$0xff] %v6682
        %6693 = vst [vmem:[%s499 + $0x18] sm:$0xff] %v6684
        %6694 = vst [vmem:[%s499 + $0x20] sm:$0xff] %v6600
        %6695 = vst [vmem:[%s499 + $0x28] sm:$0xff] %v6602
        %6696 = vst [vmem:[%s499 + $0x30] sm:$0xff] %v6686
        %6697 = vst [vmem:[%s499 + $0x38] sm:$0xff] %v6688
        %s6698 = sand.u32 %s259, 1
        %s6699 = scalar_lea.sflag [#allocation5], %s6698
        %s6700 = sand.u32 %s259, 1
        %s6701 = smul.addr %s6700, 64
        %s6702 = scalar_lea.vmem [#allocation18], %s6701
        // Predicated region
        $region97: #{spatial_edge_self_attn.1} parent=59 // pred_check
          %p6703 = pneg %p269
        $region98: #{spatial_edge_self_attn.1} parent=59 // pred_check_branch
          %6705 = sbr.rel (%p6703) target = $region100
        $region99: #{spatial_edge_self_attn.1} parent=59 // pred_region
          %s6706 = smul.u32 2, %s31
          %s6708 = ssub.s32 1024, 1024
          %6709 = vsyncadd %s6699, %s6708
          %s6710 = smul.addr %s6706, 4
          %s6711 = smul.addr %s6710, 128
          %s6712 = scalar_lea.hbm %s10, %s6711
          %s6713 = sshll.u32 %s6702, 4
          %s6714 = int_to_ptr.vmem [resolvable:$true] %s6713
          %6719 = dma.vmem_to_hbm [thread:$0]  %s6714, 1024, %s6712, %s6699, 512, 512, 32
        $region100: #{spatial_edge_self_attn.1} parent=59 // pred_fallthru
          _
      $region60: #{spatial_edge_self_attn.1} parent=5 // pred_fallthru
        _
      %p6720 = scmp.le.s32.totalorder 2, %s26
      // Predicated region
      $region101: #{spatial_edge_self_attn.1} parent=5 // pred_check
        %p6721 = pneg %p6720
      $region102: #{spatial_edge_self_attn.1} parent=5 // pred_check_branch
        %6723 = sbr.rel (%p6721) target = $region104
      $region103: #{spatial_edge_self_attn.1} parent=5 // pred_region
        %s6724 = ssub.s32 %s26, 2
        // Predicated region
        $region105: #{spatial_edge_self_attn.1} parent=103 // pred_check
          %p6725 = pneg %p275
        $region106: #{spatial_edge_self_attn.1} parent=103 // pred_check_branch
          %6727 = sbr.rel (%p6725) target = $region108
        $region107: #{spatial_edge_self_attn.1} parent=103 // pred_region
          %s6728 = sand.u32 %s260, 1
          %s6729 = scalar_lea.sflag [#allocation5], %s6728
          %s6730 = sand.u32 %s260, 1
          %s6731 = smul.addr %s6730, 64
          %s6732 = scalar_lea.vmem [#allocation18], %s6731
          %6733 = dma.done %s6729, 1024
        $region108: #{spatial_edge_self_attn.1} parent=103 // pred_fallthru
          _
      $region104: #{spatial_edge_self_attn.1} parent=5 // pred_fallthru
        _
    $region6: #{spatial_edge_self_attn.1} parent=1 // loop_footer
      %s30 = sadd.s32 1, %s26
    $region7: #{spatial_edge_self_attn.1} parent=1 // loop_footer_branch
      %25 = sbr.rel target = $region3
    $region8: #{spatial_edge_self_attn.1} parent=1 // loop_exit
      _
    %6734 = vsyncpa [#allocation4], 1
    %s6735 = scalar_lea.sflag [#allocation4], 1
    %6736 = vsyncpa %s6735, 1
    %6737 = vsyncpa [#allocation7], 1
    %6738 = vsyncpa [#allocation10], 1
    %6739 = vsyncpa [#allocation13], 1
    %6740 = vsyncpa [#allocation16], 1
    %6741 = vsyncpa [#allocation5], 1
    %s6742 = scalar_lea.sflag [#allocation5], 1
    %6743 = vsyncpa %s6742, 1

</llo_original>
